<compile_context>
chip_gen: v7x
topology: tpu7x:2x2x1
jax: 0.10.0
libtpu: 0.0.40
codegen_flags: <defaults>
</compile_context>

<pallas_src>
import functools
import math

import jax
import jax.numpy as jnp
import numpy as np
from jax import lax
from jax.experimental import pallas as pl
from jax.experimental.pallas import tpu as pltpu

# ---------------------------------------------------------------------------
# Model constants (nn.TransformerEncoderLayer(d_model=64+2, nhead=2); head = 37)
# ---------------------------------------------------------------------------
D_MODEL = 64 + 2          # audio features (64) + one-hot embedding (2)
NHEAD = 2
HD = D_MODEL // NHEAD     # 33 real per-head dim
DP = 128                  # lane-padded model dim
HP = 128                  # lane-padded per-head dim (head-blocked layout)
HH = NHEAD * HP           # 256: all heads, head-blocked
QKV_W = 3 * HH            # 768
DFF = 2048                # TransformerEncoderLayer default dim_feedforward
OUT_DIM = 37              # AIWIN_ head output
LN_EPS = 1e-5
LEAKY_SLOPE = 0.3         # WavEncoder uses LeakyReLU(0.3) (trimodal WavEncoder variant)

# Lane offsets inside the consolidated (128, W_IN_COLS) input-projection slab.
OFF_ENC_QKV = 0                       # width 768
OFF_DEC_QKV = OFF_ENC_QKV + QKV_W     # width 768
OFF_CA_Q = OFF_DEC_QKV + QKV_W        # width 256
OFF_CA_KV = OFF_CA_Q + HH             # width 512
OFF_HEAD = OFF_CA_KV + 2 * HH         # width 128
W_IN_COLS = OFF_HEAD + DP             # 2432

# Lane offsets inside the (256, 384) attention out-projection slab.
OFF_ENC_OUT = 0
OFF_DEC_SA_OUT = DP
OFF_DEC_CA_OUT = 2 * DP

# Rows of the consolidated f32 bias / LayerNorm slab (each row 2048 lanes, zero padded).
_VEC_ROWS = (
    "enc_qkv_b", "enc_out_b", "enc_ln1_g", "enc_ln1_b", "enc_ff1_b",
    "enc_ff2_b", "enc_ln2_g", "enc_ln2_b",
    "dec_sa_qkv_b", "dec_sa_out_b", "dec_ln1_g", "dec_ln1_b",
    "dec_ca_q_b", "dec_ca_kv_b", "dec_ca_out_b", "dec_ln2_g", "dec_ln2_b",
    "dec_ff1_b", "dec_ff2_b", "dec_ln3_g", "dec_ln3_b", "head_b",
)
VROW = {n: i for i, n in enumerate(_VEC_ROWS)}
VEC_COLS = DFF


# ---------------------------------------------------------------------------
# Fused transformer (encoder layer + decoder layer + head) kernel
# ---------------------------------------------------------------------------
def _transformer_kernel(x_ref, w_in, w_out, w_ff1, w_ff2, vecs, o_ref, *, bblk, seq):
    """Encoder layer + decoder layer + (Linear+Tanh) head for a block of `bblk` batch
    elements, flattened to a (bblk*seq, 128) slab.  Padded lanes are exact zeros so the
    masked LayerNorm statistics and the zero-padded attention head dims stay exact."""
    lane = lax.broadcasted_iota(jnp.int32, (1, DP), 1)
    ln_mask = (lane < D_MODEL).astype(jnp.float32)    # real model-dim lanes
    inv_d = 1.0 / D_MODEL

    def vrow(name, width):
        # Static row + 128-aligned lane slice of the f32 bias/LN slab -> (1, width).
        r = VROW[name]
        return vecs[r:r + 1, :width]

    def proj_in(t_bf16, off, width, bname):
        # (M, 128)bf16 @ (128, width)bf16 -> f32, bias in f32.
        return jnp.dot(t_bf16, w_in[:, off:off + width],
                       preferred_element_type=jnp.float32) + vrow(bname, width)

    def proj_out(t_f32, off, bname):
        # attention output projection: (M, 256) head-blocked -> (M, 128) model layout.
        return jnp.dot(t_f32.astype(jnp.bfloat16), w_out[:, off:off + DP],
                       preferred_element_type=jnp.float32) + vrow(bname, DP)

    def ffn(t_f32, half, b1name, b2name):
        h = jnp.dot(t_f32.astype(jnp.bfloat16), w_ff1[:, half * DFF:(half + 1) * DFF],
                    preferred_element_type=jnp.float32) + vrow(b1name, DFF)
        h = jnp.maximum(h, 0.0).astype(jnp.bfloat16)
        return jnp.dot(h, w_ff2[:, half * DP:(half + 1) * DP],
                       preferred_element_type=jnp.float32) + vrow(b2name, DP)

    def layernorm(t, gname, bname):
        # statistics over the 66 real lanes only (padded lanes are exact zeros);
        # gamma/beta padding is zero so padded lanes of the output stay zero.
        mu = jnp.sum(t, axis=-1, keepdims=True) * inv_d
        tc = (t - mu) * ln_mask
        var = jnp.sum(tc * tc, axis=-1, keepdims=True) * inv_d
        return tc * lax.rsqrt(var + LN_EPS) * vrow(gname, DP) + vrow(bname, DP)

    def attend(q, k, v):
        # q/k/v: (bblk*seq, 256) f32 head-blocked; per-batch / per-head unrolled loop.
        # Row slices are multiples of 8 and lane slices multiples of 128, so every
        # slice selects whole vregs (no relayouts); the 1/sqrt(33) scale is already
        # folded into the Q weights.  Padded head lanes are zero on both sides, so
        # scores and values are exact.
        rows = []
        for b in range(bblk):
            r0 = b * seq
            heads = []
            for h in range(NHEAD):
                c0 = h * HP
                qh = q[r0:r0 + seq, c0:c0 + HP]
                kh = k[r0:r0 + seq, c0:c0 + HP]
                vh = v[r0:r0 + seq, c0:c0 + HP]
                s = lax.dot_general(qh, kh, (((1,), (1,)), ((), ())),
                                    preferred_element_type=jnp.float32)
                s = s - jnp.max(s, axis=-1, keepdims=True)
                p = jnp.exp(s)
                p = p * pl.reciprocal(jnp.sum(p, axis=-1, keepdims=True), approx=True)
                heads.append(jnp.dot(p, vh, preferred_element_type=jnp.float32))
            rows.append(jnp.concatenate(heads, axis=-1))      # full-vreg lane concat
        return jnp.concatenate(rows, axis=0)                  # (bblk*seq, 256)

    x = x_ref[...]                              # (bblk*seq, 128) f32 in_data (memory)
    xb = x.astype(jnp.bfloat16)                 # cast once; reused by enc QKV & dec CA-KV

    # ---- TransformerEncoderLayer (post-norm, eval: dropout = identity) ------
    qkv = proj_in(xb, OFF_ENC_QKV, QKV_W, "enc_qkv_b")
    sa = attend(qkv[:, :HH], qkv[:, HH:2 * HH], qkv[:, 2 * HH:])
    y = layernorm(x + proj_out(sa, OFF_ENC_OUT, "enc_out_b"), "enc_ln1_g", "enc_ln1_b")
    y = layernorm(y + ffn(y, 0, "enc_ff1_b", "enc_ff2_b"), "enc_ln2_g", "enc_ln2_b")

    # ---- TransformerDecoderLayer: tgt = encoder output, memory = in_data ----
    # (the torch forward explicitly calls TransformerDecoder(tgt=enc_out, memory=in_data))
    qkv = proj_in(y.astype(jnp.bfloat16), OFF_DEC_QKV, QKV_W, "dec_sa_qkv_b")
    sa = attend(qkv[:, :HH], qkv[:, HH:2 * HH], qkv[:, 2 * HH:])
    t = layernorm(y + proj_out(sa, OFF_DEC_SA_OUT, "dec_sa_out_b"),
                  "dec_ln1_g", "dec_ln1_b")

    q = proj_in(t.astype(jnp.bfloat16), OFF_CA_Q, HH, "dec_ca_q_b")
    kv = proj_in(xb, OFF_CA_KV, 2 * HH, "dec_ca_kv_b")
    ca = attend(q, kv[:, :HH], kv[:, HH:])
    t = layernorm(t + proj_out(ca, OFF_DEC_CA_OUT, "dec_ca_out_b"),
                  "dec_ln2_g", "dec_ln2_b")
    t = layernorm(t + ffn(t, 1, "dec_ff1_b", "dec_ff2_b"), "dec_ln3_g", "dec_ln3_b")

    # ---- AIWIN_ head: Linear(66, 37) + Dropout(eval) + Tanh -----------------
    # Lane-dense (M, 128) store; the wrapper slices [:, :, :37].
    o_ref[...] = jnp.tanh(proj_in(t.astype(jnp.bfloat16), OFF_HEAD, DP, "head_b"))


def transformer_forward(x_pad, tparams, *, bblk):
    """x_pad: (Bp, T, 128) f32 zero-padded in_data, Bp % bblk == 0.
    Returns (Bp, T, 128) f32 (first 37 lanes are the real head output)."""
    Bp, T, _ = x_pad.shape
    assert Bp % bblk == 0
    M = Bp * T
    mblk = bblk * T
    x2 = x_pad.reshape(M, DP)

    w_in, w_out = tparams["w_in"], tparams["w_out"]
    w_ff1, w_ff2, vecs = tparams["w_ff1"], tparams["w_ff2"], tparams["vecs"]

    # NOTE(v7x): with a larger bblk, single-buffer the constant weight slabs
    # (pipeline_mode=pl.Buffered(1)) and re-derive the block size against 64 MiB VMEM;
    # consider pltpu.CORE_PARALLEL to guarantee both TensorCores split the batch axis.
    out = pl.pallas_call(
        functools.partial(_transformer_kernel, bblk=bblk, seq=T),
        out_shape=jax.ShapeDtypeStruct((M, DP), jnp.float32),
        grid=(M // mblk,),
        in_specs=[
            pl.BlockSpec((mblk, DP), lambda i: (i, 0)),
            pl.BlockSpec(w_in.shape, lambda i: (0, 0)),
            pl.BlockSpec(w_out.shape, lambda i: (0, 0)),
            pl.BlockSpec(w_ff1.shape, lambda i: (0, 0)),
            pl.BlockSpec(w_ff2.shape, lambda i: (0, 0)),
            pl.BlockSpec(vecs.shape, lambda i: (0, 0)),
        ],
        out_specs=pl.BlockSpec((mblk, DP), lambda i: (i, 0)),
        compiler_params=pltpu.CompilerParams(
            dimension_semantics=("parallel",),
            vmem_limit_bytes=32 * 1024 * 1024),
    )(x2, w_in, w_out, w_ff1, w_ff2, vecs)
    return out.reshape(Bp, T, DP)


# ---------------------------------------------------------------------------
# WavEncoder: 4x Conv1d (+BatchNorm1d eval identity, LeakyReLU) via XLA convs.
# Per the perf review, the previous 4 Pallas launches + gather-based im2col were
# launch/latency bound; letting XLA lower/fuse the tiny conv stack is the sanctioned
# alternative to a hand-fused conv kernel.
# ---------------------------------------------------------------------------
def _conv1d(x_ncl, w_oik, b, stride, pad):
    y = lax.conv_general_dilated(
        x_ncl, w_oik, window_strides=(stride,), padding=[(pad, pad)],
        dimension_numbers=("NCH", "OIH", "NCH"))
    return y + b[None, :, None]


def wav_encoder(in_audio, p):
    # TODO(synk): WavEncoder is not defined in the provided spec; this keeps the
    # 4-conv AIWIN/trimodal variant used by the previous revision.  BatchNorm1d in
    # eval mode with default running stats is an identity; with a real checkpoint its
    # affine transform must be folded into the adjacent conv weights at pack time.
    x = in_audio[:, None, :]                                              # (B, 1, L)
    x = jax.nn.leaky_relu(_conv1d(x, p["c1_w"], p["c1_b"], 5, 5), LEAKY_SLOPE)
    x = jax.nn.leaky_relu(_conv1d(x, p["c2_w"], p["c2_b"], 5, 5), LEAKY_SLOPE)
    x = jax.nn.leaky_relu(_conv1d(x, p["c3_w"], p["c3_b"], 4, 2), LEAKY_SLOPE)
    x = _conv1d(x, p["c4_w"], p["c4_b"], 2, 1)
    return jnp.transpose(x, (0, 2, 1))                                    # (B, T, 64)


# ---------------------------------------------------------------------------
# PoseGenerator.forward (input_context == 'audio', eval mode)
# ---------------------------------------------------------------------------
def pose_generator_forward(params, pre_seq, in_text, in_audio, one_hot_embedding,
                           *, bblk=None):
    del pre_seq  # present in the torch signature, unused by the 'audio' branch
    audio_feat_seq = wav_encoder(in_audio, params["audio_encoder"])       # (B, T, 64)
    # TODO(synk): BertModel-based TextEncoderTCN has no Pallas equivalent and its
    # output is dead for input_context == 'audio'; only the sequence-length check
    # survives (BERT last_hidden_state length == in_text.shape[1]).
    assert audio_feat_seq.shape[1] == in_text.shape[1]

    B, T, _ = audio_feat_seq.shape
    in_data = jnp.concatenate(
        [audio_feat_seq, one_hot_embedding.astype(jnp.float32)], axis=2)  # (B, T, 66)

    if bblk is None:
        # Target >=256 flattened rows per grid step (review: M >= 128 on v5e,
        # >= 256 on v6e/v7x) without exceeding the batch.
        bblk = min(B, max(1, 256 // T))
    Bp = ((B + bblk - 1) // bblk) * bblk
    x_pad = jnp.pad(in_data, ((0, Bp - B), (0, 0), (0, DP - D_MODEL)))    # lane+batch pad

    out_pad = transformer_forward(x_pad, params["transformer"], bblk=bblk)
    output = out_pad[:B, :, :OUT_DIM]                                     # (B, T, 37)
    return output, None, None, None, None, None, None


# ---------------------------------------------------------------------------
# Parameter init (torch layouts) + one-time packing into kernel layouts
# ---------------------------------------------------------------------------
def _normal(key, shape, scale=0.05):
    return scale * jax.random.normal(key, shape, dtype=jnp.float32)


def _init_mha(key, d=D_MODEL):
    k1, k2 = jax.random.split(key)
    return {"in_proj_w": _normal(k1, (3 * d, d)),
            "in_proj_b": jnp.zeros((3 * d,), jnp.float32),
            "out_proj_w": _normal(k2, (d, d)),
            "out_proj_b": jnp.zeros((d,), jnp.float32)}


def init_torch_params(key):
    """Random parameters in the original torch layouts (drop-in point for real weights)."""
    ks = jax.random.split(key, 12)
    audio = {"c1_w": _normal(ks[0], (16, 1, 15)),  "c1_b": jnp.zeros((16,), jnp.float32),
             "c2_w": _normal(ks[1], (32, 16, 15)), "c2_b": jnp.zeros((32,), jnp.float32),
             "c3_w": _normal(ks[2], (64, 32, 8)),  "c3_b": jnp.zeros((64,), jnp.float32),
             "c4_w": _normal(ks[3], (64, 64, 4)),  "c4_b": jnp.zeros((64,), jnp.float32)}

    def ln():
        return jnp.ones((D_MODEL,), jnp.float32), jnp.zeros((D_MODEL,), jnp.float32)

    enc = {"self_attn": _init_mha(ks[4]),
           "linear1_w": _normal(ks[5], (DFF, D_MODEL)),
           "linear1_b": jnp.zeros((DFF,), jnp.float32),
           "linear2_w": _normal(ks[6], (D_MODEL, DFF)),
           "linear2_b": jnp.zeros((D_MODEL,), jnp.float32)}
    enc["norm1_g"], enc["norm1_b"] = ln()
    enc["norm2_g"], enc["norm2_b"] = ln()

    dec = {"self_attn": _init_mha(ks[7]),
           "cross_attn": _init_mha(ks[8]),
           "linear1_w": _normal(ks[9], (DFF, D_MODEL)),
           "linear1_b": jnp.zeros((DFF,), jnp.float32),
           "linear2_w": _normal(ks[10], (D_MODEL, DFF)),
           "linear2_b": jnp.zeros((D_MODEL,), jnp.float32)}
    for i in (1, 2, 3):
        dec[f"norm{i}_g"], dec[f"norm{i}_b"] = ln()

    head = {"w": _normal(ks[11], (OUT_DIM, D_MODEL)),
            "b": jnp.zeros((OUT_DIM,), jnp.float32)}
    return {"audio_encoder": audio, "enc": enc, "dec": dec, "head": head}


# ---- pack-time layout helpers (numpy, one-time host work) ------------------
def _pad_vec(v, n):
    out = np.zeros((n,), np.float32)
    v = np.asarray(v, np.float32).reshape(-1)
    out[:v.shape[0]] = v
    return out


def _proj_to_heads(w, scale=1.0):
    """torch (NH*HD, D) in-projection -> (128, 256) head-blocked, zero padded."""
    w = np.asarray(w, np.float32)
    out = np.zeros((DP, HH), np.float32)
    for h in range(NHEAD):
        out[:D_MODEL, h * HP:h * HP + HD] = w[h * HD:(h + 1) * HD, :].T * scale
    return out


def _bias_to_heads(b, scale=1.0):
    b = np.asarray(b, np.float32)
    out = np.zeros((HH,), np.float32)
    for h in range(NHEAD):
        out[h * HP:h * HP + HD] = b[h * HD:(h + 1) * HD] * scale
    return out


def _out_to_model(w):
    """torch out_proj.weight (D, NH*HD) -> (256, 128): head-blocked rows, model cols."""
    w = np.asarray(w, np.float32)
    out = np.zeros((HH, DP), np.float32)
    for h in range(NHEAD):
        out[h * HP:h * HP + HD, :D_MODEL] = w[:, h * HD:(h + 1) * HD].T
    return out


def pack_params(raw):
    enc, dec, head = raw["enc"], raw["dec"], raw["head"]
    sc = 1.0 / math.sqrt(HD)   # attention scale folded into Q weights/biases

    def split_in_proj(p):
        w = np.asarray(p["in_proj_w"], np.float32)
        b = np.asarray(p["in_proj_b"], np.float32)
        return (np.split(w, 3, axis=0), np.split(b, 3, axis=0),
                p["out_proj_w"], p["out_proj_b"])

    def pack_self(p):
        (wq, wk, wv), (bq, bk, bv), wo, bo = split_in_proj(p)
        w = np.concatenate([_proj_to_heads(wq, sc), _proj_to_heads(wk),
                            _proj_to_heads(wv)], axis=1)                  # (128, 768)
        b = np.concatenate([_bias_to_heads(bq, sc), _bias_to_heads(bk),
                            _bias_to_heads(bv)])                          # (768,)
        return w, b, _out_to_model(wo), _pad_vec(bo, DP)

    def pack_cross(p):
        (wq, wk, wv), (bq, bk, bv), wo, bo = split_in_proj(p)
        kv_w = np.concatenate([_proj_to_heads(wk), _proj_to_heads(wv)], axis=1)
        kv_b = np.concatenate([_bias_to_heads(bk), _bias_to_heads(bv)])
        return (_proj_to_heads(wq, sc), _bias_to_heads(bq, sc),
                kv_w, kv_b, _out_to_model(wo), _pad_vec(bo, DP))

    def pack_ffn(p):
        w1 = np.zeros((DP, DFF), np.float32)
        w1[:D_MODEL] = np.asarray(p["linear1_w"], np.float32).T
        w2 = np.zeros((DFF, DP), np.float32)
        w2[:, :D_MODEL] = np.asarray(p["linear2_w"], np.float32).T
        return (w1, np.asarray(p["linear1_b"], np.float32),
                w2, _pad_vec(p["linear2_b"], DP))

    e_qkv_w, e_qkv_b, e_out_w, e_out_b = pack_self(enc["self_attn"])
    d_qkv_w, d_qkv_b, d_out_w, d_out_b = pack_self(dec["self_attn"])
    cq_w, cq_b, ckv_w, ckv_b, cout_w, cout_b = pack_cross(dec["cross_attn"])
    e_ff1_w, e_ff1_b, e_ff2_w, e_ff2_b = pack_ffn(enc)
    d_ff1_w, d_ff1_b, d_ff2_w, d_ff2_b = pack_ffn(dec)

    head_w = np.zeros((DP, DP), np.float32)
    head_w[:D_MODEL, :OUT_DIM] = np.asarray(head["w"], np.float32).T
    head_b = _pad_vec(head["b"], DP)

    # Consolidated weight slabs (bf16, MXU inputs).
    w_in = np.concatenate([e_qkv_w, d_qkv_w, cq_w, ckv_w, head_w], axis=1)   # (128, 2432)
    w_out = np.concatenate([e_out_w, d_out_w, cout_w], axis=1)               # (256, 384)
    w_ff1 = np.concatenate([e_ff1_w, d_ff1_w], axis=1)                       # (128, 4096)
    w_ff2 = np.concatenate([e_ff2_w, d_ff2_w], axis=1)                       # (2048, 256)
    assert w_in.shape == (DP, W_IN_COLS)

    # Consolidated f32 bias / LayerNorm slab, one zero-padded 2048-lane row per vector.
    vec_src = {
        "enc_qkv_b": e_qkv_b, "enc_out_b": e_out_b,
        "enc_ln1_g": enc["norm1_g"], "enc_ln1_b": enc["norm1_b"],
        "enc_ff1_b": e_ff1_b, "enc_ff2_b": e_ff2_b,
        "enc_ln2_g": enc["norm2_g"], "enc_ln2_b": enc["norm2_b"],
        "dec_sa_qkv_b": d_qkv_b, "dec_sa_out_b": d_out_b,
        "dec_ln1_g": dec["norm1_g"], "dec_ln1_b": dec["norm1_b"],
        "dec_ca_q_b": cq_b, "dec_ca_kv_b": ckv_b, "dec_ca_out_b": cout_b,
        "dec_ln2_g": dec["norm2_g"], "dec_ln2_b": dec["norm2_b"],
        "dec_ff1_b": d_ff1_b, "dec_ff2_b": d_ff2_b,
        "dec_ln3_g": dec["norm3_g"], "dec_ln3_b": dec["norm3_b"],
        "head_b": head_b,
    }
    nrows = ((len(_VEC_ROWS) + 7) // 8) * 8
    vecs = np.zeros((nrows, VEC_COLS), np.float32)
    for name, row in VROW.items():
        v = np.asarray(vec_src[name], np.float32).reshape(-1)
        vecs[row, :v.shape[0]] = v

    tr = {"w_in": jnp.asarray(w_in, jnp.bfloat16),
          "w_out": jnp.asarray(w_out, jnp.bfloat16),
          "w_ff1": jnp.asarray(w_ff1, jnp.bfloat16),
          "w_ff2": jnp.asarray(w_ff2, jnp.bfloat16),
          "vecs": jnp.asarray(vecs, jnp.float32)}
    return {"audio_encoder": raw["audio_encoder"], "transformer": tr}


def init_params(key):
    return pack_params(init_torch_params(key))


# ---------------------------------------------------------------------------
if __name__ == "__main__":
    key = jax.random.PRNGKey(0)
    k_param, k_audio, k_text, k_pre, k_onehot = jax.random.split(key, 5)

    B, T, POSE_DIM, AUDIO_LEN = 2, 8, 36, 1600
    params = init_params(k_param)

    in_audio = jax.random.normal(k_audio, (B, AUDIO_LEN), dtype=jnp.float32)
    in_text = jax.random.randint(k_text, (B, T), 0, 100)
    pre_seq = jax.random.normal(k_pre, (B, T, POSE_DIM + 1), dtype=jnp.float32)
    one_hot_embedding = jax.nn.one_hot(
        jax.random.randint(k_onehot, (B, T), 0, 2), 2, dtype=jnp.float32)

    fwd = jax.jit(pose_generator_forward)
    out = fwd(params, pre_seq, in_text, in_audio, one_hot_embedding)[0]
    jax.block_until_ready(out)
    assert out.shape == (B, T, OUT_DIM) and out.dtype == jnp.float32
    print("KERNEL_OK")
</pallas_src>

<mosaic_0001>
module attributes {stable_mosaic.version = 11 : i64} {
  func.func @_transformer_kernel(%arg0: i32, %arg1: memref<16x128xf32, #tpu.memory_space<vmem>>, %arg2: memref<128x2432xbf16, #tpu.memory_space<vmem>>, %arg3: memref<256x384xbf16, #tpu.memory_space<vmem>>, %arg4: memref<128x4096xbf16, #tpu.memory_space<vmem>>, %arg5: memref<2048x256xbf16, #tpu.memory_space<vmem>>, %arg6: memref<24x2048xf32, #tpu.memory_space<vmem>>, %arg7: memref<16x128xf32, #tpu.memory_space<vmem>>) attributes {dimension_semantics = [#tpu.dimension_semantics<parallel>], iteration_bounds = array<i64: 1>, scalar_prefetch = 0 : i64, scratch_operands = 0 : i64, tpu.core_type = #tpu.core_type<tc>, window_params = [{transform_indices = @transform_0, window_bounds = array<i64: 16, 128>}, {pipeline_mode = #tpu.pipeline_mode<synchronous>, transform_indices = @transform_1, window_bounds = array<i64: 128, 2432>}, {pipeline_mode = #tpu.pipeline_mode<synchronous>, transform_indices = @transform_2, window_bounds = array<i64: 256, 384>}, {pipeline_mode = #tpu.pipeline_mode<synchronous>, transform_indices = @transform_3, window_bounds = array<i64: 128, 4096>}, {pipeline_mode = #tpu.pipeline_mode<synchronous>, transform_indices = @transform_4, window_bounds = array<i64: 2048, 256>}, {pipeline_mode = #tpu.pipeline_mode<synchronous>, transform_indices = @transform_5, window_bounds = array<i64: 24, 2048>}, {transform_indices = @transform_6, window_bounds = array<i64: 16, 128>}]} {
    %0 = tpu.iota {dimensions = array<i32: 1>} : vector<1x128xi32>
    %c66_i32 = arith.constant 66 : i32
    %1 = vector.broadcast %c66_i32 : i32 to vector<1x128xi32>
    %2 = arith.cmpi slt, %0, %1 : vector<1x128xi32>
    %3 = arith.extui %2 : vector<1x128xi1> to vector<1x128xi32>
    %4 = arith.sitofp %3 : vector<1x128xi32> to vector<1x128xf32>
    %c0 = arith.constant 0 : index
    %c0_0 = arith.constant 0 : index
    %5 = vector.load %arg1[%c0, %c0_0] : memref<16x128xf32, #tpu.memory_space<vmem>>, vector<16x128xf32>
    %6 = arith.truncf %5 : vector<16x128xf32> to vector<16x128xbf16>
    %c0_1 = arith.constant 0 : index
    %c0_2 = arith.constant 0 : index
    %7 = vector.load %arg2[%c0_1, %c0_2] : memref<128x2432xbf16, #tpu.memory_space<vmem>>, vector<128x768xbf16>
    %cst = arith.constant dense<0.000000e+00> : vector<16x768xf32>
    %8 = tpu.matmul %6, %7, %cst {dimension_numbers = #tpu.dot_dimension_numbers<[1], [0], [0], [1], [0, 0, 1, 1], [], []>} : vector<16x128xbf16>, vector<128x768xbf16>, vector<16x768xf32> -> vector<16x768xf32>
    %c0_3 = arith.constant 0 : index
    %c0_4 = arith.constant 0 : index
    %9 = vector.load %arg6[%c0_3, %c0_4] : memref<24x2048xf32, #tpu.memory_space<vmem>>, vector<1x768xf32>
    %10 = vector.broadcast %9 : vector<1x768xf32> to vector<16x768xf32>
    %11 = arith.addf %8, %10 : vector<16x768xf32>
    %12 = vector.extract_strided_slice %11 {offsets = [0, 0], sizes = [16, 256], strides = [1, 1]} : vector<16x768xf32> to vector<16x256xf32>
    %13 = vector.extract_strided_slice %11 {offsets = [0, 256], sizes = [16, 256], strides = [1, 1]} : vector<16x768xf32> to vector<16x256xf32>
    %14 = vector.extract_strided_slice %11 {offsets = [0, 512], sizes = [16, 256], strides = [1, 1]} : vector<16x768xf32> to vector<16x256xf32>
    %15 = vector.extract_strided_slice %12 {offsets = [0, 0], sizes = [8, 128], strides = [1, 1]} : vector<16x256xf32> to vector<8x128xf32>
    %16 = vector.extract_strided_slice %13 {offsets = [0, 0], sizes = [8, 128], strides = [1, 1]} : vector<16x256xf32> to vector<8x128xf32>
    %17 = vector.extract_strided_slice %14 {offsets = [0, 0], sizes = [8, 128], strides = [1, 1]} : vector<16x256xf32> to vector<8x128xf32>
    %cst_5 = arith.constant dense<0.000000e+00> : vector<8x8xf32>
    %18 = tpu.matmul %15, %16, %cst_5 {dimension_numbers = #tpu.dot_dimension_numbers<[1], [1], [0], [0], [0, 0, 1, 0], [], []>} : vector<8x128xf32>, vector<8x128xf32>, vector<8x8xf32> -> vector<8x8xf32>
    %cst_6 = arith.constant dense<0xFF800000> : vector<8xf32>
    %19 = vector.multi_reduction <maximumf>, %18, %cst_6 [1] : vector<8x8xf32> to vector<8xf32>
    %20 = vector.shape_cast %19 : vector<8xf32> to vector<8x1xf32>
    %21 = vector.broadcast %20 : vector<8x1xf32> to vector<8x8xf32>
    %22 = arith.subf %18, %21 : vector<8x8xf32>
    %23 = math.exp %22 : vector<8x8xf32>
    %cst_7 = arith.constant dense<0.000000e+00> : vector<8xf32>
    %24 = vector.multi_reduction <add>, %23, %cst_7 [1] : vector<8x8xf32> to vector<8xf32>
    %25 = vector.shape_cast %24 : vector<8xf32> to vector<8x1xf32>
    %26 = tpu.reciprocal %25 {approx = true} : vector<8x1xf32> -> vector<8x1xf32>
    %27 = vector.broadcast %26 : vector<8x1xf32> to vector<8x8xf32>
    %28 = arith.mulf %23, %27 : vector<8x8xf32>
    %cst_8 = arith.constant dense<0.000000e+00> : vector<8x128xf32>
    %29 = tpu.matmul %28, %17, %cst_8 {dimension_numbers = #tpu.dot_dimension_numbers<[1], [0], [0], [1], [0, 0, 1, 1], [], []>} : vector<8x8xf32>, vector<8x128xf32>, vector<8x128xf32> -> vector<8x128xf32>
    %30 = vector.extract_strided_slice %12 {offsets = [0, 128], sizes = [8, 128], strides = [1, 1]} : vector<16x256xf32> to vector<8x128xf32>
    %31 = vector.extract_strided_slice %13 {offsets = [0, 128], sizes = [8, 128], strides = [1, 1]} : vector<16x256xf32> to vector<8x128xf32>
    %32 = vector.extract_strided_slice %14 {offsets = [0, 128], sizes = [8, 128], strides = [1, 1]} : vector<16x256xf32> to vector<8x128xf32>
    %cst_9 = arith.constant dense<0.000000e+00> : vector<8x8xf32>
    %33 = tpu.matmul %30, %31, %cst_9 {dimension_numbers = #tpu.dot_dimension_numbers<[1], [1], [0], [0], [0, 0, 1, 0], [], []>} : vector<8x128xf32>, vector<8x128xf32>, vector<8x8xf32> -> vector<8x8xf32>
    %cst_10 = arith.constant dense<0xFF800000> : vector<8xf32>
    %34 = vector.multi_reduction <maximumf>, %33, %cst_10 [1] : vector<8x8xf32> to vector<8xf32>
    %35 = vector.shape_cast %34 : vector<8xf32> to vector<8x1xf32>
    %36 = vector.broadcast %35 : vector<8x1xf32> to vector<8x8xf32>
    %37 = arith.subf %33, %36 : vector<8x8xf32>
    %38 = math.exp %37 : vector<8x8xf32>
    %cst_11 = arith.constant dense<0.000000e+00> : vector<8xf32>
    %39 = vector.multi_reduction <add>, %38, %cst_11 [1] : vector<8x8xf32> to vector<8xf32>
    %40 = vector.shape_cast %39 : vector<8xf32> to vector<8x1xf32>
    %41 = tpu.reciprocal %40 {approx = true} : vector<8x1xf32> -> vector<8x1xf32>
    %42 = vector.broadcast %41 : vector<8x1xf32> to vector<8x8xf32>
    %43 = arith.mulf %38, %42 : vector<8x8xf32>
    %cst_12 = arith.constant dense<0.000000e+00> : vector<8x128xf32>
    %44 = tpu.matmul %43, %32, %cst_12 {dimension_numbers = #tpu.dot_dimension_numbers<[1], [0], [0], [1], [0, 0, 1, 1], [], []>} : vector<8x8xf32>, vector<8x128xf32>, vector<8x128xf32> -> vector<8x128xf32>
    %45 = tpu.concatenate %29, %44 in 1 : vector<8x128xf32>, vector<8x128xf32> -> vector<8x256xf32>
    %46 = vector.extract_strided_slice %12 {offsets = [8, 0], sizes = [8, 128], strides = [1, 1]} : vector<16x256xf32> to vector<8x128xf32>
    %47 = vector.extract_strided_slice %13 {offsets = [8, 0], sizes = [8, 128], strides = [1, 1]} : vector<16x256xf32> to vector<8x128xf32>
    %48 = vector.extract_strided_slice %14 {offsets = [8, 0], sizes = [8, 128], strides = [1, 1]} : vector<16x256xf32> to vector<8x128xf32>
    %cst_13 = arith.constant dense<0.000000e+00> : vector<8x8xf32>
    %49 = tpu.matmul %46, %47, %cst_13 {dimension_numbers = #tpu.dot_dimension_numbers<[1], [1], [0], [0], [0, 0, 1, 0], [], []>} : vector<8x128xf32>, vector<8x128xf32>, vector<8x8xf32> -> vector<8x8xf32>
    %cst_14 = arith.constant dense<0xFF800000> : vector<8xf32>
    %50 = vector.multi_reduction <maximumf>, %49, %cst_14 [1] : vector<8x8xf32> to vector<8xf32>
    %51 = vector.shape_cast %50 : vector<8xf32> to vector<8x1xf32>
    %52 = vector.broadcast %51 : vector<8x1xf32> to vector<8x8xf32>
    %53 = arith.subf %49, %52 : vector<8x8xf32>
    %54 = math.exp %53 : vector<8x8xf32>
    %cst_15 = arith.constant dense<0.000000e+00> : vector<8xf32>
    %55 = vector.multi_reduction <add>, %54, %cst_15 [1] : vector<8x8xf32> to vector<8xf32>
    %56 = vector.shape_cast %55 : vector<8xf32> to vector<8x1xf32>
    %57 = tpu.reciprocal %56 {approx = true} : vector<8x1xf32> -> vector<8x1xf32>
    %58 = vector.broadcast %57 : vector<8x1xf32> to vector<8x8xf32>
    %59 = arith.mulf %54, %58 : vector<8x8xf32>
    %cst_16 = arith.constant dense<0.000000e+00> : vector<8x128xf32>
    %60 = tpu.matmul %59, %48, %cst_16 {dimension_numbers = #tpu.dot_dimension_numbers<[1], [0], [0], [1], [0, 0, 1, 1], [], []>} : vector<8x8xf32>, vector<8x128xf32>, vector<8x128xf32> -> vector<8x128xf32>
    %61 = vector.extract_strided_slice %12 {offsets = [8, 128], sizes = [8, 128], strides = [1, 1]} : vector<16x256xf32> to vector<8x128xf32>
    %62 = vector.extract_strided_slice %13 {offsets = [8, 128], sizes = [8, 128], strides = [1, 1]} : vector<16x256xf32> to vector<8x128xf32>
    %63 = vector.extract_strided_slice %14 {offsets = [8, 128], sizes = [8, 128], strides = [1, 1]} : vector<16x256xf32> to vector<8x128xf32>
    %cst_17 = arith.constant dense<0.000000e+00> : vector<8x8xf32>
    %64 = tpu.matmul %61, %62, %cst_17 {dimension_numbers = #tpu.dot_dimension_numbers<[1], [1], [0], [0], [0, 0, 1, 0], [], []>} : vector<8x128xf32>, vector<8x128xf32>, vector<8x8xf32> -> vector<8x8xf32>
    %cst_18 = arith.constant dense<0xFF800000> : vector<8xf32>
    %65 = vector.multi_reduction <maximumf>, %64, %cst_18 [1] : vector<8x8xf32> to vector<8xf32>
    %66 = vector.shape_cast %65 : vector<8xf32> to vector<8x1xf32>
    %67 = vector.broadcast %66 : vector<8x1xf32> to vector<8x8xf32>
    %68 = arith.subf %64, %67 : vector<8x8xf32>
    %69 = math.exp %68 : vector<8x8xf32>
    %cst_19 = arith.constant dense<0.000000e+00> : vector<8xf32>
    %70 = vector.multi_reduction <add>, %69, %cst_19 [1] : vector<8x8xf32> to vector<8xf32>
    %71 = vector.shape_cast %70 : vector<8xf32> to vector<8x1xf32>
    %72 = tpu.reciprocal %71 {approx = true} : vector<8x1xf32> -> vector<8x1xf32>
    %73 = vector.broadcast %72 : vector<8x1xf32> to vector<8x8xf32>
    %74 = arith.mulf %69, %73 : vector<8x8xf32>
    %cst_20 = arith.constant dense<0.000000e+00> : vector<8x128xf32>
    %75 = tpu.matmul %74, %63, %cst_20 {dimension_numbers = #tpu.dot_dimension_numbers<[1], [0], [0], [1], [0, 0, 1, 1], [], []>} : vector<8x8xf32>, vector<8x128xf32>, vector<8x128xf32> -> vector<8x128xf32>
    %76 = tpu.concatenate %60, %75 in 1 : vector<8x128xf32>, vector<8x128xf32> -> vector<8x256xf32>
    %77 = tpu.concatenate %45, %76 in 0 : vector<8x256xf32>, vector<8x256xf32> -> vector<16x256xf32>
    %78 = arith.truncf %77 : vector<16x256xf32> to vector<16x256xbf16>
    %c0_21 = arith.constant 0 : index
    %c0_22 = arith.constant 0 : index
    %79 = vector.load %arg3[%c0_21, %c0_22] : memref<256x384xbf16, #tpu.memory_space<vmem>>, vector<256x128xbf16>
    %cst_23 = arith.constant dense<0.000000e+00> : vector<16x128xf32>
    %80 = tpu.matmul %78, %79, %cst_23 {dimension_numbers = #tpu.dot_dimension_numbers<[1], [0], [0], [1], [0, 0, 1, 1], [], []>} : vector<16x256xbf16>, vector<256x128xbf16>, vector<16x128xf32> -> vector<16x128xf32>
    %c1 = arith.constant 1 : index
    %c0_24 = arith.constant 0 : index
    %81 = vector.load %arg6[%c1, %c0_24] : memref<24x2048xf32, #tpu.memory_space<vmem>>, vector<1x128xf32>
    %82 = vector.broadcast %81 : vector<1x128xf32> to vector<16x128xf32>
    %83 = arith.addf %80, %82 : vector<16x128xf32>
    %84 = arith.addf %5, %83 : vector<16x128xf32>
    %cst_25 = arith.constant dense<0.000000e+00> : vector<16xf32>
    %85 = vector.multi_reduction <add>, %84, %cst_25 [1] : vector<16x128xf32> to vector<16xf32>
    %86 = vector.shape_cast %85 : vector<16xf32> to vector<16x1xf32>
    %cst_26 = arith.constant 0.0151515156 : f32
    %87 = vector.broadcast %cst_26 : f32 to vector<16x1xf32>
    %88 = arith.mulf %86, %87 : vector<16x1xf32>
    %89 = vector.broadcast %88 : vector<16x1xf32> to vector<16x128xf32>
    %90 = arith.subf %84, %89 : vector<16x128xf32>
    %91 = vector.broadcast %4 : vector<1x128xf32> to vector<16x128xf32>
    %92 = arith.mulf %90, %91 : vector<16x128xf32>
    %93 = arith.mulf %92, %92 : vector<16x128xf32>
    %cst_27 = arith.constant dense<0.000000e+00> : vector<16xf32>
    %94 = vector.multi_reduction <add>, %93, %cst_27 [1] : vector<16x128xf32> to vector<16xf32>
    %95 = vector.shape_cast %94 : vector<16xf32> to vector<16x1xf32>
    %cst_28 = arith.constant 0.0151515156 : f32
    %96 = vector.broadcast %cst_28 : f32 to vector<16x1xf32>
    %97 = arith.mulf %95, %96 : vector<16x1xf32>
    %cst_29 = arith.constant 9.99999974E-6 : f32
    %98 = vector.broadcast %cst_29 : f32 to vector<16x1xf32>
    %99 = arith.addf %97, %98 : vector<16x1xf32>
    %100 = math.rsqrt %99 : vector<16x1xf32>
    %101 = vector.broadcast %100 : vector<16x1xf32> to vector<16x128xf32>
    %102 = arith.mulf %92, %101 : vector<16x128xf32>
    %c2 = arith.constant 2 : index
    %c0_30 = arith.constant 0 : index
    %103 = vector.load %arg6[%c2, %c0_30] : memref<24x2048xf32, #tpu.memory_space<vmem>>, vector<1x128xf32>
    %104 = vector.broadcast %103 : vector<1x128xf32> to vector<16x128xf32>
    %105 = arith.mulf %102, %104 : vector<16x128xf32>
    %c3 = arith.constant 3 : index
    %c0_31 = arith.constant 0 : index
    %106 = vector.load %arg6[%c3, %c0_31] : memref<24x2048xf32, #tpu.memory_space<vmem>>, vector<1x128xf32>
    %107 = vector.broadcast %106 : vector<1x128xf32> to vector<16x128xf32>
    %108 = arith.addf %105, %107 : vector<16x128xf32>
    %109 = arith.truncf %108 : vector<16x128xf32> to vector<16x128xbf16>
    %c0_32 = arith.constant 0 : index
    %c0_33 = arith.constant 0 : index
    %110 = vector.load %arg4[%c0_32, %c0_33] : memref<128x4096xbf16, #tpu.memory_space<vmem>>, vector<128x2048xbf16>
    %cst_34 = arith.constant dense<0.000000e+00> : vector<16x2048xf32>
    %111 = tpu.matmul %109, %110, %cst_34 {dimension_numbers = #tpu.dot_dimension_numbers<[1], [0], [0], [1], [0, 0, 1, 1], [], []>} : vector<16x128xbf16>, vector<128x2048xbf16>, vector<16x2048xf32> -> vector<16x2048xf32>
    %c4 = arith.constant 4 : index
    %c0_35 = arith.constant 0 : index
    %112 = vector.load %arg6[%c4, %c0_35] : memref<24x2048xf32, #tpu.memory_space<vmem>>, vector<1x2048xf32>
    %113 = vector.broadcast %112 : vector<1x2048xf32> to vector<16x2048xf32>
    %114 = arith.addf %111, %113 : vector<16x2048xf32>
    %cst_36 = arith.constant 0.000000e+00 : f32
    %115 = vector.broadcast %cst_36 : f32 to vector<16x2048xf32>
    %116 = arith.maximumf %114, %115 : vector<16x2048xf32>
    %117 = arith.truncf %116 : vector<16x2048xf32> to vector<16x2048xbf16>
    %c0_37 = arith.constant 0 : index
    %c0_38 = arith.constant 0 : index
    %118 = vector.load %arg5[%c0_37, %c0_38] : memref<2048x256xbf16, #tpu.memory_space<vmem>>, vector<2048x128xbf16>
    %cst_39 = arith.constant dense<0.000000e+00> : vector<16x128xf32>
    %119 = tpu.matmul %117, %118, %cst_39 {dimension_numbers = #tpu.dot_dimension_numbers<[1], [0], [0], [1], [0, 0, 1, 1], [], []>} : vector<16x2048xbf16>, vector<2048x128xbf16>, vector<16x128xf32> -> vector<16x128xf32>
    %c5 = arith.constant 5 : index
    %c0_40 = arith.constant 0 : index
    %120 = vector.load %arg6[%c5, %c0_40] : memref<24x2048xf32, #tpu.memory_space<vmem>>, vector<1x128xf32>
    %121 = vector.broadcast %120 : vector<1x128xf32> to vector<16x128xf32>
    %122 = arith.addf %119, %121 : vector<16x128xf32>
    %123 = arith.addf %108, %122 : vector<16x128xf32>
    %cst_41 = arith.constant dense<0.000000e+00> : vector<16xf32>
    %124 = vector.multi_reduction <add>, %123, %cst_41 [1] : vector<16x128xf32> to vector<16xf32>
    %125 = vector.shape_cast %124 : vector<16xf32> to vector<16x1xf32>
    %cst_42 = arith.constant 0.0151515156 : f32
    %126 = vector.broadcast %cst_42 : f32 to vector<16x1xf32>
    %127 = arith.mulf %125, %126 : vector<16x1xf32>
    %128 = vector.broadcast %127 : vector<16x1xf32> to vector<16x128xf32>
    %129 = arith.subf %123, %128 : vector<16x128xf32>
    %130 = vector.broadcast %4 : vector<1x128xf32> to vector<16x128xf32>
    %131 = arith.mulf %129, %130 : vector<16x128xf32>
    %132 = arith.mulf %131, %131 : vector<16x128xf32>
    %cst_43 = arith.constant dense<0.000000e+00> : vector<16xf32>
    %133 = vector.multi_reduction <add>, %132, %cst_43 [1] : vector<16x128xf32> to vector<16xf32>
    %134 = vector.shape_cast %133 : vector<16xf32> to vector<16x1xf32>
    %cst_44 = arith.constant 0.0151515156 : f32
    %135 = vector.broadcast %cst_44 : f32 to vector<16x1xf32>
    %136 = arith.mulf %134, %135 : vector<16x1xf32>
    %cst_45 = arith.constant 9.99999974E-6 : f32
    %137 = vector.broadcast %cst_45 : f32 to vector<16x1xf32>
    %138 = arith.addf %136, %137 : vector<16x1xf32>
    %139 = math.rsqrt %138 : vector<16x1xf32>
    %140 = vector.broadcast %139 : vector<16x1xf32> to vector<16x128xf32>
    %141 = arith.mulf %131, %140 : vector<16x128xf32>
    %c6 = arith.constant 6 : index
    %c0_46 = arith.constant 0 : index
    %142 = vector.load %arg6[%c6, %c0_46] : memref<24x2048xf32, #tpu.memory_space<vmem>>, vector<1x128xf32>
    %143 = vector.broadcast %142 : vector<1x128xf32> to vector<16x128xf32>
    %144 = arith.mulf %141, %143 : vector<16x128xf32>
    %c7 = arith.constant 7 : index
    %c0_47 = arith.constant 0 : index
    %145 = vector.load %arg6[%c7, %c0_47] : memref<24x2048xf32, #tpu.memory_space<vmem>>, vector<1x128xf32>
    %146 = vector.broadcast %145 : vector<1x128xf32> to vector<16x128xf32>
    %147 = arith.addf %144, %146 : vector<16x128xf32>
    %148 = arith.truncf %147 : vector<16x128xf32> to vector<16x128xbf16>
    %c0_48 = arith.constant 0 : index
    %c768 = arith.constant 768 : index
    %149 = vector.load %arg2[%c0_48, %c768] : memref<128x2432xbf16, #tpu.memory_space<vmem>>, vector<128x768xbf16>
    %cst_49 = arith.constant dense<0.000000e+00> : vector<16x768xf32>
    %150 = tpu.matmul %148, %149, %cst_49 {dimension_numbers = #tpu.dot_dimension_numbers<[1], [0], [0], [1], [0, 0, 1, 1], [], []>} : vector<16x128xbf16>, vector<128x768xbf16>, vector<16x768xf32> -> vector<16x768xf32>
    %c8 = arith.constant 8 : index
    %c0_50 = arith.constant 0 : index
    %151 = vector.load %arg6[%c8, %c0_50] : memref<24x2048xf32, #tpu.memory_space<vmem>>, vector<1x768xf32>
    %152 = vector.broadcast %151 : vector<1x768xf32> to vector<16x768xf32>
    %153 = arith.addf %150, %152 : vector<16x768xf32>
    %154 = vector.extract_strided_slice %153 {offsets = [0, 0], sizes = [16, 256], strides = [1, 1]} : vector<16x768xf32> to vector<16x256xf32>
    %155 = vector.extract_strided_slice %153 {offsets = [0, 256], sizes = [16, 256], strides = [1, 1]} : vector<16x768xf32> to vector<16x256xf32>
    %156 = vector.extract_strided_slice %153 {offsets = [0, 512], sizes = [16, 256], strides = [1, 1]} : vector<16x768xf32> to vector<16x256xf32>
    %157 = vector.extract_strided_slice %154 {offsets = [0, 0], sizes = [8, 128], strides = [1, 1]} : vector<16x256xf32> to vector<8x128xf32>
    %158 = vector.extract_strided_slice %155 {offsets = [0, 0], sizes = [8, 128], strides = [1, 1]} : vector<16x256xf32> to vector<8x128xf32>
    %159 = vector.extract_strided_slice %156 {offsets = [0, 0], sizes = [8, 128], strides = [1, 1]} : vector<16x256xf32> to vector<8x128xf32>
    %cst_51 = arith.constant dense<0.000000e+00> : vector<8x8xf32>
    %160 = tpu.matmul %157, %158, %cst_51 {dimension_numbers = #tpu.dot_dimension_numbers<[1], [1], [0], [0], [0, 0, 1, 0], [], []>} : vector<8x128xf32>, vector<8x128xf32>, vector<8x8xf32> -> vector<8x8xf32>
    %cst_52 = arith.constant dense<0xFF800000> : vector<8xf32>
    %161 = vector.multi_reduction <maximumf>, %160, %cst_52 [1] : vector<8x8xf32> to vector<8xf32>
    %162 = vector.shape_cast %161 : vector<8xf32> to vector<8x1xf32>
    %163 = vector.broadcast %162 : vector<8x1xf32> to vector<8x8xf32>
    %164 = arith.subf %160, %163 : vector<8x8xf32>
    %165 = math.exp %164 : vector<8x8xf32>
    %cst_53 = arith.constant dense<0.000000e+00> : vector<8xf32>
    %166 = vector.multi_reduction <add>, %165, %cst_53 [1] : vector<8x8xf32> to vector<8xf32>
    %167 = vector.shape_cast %166 : vector<8xf32> to vector<8x1xf32>
    %168 = tpu.reciprocal %167 {approx = true} : vector<8x1xf32> -> vector<8x1xf32>
    %169 = vector.broadcast %168 : vector<8x1xf32> to vector<8x8xf32>
    %170 = arith.mulf %165, %169 : vector<8x8xf32>
    %cst_54 = arith.constant dense<0.000000e+00> : vector<8x128xf32>
    %171 = tpu.matmul %170, %159, %cst_54 {dimension_numbers = #tpu.dot_dimension_numbers<[1], [0], [0], [1], [0, 0, 1, 1], [], []>} : vector<8x8xf32>, vector<8x128xf32>, vector<8x128xf32> -> vector<8x128xf32>
    %172 = vector.extract_strided_slice %154 {offsets = [0, 128], sizes = [8, 128], strides = [1, 1]} : vector<16x256xf32> to vector<8x128xf32>
    %173 = vector.extract_strided_slice %155 {offsets = [0, 128], sizes = [8, 128], strides = [1, 1]} : vector<16x256xf32> to vector<8x128xf32>
    %174 = vector.extract_strided_slice %156 {offsets = [0, 128], sizes = [8, 128], strides = [1, 1]} : vector<16x256xf32> to vector<8x128xf32>
    %cst_55 = arith.constant dense<0.000000e+00> : vector<8x8xf32>
    %175 = tpu.matmul %172, %173, %cst_55 {dimension_numbers = #tpu.dot_dimension_numbers<[1], [1], [0], [0], [0, 0, 1, 0], [], []>} : vector<8x128xf32>, vector<8x128xf32>, vector<8x8xf32> -> vector<8x8xf32>
    %cst_56 = arith.constant dense<0xFF800000> : vector<8xf32>
    %176 = vector.multi_reduction <maximumf>, %175, %cst_56 [1] : vector<8x8xf32> to vector<8xf32>
    %177 = vector.shape_cast %176 : vector<8xf32> to vector<8x1xf32>
    %178 = vector.broadcast %177 : vector<8x1xf32> to vector<8x8xf32>
    %179 = arith.subf %175, %178 : vector<8x8xf32>
    %180 = math.exp %179 : vector<8x8xf32>
    %cst_57 = arith.constant dense<0.000000e+00> : vector<8xf32>
    %181 = vector.multi_reduction <add>, %180, %cst_57 [1] : vector<8x8xf32> to vector<8xf32>
    %182 = vector.shape_cast %181 : vector<8xf32> to vector<8x1xf32>
    %183 = tpu.reciprocal %182 {approx = true} : vector<8x1xf32> -> vector<8x1xf32>
    %184 = vector.broadcast %183 : vector<8x1xf32> to vector<8x8xf32>
    %185 = arith.mulf %180, %184 : vector<8x8xf32>
    %cst_58 = arith.constant dense<0.000000e+00> : vector<8x128xf32>
    %186 = tpu.matmul %185, %174, %cst_58 {dimension_numbers = #tpu.dot_dimension_numbers<[1], [0], [0], [1], [0, 0, 1, 1], [], []>} : vector<8x8xf32>, vector<8x128xf32>, vector<8x128xf32> -> vector<8x128xf32>
    %187 = tpu.concatenate %171, %186 in 1 : vector<8x128xf32>, vector<8x128xf32> -> vector<8x256xf32>
    %188 = vector.extract_strided_slice %154 {offsets = [8, 0], sizes = [8, 128], strides = [1, 1]} : vector<16x256xf32> to vector<8x128xf32>
    %189 = vector.extract_strided_slice %155 {offsets = [8, 0], sizes = [8, 128], strides = [1, 1]} : vector<16x256xf32> to vector<8x128xf32>
    %190 = vector.extract_strided_slice %156 {offsets = [8, 0], sizes = [8, 128], strides = [1, 1]} : vector<16x256xf32> to vector<8x128xf32>
    %cst_59 = arith.constant dense<0.000000e+00> : vector<8x8xf32>
    %191 = tpu.matmul %188, %189, %cst_59 {dimension_numbers = #tpu.dot_dimension_numbers<[1], [1], [0], [0], [0, 0, 1, 0], [], []>} : vector<8x128xf32>, vector<8x128xf32>, vector<8x8xf32> -> vector<8x8xf32>
    %cst_60 = arith.constant dense<0xFF800000> : vector<8xf32>
    %192 = vector.multi_reduction <maximumf>, %191, %cst_60 [1] : vector<8x8xf32> to vector<8xf32>
    %193 = vector.shape_cast %192 : vector<8xf32> to vector<8x1xf32>
    %194 = vector.broadcast %193 : vector<8x1xf32> to vector<8x8xf32>
    %195 = arith.subf %191, %194 : vector<8x8xf32>
    %196 = math.exp %195 : vector<8x8xf32>
    %cst_61 = arith.constant dense<0.000000e+00> : vector<8xf32>
    %197 = vector.multi_reduction <add>, %196, %cst_61 [1] : vector<8x8xf32> to vector<8xf32>
    %198 = vector.shape_cast %197 : vector<8xf32> to vector<8x1xf32>
    %199 = tpu.reciprocal %198 {approx = true} : vector<8x1xf32> -> vector<8x1xf32>
    %200 = vector.broadcast %199 : vector<8x1xf32> to vector<8x8xf32>
    %201 = arith.mulf %196, %200 : vector<8x8xf32>
    %cst_62 = arith.constant dense<0.000000e+00> : vector<8x128xf32>
    %202 = tpu.matmul %201, %190, %cst_62 {dimension_numbers = #tpu.dot_dimension_numbers<[1], [0], [0], [1], [0, 0, 1, 1], [], []>} : vector<8x8xf32>, vector<8x128xf32>, vector<8x128xf32> -> vector<8x128xf32>
    %203 = vector.extract_strided_slice %154 {offsets = [8, 128], sizes = [8, 128], strides = [1, 1]} : vector<16x256xf32> to vector<8x128xf32>
    %204 = vector.extract_strided_slice %155 {offsets = [8, 128], sizes = [8, 128], strides = [1, 1]} : vector<16x256xf32> to vector<8x128xf32>
    %205 = vector.extract_strided_slice %156 {offsets = [8, 128], sizes = [8, 128], strides = [1, 1]} : vector<16x256xf32> to vector<8x128xf32>
    %cst_63 = arith.constant dense<0.000000e+00> : vector<8x8xf32>
    %206 = tpu.matmul %203, %204, %cst_63 {dimension_numbers = #tpu.dot_dimension_numbers<[1], [1], [0], [0], [0, 0, 1, 0], [], []>} : vector<8x128xf32>, vector<8x128xf32>, vector<8x8xf32> -> vector<8x8xf32>
    %cst_64 = arith.constant dense<0xFF800000> : vector<8xf32>
    %207 = vector.multi_reduction <maximumf>, %206, %cst_64 [1] : vector<8x8xf32> to vector<8xf32>
    %208 = vector.shape_cast %207 : vector<8xf32> to vector<8x1xf32>
    %209 = vector.broadcast %208 : vector<8x1xf32> to vector<8x8xf32>
    %210 = arith.subf %206, %209 : vector<8x8xf32>
    %211 = math.exp %210 : vector<8x8xf32>
    %cst_65 = arith.constant dense<0.000000e+00> : vector<8xf32>
    %212 = vector.multi_reduction <add>, %211, %cst_65 [1] : vector<8x8xf32> to vector<8xf32>
    %213 = vector.shape_cast %212 : vector<8xf32> to vector<8x1xf32>
    %214 = tpu.reciprocal %213 {approx = true} : vector<8x1xf32> -> vector<8x1xf32>
    %215 = vector.broadcast %214 : vector<8x1xf32> to vector<8x8xf32>
    %216 = arith.mulf %211, %215 : vector<8x8xf32>
    %cst_66 = arith.constant dense<0.000000e+00> : vector<8x128xf32>
    %217 = tpu.matmul %216, %205, %cst_66 {dimension_numbers = #tpu.dot_dimension_numbers<[1], [0], [0], [1], [0, 0, 1, 1], [], []>} : vector<8x8xf32>, vector<8x128xf32>, vector<8x128xf32> -> vector<8x128xf32>
    %218 = tpu.concatenate %202, %217 in 1 : vector<8x128xf32>, vector<8x128xf32> -> vector<8x256xf32>
    %219 = tpu.concatenate %187, %218 in 0 : vector<8x256xf32>, vector<8x256xf32> -> vector<16x256xf32>
    %220 = arith.truncf %219 : vector<16x256xf32> to vector<16x256xbf16>
    %c0_67 = arith.constant 0 : index
    %c128 = arith.constant 128 : index
    %221 = vector.load %arg3[%c0_67, %c128] : memref<256x384xbf16, #tpu.memory_space<vmem>>, vector<256x128xbf16>
    %cst_68 = arith.constant dense<0.000000e+00> : vector<16x128xf32>
    %222 = tpu.matmul %220, %221, %cst_68 {dimension_numbers = #tpu.dot_dimension_numbers<[1], [0], [0], [1], [0, 0, 1, 1], [], []>} : vector<16x256xbf16>, vector<256x128xbf16>, vector<16x128xf32> -> vector<16x128xf32>
    %c9 = arith.constant 9 : index
    %c0_69 = arith.constant 0 : index
    %223 = vector.load %arg6[%c9, %c0_69] : memref<24x2048xf32, #tpu.memory_space<vmem>>, vector<1x128xf32>
    %224 = vector.broadcast %223 : vector<1x128xf32> to vector<16x128xf32>
    %225 = arith.addf %222, %224 : vector<16x128xf32>
    %226 = arith.addf %147, %225 : vector<16x128xf32>
    %cst_70 = arith.constant dense<0.000000e+00> : vector<16xf32>
    %227 = vector.multi_reduction <add>, %226, %cst_70 [1] : vector<16x128xf32> to vector<16xf32>
    %228 = vector.shape_cast %227 : vector<16xf32> to vector<16x1xf32>
    %cst_71 = arith.constant 0.0151515156 : f32
    %229 = vector.broadcast %cst_71 : f32 to vector<16x1xf32>
    %230 = arith.mulf %228, %229 : vector<16x1xf32>
    %231 = vector.broadcast %230 : vector<16x1xf32> to vector<16x128xf32>
    %232 = arith.subf %226, %231 : vector<16x128xf32>
    %233 = vector.broadcast %4 : vector<1x128xf32> to vector<16x128xf32>
    %234 = arith.mulf %232, %233 : vector<16x128xf32>
    %235 = arith.mulf %234, %234 : vector<16x128xf32>
    %cst_72 = arith.constant dense<0.000000e+00> : vector<16xf32>
    %236 = vector.multi_reduction <add>, %235, %cst_72 [1] : vector<16x128xf32> to vector<16xf32>
    %237 = vector.shape_cast %236 : vector<16xf32> to vector<16x1xf32>
    %cst_73 = arith.constant 0.0151515156 : f32
    %238 = vector.broadcast %cst_73 : f32 to vector<16x1xf32>
    %239 = arith.mulf %237, %238 : vector<16x1xf32>
    %cst_74 = arith.constant 9.99999974E-6 : f32
    %240 = vector.broadcast %cst_74 : f32 to vector<16x1xf32>
    %241 = arith.addf %239, %240 : vector<16x1xf32>
    %242 = math.rsqrt %241 : vector<16x1xf32>
    %243 = vector.broadcast %242 : vector<16x1xf32> to vector<16x128xf32>
    %244 = arith.mulf %234, %243 : vector<16x128xf32>
    %c10 = arith.constant 10 : index
    %c0_75 = arith.constant 0 : index
    %245 = vector.load %arg6[%c10, %c0_75] : memref<24x2048xf32, #tpu.memory_space<vmem>>, vector<1x128xf32>
    %246 = vector.broadcast %245 : vector<1x128xf32> to vector<16x128xf32>
    %247 = arith.mulf %244, %246 : vector<16x128xf32>
    %c11 = arith.constant 11 : index
    %c0_76 = arith.constant 0 : index
    %248 = vector.load %arg6[%c11, %c0_76] : memref<24x2048xf32, #tpu.memory_space<vmem>>, vector<1x128xf32>
    %249 = vector.broadcast %248 : vector<1x128xf32> to vector<16x128xf32>
    %250 = arith.addf %247, %249 : vector<16x128xf32>
    %251 = arith.truncf %250 : vector<16x128xf32> to vector<16x128xbf16>
    %c0_77 = arith.constant 0 : index
    %c1536 = arith.constant 1536 : index
    %252 = vector.load %arg2[%c0_77, %c1536] : memref<128x2432xbf16, #tpu.memory_space<vmem>>, vector<128x256xbf16>
    %cst_78 = arith.constant dense<0.000000e+00> : vector<16x256xf32>
    %253 = tpu.matmul %251, %252, %cst_78 {dimension_numbers = #tpu.dot_dimension_numbers<[1], [0], [0], [1], [0, 0, 1, 1], [], []>} : vector<16x128xbf16>, vector<128x256xbf16>, vector<16x256xf32> -> vector<16x256xf32>
    %c12 = arith.constant 12 : index
    %c0_79 = arith.constant 0 : index
    %254 = vector.load %arg6[%c12, %c0_79] : memref<24x2048xf32, #tpu.memory_space<vmem>>, vector<1x256xf32>
    %255 = vector.broadcast %254 : vector<1x256xf32> to vector<16x256xf32>
    %256 = arith.addf %253, %255 : vector<16x256xf32>
    %c0_80 = arith.constant 0 : index
    %c1792 = arith.constant 1792 : index
    %257 = vector.load %arg2[%c0_80, %c1792] : memref<128x2432xbf16, #tpu.memory_space<vmem>>, vector<128x512xbf16>
    %cst_81 = arith.constant dense<0.000000e+00> : vector<16x512xf32>
    %258 = tpu.matmul %6, %257, %cst_81 {dimension_numbers = #tpu.dot_dimension_numbers<[1], [0], [0], [1], [0, 0, 1, 1], [], []>} : vector<16x128xbf16>, vector<128x512xbf16>, vector<16x512xf32> -> vector<16x512xf32>
    %c13 = arith.constant 13 : index
    %c0_82 = arith.constant 0 : index
    %259 = vector.load %arg6[%c13, %c0_82] : memref<24x2048xf32, #tpu.memory_space<vmem>>, vector<1x512xf32>
    %260 = vector.broadcast %259 : vector<1x512xf32> to vector<16x512xf32>
    %261 = arith.addf %258, %260 : vector<16x512xf32>
    %262 = vector.extract_strided_slice %261 {offsets = [0, 0], sizes = [16, 256], strides = [1, 1]} : vector<16x512xf32> to vector<16x256xf32>
    %263 = vector.extract_strided_slice %261 {offsets = [0, 256], sizes = [16, 256], strides = [1, 1]} : vector<16x512xf32> to vector<16x256xf32>
    %264 = vector.extract_strided_slice %256 {offsets = [0, 0], sizes = [8, 128], strides = [1, 1]} : vector<16x256xf32> to vector<8x128xf32>
    %265 = vector.extract_strided_slice %262 {offsets = [0, 0], sizes = [8, 128], strides = [1, 1]} : vector<16x256xf32> to vector<8x128xf32>
    %266 = vector.extract_strided_slice %263 {offsets = [0, 0], sizes = [8, 128], strides = [1, 1]} : vector<16x256xf32> to vector<8x128xf32>
    %cst_83 = arith.constant dense<0.000000e+00> : vector<8x8xf32>
    %267 = tpu.matmul %264, %265, %cst_83 {dimension_numbers = #tpu.dot_dimension_numbers<[1], [1], [0], [0], [0, 0, 1, 0], [], []>} : vector<8x128xf32>, vector<8x128xf32>, vector<8x8xf32> -> vector<8x8xf32>
    %cst_84 = arith.constant dense<0xFF800000> : vector<8xf32>
    %268 = vector.multi_reduction <maximumf>, %267, %cst_84 [1] : vector<8x8xf32> to vector<8xf32>
    %269 = vector.shape_cast %268 : vector<8xf32> to vector<8x1xf32>
    %270 = vector.broadcast %269 : vector<8x1xf32> to vector<8x8xf32>
    %271 = arith.subf %267, %270 : vector<8x8xf32>
    %272 = math.exp %271 : vector<8x8xf32>
    %cst_85 = arith.constant dense<0.000000e+00> : vector<8xf32>
    %273 = vector.multi_reduction <add>, %272, %cst_85 [1] : vector<8x8xf32> to vector<8xf32>
    %274 = vector.shape_cast %273 : vector<8xf32> to vector<8x1xf32>
    %275 = tpu.reciprocal %274 {approx = true} : vector<8x1xf32> -> vector<8x1xf32>
    %276 = vector.broadcast %275 : vector<8x1xf32> to vector<8x8xf32>
    %277 = arith.mulf %272, %276 : vector<8x8xf32>
    %cst_86 = arith.constant dense<0.000000e+00> : vector<8x128xf32>
    %278 = tpu.matmul %277, %266, %cst_86 {dimension_numbers = #tpu.dot_dimension_numbers<[1], [0], [0], [1], [0, 0, 1, 1], [], []>} : vector<8x8xf32>, vector<8x128xf32>, vector<8x128xf32> -> vector<8x128xf32>
    %279 = vector.extract_strided_slice %256 {offsets = [0, 128], sizes = [8, 128], strides = [1, 1]} : vector<16x256xf32> to vector<8x128xf32>
    %280 = vector.extract_strided_slice %262 {offsets = [0, 128], sizes = [8, 128], strides = [1, 1]} : vector<16x256xf32> to vector<8x128xf32>
    %281 = vector.extract_strided_slice %263 {offsets = [0, 128], sizes = [8, 128], strides = [1, 1]} : vector<16x256xf32> to vector<8x128xf32>
    %cst_87 = arith.constant dense<0.000000e+00> : vector<8x8xf32>
    %282 = tpu.matmul %279, %280, %cst_87 {dimension_numbers = #tpu.dot_dimension_numbers<[1], [1], [0], [0], [0, 0, 1, 0], [], []>} : vector<8x128xf32>, vector<8x128xf32>, vector<8x8xf32> -> vector<8x8xf32>
    %cst_88 = arith.constant dense<0xFF800000> : vector<8xf32>
    %283 = vector.multi_reduction <maximumf>, %282, %cst_88 [1] : vector<8x8xf32> to vector<8xf32>
    %284 = vector.shape_cast %283 : vector<8xf32> to vector<8x1xf32>
    %285 = vector.broadcast %284 : vector<8x1xf32> to vector<8x8xf32>
    %286 = arith.subf %282, %285 : vector<8x8xf32>
    %287 = math.exp %286 : vector<8x8xf32>
    %cst_89 = arith.constant dense<0.000000e+00> : vector<8xf32>
    %288 = vector.multi_reduction <add>, %287, %cst_89 [1] : vector<8x8xf32> to vector<8xf32>
    %289 = vector.shape_cast %288 : vector<8xf32> to vector<8x1xf32>
    %290 = tpu.reciprocal %289 {approx = true} : vector<8x1xf32> -> vector<8x1xf32>
    %291 = vector.broadcast %290 : vector<8x1xf32> to vector<8x8xf32>
    %292 = arith.mulf %287, %291 : vector<8x8xf32>
    %cst_90 = arith.constant dense<0.000000e+00> : vector<8x128xf32>
    %293 = tpu.matmul %292, %281, %cst_90 {dimension_numbers = #tpu.dot_dimension_numbers<[1], [0], [0], [1], [0, 0, 1, 1], [], []>} : vector<8x8xf32>, vector<8x128xf32>, vector<8x128xf32> -> vector<8x128xf32>
    %294 = tpu.concatenate %278, %293 in 1 : vector<8x128xf32>, vector<8x128xf32> -> vector<8x256xf32>
    %295 = vector.extract_strided_slice %256 {offsets = [8, 0], sizes = [8, 128], strides = [1, 1]} : vector<16x256xf32> to vector<8x128xf32>
    %296 = vector.extract_strided_slice %262 {offsets = [8, 0], sizes = [8, 128], strides = [1, 1]} : vector<16x256xf32> to vector<8x128xf32>
    %297 = vector.extract_strided_slice %263 {offsets = [8, 0], sizes = [8, 128], strides = [1, 1]} : vector<16x256xf32> to vector<8x128xf32>
    %cst_91 = arith.constant dense<0.000000e+00> : vector<8x8xf32>
    %298 = tpu.matmul %295, %296, %cst_91 {dimension_numbers = #tpu.dot_dimension_numbers<[1], [1], [0], [0], [0, 0, 1, 0], [], []>} : vector<8x128xf32>, vector<8x128xf32>, vector<8x8xf32> -> vector<8x8xf32>
    %cst_92 = arith.constant dense<0xFF800000> : vector<8xf32>
    %299 = vector.multi_reduction <maximumf>, %298, %cst_92 [1] : vector<8x8xf32> to vector<8xf32>
    %300 = vector.shape_cast %299 : vector<8xf32> to vector<8x1xf32>
    %301 = vector.broadcast %300 : vector<8x1xf32> to vector<8x8xf32>
    %302 = arith.subf %298, %301 : vector<8x8xf32>
    %303 = math.exp %302 : vector<8x8xf32>
    %cst_93 = arith.constant dense<0.000000e+00> : vector<8xf32>
    %304 = vector.multi_reduction <add>, %303, %cst_93 [1] : vector<8x8xf32> to vector<8xf32>
    %305 = vector.shape_cast %304 : vector<8xf32> to vector<8x1xf32>
    %306 = tpu.reciprocal %305 {approx = true} : vector<8x1xf32> -> vector<8x1xf32>
    %307 = vector.broadcast %306 : vector<8x1xf32> to vector<8x8xf32>
    %308 = arith.mulf %303, %307 : vector<8x8xf32>
    %cst_94 = arith.constant dense<0.000000e+00> : vector<8x128xf32>
    %309 = tpu.matmul %308, %297, %cst_94 {dimension_numbers = #tpu.dot_dimension_numbers<[1], [0], [0], [1], [0, 0, 1, 1], [], []>} : vector<8x8xf32>, vector<8x128xf32>, vector<8x128xf32> -> vector<8x128xf32>
    %310 = vector.extract_strided_slice %256 {offsets = [8, 128], sizes = [8, 128], strides = [1, 1]} : vector<16x256xf32> to vector<8x128xf32>
    %311 = vector.extract_strided_slice %262 {offsets = [8, 128], sizes = [8, 128], strides = [1, 1]} : vector<16x256xf32> to vector<8x128xf32>
    %312 = vector.extract_strided_slice %263 {offsets = [8, 128], sizes = [8, 128], strides = [1, 1]} : vector<16x256xf32> to vector<8x128xf32>
    %cst_95 = arith.constant dense<0.000000e+00> : vector<8x8xf32>
    %313 = tpu.matmul %310, %311, %cst_95 {dimension_numbers = #tpu.dot_dimension_numbers<[1], [1], [0], [0], [0, 0, 1, 0], [], []>} : vector<8x128xf32>, vector<8x128xf32>, vector<8x8xf32> -> vector<8x8xf32>
    %cst_96 = arith.constant dense<0xFF800000> : vector<8xf32>
    %314 = vector.multi_reduction <maximumf>, %313, %cst_96 [1] : vector<8x8xf32> to vector<8xf32>
    %315 = vector.shape_cast %314 : vector<8xf32> to vector<8x1xf32>
    %316 = vector.broadcast %315 : vector<8x1xf32> to vector<8x8xf32>
    %317 = arith.subf %313, %316 : vector<8x8xf32>
    %318 = math.exp %317 : vector<8x8xf32>
    %cst_97 = arith.constant dense<0.000000e+00> : vector<8xf32>
    %319 = vector.multi_reduction <add>, %318, %cst_97 [1] : vector<8x8xf32> to vector<8xf32>
    %320 = vector.shape_cast %319 : vector<8xf32> to vector<8x1xf32>
    %321 = tpu.reciprocal %320 {approx = true} : vector<8x1xf32> -> vector<8x1xf32>
    %322 = vector.broadcast %321 : vector<8x1xf32> to vector<8x8xf32>
    %323 = arith.mulf %318, %322 : vector<8x8xf32>
    %cst_98 = arith.constant dense<0.000000e+00> : vector<8x128xf32>
    %324 = tpu.matmul %323, %312, %cst_98 {dimension_numbers = #tpu.dot_dimension_numbers<[1], [0], [0], [1], [0, 0, 1, 1], [], []>} : vector<8x8xf32>, vector<8x128xf32>, vector<8x128xf32> -> vector<8x128xf32>
    %325 = tpu.concatenate %309, %324 in 1 : vector<8x128xf32>, vector<8x128xf32> -> vector<8x256xf32>
    %326 = tpu.concatenate %294, %325 in 0 : vector<8x256xf32>, vector<8x256xf32> -> vector<16x256xf32>
    %327 = arith.truncf %326 : vector<16x256xf32> to vector<16x256xbf16>
    %c0_99 = arith.constant 0 : index
    %c256 = arith.constant 256 : index
    %328 = vector.load %arg3[%c0_99, %c256] : memref<256x384xbf16, #tpu.memory_space<vmem>>, vector<256x128xbf16>
    %cst_100 = arith.constant dense<0.000000e+00> : vector<16x128xf32>
    %329 = tpu.matmul %327, %328, %cst_100 {dimension_numbers = #tpu.dot_dimension_numbers<[1], [0], [0], [1], [0, 0, 1, 1], [], []>} : vector<16x256xbf16>, vector<256x128xbf16>, vector<16x128xf32> -> vector<16x128xf32>
    %c14 = arith.constant 14 : index
    %c0_101 = arith.constant 0 : index
    %330 = vector.load %arg6[%c14, %c0_101] : memref<24x2048xf32, #tpu.memory_space<vmem>>, vector<1x128xf32>
    %331 = vector.broadcast %330 : vector<1x128xf32> to vector<16x128xf32>
    %332 = arith.addf %329, %331 : vector<16x128xf32>
    %333 = arith.addf %250, %332 : vector<16x128xf32>
    %cst_102 = arith.constant dense<0.000000e+00> : vector<16xf32>
    %334 = vector.multi_reduction <add>, %333, %cst_102 [1] : vector<16x128xf32> to vector<16xf32>
    %335 = vector.shape_cast %334 : vector<16xf32> to vector<16x1xf32>
    %cst_103 = arith.constant 0.0151515156 : f32
    %336 = vector.broadcast %cst_103 : f32 to vector<16x1xf32>
    %337 = arith.mulf %335, %336 : vector<16x1xf32>
    %338 = vector.broadcast %337 : vector<16x1xf32> to vector<16x128xf32>
    %339 = arith.subf %333, %338 : vector<16x128xf32>
    %340 = vector.broadcast %4 : vector<1x128xf32> to vector<16x128xf32>
    %341 = arith.mulf %339, %340 : vector<16x128xf32>
    %342 = arith.mulf %341, %341 : vector<16x128xf32>
    %cst_104 = arith.constant dense<0.000000e+00> : vector<16xf32>
    %343 = vector.multi_reduction <add>, %342, %cst_104 [1] : vector<16x128xf32> to vector<16xf32>
    %344 = vector.shape_cast %343 : vector<16xf32> to vector<16x1xf32>
    %cst_105 = arith.constant 0.0151515156 : f32
    %345 = vector.broadcast %cst_105 : f32 to vector<16x1xf32>
    %346 = arith.mulf %344, %345 : vector<16x1xf32>
    %cst_106 = arith.constant 9.99999974E-6 : f32
    %347 = vector.broadcast %cst_106 : f32 to vector<16x1xf32>
    %348 = arith.addf %346, %347 : vector<16x1xf32>
    %349 = math.rsqrt %348 : vector<16x1xf32>
    %350 = vector.broadcast %349 : vector<16x1xf32> to vector<16x128xf32>
    %351 = arith.mulf %341, %350 : vector<16x128xf32>
    %c15 = arith.constant 15 : index
    %c0_107 = arith.constant 0 : index
    %352 = vector.load %arg6[%c15, %c0_107] : memref<24x2048xf32, #tpu.memory_space<vmem>>, vector<1x128xf32>
    %353 = vector.broadcast %352 : vector<1x128xf32> to vector<16x128xf32>
    %354 = arith.mulf %351, %353 : vector<16x128xf32>
    %c16 = arith.constant 16 : index
    %c0_108 = arith.constant 0 : index
    %355 = vector.load %arg6[%c16, %c0_108] : memref<24x2048xf32, #tpu.memory_space<vmem>>, vector<1x128xf32>
    %356 = vector.broadcast %355 : vector<1x128xf32> to vector<16x128xf32>
    %357 = arith.addf %354, %356 : vector<16x128xf32>
    %358 = arith.truncf %357 : vector<16x128xf32> to vector<16x128xbf16>
    %c0_109 = arith.constant 0 : index
    %c2048 = arith.constant 2048 : index
    %359 = vector.load %arg4[%c0_109, %c2048] : memref<128x4096xbf16, #tpu.memory_space<vmem>>, vector<128x2048xbf16>
    %cst_110 = arith.constant dense<0.000000e+00> : vector<16x2048xf32>
    %360 = tpu.matmul %358, %359, %cst_110 {dimension_numbers = #tpu.dot_dimension_numbers<[1], [0], [0], [1], [0, 0, 1, 1], [], []>} : vector<16x128xbf16>, vector<128x2048xbf16>, vector<16x2048xf32> -> vector<16x2048xf32>
    %c17 = arith.constant 17 : index
    %c0_111 = arith.constant 0 : index
    %361 = vector.load %arg6[%c17, %c0_111] : memref<24x2048xf32, #tpu.memory_space<vmem>>, vector<1x2048xf32>
    %362 = vector.broadcast %361 : vector<1x2048xf32> to vector<16x2048xf32>
    %363 = arith.addf %360, %362 : vector<16x2048xf32>
    %cst_112 = arith.constant 0.000000e+00 : f32
    %364 = vector.broadcast %cst_112 : f32 to vector<16x2048xf32>
    %365 = arith.maximumf %363, %364 : vector<16x2048xf32>
    %366 = arith.truncf %365 : vector<16x2048xf32> to vector<16x2048xbf16>
    %c0_113 = arith.constant 0 : index
    %c128_114 = arith.constant 128 : index
    %367 = vector.load %arg5[%c0_113, %c128_114] : memref<2048x256xbf16, #tpu.memory_space<vmem>>, vector<2048x128xbf16>
    %cst_115 = arith.constant dense<0.000000e+00> : vector<16x128xf32>
    %368 = tpu.matmul %366, %367, %cst_115 {dimension_numbers = #tpu.dot_dimension_numbers<[1], [0], [0], [1], [0, 0, 1, 1], [], []>} : vector<16x2048xbf16>, vector<2048x128xbf16>, vector<16x128xf32> -> vector<16x128xf32>
    %c18 = arith.constant 18 : index
    %c0_116 = arith.constant 0 : index
    %369 = vector.load %arg6[%c18, %c0_116] : memref<24x2048xf32, #tpu.memory_space<vmem>>, vector<1x128xf32>
    %370 = vector.broadcast %369 : vector<1x128xf32> to vector<16x128xf32>
    %371 = arith.addf %368, %370 : vector<16x128xf32>
    %372 = arith.addf %357, %371 : vector<16x128xf32>
    %cst_117 = arith.constant dense<0.000000e+00> : vector<16xf32>
    %373 = vector.multi_reduction <add>, %372, %cst_117 [1] : vector<16x128xf32> to vector<16xf32>
    %374 = vector.shape_cast %373 : vector<16xf32> to vector<16x1xf32>
    %cst_118 = arith.constant 0.0151515156 : f32
    %375 = vector.broadcast %cst_118 : f32 to vector<16x1xf32>
    %376 = arith.mulf %374, %375 : vector<16x1xf32>
    %377 = vector.broadcast %376 : vector<16x1xf32> to vector<16x128xf32>
    %378 = arith.subf %372, %377 : vector<16x128xf32>
    %379 = vector.broadcast %4 : vector<1x128xf32> to vector<16x128xf32>
    %380 = arith.mulf %378, %379 : vector<16x128xf32>
    %381 = arith.mulf %380, %380 : vector<16x128xf32>
    %cst_119 = arith.constant dense<0.000000e+00> : vector<16xf32>
    %382 = vector.multi_reduction <add>, %381, %cst_119 [1] : vector<16x128xf32> to vector<16xf32>
    %383 = vector.shape_cast %382 : vector<16xf32> to vector<16x1xf32>
    %cst_120 = arith.constant 0.0151515156 : f32
    %384 = vector.broadcast %cst_120 : f32 to vector<16x1xf32>
    %385 = arith.mulf %383, %384 : vector<16x1xf32>
    %cst_121 = arith.constant 9.99999974E-6 : f32
    %386 = vector.broadcast %cst_121 : f32 to vector<16x1xf32>
    %387 = arith.addf %385, %386 : vector<16x1xf32>
    %388 = math.rsqrt %387 : vector<16x1xf32>
    %389 = vector.broadcast %388 : vector<16x1xf32> to vector<16x128xf32>
    %390 = arith.mulf %380, %389 : vector<16x128xf32>
    %c19 = arith.constant 19 : index
    %c0_122 = arith.constant 0 : index
    %391 = vector.load %arg6[%c19, %c0_122] : memref<24x2048xf32, #tpu.memory_space<vmem>>, vector<1x128xf32>
    %392 = vector.broadcast %391 : vector<1x128xf32> to vector<16x128xf32>
    %393 = arith.mulf %390, %392 : vector<16x128xf32>
    %c20 = arith.constant 20 : index
    %c0_123 = arith.constant 0 : index
    %394 = vector.load %arg6[%c20, %c0_123] : memref<24x2048xf32, #tpu.memory_space<vmem>>, vector<1x128xf32>
    %395 = vector.broadcast %394 : vector<1x128xf32> to vector<16x128xf32>
    %396 = arith.addf %393, %395 : vector<16x128xf32>
    %397 = arith.truncf %396 : vector<16x128xf32> to vector<16x128xbf16>
    %c0_124 = arith.constant 0 : index
    %c2304 = arith.constant 2304 : index
    %398 = vector.load %arg2[%c0_124, %c2304] : memref<128x2432xbf16, #tpu.memory_space<vmem>>, vector<128x128xbf16>
    %cst_125 = arith.constant dense<0.000000e+00> : vector<16x128xf32>
    %399 = tpu.matmul %397, %398, %cst_125 {dimension_numbers = #tpu.dot_dimension_numbers<[1], [0], [0], [1], [0, 0, 1, 1], [], []>} : vector<16x128xbf16>, vector<128x128xbf16>, vector<16x128xf32> -> vector<16x128xf32>
    %c21 = arith.constant 21 : index
    %c0_126 = arith.constant 0 : index
    %400 = vector.load %arg6[%c21, %c0_126] : memref<24x2048xf32, #tpu.memory_space<vmem>>, vector<1x128xf32>
    %401 = vector.broadcast %400 : vector<1x128xf32> to vector<16x128xf32>
    %402 = arith.addf %399, %401 : vector<16x128xf32>
    %403 = math.tanh %402 : vector<16x128xf32>
    %c0_127 = arith.constant 0 : index
    %c0_128 = arith.constant 0 : index
    %404 = vector.load %arg7[%c0_127, %c0_128] : memref<16x128xf32, #tpu.memory_space<vmem>>, vector<16x128xf32>
    tpu.vector_store %arg7[%c0_127, %c0_128], %403 {strides = array<i32>} : memref<16x128xf32, #tpu.memory_space<vmem>>, vector<16x128xf32>,
    return
  }
  func.func @transform_0(%arg0: i32) -> (i32, i32) {
    %c0_i32 = arith.constant 0 : i32
    %c0_i32_0 = arith.constant 0 : i32
    return %arg0, %c0_i32 : i32, i32
  }
  func.func @transform_1(%arg0: i32) -> (i32, i32) {
    %c0_i32 = arith.constant 0 : i32
    %c0_i32_0 = arith.constant 0 : i32
    %c0_i32_1 = arith.constant 0 : i32
    return %c0_i32, %c0_i32_0 : i32, i32
  }
  func.func @transform_2(%arg0: i32) -> (i32, i32) {
    %c0_i32 = arith.constant 0 : i32
    %c0_i32_0 = arith.constant 0 : i32
    %c0_i32_1 = arith.constant 0 : i32
    return %c0_i32, %c0_i32_0 : i32, i32
  }
  func.func @transform_3(%arg0: i32) -> (i32, i32) {
    %c0_i32 = arith.constant 0 : i32
    %c0_i32_0 = arith.constant 0 : i32
    %c0_i32_1 = arith.constant 0 : i32
    return %c0_i32, %c0_i32_0 : i32, i32
  }
  func.func @transform_4(%arg0: i32) -> (i32, i32) {
    %c0_i32 = arith.constant 0 : i32
    %c0_i32_0 = arith.constant 0 : i32
    %c0_i32_1 = arith.constant 0 : i32
    return %c0_i32, %c0_i32_0 : i32, i32
  }
  func.func @transform_5(%arg0: i32) -> (i32, i32) {
    %c0_i32 = arith.constant 0 : i32
    %c0_i32_0 = arith.constant 0 : i32
    %c0_i32_1 = arith.constant 0 : i32
    return %c0_i32, %c0_i32_0 : i32, i32
  }
  func.func @transform_6(%arg0: i32) -> (i32, i32) {
    %c0_i32 = arith.constant 0 : i32
    %c0_i32_0 = arith.constant 0 : i32
    return %arg0, %c0_i32 : i32, i32
  }
}

</mosaic_0001>

<llo_original>
// kernel: pose_generator_forward.1
$region0: #{pose_generator_forward.1}
  #allocation0 [shape = 'u32[]', space=smem, size = 0x4, offset = 0x4, fixed_abs, tag = 'smem constant byte address 0x4 - core index']
  #allocation1 [shape = 'u32[144,128]{1,0:T(1,128)}', space=vmem, size = 0x12000, scoped, tag = 'internal scratch']
  %s0 = inlined_call_operand.vmem [shape: f32[16,128], index: 0, kind: input, shape index: {}]
  %s1 = inlined_call_operand.vmem [shape: bf16[128,2432], index: 1, kind: input, shape index: {}]
  %s2 = inlined_call_operand.vmem [shape: bf16[256,384], index: 2, kind: input, shape index: {}]
  %s3 = inlined_call_operand.vmem [shape: bf16[128,4096], index: 3, kind: input, shape index: {}]
  %s4 = inlined_call_operand.vmem [shape: bf16[2048,256], index: 4, kind: input, shape index: {}]
  %s5 = inlined_call_operand.vmem [shape: f32[24,2048], index: 5, kind: input, shape index: {}]
  %s6 = inlined_call_operand.hbm [shape: f32[16,128], index: 6, kind: output, shape index: {}]
  %s7 = sld [smem:[#allocation0]]
  $region34: #{pose_generator_forward.1} parent=0
    _
  %s9 = ssub.s32 1, %s7
  %s10 = scalar_select 0, %s9, %s7
  $region1: #{pose_generator_forward.1} parent=0
    #allocation2 [shape = 'u8[8192]{0}', space=vmem, size = 0x2000, scoped, tag = 'output window, operand 0, single buffered']
    #allocation3 [shape = 's32[1]{0}', space=sflag, size = 0x4, scoped, tag = 'scoped memory for pose_generator_forward.1']
    %11 = vsyncpa [#allocation3], 0
    // Predicated region
    $region2: #{pose_generator_forward.1} parent=1 // pred_check
      _
    $region3: #{pose_generator_forward.1} parent=1 // pred_check_branch
      %13 = sbr.rel (0) target = $region5
    $region4: #{pose_generator_forward.1} parent=1 // pred_region
      _
    $region5: #{pose_generator_forward.1} parent=1 // pred_fallthru
      _
    // Predicated region
    $region6: #{pose_generator_forward.1} parent=1 // pred_check
      _
    $region7: #{pose_generator_forward.1} parent=1 // pred_check_branch
      %15 = sbr.rel (0) target = $region9
    $region8: #{pose_generator_forward.1} parent=1 // pred_region
      _
    $region9: #{pose_generator_forward.1} parent=1 // pred_fallthru
      _
    // Predicated region
    $region10: #{pose_generator_forward.1} parent=1 // pred_check
      _
    $region11: #{pose_generator_forward.1} parent=1 // pred_check_branch
      %17 = sbr.rel (0) target = $region13
    $region12: #{pose_generator_forward.1} parent=1 // pred_region
      _
    $region13: #{pose_generator_forward.1} parent=1 // pred_fallthru
      _
    // Predicated region
    $region14: #{pose_generator_forward.1} parent=1 // pred_check
      _
    $region15: #{pose_generator_forward.1} parent=1 // pred_check_branch
      %19 = sbr.rel (0) target = $region17
    $region16: #{pose_generator_forward.1} parent=1 // pred_region
      _
    $region17: #{pose_generator_forward.1} parent=1 // pred_fallthru
      _
    // Predicated region
    $region18: #{pose_generator_forward.1} parent=1 // pred_check
      _
    $region19: #{pose_generator_forward.1} parent=1 // pred_check_branch
      %21 = sbr.rel (0) target = $region21
    $region20: #{pose_generator_forward.1} parent=1 // pred_region
      _
    $region21: #{pose_generator_forward.1} parent=1 // pred_fallthru
      _
    // Predicated region
    $region22: #{pose_generator_forward.1} parent=1 // pred_check
      _
    $region23: #{pose_generator_forward.1} parent=1 // pred_check_branch
      %23 = sbr.rel (0) target = $region25
    $region24: #{pose_generator_forward.1} parent=1 // pred_region
      _
    $region25: #{pose_generator_forward.1} parent=1 // pred_fallthru
      _
    %v25 = vlaneseq
    %v26 = vand.u32 %v25, 127
    %vm27 = vcmp.lt.s32.totalorder %v26, 66
    %v28 = vsel %vm27, 1, 0
    %v29 = vcvt.s32.f32 %v28
    %v30 = vld [vmem:[%s0] sm:$0xff]
    %v31 = vld [vmem:[%s0 + $0x8] sm:$0xff]
    %v32 = vpack.c.bf16 %v31, %v30
    %v33 = vld [vmem:[%s1] sm:$0xff]
    %v34 = vld [vmem:[%s1 + $0x8] sm:$0xff]
    %v35 = vld [vmem:[%s1 + $0x10] sm:$0xff]
    %v36 = vld [vmem:[%s1 + $0x4c] sm:$0xff]
    %v37 = vld [vmem:[%s1 + $0x54] sm:$0xff]
    %v38 = vld [vmem:[%s1 + $0x5c] sm:$0xff]
    %v39 = vld [vmem:[%s1 + $0x98] sm:$0xff]
    %v40 = vld [vmem:[%s1 + $0xa0] sm:$0xff]
    %v41 = vld [vmem:[%s1 + $0xa8] sm:$0xff]
    %v42 = vld [vmem:[%s1 + $0xe4] sm:$0xff]
    %v43 = vld [vmem:[%s1 + $0xec] sm:$0xff]
    %v44 = vld [vmem:[%s1 + $0xf4] sm:$0xff]
    %v45 = vld [vmem:[%s1 + $0x130] sm:$0xff]
    %v46 = vld [vmem:[%s1 + $0x138] sm:$0xff]
    %v47 = vld [vmem:[%s1 + $0x140] sm:$0xff]
    %v48 = vld [vmem:[%s1 + $0x17c] sm:$0xff]
    %v49 = vld [vmem:[%s1 + $0x184] sm:$0xff]
    %v50 = vld [vmem:[%s1 + $0x18c] sm:$0xff]
    %v51 = vld [vmem:[%s1 + $0x1c8] sm:$0xff]
    %v52 = vld [vmem:[%s1 + $0x1d0] sm:$0xff]
    %v53 = vld [vmem:[%s1 + $0x1d8] sm:$0xff]
    %v54 = vld [vmem:[%s1 + $0x214] sm:$0xff]
    %v55 = vld [vmem:[%s1 + $0x21c] sm:$0xff]
    %v56 = vld [vmem:[%s1 + $0x224] sm:$0xff]
    %v57 = vld [vmem:[%s1 + $0x260] sm:$0xff]
    %v58 = vld [vmem:[%s1 + $0x268] sm:$0xff]
    %v59 = vld [vmem:[%s1 + $0x270] sm:$0xff]
    %v60 = vld [vmem:[%s1 + $0x2ac] sm:$0xff]
    %v61 = vld [vmem:[%s1 + $0x2b4] sm:$0xff]
    %v62 = vld [vmem:[%s1 + $0x2bc] sm:$0xff]
    %v63 = vld [vmem:[%s1 + $0x2f8] sm:$0xff]
    %v64 = vld [vmem:[%s1 + $0x300] sm:$0xff]
    %v65 = vld [vmem:[%s1 + $0x308] sm:$0xff]
    %v66 = vld [vmem:[%s1 + $0x344] sm:$0xff]
    %v67 = vld [vmem:[%s1 + $0x34c] sm:$0xff]
    %v68 = vld [vmem:[%s1 + $0x354] sm:$0xff]
    %v69 = vld [vmem:[%s1 + $0x390] sm:$0xff]
    %v70 = vld [vmem:[%s1 + $0x398] sm:$0xff]
    %v71 = vld [vmem:[%s1 + $0x3a0] sm:$0xff]
    %v72 = vld [vmem:[%s1 + $0x3dc] sm:$0xff]
    %v73 = vld [vmem:[%s1 + $0x3e4] sm:$0xff]
    %v74 = vld [vmem:[%s1 + $0x3ec] sm:$0xff]
    %v75 = vld [vmem:[%s1 + $0x428] sm:$0xff]
    %v76 = vld [vmem:[%s1 + $0x430] sm:$0xff]
    %v77 = vld [vmem:[%s1 + $0x438] sm:$0xff]
    %v78 = vld [vmem:[%s1 + $0x474] sm:$0xff]
    %v79 = vld [vmem:[%s1 + $0x47c] sm:$0xff]
    %v80 = vld [vmem:[%s1 + $0x484] sm:$0xff]
    %v81 = vld [vmem:[%s5] ss:$8 sm:$0xf]
    %v82 = vld [vmem:[%s5] ss:$8 sm:$0x30]
    %v83 = vor.u32 %v81, %v82
    %v85 = vlaneseq
    %v86 = vshrl.u32 %v85, 7
    %v87 = vsub.s32 0, %v86
    %v88 = vrot.slane %v83, %v87
    %v89 = vlaneseq
    %v90 = vshrl.u32 %v89, 7
    %v91 = vsub.s32 1, %v90
    %v92 = vrot.slane %v83, %v91
    %v93 = vlaneseq
    %v94 = vshrl.u32 %v93, 7
    %v95 = vsub.s32 2, %v94
    %v96 = vrot.slane %v83, %v95
    %v97 = vlaneseq
    %v98 = vshrl.u32 %v97, 7
    %v99 = vsub.s32 3, %v98
    %v100 = vrot.slane %v83, %v99
    %v101 = vlaneseq
    %v102 = vshrl.u32 %v101, 7
    %v103 = vsub.s32 4, %v102
    %v104 = vrot.slane %v83, %v103
    %v105 = vlaneseq
    %v106 = vshrl.u32 %v105, 7
    %v107 = vsub.s32 5, %v106
    %v108 = vrot.slane %v83, %v107
    %v163 = vunpack.c.l.b16 %v33
    %v164 = vunpack.c.h.b16 %v33
    %v165 = vunpack.c.l.b16 %v34
    %v166 = vunpack.c.h.b16 %v34
    %v167 = vunpack.c.l.b16 %v35
    %v168 = vunpack.c.h.b16 %v35
    %v169 = vunpack.c.l.b16 %v36
    %v170 = vunpack.c.h.b16 %v36
    %v171 = vunpack.c.l.b16 %v37
    %v172 = vunpack.c.h.b16 %v37
    %v173 = vunpack.c.l.b16 %v38
    %v174 = vunpack.c.h.b16 %v38
    %v175 = vunpack.c.l.b16 %v39
    %v176 = vunpack.c.h.b16 %v39
    %v177 = vunpack.c.l.b16 %v40
    %v178 = vunpack.c.h.b16 %v40
    %v179 = vunpack.c.l.b16 %v41
    %v180 = vunpack.c.h.b16 %v41
    %v181 = vunpack.c.l.b16 %v42
    %v182 = vunpack.c.h.b16 %v42
    %v183 = vunpack.c.l.b16 %v43
    %v184 = vunpack.c.h.b16 %v43
    %v185 = vunpack.c.l.b16 %v44
    %v186 = vunpack.c.h.b16 %v44
    %v187 = vunpack.c.l.b16 %v45
    %v188 = vunpack.c.h.b16 %v45
    %v189 = vunpack.c.l.b16 %v46
    %v190 = vunpack.c.h.b16 %v46
    %v191 = vunpack.c.l.b16 %v47
    %v192 = vunpack.c.h.b16 %v47
    %v193 = vunpack.c.l.b16 %v48
    %v194 = vunpack.c.h.b16 %v48
    %v195 = vunpack.c.l.b16 %v49
    %v196 = vunpack.c.h.b16 %v49
    %v197 = vunpack.c.l.b16 %v50
    %v198 = vunpack.c.h.b16 %v50
    %v199 = vunpack.c.l.b16 %v51
    %v200 = vunpack.c.h.b16 %v51
    %v201 = vunpack.c.l.b16 %v52
    %v202 = vunpack.c.h.b16 %v52
    %v203 = vunpack.c.l.b16 %v53
    %v204 = vunpack.c.h.b16 %v53
    %v205 = vunpack.c.l.b16 %v54
    %v206 = vunpack.c.h.b16 %v54
    %v207 = vunpack.c.l.b16 %v55
    %v208 = vunpack.c.h.b16 %v55
    %v209 = vunpack.c.l.b16 %v56
    %v210 = vunpack.c.h.b16 %v56
    %v211 = vunpack.c.l.b16 %v57
    %v212 = vunpack.c.h.b16 %v57
    %v213 = vunpack.c.l.b16 %v58
    %v214 = vunpack.c.h.b16 %v58
    %v215 = vunpack.c.l.b16 %v59
    %v216 = vunpack.c.h.b16 %v59
    %v217 = vunpack.c.l.b16 %v60
    %v218 = vunpack.c.h.b16 %v60
    %v219 = vunpack.c.l.b16 %v61
    %v220 = vunpack.c.h.b16 %v61
    %v221 = vunpack.c.l.b16 %v62
    %v222 = vunpack.c.h.b16 %v62
    %v223 = vunpack.c.l.b16 %v63
    %v224 = vunpack.c.h.b16 %v63
    %v225 = vunpack.c.l.b16 %v64
    %v226 = vunpack.c.h.b16 %v64
    %v227 = vunpack.c.l.b16 %v65
    %v228 = vunpack.c.h.b16 %v65
    %v229 = vunpack.c.l.b16 %v66
    %v230 = vunpack.c.h.b16 %v66
    %v231 = vunpack.c.l.b16 %v67
    %v232 = vunpack.c.h.b16 %v67
    %v233 = vunpack.c.l.b16 %v68
    %v234 = vunpack.c.h.b16 %v68
    %v235 = vunpack.c.l.b16 %v69
    %v236 = vunpack.c.h.b16 %v69
    %v237 = vunpack.c.l.b16 %v70
    %v238 = vunpack.c.h.b16 %v70
    %v239 = vunpack.c.l.b16 %v71
    %v240 = vunpack.c.h.b16 %v71
    %v241 = vunpack.c.l.b16 %v72
    %v242 = vunpack.c.h.b16 %v72
    %v243 = vunpack.c.l.b16 %v73
    %v244 = vunpack.c.h.b16 %v73
    %v245 = vunpack.c.l.b16 %v74
    %v246 = vunpack.c.h.b16 %v74
    %v247 = vunpack.c.l.b16 %v75
    %v248 = vunpack.c.h.b16 %v75
    %v249 = vunpack.c.l.b16 %v76
    %v250 = vunpack.c.h.b16 %v76
    %v251 = vunpack.c.l.b16 %v77
    %v252 = vunpack.c.h.b16 %v77
    %v253 = vunpack.c.l.b16 %v78
    %v254 = vunpack.c.h.b16 %v78
    %v255 = vunpack.c.l.b16 %v79
    %v256 = vunpack.c.h.b16 %v79
    %v257 = vunpack.c.l.b16 %v80
    %v258 = vunpack.c.h.b16 %v80
    %v259 = vpack.c.b16 %v169, %v163
    %v260 = vpack.c.b16 %v170, %v164
    %v261 = vpack.c.b16 %v171, %v165
    %v262 = vpack.c.b16 %v172, %v166
    %v263 = vpack.c.b16 %v173, %v167
    %v264 = vpack.c.b16 %v174, %v168
    %v265 = vpack.c.b16 %v181, %v175
    %v266 = vpack.c.b16 %v182, %v176
    %v267 = vpack.c.b16 %v183, %v177
    %v268 = vpack.c.b16 %v184, %v178
    %v269 = vpack.c.b16 %v185, %v179
    %v270 = vpack.c.b16 %v186, %v180
    %v271 = vpack.c.b16 %v193, %v187
    %v272 = vpack.c.b16 %v194, %v188
    %v273 = vpack.c.b16 %v195, %v189
    %v274 = vpack.c.b16 %v196, %v190
    %v275 = vpack.c.b16 %v197, %v191
    %v276 = vpack.c.b16 %v198, %v192
    %v277 = vpack.c.b16 %v205, %v199
    %v278 = vpack.c.b16 %v206, %v200
    %v279 = vpack.c.b16 %v207, %v201
    %v280 = vpack.c.b16 %v208, %v202
    %v281 = vpack.c.b16 %v209, %v203
    %v282 = vpack.c.b16 %v210, %v204
    %v283 = vpack.c.b16 %v217, %v211
    %v284 = vpack.c.b16 %v218, %v212
    %v285 = vpack.c.b16 %v219, %v213
    %v286 = vpack.c.b16 %v220, %v214
    %v287 = vpack.c.b16 %v221, %v215
    %v288 = vpack.c.b16 %v222, %v216
    %v289 = vpack.c.b16 %v229, %v223
    %v290 = vpack.c.b16 %v230, %v224
    %v291 = vpack.c.b16 %v231, %v225
    %v292 = vpack.c.b16 %v232, %v226
    %v293 = vpack.c.b16 %v233, %v227
    %v294 = vpack.c.b16 %v234, %v228
    %v295 = vpack.c.b16 %v241, %v235
    %v296 = vpack.c.b16 %v242, %v236
    %v297 = vpack.c.b16 %v243, %v237
    %v298 = vpack.c.b16 %v244, %v238
    %v299 = vpack.c.b16 %v245, %v239
    %v300 = vpack.c.b16 %v246, %v240
    %v301 = vpack.c.b16 %v253, %v247
    %v302 = vpack.c.b16 %v254, %v248
    %v303 = vpack.c.b16 %v255, %v249
    %v304 = vpack.c.b16 %v256, %v250
    %v305 = vpack.c.b16 %v257, %v251
    %v306 = vpack.c.b16 %v258, %v252
    %355 = vmatprep.subr.bf16.mxu0 %v260
    %356 = vmatpush1.bf16.msra.mxu0 %v259
    %357 = vmatprep.subr.bf16.mxu0 %v266
    %358 = vmatpush1.bf16.msra.mxu0 %v265
    %359 = vmatprep.subr.bf16.mxu0 %v272
    %360 = vmatpush1.bf16.msra.mxu0 %v271
    %361 = vmatprep.subr.bf16.mxu0 %v278
    %362 = vmatpush1.bf16.msra.mxu0 %v277
    %363 = vmatprep.subr.bf16.mxu0 %v284
    %364 = vmatpush1.bf16.msra.mxu0 %v283
    %365 = vmatprep.subr.bf16.mxu0 %v290
    %366 = vmatpush1.bf16.msra.mxu0 %v289
    %367 = vmatprep.subr.bf16.mxu0 %v296
    %368 = vmatpush1.bf16.msra.mxu0 %v295
    %369 = vmatprep.subr.bf16.mxu0 %v302
    %370 = vmatpush1.bf16.msra.mxu0 %v301
    %371 = vmatprep.subr.bf16.mxu0 0
    %372 = vmatpush1.bf16.msra.mxu0 0
    %373 = vmatprep.subr.bf16.mxu0 0
    %374 = vmatpush1.bf16.msra.mxu0 0
    %375 = vmatprep.subr.bf16.mxu0 0
    %376 = vmatpush1.bf16.msra.mxu0 0
    %377 = vmatprep.subr.bf16.mxu0 0
    %378 = vmatpush1.bf16.msra.mxu0 0
    %379 = vmatprep.subr.bf16.mxu0 0
    %380 = vmatpush1.bf16.msra.mxu0 0
    %381 = vmatprep.subr.bf16.mxu0 0
    %382 = vmatpush1.bf16.msra.mxu0 0
    %383 = vmatprep.subr.bf16.mxu0 0
    %384 = vmatpush1.bf16.msra.mxu0 0
    %385 = vmatprep.subr.bf16.mxu0 0
    %386 = vmatpush1.bf16.msra.mxu0 0
    %387 = vmatprep.mubr.bf16.mxu0 0
    %388 = vmatmul.mubr.bf16.gmra.mrb[0].mxu0 %v32
    %v389 = vpop.f32.mrb[0].mxu0
    %v390 = vadd.f32 %v88, %v389
    %v391 = vpop.f32.mrb[0].mxu0
    %v392 = vadd.f32 %v92, %v391
    %v393 = vpop.f32.mrb[0].mxu0
    %v394 = vadd.f32 %v88, %v393
    %v395 = vpop.f32.mrb[0].mxu0
    %v396 = vadd.f32 %v92, %v395
    %397 = vdwg.mxu0
    %398 = vmatprep.subr.bf16.mxu0 %v262
    %399 = vmatpush1.bf16.msra.mxu0 %v261
    %400 = vmatprep.subr.bf16.mxu0 %v268
    %401 = vmatpush1.bf16.msra.mxu0 %v267
    %402 = vmatprep.subr.bf16.mxu0 %v274
    %403 = vmatpush1.bf16.msra.mxu0 %v273
    %404 = vmatprep.subr.bf16.mxu0 %v280
    %405 = vmatpush1.bf16.msra.mxu0 %v279
    %406 = vmatprep.subr.bf16.mxu0 %v286
    %407 = vmatpush1.bf16.msra.mxu0 %v285
    %408 = vmatprep.subr.bf16.mxu0 %v292
    %409 = vmatpush1.bf16.msra.mxu0 %v291
    %410 = vmatprep.subr.bf16.mxu0 %v298
    %411 = vmatpush1.bf16.msra.mxu0 %v297
    %412 = vmatprep.subr.bf16.mxu0 %v304
    %413 = vmatpush1.bf16.msra.mxu0 %v303
    %414 = vmatprep.subr.bf16.mxu0 0
    %415 = vmatpush1.bf16.msra.mxu0 0
    %416 = vmatprep.subr.bf16.mxu0 0
    %417 = vmatpush1.bf16.msra.mxu0 0
    %418 = vmatprep.subr.bf16.mxu0 0
    %419 = vmatpush1.bf16.msra.mxu0 0
    %420 = vmatprep.subr.bf16.mxu0 0
    %421 = vmatpush1.bf16.msra.mxu0 0
    %422 = vmatprep.subr.bf16.mxu0 0
    %423 = vmatpush1.bf16.msra.mxu0 0
    %424 = vmatprep.subr.bf16.mxu0 0
    %425 = vmatpush1.bf16.msra.mxu0 0
    %426 = vmatprep.subr.bf16.mxu0 0
    %427 = vmatpush1.bf16.msra.mxu0 0
    %428 = vmatprep.subr.bf16.mxu0 0
    %429 = vmatpush1.bf16.msra.mxu0 0
    %430 = vmatprep.mubr.bf16.mxu0 0
    %431 = vmatmul.mubr.bf16.gmra.mrb[0].mxu0 %v32
    %v432 = vpop.f32.mrb[0].mxu0
    %v433 = vadd.f32 %v96, %v432
    %v434 = vpop.f32.mrb[0].mxu0
    %v435 = vadd.f32 %v100, %v434
    %v436 = vpop.f32.mrb[0].mxu0
    %v437 = vadd.f32 %v96, %v436
    %v438 = vpop.f32.mrb[0].mxu0
    %v439 = vadd.f32 %v100, %v438
    %440 = vdwg.mxu0
    %441 = vmatprep.subr.bf16.mxu0 %v264
    %442 = vmatpush1.bf16.msra.mxu0 %v263
    %443 = vmatprep.subr.bf16.mxu0 %v270
    %444 = vmatpush1.bf16.msra.mxu0 %v269
    %445 = vmatprep.subr.bf16.mxu0 %v276
    %446 = vmatpush1.bf16.msra.mxu0 %v275
    %447 = vmatprep.subr.bf16.mxu0 %v282
    %448 = vmatpush1.bf16.msra.mxu0 %v281
    %449 = vmatprep.subr.bf16.mxu0 %v288
    %450 = vmatpush1.bf16.msra.mxu0 %v287
    %451 = vmatprep.subr.bf16.mxu0 %v294
    %452 = vmatpush1.bf16.msra.mxu0 %v293
    %453 = vmatprep.subr.bf16.mxu0 %v300
    %454 = vmatpush1.bf16.msra.mxu0 %v299
    %455 = vmatprep.subr.bf16.mxu0 %v306
    %456 = vmatpush1.bf16.msra.mxu0 %v305
    %457 = vmatprep.subr.bf16.mxu0 0
    %458 = vmatpush1.bf16.msra.mxu0 0
    %459 = vmatprep.subr.bf16.mxu0 0
    %460 = vmatpush1.bf16.msra.mxu0 0
    %461 = vmatprep.subr.bf16.mxu0 0
    %462 = vmatpush1.bf16.msra.mxu0 0
    %463 = vmatprep.subr.bf16.mxu0 0
    %464 = vmatpush1.bf16.msra.mxu0 0
    %465 = vmatprep.subr.bf16.mxu0 0
    %466 = vmatpush1.bf16.msra.mxu0 0
    %467 = vmatprep.subr.bf16.mxu0 0
    %468 = vmatpush1.bf16.msra.mxu0 0
    %469 = vmatprep.subr.bf16.mxu0 0
    %470 = vmatpush1.bf16.msra.mxu0 0
    %471 = vmatprep.subr.bf16.mxu0 0
    %472 = vmatpush1.bf16.msra.mxu0 0
    %473 = vmatprep.mubr.bf16.mxu0 0
    %474 = vmatmul.mubr.bf16.gmra.mrb[0].mxu0 %v32
    %v475 = vpop.f32.mrb[0].mxu0
    %v476 = vadd.f32 %v104, %v475
    %v477 = vpop.f32.mrb[0].mxu0
    %v478 = vadd.f32 %v108, %v477
    %v479 = vpop.f32.mrb[0].mxu0
    %v480 = vadd.f32 %v104, %v479
    %v481 = vpop.f32.mrb[0].mxu0
    %v482 = vadd.f32 %v108, %v481
    %483 = vdwg.mxu0
    %484 = vmatprep.subr.mxu0 0.0
    %485 = vmatpush1.xpose.msra.mxu0 %v433
    %486 = vmatprep.subr.mxu0 0.0
    %487 = vmatpush1.xpose.msra.mxu0 0.0
    %488 = vmatprep.subr.mxu0 0.0
    %489 = vmatpush1.xpose.msra.mxu0 0.0
    %490 = vmatprep.subr.mxu0 0.0
    %491 = vmatpush1.xpose.msra.mxu0 0.0
    %492 = vmatprep.subr.mxu0 0.0
    %493 = vmatpush1.xpose.msra.mxu0 0.0
    %494 = vmatprep.subr.mxu0 0.0
    %495 = vmatpush1.xpose.msra.mxu0 0.0
    %496 = vmatprep.subr.mxu0 0.0
    %497 = vmatpush1.xpose.msra.mxu0 0.0
    %498 = vmatprep.subr.mxu0 0.0
    %499 = vmatpush1.xpose.msra.mxu0 0.0
    %500 = vmatprep.subr.mxu0 0.0
    %501 = vmatpush1.xpose.msra.mxu0 0.0
    %502 = vmatprep.subr.mxu0 0.0
    %503 = vmatpush1.xpose.msra.mxu0 0.0
    %504 = vmatprep.subr.mxu0 0.0
    %505 = vmatpush1.xpose.msra.mxu0 0.0
    %506 = vmatprep.subr.mxu0 0.0
    %507 = vmatpush1.xpose.msra.mxu0 0.0
    %508 = vmatprep.subr.mxu0 0.0
    %509 = vmatpush1.xpose.msra.mxu0 0.0
    %510 = vmatprep.subr.mxu0 0.0
    %511 = vmatpush1.xpose.msra.mxu0 0.0
    %512 = vmatprep.subr.mxu0 0.0
    %513 = vmatpush1.xpose.msra.mxu0 0.0
    %514 = vmatprep.subr.mxu0 0.0
    %515 = vmatpush1.xpose.msra.mxu0 0.0
    %516 = vmatprep.subr.mxu0 0.0
    %517 = vmatpush1.xpose.msra.mxu0 0.0
    %518 = vmatprep.subr.mxu0 0.0
    %519 = vmatpush1.xpose.msra.mxu0 0.0
    %520 = vmatprep.subr.mxu0 0.0
    %521 = vmatpush1.xpose.msra.mxu0 0.0
    %522 = vmatprep.subr.mxu0 0.0
    %523 = vmatpush1.xpose.msra.mxu0 0.0
    %524 = vmatprep.subr.mxu0 0.0
    %525 = vmatpush1.xpose.msra.mxu0 0.0
    %526 = vmatprep.subr.mxu0 0.0
    %527 = vmatpush1.xpose.msra.mxu0 0.0
    %528 = vmatprep.subr.mxu0 0.0
    %529 = vmatpush1.xpose.msra.mxu0 0.0
    %530 = vmatprep.subr.mxu0 0.0
    %531 = vmatpush1.xpose.msra.mxu0 0.0
    %532 = vmatprep.subr.mxu0 0.0
    %533 = vmatpush1.xpose.msra.mxu0 0.0
    %534 = vmatprep.subr.mxu0 0.0
    %535 = vmatpush1.xpose.msra.mxu0 0.0
    %536 = vmatprep.subr.mxu0 0.0
    %537 = vmatpush1.xpose.msra.mxu0 0.0
    %538 = vmatprep.subr.mxu0 0.0
    %539 = vmatpush1.xpose.msra.mxu0 0.0
    %540 = vmatprep.subr.mxu0 0.0
    %541 = vmatpush1.xpose.msra.mxu0 0.0
    %542 = vmatprep.subr.mxu0 0.0
    %543 = vmatpush1.xpose.msra.mxu0 0.0
    %544 = vmatprep.subr.mxu0 0.0
    %545 = vmatpush1.xpose.msra.mxu0 0.0
    %546 = vmatprep.subr.mxu0 0.0
    %547 = vmatpush1.xpose.msra.mxu0 0.0
    %548 = vmatprep.mubr.f32.mxu0 0.0
    %549 = vmatmul.mubr.f32.gmra.mrb[0].mxu0 %v390
    %v550 = vpop.f32.mrb[0].mxu0
    %v551 = vadd.f32 0.0, %v550
    %v552 = vpop.f32.mrb[0].mxu0
    %553 = vdwg.mxu0
    %vm554 = vcmask 64512
    %v555 = vsel %vm554, %v551, -inf
    %556 = vmax.xlane.f32.xlu0 %v555
    %v557 = vpop.xlane.xlu0 %556
    %v558 = vsub.f32 %v551, %v557
    %v559 = vmul.f32 %v558, 1.442695
    %v560 = vpow.pop %v559
    %v561 = vsel %vm554, %v560, 0.0
    %562 = vadd.xlane.f32.xlu0 %v561
    %v563 = vpop.xlane.xlu0 %562
    %v564 = vrcp.pop %v563
    %v565 = vmul.f32 %v560, %v564
    %v567 = vsel %vm554, %v565, 0
    %569 = vmatprep.subr.mxu0 0.0
    %570 = vmatpush1.msra.mxu0 %v476
    %571 = vmatprep.subr.mxu0 0.0
    %572 = vmatpush1.msra.mxu0 0.0
    %573 = vmatprep.subr.mxu0 0.0
    %574 = vmatpush1.msra.mxu0 0.0
    %575 = vmatprep.subr.mxu0 0.0
    %576 = vmatpush1.msra.mxu0 0.0
    %577 = vmatprep.subr.mxu0 0.0
    %578 = vmatpush1.msra.mxu0 0.0
    %579 = vmatprep.subr.mxu0 0.0
    %580 = vmatpush1.msra.mxu0 0.0
    %581 = vmatprep.subr.mxu0 0.0
    %582 = vmatpush1.msra.mxu0 0.0
    %583 = vmatprep.subr.mxu0 0.0
    %584 = vmatpush1.msra.mxu0 0.0
    %585 = vmatprep.subr.mxu0 0.0
    %586 = vmatpush1.msra.mxu0 0.0
    %587 = vmatprep.subr.mxu0 0.0
    %588 = vmatpush1.msra.mxu0 0.0
    %589 = vmatprep.subr.mxu0 0.0
    %590 = vmatpush1.msra.mxu0 0.0
    %591 = vmatprep.subr.mxu0 0.0
    %592 = vmatpush1.msra.mxu0 0.0
    %593 = vmatprep.subr.mxu0 0.0
    %594 = vmatpush1.msra.mxu0 0.0
    %595 = vmatprep.subr.mxu0 0.0
    %596 = vmatpush1.msra.mxu0 0.0
    %597 = vmatprep.subr.mxu0 0.0
    %598 = vmatpush1.msra.mxu0 0.0
    %599 = vmatprep.subr.mxu0 0.0
    %600 = vmatpush1.msra.mxu0 0.0
    %601 = vmatprep.subr.mxu0 0.0
    %602 = vmatpush1.msra.mxu0 0.0
    %603 = vmatprep.subr.mxu0 0.0
    %604 = vmatpush1.msra.mxu0 0.0
    %605 = vmatprep.subr.mxu0 0.0
    %606 = vmatpush1.msra.mxu0 0.0
    %607 = vmatprep.subr.mxu0 0.0
    %608 = vmatpush1.msra.mxu0 0.0
    %609 = vmatprep.subr.mxu0 0.0
    %610 = vmatpush1.msra.mxu0 0.0
    %611 = vmatprep.subr.mxu0 0.0
    %612 = vmatpush1.msra.mxu0 0.0
    %613 = vmatprep.subr.mxu0 0.0
    %614 = vmatpush1.msra.mxu0 0.0
    %615 = vmatprep.subr.mxu0 0.0
    %616 = vmatpush1.msra.mxu0 0.0
    %617 = vmatprep.subr.mxu0 0.0
    %618 = vmatpush1.msra.mxu0 0.0
    %619 = vmatprep.subr.mxu0 0.0
    %620 = vmatpush1.msra.mxu0 0.0
    %621 = vmatprep.subr.mxu0 0.0
    %622 = vmatpush1.msra.mxu0 0.0
    %623 = vmatprep.subr.mxu0 0.0
    %624 = vmatpush1.msra.mxu0 0.0
    %625 = vmatprep.subr.mxu0 0.0
    %626 = vmatpush1.msra.mxu0 0.0
    %627 = vmatprep.subr.mxu0 0.0
    %628 = vmatpush1.msra.mxu0 0.0
    %629 = vmatprep.subr.mxu0 0.0
    %630 = vmatpush1.msra.mxu0 0.0
    %631 = vmatprep.subr.mxu0 0.0
    %632 = vmatpush1.msra.mxu0 0.0
    %633 = vmatprep.mubr.f32.mxu0 0.0
    %634 = vmatmul.mubr.f32.gmra.mrb[0].mxu0 %v567
    %v635 = vpop.f32.mrb[0].mxu0
    %v636 = vadd.f32 0.0, %v635
    %v637 = vpop.f32.mrb[0].mxu0
    %638 = vdwg.mxu0
    %639 = vmatprep.subr.mxu0 0.0
    %640 = vmatpush1.xpose.msra.mxu0 %v435
    %641 = vmatprep.subr.mxu0 0.0
    %642 = vmatpush1.xpose.msra.mxu0 0.0
    %643 = vmatprep.subr.mxu0 0.0
    %644 = vmatpush1.xpose.msra.mxu0 0.0
    %645 = vmatprep.subr.mxu0 0.0
    %646 = vmatpush1.xpose.msra.mxu0 0.0
    %647 = vmatprep.subr.mxu0 0.0
    %648 = vmatpush1.xpose.msra.mxu0 0.0
    %649 = vmatprep.subr.mxu0 0.0
    %650 = vmatpush1.xpose.msra.mxu0 0.0
    %651 = vmatprep.subr.mxu0 0.0
    %652 = vmatpush1.xpose.msra.mxu0 0.0
    %653 = vmatprep.subr.mxu0 0.0
    %654 = vmatpush1.xpose.msra.mxu0 0.0
    %655 = vmatprep.subr.mxu0 0.0
    %656 = vmatpush1.xpose.msra.mxu0 0.0
    %657 = vmatprep.subr.mxu0 0.0
    %658 = vmatpush1.xpose.msra.mxu0 0.0
    %659 = vmatprep.subr.mxu0 0.0
    %660 = vmatpush1.xpose.msra.mxu0 0.0
    %661 = vmatprep.subr.mxu0 0.0
    %662 = vmatpush1.xpose.msra.mxu0 0.0
    %663 = vmatprep.subr.mxu0 0.0
    %664 = vmatpush1.xpose.msra.mxu0 0.0
    %665 = vmatprep.subr.mxu0 0.0
    %666 = vmatpush1.xpose.msra.mxu0 0.0
    %667 = vmatprep.subr.mxu0 0.0
    %668 = vmatpush1.xpose.msra.mxu0 0.0
    %669 = vmatprep.subr.mxu0 0.0
    %670 = vmatpush1.xpose.msra.mxu0 0.0
    %671 = vmatprep.subr.mxu0 0.0
    %672 = vmatpush1.xpose.msra.mxu0 0.0
    %673 = vmatprep.subr.mxu0 0.0
    %674 = vmatpush1.xpose.msra.mxu0 0.0
    %675 = vmatprep.subr.mxu0 0.0
    %676 = vmatpush1.xpose.msra.mxu0 0.0
    %677 = vmatprep.subr.mxu0 0.0
    %678 = vmatpush1.xpose.msra.mxu0 0.0
    %679 = vmatprep.subr.mxu0 0.0
    %680 = vmatpush1.xpose.msra.mxu0 0.0
    %681 = vmatprep.subr.mxu0 0.0
    %682 = vmatpush1.xpose.msra.mxu0 0.0
    %683 = vmatprep.subr.mxu0 0.0
    %684 = vmatpush1.xpose.msra.mxu0 0.0
    %685 = vmatprep.subr.mxu0 0.0
    %686 = vmatpush1.xpose.msra.mxu0 0.0
    %687 = vmatprep.subr.mxu0 0.0
    %688 = vmatpush1.xpose.msra.mxu0 0.0
    %689 = vmatprep.subr.mxu0 0.0
    %690 = vmatpush1.xpose.msra.mxu0 0.0
    %691 = vmatprep.subr.mxu0 0.0
    %692 = vmatpush1.xpose.msra.mxu0 0.0
    %693 = vmatprep.subr.mxu0 0.0
    %694 = vmatpush1.xpose.msra.mxu0 0.0
    %695 = vmatprep.subr.mxu0 0.0
    %696 = vmatpush1.xpose.msra.mxu0 0.0
    %697 = vmatprep.subr.mxu0 0.0
    %698 = vmatpush1.xpose.msra.mxu0 0.0
    %699 = vmatprep.subr.mxu0 0.0
    %700 = vmatpush1.xpose.msra.mxu0 0.0
    %701 = vmatprep.subr.mxu0 0.0
    %702 = vmatpush1.xpose.msra.mxu0 0.0
    %703 = vmatprep.mubr.f32.mxu0 0.0
    %704 = vmatmul.mubr.f32.gmra.mrb[0].mxu0 %v392
    %v705 = vpop.f32.mrb[0].mxu0
    %v706 = vadd.f32 0.0, %v705
    %v707 = vpop.f32.mrb[0].mxu0
    %708 = vdwg.mxu0
    %v709 = vsel %vm554, %v706, -inf
    %710 = vmax.xlane.f32.xlu0 %v709
    %v711 = vpop.xlane.xlu0 %710
    %v712 = vsub.f32 %v706, %v711
    %v713 = vmul.f32 %v712, 1.442695
    %v714 = vpow.pop %v713
    %v715 = vsel %vm554, %v714, 0.0
    %716 = vadd.xlane.f32.xlu0 %v715
    %v717 = vpop.xlane.xlu0 %716
    %v718 = vrcp.pop %v717
    %v719 = vmul.f32 %v714, %v718
    %v721 = vsel %vm554, %v719, 0
    %723 = vmatprep.subr.mxu0 0.0
    %724 = vmatpush1.msra.mxu0 %v478
    %725 = vmatprep.subr.mxu0 0.0
    %726 = vmatpush1.msra.mxu0 0.0
    %727 = vmatprep.subr.mxu0 0.0
    %728 = vmatpush1.msra.mxu0 0.0
    %729 = vmatprep.subr.mxu0 0.0
    %730 = vmatpush1.msra.mxu0 0.0
    %731 = vmatprep.subr.mxu0 0.0
    %732 = vmatpush1.msra.mxu0 0.0
    %733 = vmatprep.subr.mxu0 0.0
    %734 = vmatpush1.msra.mxu0 0.0
    %735 = vmatprep.subr.mxu0 0.0
    %736 = vmatpush1.msra.mxu0 0.0
    %737 = vmatprep.subr.mxu0 0.0
    %738 = vmatpush1.msra.mxu0 0.0
    %739 = vmatprep.subr.mxu0 0.0
    %740 = vmatpush1.msra.mxu0 0.0
    %741 = vmatprep.subr.mxu0 0.0
    %742 = vmatpush1.msra.mxu0 0.0
    %743 = vmatprep.subr.mxu0 0.0
    %744 = vmatpush1.msra.mxu0 0.0
    %745 = vmatprep.subr.mxu0 0.0
    %746 = vmatpush1.msra.mxu0 0.0
    %747 = vmatprep.subr.mxu0 0.0
    %748 = vmatpush1.msra.mxu0 0.0
    %749 = vmatprep.subr.mxu0 0.0
    %750 = vmatpush1.msra.mxu0 0.0
    %751 = vmatprep.subr.mxu0 0.0
    %752 = vmatpush1.msra.mxu0 0.0
    %753 = vmatprep.subr.mxu0 0.0
    %754 = vmatpush1.msra.mxu0 0.0
    %755 = vmatprep.subr.mxu0 0.0
    %756 = vmatpush1.msra.mxu0 0.0
    %757 = vmatprep.subr.mxu0 0.0
    %758 = vmatpush1.msra.mxu0 0.0
    %759 = vmatprep.subr.mxu0 0.0
    %760 = vmatpush1.msra.mxu0 0.0
    %761 = vmatprep.subr.mxu0 0.0
    %762 = vmatpush1.msra.mxu0 0.0
    %763 = vmatprep.subr.mxu0 0.0
    %764 = vmatpush1.msra.mxu0 0.0
    %765 = vmatprep.subr.mxu0 0.0
    %766 = vmatpush1.msra.mxu0 0.0
    %767 = vmatprep.subr.mxu0 0.0
    %768 = vmatpush1.msra.mxu0 0.0
    %769 = vmatprep.subr.mxu0 0.0
    %770 = vmatpush1.msra.mxu0 0.0
    %771 = vmatprep.subr.mxu0 0.0
    %772 = vmatpush1.msra.mxu0 0.0
    %773 = vmatprep.subr.mxu0 0.0
    %774 = vmatpush1.msra.mxu0 0.0
    %775 = vmatprep.subr.mxu0 0.0
    %776 = vmatpush1.msra.mxu0 0.0
    %777 = vmatprep.subr.mxu0 0.0
    %778 = vmatpush1.msra.mxu0 0.0
    %779 = vmatprep.subr.mxu0 0.0
    %780 = vmatpush1.msra.mxu0 0.0
    %781 = vmatprep.subr.mxu0 0.0
    %782 = vmatpush1.msra.mxu0 0.0
    %783 = vmatprep.subr.mxu0 0.0
    %784 = vmatpush1.msra.mxu0 0.0
    %785 = vmatprep.subr.mxu0 0.0
    %786 = vmatpush1.msra.mxu0 0.0
    %787 = vmatprep.mubr.f32.mxu0 0.0
    %788 = vmatmul.mubr.f32.gmra.mrb[0].mxu0 %v721
    %v789 = vpop.f32.mrb[0].mxu0
    %v790 = vadd.f32 0.0, %v789
    %v791 = vpop.f32.mrb[0].mxu0
    %792 = vdwg.mxu0
    %793 = vmatprep.subr.mxu0 0.0
    %794 = vmatpush1.xpose.msra.mxu0 %v437
    %795 = vmatprep.subr.mxu0 0.0
    %796 = vmatpush1.xpose.msra.mxu0 0.0
    %797 = vmatprep.subr.mxu0 0.0
    %798 = vmatpush1.xpose.msra.mxu0 0.0
    %799 = vmatprep.subr.mxu0 0.0
    %800 = vmatpush1.xpose.msra.mxu0 0.0
    %801 = vmatprep.subr.mxu0 0.0
    %802 = vmatpush1.xpose.msra.mxu0 0.0
    %803 = vmatprep.subr.mxu0 0.0
    %804 = vmatpush1.xpose.msra.mxu0 0.0
    %805 = vmatprep.subr.mxu0 0.0
    %806 = vmatpush1.xpose.msra.mxu0 0.0
    %807 = vmatprep.subr.mxu0 0.0
    %808 = vmatpush1.xpose.msra.mxu0 0.0
    %809 = vmatprep.subr.mxu0 0.0
    %810 = vmatpush1.xpose.msra.mxu0 0.0
    %811 = vmatprep.subr.mxu0 0.0
    %812 = vmatpush1.xpose.msra.mxu0 0.0
    %813 = vmatprep.subr.mxu0 0.0
    %814 = vmatpush1.xpose.msra.mxu0 0.0
    %815 = vmatprep.subr.mxu0 0.0
    %816 = vmatpush1.xpose.msra.mxu0 0.0
    %817 = vmatprep.subr.mxu0 0.0
    %818 = vmatpush1.xpose.msra.mxu0 0.0
    %819 = vmatprep.subr.mxu0 0.0
    %820 = vmatpush1.xpose.msra.mxu0 0.0
    %821 = vmatprep.subr.mxu0 0.0
    %822 = vmatpush1.xpose.msra.mxu0 0.0
    %823 = vmatprep.subr.mxu0 0.0
    %824 = vmatpush1.xpose.msra.mxu0 0.0
    %825 = vmatprep.subr.mxu0 0.0
    %826 = vmatpush1.xpose.msra.mxu0 0.0
    %827 = vmatprep.subr.mxu0 0.0
    %828 = vmatpush1.xpose.msra.mxu0 0.0
    %829 = vmatprep.subr.mxu0 0.0
    %830 = vmatpush1.xpose.msra.mxu0 0.0
    %831 = vmatprep.subr.mxu0 0.0
    %832 = vmatpush1.xpose.msra.mxu0 0.0
    %833 = vmatprep.subr.mxu0 0.0
    %834 = vmatpush1.xpose.msra.mxu0 0.0
    %835 = vmatprep.subr.mxu0 0.0
    %836 = vmatpush1.xpose.msra.mxu0 0.0
    %837 = vmatprep.subr.mxu0 0.0
    %838 = vmatpush1.xpose.msra.mxu0 0.0
    %839 = vmatprep.subr.mxu0 0.0
    %840 = vmatpush1.xpose.msra.mxu0 0.0
    %841 = vmatprep.subr.mxu0 0.0
    %842 = vmatpush1.xpose.msra.mxu0 0.0
    %843 = vmatprep.subr.mxu0 0.0
    %844 = vmatpush1.xpose.msra.mxu0 0.0
    %845 = vmatprep.subr.mxu0 0.0
    %846 = vmatpush1.xpose.msra.mxu0 0.0
    %847 = vmatprep.subr.mxu0 0.0
    %848 = vmatpush1.xpose.msra.mxu0 0.0
    %849 = vmatprep.subr.mxu0 0.0
    %850 = vmatpush1.xpose.msra.mxu0 0.0
    %851 = vmatprep.subr.mxu0 0.0
    %852 = vmatpush1.xpose.msra.mxu0 0.0
    %853 = vmatprep.subr.mxu0 0.0
    %854 = vmatpush1.xpose.msra.mxu0 0.0
    %855 = vmatprep.subr.mxu0 0.0
    %856 = vmatpush1.xpose.msra.mxu0 0.0
    %857 = vmatprep.mubr.f32.mxu0 0.0
    %858 = vmatmul.mubr.f32.gmra.mrb[0].mxu0 %v394
    %v859 = vpop.f32.mrb[0].mxu0
    %v860 = vadd.f32 0.0, %v859
    %v861 = vpop.f32.mrb[0].mxu0
    %862 = vdwg.mxu0
    %v863 = vsel %vm554, %v860, -inf
    %864 = vmax.xlane.f32.xlu0 %v863
    %v865 = vpop.xlane.xlu0 %864
    %v866 = vsub.f32 %v860, %v865
    %v867 = vmul.f32 %v866, 1.442695
    %v868 = vpow.pop %v867
    %v869 = vsel %vm554, %v868, 0.0
    %870 = vadd.xlane.f32.xlu0 %v869
    %v871 = vpop.xlane.xlu0 %870
    %v872 = vrcp.pop %v871
    %v873 = vmul.f32 %v868, %v872
    %v875 = vsel %vm554, %v873, 0
    %877 = vmatprep.subr.mxu0 0.0
    %878 = vmatpush1.msra.mxu0 %v480
    %879 = vmatprep.subr.mxu0 0.0
    %880 = vmatpush1.msra.mxu0 0.0
    %881 = vmatprep.subr.mxu0 0.0
    %882 = vmatpush1.msra.mxu0 0.0
    %883 = vmatprep.subr.mxu0 0.0
    %884 = vmatpush1.msra.mxu0 0.0
    %885 = vmatprep.subr.mxu0 0.0
    %886 = vmatpush1.msra.mxu0 0.0
    %887 = vmatprep.subr.mxu0 0.0
    %888 = vmatpush1.msra.mxu0 0.0
    %889 = vmatprep.subr.mxu0 0.0
    %890 = vmatpush1.msra.mxu0 0.0
    %891 = vmatprep.subr.mxu0 0.0
    %892 = vmatpush1.msra.mxu0 0.0
    %893 = vmatprep.subr.mxu0 0.0
    %894 = vmatpush1.msra.mxu0 0.0
    %895 = vmatprep.subr.mxu0 0.0
    %896 = vmatpush1.msra.mxu0 0.0
    %897 = vmatprep.subr.mxu0 0.0
    %898 = vmatpush1.msra.mxu0 0.0
    %899 = vmatprep.subr.mxu0 0.0
    %900 = vmatpush1.msra.mxu0 0.0
    %901 = vmatprep.subr.mxu0 0.0
    %902 = vmatpush1.msra.mxu0 0.0
    %903 = vmatprep.subr.mxu0 0.0
    %904 = vmatpush1.msra.mxu0 0.0
    %905 = vmatprep.subr.mxu0 0.0
    %906 = vmatpush1.msra.mxu0 0.0
    %907 = vmatprep.subr.mxu0 0.0
    %908 = vmatpush1.msra.mxu0 0.0
    %909 = vmatprep.subr.mxu0 0.0
    %910 = vmatpush1.msra.mxu0 0.0
    %911 = vmatprep.subr.mxu0 0.0
    %912 = vmatpush1.msra.mxu0 0.0
    %913 = vmatprep.subr.mxu0 0.0
    %914 = vmatpush1.msra.mxu0 0.0
    %915 = vmatprep.subr.mxu0 0.0
    %916 = vmatpush1.msra.mxu0 0.0
    %917 = vmatprep.subr.mxu0 0.0
    %918 = vmatpush1.msra.mxu0 0.0
    %919 = vmatprep.subr.mxu0 0.0
    %920 = vmatpush1.msra.mxu0 0.0
    %921 = vmatprep.subr.mxu0 0.0
    %922 = vmatpush1.msra.mxu0 0.0
    %923 = vmatprep.subr.mxu0 0.0
    %924 = vmatpush1.msra.mxu0 0.0
    %925 = vmatprep.subr.mxu0 0.0
    %926 = vmatpush1.msra.mxu0 0.0
    %927 = vmatprep.subr.mxu0 0.0
    %928 = vmatpush1.msra.mxu0 0.0
    %929 = vmatprep.subr.mxu0 0.0
    %930 = vmatpush1.msra.mxu0 0.0
    %931 = vmatprep.subr.mxu0 0.0
    %932 = vmatpush1.msra.mxu0 0.0
    %933 = vmatprep.subr.mxu0 0.0
    %934 = vmatpush1.msra.mxu0 0.0
    %935 = vmatprep.subr.mxu0 0.0
    %936 = vmatpush1.msra.mxu0 0.0
    %937 = vmatprep.subr.mxu0 0.0
    %938 = vmatpush1.msra.mxu0 0.0
    %939 = vmatprep.subr.mxu0 0.0
    %940 = vmatpush1.msra.mxu0 0.0
    %941 = vmatprep.mubr.f32.mxu0 0.0
    %942 = vmatmul.mubr.f32.gmra.mrb[0].mxu0 %v875
    %v943 = vpop.f32.mrb[0].mxu0
    %v944 = vadd.f32 0.0, %v943
    %v945 = vpop.f32.mrb[0].mxu0
    %946 = vdwg.mxu0
    %947 = vmatprep.subr.mxu0 0.0
    %948 = vmatpush1.xpose.msra.mxu0 %v439
    %949 = vmatprep.subr.mxu0 0.0
    %950 = vmatpush1.xpose.msra.mxu0 0.0
    %951 = vmatprep.subr.mxu0 0.0
    %952 = vmatpush1.xpose.msra.mxu0 0.0
    %953 = vmatprep.subr.mxu0 0.0
    %954 = vmatpush1.xpose.msra.mxu0 0.0
    %955 = vmatprep.subr.mxu0 0.0
    %956 = vmatpush1.xpose.msra.mxu0 0.0
    %957 = vmatprep.subr.mxu0 0.0
    %958 = vmatpush1.xpose.msra.mxu0 0.0
    %959 = vmatprep.subr.mxu0 0.0
    %960 = vmatpush1.xpose.msra.mxu0 0.0
    %961 = vmatprep.subr.mxu0 0.0
    %962 = vmatpush1.xpose.msra.mxu0 0.0
    %963 = vmatprep.subr.mxu0 0.0
    %964 = vmatpush1.xpose.msra.mxu0 0.0
    %965 = vmatprep.subr.mxu0 0.0
    %966 = vmatpush1.xpose.msra.mxu0 0.0
    %967 = vmatprep.subr.mxu0 0.0
    %968 = vmatpush1.xpose.msra.mxu0 0.0
    %969 = vmatprep.subr.mxu0 0.0
    %970 = vmatpush1.xpose.msra.mxu0 0.0
    %971 = vmatprep.subr.mxu0 0.0
    %972 = vmatpush1.xpose.msra.mxu0 0.0
    %973 = vmatprep.subr.mxu0 0.0
    %974 = vmatpush1.xpose.msra.mxu0 0.0
    %975 = vmatprep.subr.mxu0 0.0
    %976 = vmatpush1.xpose.msra.mxu0 0.0
    %977 = vmatprep.subr.mxu0 0.0
    %978 = vmatpush1.xpose.msra.mxu0 0.0
    %979 = vmatprep.subr.mxu0 0.0
    %980 = vmatpush1.xpose.msra.mxu0 0.0
    %981 = vmatprep.subr.mxu0 0.0
    %982 = vmatpush1.xpose.msra.mxu0 0.0
    %983 = vmatprep.subr.mxu0 0.0
    %984 = vmatpush1.xpose.msra.mxu0 0.0
    %985 = vmatprep.subr.mxu0 0.0
    %986 = vmatpush1.xpose.msra.mxu0 0.0
    %987 = vmatprep.subr.mxu0 0.0
    %988 = vmatpush1.xpose.msra.mxu0 0.0
    %989 = vmatprep.subr.mxu0 0.0
    %990 = vmatpush1.xpose.msra.mxu0 0.0
    %991 = vmatprep.subr.mxu0 0.0
    %992 = vmatpush1.xpose.msra.mxu0 0.0
    %993 = vmatprep.subr.mxu0 0.0
    %994 = vmatpush1.xpose.msra.mxu0 0.0
    %995 = vmatprep.subr.mxu0 0.0
    %996 = vmatpush1.xpose.msra.mxu0 0.0
    %997 = vmatprep.subr.mxu0 0.0
    %998 = vmatpush1.xpose.msra.mxu0 0.0
    %999 = vmatprep.subr.mxu0 0.0
    %1000 = vmatpush1.xpose.msra.mxu0 0.0
    %1001 = vmatprep.subr.mxu0 0.0
    %1002 = vmatpush1.xpose.msra.mxu0 0.0
    %1003 = vmatprep.subr.mxu0 0.0
    %1004 = vmatpush1.xpose.msra.mxu0 0.0
    %1005 = vmatprep.subr.mxu0 0.0
    %1006 = vmatpush1.xpose.msra.mxu0 0.0
    %1007 = vmatprep.subr.mxu0 0.0
    %1008 = vmatpush1.xpose.msra.mxu0 0.0
    %1009 = vmatprep.subr.mxu0 0.0
    %1010 = vmatpush1.xpose.msra.mxu0 0.0
    %1011 = vmatprep.mubr.f32.mxu0 0.0
    %1012 = vmatmul.mubr.f32.gmra.mrb[0].mxu0 %v396
    %v1013 = vpop.f32.mrb[0].mxu0
    %v1014 = vadd.f32 0.0, %v1013
    %v1015 = vpop.f32.mrb[0].mxu0
    %1016 = vdwg.mxu0
    %v1017 = vsel %vm554, %v1014, -inf
    %1018 = vmax.xlane.f32.xlu0 %v1017
    %v1019 = vpop.xlane.xlu0 %1018
    %v1020 = vsub.f32 %v1014, %v1019
    %v1021 = vmul.f32 %v1020, 1.442695
    %v1022 = vpow.pop %v1021
    %v1023 = vsel %vm554, %v1022, 0.0
    %1024 = vadd.xlane.f32.xlu0 %v1023
    %v1025 = vpop.xlane.xlu0 %1024
    %v1026 = vrcp.pop %v1025
    %v1027 = vmul.f32 %v1022, %v1026
    %v1029 = vsel %vm554, %v1027, 0
    %1031 = vmatprep.subr.mxu0 0.0
    %1032 = vmatpush1.msra.mxu0 %v482
    %1033 = vmatprep.subr.mxu0 0.0
    %1034 = vmatpush1.msra.mxu0 0.0
    %1035 = vmatprep.subr.mxu0 0.0
    %1036 = vmatpush1.msra.mxu0 0.0
    %1037 = vmatprep.subr.mxu0 0.0
    %1038 = vmatpush1.msra.mxu0 0.0
    %1039 = vmatprep.subr.mxu0 0.0
    %1040 = vmatpush1.msra.mxu0 0.0
    %1041 = vmatprep.subr.mxu0 0.0
    %1042 = vmatpush1.msra.mxu0 0.0
    %1043 = vmatprep.subr.mxu0 0.0
    %1044 = vmatpush1.msra.mxu0 0.0
    %1045 = vmatprep.subr.mxu0 0.0
    %1046 = vmatpush1.msra.mxu0 0.0
    %1047 = vmatprep.subr.mxu0 0.0
    %1048 = vmatpush1.msra.mxu0 0.0
    %1049 = vmatprep.subr.mxu0 0.0
    %1050 = vmatpush1.msra.mxu0 0.0
    %1051 = vmatprep.subr.mxu0 0.0
    %1052 = vmatpush1.msra.mxu0 0.0
    %1053 = vmatprep.subr.mxu0 0.0
    %1054 = vmatpush1.msra.mxu0 0.0
    %1055 = vmatprep.subr.mxu0 0.0
    %1056 = vmatpush1.msra.mxu0 0.0
    %1057 = vmatprep.subr.mxu0 0.0
    %1058 = vmatpush1.msra.mxu0 0.0
    %1059 = vmatprep.subr.mxu0 0.0
    %1060 = vmatpush1.msra.mxu0 0.0
    %1061 = vmatprep.subr.mxu0 0.0
    %1062 = vmatpush1.msra.mxu0 0.0
    %1063 = vmatprep.subr.mxu0 0.0
    %1064 = vmatpush1.msra.mxu0 0.0
    %1065 = vmatprep.subr.mxu0 0.0
    %1066 = vmatpush1.msra.mxu0 0.0
    %1067 = vmatprep.subr.mxu0 0.0
    %1068 = vmatpush1.msra.mxu0 0.0
    %1069 = vmatprep.subr.mxu0 0.0
    %1070 = vmatpush1.msra.mxu0 0.0
    %1071 = vmatprep.subr.mxu0 0.0
    %1072 = vmatpush1.msra.mxu0 0.0
    %1073 = vmatprep.subr.mxu0 0.0
    %1074 = vmatpush1.msra.mxu0 0.0
    %1075 = vmatprep.subr.mxu0 0.0
    %1076 = vmatpush1.msra.mxu0 0.0
    %1077 = vmatprep.subr.mxu0 0.0
    %1078 = vmatpush1.msra.mxu0 0.0
    %1079 = vmatprep.subr.mxu0 0.0
    %1080 = vmatpush1.msra.mxu0 0.0
    %1081 = vmatprep.subr.mxu0 0.0
    %1082 = vmatpush1.msra.mxu0 0.0
    %1083 = vmatprep.subr.mxu0 0.0
    %1084 = vmatpush1.msra.mxu0 0.0
    %1085 = vmatprep.subr.mxu0 0.0
    %1086 = vmatpush1.msra.mxu0 0.0
    %1087 = vmatprep.subr.mxu0 0.0
    %1088 = vmatpush1.msra.mxu0 0.0
    %1089 = vmatprep.subr.mxu0 0.0
    %1090 = vmatpush1.msra.mxu0 0.0
    %1091 = vmatprep.subr.mxu0 0.0
    %1092 = vmatpush1.msra.mxu0 0.0
    %1093 = vmatprep.subr.mxu0 0.0
    %1094 = vmatpush1.msra.mxu0 0.0
    %1095 = vmatprep.mubr.f32.mxu0 0.0
    %1096 = vmatmul.mubr.f32.gmra.mrb[0].mxu0 %v1029
    %v1097 = vpop.f32.mrb[0].mxu0
    %v1098 = vadd.f32 0.0, %v1097
    %v1099 = vpop.f32.mrb[0].mxu0
    %1100 = vdwg.mxu0
    %v1101 = vpack.c.bf16 %v944, %v636
    %v1102 = vpack.c.bf16 %v1098, %v790
    %v1103 = vld [vmem:[%s2] sm:$0xf]
    %v1104 = vld [vmem:[%s2 + $0xc] sm:$0xf]
    %v1105 = vld [vmem:[%s2 + $0x18] sm:$0xf]
    %v1106 = vld [vmem:[%s2 + $0x24] sm:$0xf]
    %v1107 = vld [vmem:[%s2 + $0x30] sm:$0xf]
    %v1108 = vld [vmem:[%s2 + $0x3c] sm:$0xf]
    %v1109 = vld [vmem:[%s2 + $0x48] sm:$0xf]
    %v1110 = vld [vmem:[%s2 + $0x54] sm:$0xf]
    %v1111 = vld [vmem:[%s2 + $0x60] sm:$0xf]
    %v1112 = vld [vmem:[%s2 + $0x6c] sm:$0xf]
    %v1113 = vld [vmem:[%s2 + $0x78] sm:$0xf]
    %v1114 = vld [vmem:[%s2 + $0x84] sm:$0xf]
    %v1115 = vld [vmem:[%s2 + $0x90] sm:$0xf]
    %v1116 = vld [vmem:[%s2 + $0x9c] sm:$0xf]
    %v1117 = vld [vmem:[%s2 + $0xa8] sm:$0xf]
    %v1118 = vld [vmem:[%s2 + $0xb4] sm:$0xf]
    %v1119 = vld [vmem:[%s2 + $0xc0] sm:$0xf]
    %v1120 = vld [vmem:[%s2 + $0xcc] sm:$0xf]
    %v1121 = vld [vmem:[%s2 + $0xd8] sm:$0xf]
    %v1122 = vld [vmem:[%s2 + $0xe4] sm:$0xf]
    %v1123 = vld [vmem:[%s2 + $0xf0] sm:$0xf]
    %v1124 = vld [vmem:[%s2 + $0xfc] sm:$0xf]
    %v1125 = vld [vmem:[%s2 + $0x108] sm:$0xf]
    %v1126 = vld [vmem:[%s2 + $0x114] sm:$0xf]
    %v1127 = vld [vmem:[%s2 + $0x120] sm:$0xf]
    %v1128 = vld [vmem:[%s2 + $0x12c] sm:$0xf]
    %v1129 = vld [vmem:[%s2 + $0x138] sm:$0xf]
    %v1130 = vld [vmem:[%s2 + $0x144] sm:$0xf]
    %v1131 = vld [vmem:[%s2 + $0x150] sm:$0xf]
    %v1132 = vld [vmem:[%s2 + $0x15c] sm:$0xf]
    %v1133 = vld [vmem:[%s2 + $0x168] sm:$0xf]
    %v1134 = vld [vmem:[%s2 + $0x174] sm:$0xf]
    %v1135 = vld [vmem:[%s5 + $0x1] ss:$0 sm:$0xff]
    %v1168 = vunpack.c.l.b16 %v1103
    %v1169 = vunpack.c.l.b16 %v1104
    %v1170 = vunpack.c.l.b16 %v1105
    %v1171 = vunpack.c.l.b16 %v1106
    %v1172 = vunpack.c.l.b16 %v1107
    %v1173 = vunpack.c.l.b16 %v1108
    %v1174 = vunpack.c.l.b16 %v1109
    %v1175 = vunpack.c.l.b16 %v1110
    %v1176 = vunpack.c.l.b16 %v1111
    %v1177 = vunpack.c.l.b16 %v1112
    %v1178 = vunpack.c.l.b16 %v1113
    %v1179 = vunpack.c.l.b16 %v1114
    %v1180 = vunpack.c.l.b16 %v1115
    %v1181 = vunpack.c.l.b16 %v1116
    %v1182 = vunpack.c.l.b16 %v1117
    %v1183 = vunpack.c.l.b16 %v1118
    %v1184 = vunpack.c.l.b16 %v1119
    %v1185 = vunpack.c.l.b16 %v1120
    %v1186 = vunpack.c.l.b16 %v1121
    %v1187 = vunpack.c.l.b16 %v1122
    %v1188 = vunpack.c.l.b16 %v1123
    %v1189 = vunpack.c.l.b16 %v1124
    %v1190 = vunpack.c.l.b16 %v1125
    %v1191 = vunpack.c.l.b16 %v1126
    %v1192 = vunpack.c.l.b16 %v1127
    %v1193 = vunpack.c.l.b16 %v1128
    %v1194 = vunpack.c.l.b16 %v1129
    %v1195 = vunpack.c.l.b16 %v1130
    %v1196 = vunpack.c.l.b16 %v1131
    %v1197 = vunpack.c.l.b16 %v1132
    %v1198 = vunpack.c.l.b16 %v1133
    %v1199 = vunpack.c.l.b16 %v1134
    %v1200 = vpack.c.b16 %v1169, %v1168
    %v1201 = vpack.c.b16 %v1171, %v1170
    %v1202 = vpack.c.b16 %v1173, %v1172
    %v1203 = vpack.c.b16 %v1175, %v1174
    %v1204 = vpack.c.b16 %v1177, %v1176
    %v1205 = vpack.c.b16 %v1179, %v1178
    %v1206 = vpack.c.b16 %v1181, %v1180
    %v1207 = vpack.c.b16 %v1183, %v1182
    %v1208 = vpack.c.b16 %v1185, %v1184
    %v1209 = vpack.c.b16 %v1187, %v1186
    %v1210 = vpack.c.b16 %v1189, %v1188
    %v1211 = vpack.c.b16 %v1191, %v1190
    %v1212 = vpack.c.b16 %v1193, %v1192
    %v1213 = vpack.c.b16 %v1195, %v1194
    %v1214 = vpack.c.b16 %v1197, %v1196
    %v1215 = vpack.c.b16 %v1199, %v1198
    %1232 = vmatprep.subr.bf16.mxu0 0
    %1233 = vmatpush1.bf16.msra.mxu0 %v1200
    %1234 = vmatprep.subr.bf16.mxu0 0
    %1235 = vmatpush1.bf16.msra.mxu0 %v1201
    %1236 = vmatprep.subr.bf16.mxu0 0
    %1237 = vmatpush1.bf16.msra.mxu0 %v1202
    %1238 = vmatprep.subr.bf16.mxu0 0
    %1239 = vmatpush1.bf16.msra.mxu0 %v1203
    %1240 = vmatprep.subr.bf16.mxu0 0
    %1241 = vmatpush1.bf16.msra.mxu0 %v1204
    %1242 = vmatprep.subr.bf16.mxu0 0
    %1243 = vmatpush1.bf16.msra.mxu0 %v1205
    %1244 = vmatprep.subr.bf16.mxu0 0
    %1245 = vmatpush1.bf16.msra.mxu0 %v1206
    %1246 = vmatprep.subr.bf16.mxu0 0
    %1247 = vmatpush1.bf16.msra.mxu0 %v1207
    %1248 = vmatprep.subr.bf16.mxu0 0
    %1249 = vmatpush1.bf16.msra.mxu0 %v1208
    %1250 = vmatprep.subr.bf16.mxu0 0
    %1251 = vmatpush1.bf16.msra.mxu0 %v1209
    %1252 = vmatprep.subr.bf16.mxu0 0
    %1253 = vmatpush1.bf16.msra.mxu0 %v1210
    %1254 = vmatprep.subr.bf16.mxu0 0
    %1255 = vmatpush1.bf16.msra.mxu0 %v1211
    %1256 = vmatprep.subr.bf16.mxu0 0
    %1257 = vmatpush1.bf16.msra.mxu0 %v1212
    %1258 = vmatprep.subr.bf16.mxu0 0
    %1259 = vmatpush1.bf16.msra.mxu0 %v1213
    %1260 = vmatprep.subr.bf16.mxu0 0
    %1261 = vmatpush1.bf16.msra.mxu0 %v1214
    %1262 = vmatprep.subr.bf16.mxu0 0
    %1263 = vmatpush1.bf16.msra.mxu0 %v1215
    %1264 = vmatprep.mubr.bf16.mxu0 %v1102
    %1265 = vmatmul.mubr.bf16.gmra.mrb[0].mxu0 %v1101
    %v1266 = vpop.f32.mrb[0].mxu0
    %v1267 = vadd.f32 %v1135, %v1266
    %v1268 = vpop.f32.mrb[0].mxu0
    %v1269 = vpop.f32.mrb[0].mxu0
    %v1270 = vadd.f32 %v1135, %v1269
    %v1271 = vpop.f32.mrb[0].mxu0
    %1272 = vdwg.mxu0
    %v1273 = vadd.f32 %v30, %v1267
    %v1274 = vadd.f32 %v31, %v1270
    %1275 = vadd.xlane.f32.xlu0 %v1273
    %v1276 = vpop.xlane.xlu0 %1275
    %1277 = vadd.xlane.f32.xlu0 %v1274
    %v1278 = vpop.xlane.xlu0 %1277
    %v1279 = vmul.f32 %v1276, 0.015151516
    %v1280 = vmul.f32 %v1278, 0.015151516
    %v1281 = vsub.f32 %v1273, %v1279
    %v1282 = vsub.f32 %v1274, %v1280
    %v1283 = vmul.f32 %v1281, %v29
    %v1284 = vmul.f32 %v1282, %v29
    %v1285 = vmul.f32 %v1283, %v1283
    %v1286 = vmul.f32 %v1284, %v1284
    %1287 = vadd.xlane.f32.xlu0 %v1285
    %v1288 = vpop.xlane.xlu0 %1287
    %1289 = vadd.xlane.f32.xlu0 %v1286
    %v1290 = vpop.xlane.xlu0 %1289
    %v1291 = vmul.f32 %v1288, 0.015151516
    %v1292 = vmul.f32 %v1290, 0.015151516
    %v1293 = vadd.f32 %v1291, 1e-05
    %v1294 = vadd.f32 %v1292, 1e-05
    %v1295 = vrsqrt.pop %v1293
    %v1296 = vrsqrt.pop %v1294
    %v1297 = vmul.f32 %v1283, %v1295
    %v1298 = vmul.f32 %v1284, %v1296
    %v1299 = vld [vmem:[%s5 + $0x2] ss:$0 sm:$0xff]
    %v1300 = vmul.f32 %v1297, %v1299
    %v1301 = vmul.f32 %v1298, %v1299
    %v1302 = vld [vmem:[%s5 + $0x3] ss:$0 sm:$0xff]
    %v1303 = vadd.f32 %v1300, %v1302
    %v1304 = vadd.f32 %v1301, %v1302
    %v1305 = vpack.c.bf16 %v1304, %v1303
    %v1306 = vld [vmem:[%s3] sm:$0xff]
    %v1307 = vld [vmem:[%s3 + $0x8] sm:$0xff]
    %v1308 = vld [vmem:[%s3 + $0x10] sm:$0xff]
    %v1309 = vld [vmem:[%s3 + $0x18] sm:$0xff]
    %v1310 = vld [vmem:[%s3 + $0x20] sm:$0xff]
    %v1311 = vld [vmem:[%s3 + $0x28] sm:$0xff]
    %v1312 = vld [vmem:[%s3 + $0x30] sm:$0xff]
    %v1313 = vld [vmem:[%s3 + $0x38] sm:$0xff]
    %v1314 = vld [vmem:[%s3 + $0x80] sm:$0xff]
    %v1315 = vld [vmem:[%s3 + $0x88] sm:$0xff]
    %v1316 = vld [vmem:[%s3 + $0x90] sm:$0xff]
    %v1317 = vld [vmem:[%s3 + $0x98] sm:$0xff]
    %v1318 = vld [vmem:[%s3 + $0xa0] sm:$0xff]
    %v1319 = vld [vmem:[%s3 + $0xa8] sm:$0xff]
    %v1320 = vld [vmem:[%s3 + $0xb0] sm:$0xff]
    %v1321 = vld [vmem:[%s3 + $0xb8] sm:$0xff]
    %v1322 = vld [vmem:[%s3 + $0x100] sm:$0xff]
    %v1323 = vld [vmem:[%s3 + $0x108] sm:$0xff]
    %v1324 = vld [vmem:[%s3 + $0x110] sm:$0xff]
    %v1325 = vld [vmem:[%s3 + $0x118] sm:$0xff]
    %v1326 = vld [vmem:[%s3 + $0x120] sm:$0xff]
    %v1327 = vld [vmem:[%s3 + $0x128] sm:$0xff]
    %v1328 = vld [vmem:[%s3 + $0x130] sm:$0xff]
    %v1329 = vld [vmem:[%s3 + $0x138] sm:$0xff]
    %v1330 = vld [vmem:[%s3 + $0x180] sm:$0xff]
    %v1331 = vld [vmem:[%s3 + $0x188] sm:$0xff]
    %v1332 = vld [vmem:[%s3 + $0x190] sm:$0xff]
    %v1333 = vld [vmem:[%s3 + $0x198] sm:$0xff]
    %v1334 = vld [vmem:[%s3 + $0x1a0] sm:$0xff]
    %v1335 = vld [vmem:[%s3 + $0x1a8] sm:$0xff]
    %v1336 = vld [vmem:[%s3 + $0x1b0] sm:$0xff]
    %v1337 = vld [vmem:[%s3 + $0x1b8] sm:$0xff]
    %v1338 = vld [vmem:[%s3 + $0x200] sm:$0xff]
    %v1339 = vld [vmem:[%s3 + $0x208] sm:$0xff]
    %v1340 = vld [vmem:[%s3 + $0x210] sm:$0xff]
    %v1341 = vld [vmem:[%s3 + $0x218] sm:$0xff]
    %v1342 = vld [vmem:[%s3 + $0x220] sm:$0xff]
    %v1343 = vld [vmem:[%s3 + $0x228] sm:$0xff]
    %v1344 = vld [vmem:[%s3 + $0x230] sm:$0xff]
    %v1345 = vld [vmem:[%s3 + $0x238] sm:$0xff]
    %v1346 = vld [vmem:[%s3 + $0x280] sm:$0xff]
    %v1347 = vld [vmem:[%s3 + $0x288] sm:$0xff]
    %v1348 = vld [vmem:[%s3 + $0x290] sm:$0xff]
    %v1349 = vld [vmem:[%s3 + $0x298] sm:$0xff]
    %v1350 = vld [vmem:[%s3 + $0x2a0] sm:$0xff]
    %v1351 = vld [vmem:[%s3 + $0x2a8] sm:$0xff]
    %v1352 = vld [vmem:[%s3 + $0x2b0] sm:$0xff]
    %v1353 = vld [vmem:[%s3 + $0x2b8] sm:$0xff]
    %v1354 = vld [vmem:[%s3 + $0x300] sm:$0xff]
    %v1355 = vld [vmem:[%s3 + $0x308] sm:$0xff]
    %v1356 = vld [vmem:[%s3 + $0x310] sm:$0xff]
    %v1357 = vld [vmem:[%s3 + $0x318] sm:$0xff]
    %v1358 = vld [vmem:[%s3 + $0x320] sm:$0xff]
    %v1359 = vld [vmem:[%s3 + $0x328] sm:$0xff]
    %v1360 = vld [vmem:[%s3 + $0x330] sm:$0xff]
    %v1361 = vld [vmem:[%s3 + $0x338] sm:$0xff]
    %v1362 = vld [vmem:[%s3 + $0x380] sm:$0xff]
    %v1363 = vld [vmem:[%s3 + $0x388] sm:$0xff]
    %v1364 = vld [vmem:[%s3 + $0x390] sm:$0xff]
    %v1365 = vld [vmem:[%s3 + $0x398] sm:$0xff]
    %v1366 = vld [vmem:[%s3 + $0x3a0] sm:$0xff]
    %v1367 = vld [vmem:[%s3 + $0x3a8] sm:$0xff]
    %v1368 = vld [vmem:[%s3 + $0x3b0] sm:$0xff]
    %v1369 = vld [vmem:[%s3 + $0x3b8] sm:$0xff]
    %v1370 = vld [vmem:[%s3 + $0x400] sm:$0xff]
    %v1371 = vld [vmem:[%s3 + $0x408] sm:$0xff]
    %v1372 = vld [vmem:[%s3 + $0x410] sm:$0xff]
    %v1373 = vld [vmem:[%s3 + $0x418] sm:$0xff]
    %v1374 = vld [vmem:[%s3 + $0x420] sm:$0xff]
    %v1375 = vld [vmem:[%s3 + $0x428] sm:$0xff]
    %v1376 = vld [vmem:[%s3 + $0x430] sm:$0xff]
    %v1377 = vld [vmem:[%s3 + $0x438] sm:$0xff]
    %v1378 = vld [vmem:[%s3 + $0x480] sm:$0xff]
    %v1379 = vld [vmem:[%s3 + $0x488] sm:$0xff]
    %v1380 = vld [vmem:[%s3 + $0x490] sm:$0xff]
    %v1381 = vld [vmem:[%s3 + $0x498] sm:$0xff]
    %v1382 = vld [vmem:[%s3 + $0x4a0] sm:$0xff]
    %v1383 = vld [vmem:[%s3 + $0x4a8] sm:$0xff]
    %v1384 = vld [vmem:[%s3 + $0x4b0] sm:$0xff]
    %v1385 = vld [vmem:[%s3 + $0x4b8] sm:$0xff]
    %v1386 = vld [vmem:[%s3 + $0x500] sm:$0xff]
    %v1387 = vld [vmem:[%s3 + $0x508] sm:$0xff]
    %v1388 = vld [vmem:[%s3 + $0x510] sm:$0xff]
    %v1389 = vld [vmem:[%s3 + $0x518] sm:$0xff]
    %v1390 = vld [vmem:[%s3 + $0x520] sm:$0xff]
    %v1391 = vld [vmem:[%s3 + $0x528] sm:$0xff]
    %v1392 = vld [vmem:[%s3 + $0x530] sm:$0xff]
    %v1393 = vld [vmem:[%s3 + $0x538] sm:$0xff]
    %v1394 = vld [vmem:[%s3 + $0x580] sm:$0xff]
    %v1395 = vld [vmem:[%s3 + $0x588] sm:$0xff]
    %v1396 = vld [vmem:[%s3 + $0x590] sm:$0xff]
    %v1397 = vld [vmem:[%s3 + $0x598] sm:$0xff]
    %v1398 = vld [vmem:[%s3 + $0x5a0] sm:$0xff]
    %v1399 = vld [vmem:[%s3 + $0x5a8] sm:$0xff]
    %v1400 = vld [vmem:[%s3 + $0x5b0] sm:$0xff]
    %v1401 = vld [vmem:[%s3 + $0x5b8] sm:$0xff]
    %v1402 = vld [vmem:[%s3 + $0x600] sm:$0xff]
    %v1403 = vld [vmem:[%s3 + $0x608] sm:$0xff]
    %v1404 = vld [vmem:[%s3 + $0x610] sm:$0xff]
    %v1405 = vld [vmem:[%s3 + $0x618] sm:$0xff]
    %v1406 = vld [vmem:[%s3 + $0x620] sm:$0xff]
    %v1407 = vld [vmem:[%s3 + $0x628] sm:$0xff]
    %v1408 = vld [vmem:[%s3 + $0x630] sm:$0xff]
    %v1409 = vld [vmem:[%s3 + $0x638] sm:$0xff]
    %v1410 = vld [vmem:[%s3 + $0x680] sm:$0xff]
    %v1411 = vld [vmem:[%s3 + $0x688] sm:$0xff]
    %v1412 = vld [vmem:[%s3 + $0x690] sm:$0xff]
    %v1413 = vld [vmem:[%s3 + $0x698] sm:$0xff]
    %v1414 = vld [vmem:[%s3 + $0x6a0] sm:$0xff]
    %v1415 = vld [vmem:[%s3 + $0x6a8] sm:$0xff]
    %v1416 = vld [vmem:[%s3 + $0x6b0] sm:$0xff]
    %v1417 = vld [vmem:[%s3 + $0x6b8] sm:$0xff]
    %v1418 = vld [vmem:[%s3 + $0x700] sm:$0xff]
    %v1419 = vld [vmem:[%s3 + $0x708] sm:$0xff]
    %v1420 = vld [vmem:[%s3 + $0x710] sm:$0xff]
    %v1421 = vld [vmem:[%s3 + $0x718] sm:$0xff]
    %v1422 = vld [vmem:[%s3 + $0x720] sm:$0xff]
    %v1423 = vld [vmem:[%s3 + $0x728] sm:$0xff]
    %v1424 = vld [vmem:[%s3 + $0x730] sm:$0xff]
    %v1425 = vld [vmem:[%s3 + $0x738] sm:$0xff]
    %v1426 = vld [vmem:[%s3 + $0x780] sm:$0xff]
    %v1427 = vld [vmem:[%s3 + $0x788] sm:$0xff]
    %v1428 = vld [vmem:[%s3 + $0x790] sm:$0xff]
    %v1429 = vld [vmem:[%s3 + $0x798] sm:$0xff]
    %v1430 = vld [vmem:[%s3 + $0x7a0] sm:$0xff]
    %v1431 = vld [vmem:[%s3 + $0x7a8] sm:$0xff]
    %v1432 = vld [vmem:[%s3 + $0x7b0] sm:$0xff]
    %v1433 = vld [vmem:[%s3 + $0x7b8] sm:$0xff]
    %s1434 = scalar_lea.vmem %s5, 4
    %v1435 = vld [vmem:[%s1434] ss:$8 sm:$0xf]
    %v1436 = vld [vmem:[%s1434] ss:$8 sm:$0xf0]
    %v1437 = vor.u32 %v1435, %v1436
    %s1438 = scalar_lea.vmem %s5, 68
    %v1439 = vld [vmem:[%s1438] ss:$8 sm:$0xf]
    %v1440 = vld [vmem:[%s1438] ss:$8 sm:$0xf0]
    %v1441 = vor.u32 %v1439, %v1440
    %v1444 = vlaneseq
    %v1445 = vshrl.u32 %v1444, 7
    %v1446 = vsub.s32 0, %v1445
    %v1447 = vrot.slane %v1437, %v1446
    %v1448 = vlaneseq
    %v1449 = vshrl.u32 %v1448, 7
    %v1450 = vsub.s32 1, %v1449
    %v1451 = vrot.slane %v1437, %v1450
    %v1452 = vlaneseq
    %v1453 = vshrl.u32 %v1452, 7
    %v1454 = vsub.s32 2, %v1453
    %v1455 = vrot.slane %v1437, %v1454
    %v1456 = vlaneseq
    %v1457 = vshrl.u32 %v1456, 7
    %v1458 = vsub.s32 3, %v1457
    %v1459 = vrot.slane %v1437, %v1458
    %v1460 = vlaneseq
    %v1461 = vshrl.u32 %v1460, 7
    %v1462 = vsub.s32 4, %v1461
    %v1463 = vrot.slane %v1437, %v1462
    %v1464 = vlaneseq
    %v1465 = vshrl.u32 %v1464, 7
    %v1466 = vsub.s32 5, %v1465
    %v1467 = vrot.slane %v1437, %v1466
    %v1468 = vlaneseq
    %v1469 = vshrl.u32 %v1468, 7
    %v1470 = vsub.s32 6, %v1469
    %v1471 = vrot.slane %v1437, %v1470
    %v1472 = vlaneseq
    %v1473 = vshrl.u32 %v1472, 7
    %v1474 = vsub.s32 7, %v1473
    %v1475 = vrot.slane %v1437, %v1474
    %v1476 = vlaneseq
    %v1477 = vshrl.u32 %v1476, 7
    %v1478 = vsub.s32 0, %v1477
    %v1479 = vrot.slane %v1441, %v1478
    %v1480 = vlaneseq
    %v1481 = vshrl.u32 %v1480, 7
    %v1482 = vsub.s32 1, %v1481
    %v1483 = vrot.slane %v1441, %v1482
    %v1484 = vlaneseq
    %v1485 = vshrl.u32 %v1484, 7
    %v1486 = vsub.s32 2, %v1485
    %v1487 = vrot.slane %v1441, %v1486
    %v1488 = vlaneseq
    %v1489 = vshrl.u32 %v1488, 7
    %v1490 = vsub.s32 3, %v1489
    %v1491 = vrot.slane %v1441, %v1490
    %v1492 = vlaneseq
    %v1493 = vshrl.u32 %v1492, 7
    %v1494 = vsub.s32 4, %v1493
    %v1495 = vrot.slane %v1441, %v1494
    %v1496 = vlaneseq
    %v1497 = vshrl.u32 %v1496, 7
    %v1498 = vsub.s32 5, %v1497
    %v1499 = vrot.slane %v1441, %v1498
    %v1500 = vlaneseq
    %v1501 = vshrl.u32 %v1500, 7
    %v1502 = vsub.s32 6, %v1501
    %v1503 = vrot.slane %v1441, %v1502
    %v1504 = vlaneseq
    %v1505 = vshrl.u32 %v1504, 7
    %v1506 = vsub.s32 7, %v1505
    %v1507 = vrot.slane %v1441, %v1506
    %v1652 = vunpack.c.l.b16 %v1306
    %v1653 = vunpack.c.h.b16 %v1306
    %v1654 = vunpack.c.l.b16 %v1307
    %v1655 = vunpack.c.h.b16 %v1307
    %v1656 = vunpack.c.l.b16 %v1308
    %v1657 = vunpack.c.h.b16 %v1308
    %v1658 = vunpack.c.l.b16 %v1309
    %v1659 = vunpack.c.h.b16 %v1309
    %v1660 = vunpack.c.l.b16 %v1310
    %v1661 = vunpack.c.h.b16 %v1310
    %v1662 = vunpack.c.l.b16 %v1311
    %v1663 = vunpack.c.h.b16 %v1311
    %v1664 = vunpack.c.l.b16 %v1312
    %v1665 = vunpack.c.h.b16 %v1312
    %v1666 = vunpack.c.l.b16 %v1313
    %v1667 = vunpack.c.h.b16 %v1313
    %v1668 = vunpack.c.l.b16 %v1314
    %v1669 = vunpack.c.h.b16 %v1314
    %v1670 = vunpack.c.l.b16 %v1315
    %v1671 = vunpack.c.h.b16 %v1315
    %v1672 = vunpack.c.l.b16 %v1316
    %v1673 = vunpack.c.h.b16 %v1316
    %v1674 = vunpack.c.l.b16 %v1317
    %v1675 = vunpack.c.h.b16 %v1317
    %v1676 = vunpack.c.l.b16 %v1318
    %v1677 = vunpack.c.h.b16 %v1318
    %v1678 = vunpack.c.l.b16 %v1319
    %v1679 = vunpack.c.h.b16 %v1319
    %v1680 = vunpack.c.l.b16 %v1320
    %v1681 = vunpack.c.h.b16 %v1320
    %v1682 = vunpack.c.l.b16 %v1321
    %v1683 = vunpack.c.h.b16 %v1321
    %v1684 = vunpack.c.l.b16 %v1322
    %v1685 = vunpack.c.h.b16 %v1322
    %v1686 = vunpack.c.l.b16 %v1323
    %v1687 = vunpack.c.h.b16 %v1323
    %v1688 = vunpack.c.l.b16 %v1324
    %v1689 = vunpack.c.h.b16 %v1324
    %v1690 = vunpack.c.l.b16 %v1325
    %v1691 = vunpack.c.h.b16 %v1325
    %v1692 = vunpack.c.l.b16 %v1326
    %v1693 = vunpack.c.h.b16 %v1326
    %v1694 = vunpack.c.l.b16 %v1327
    %v1695 = vunpack.c.h.b16 %v1327
    %v1696 = vunpack.c.l.b16 %v1328
    %v1697 = vunpack.c.h.b16 %v1328
    %v1698 = vunpack.c.l.b16 %v1329
    %v1699 = vunpack.c.h.b16 %v1329
    %v1700 = vunpack.c.l.b16 %v1330
    %v1701 = vunpack.c.h.b16 %v1330
    %v1702 = vunpack.c.l.b16 %v1331
    %v1703 = vunpack.c.h.b16 %v1331
    %v1704 = vunpack.c.l.b16 %v1332
    %v1705 = vunpack.c.h.b16 %v1332
    %v1706 = vunpack.c.l.b16 %v1333
    %v1707 = vunpack.c.h.b16 %v1333
    %v1708 = vunpack.c.l.b16 %v1334
    %v1709 = vunpack.c.h.b16 %v1334
    %v1710 = vunpack.c.l.b16 %v1335
    %v1711 = vunpack.c.h.b16 %v1335
    %v1712 = vunpack.c.l.b16 %v1336
    %v1713 = vunpack.c.h.b16 %v1336
    %v1714 = vunpack.c.l.b16 %v1337
    %v1715 = vunpack.c.h.b16 %v1337
    %v1716 = vunpack.c.l.b16 %v1338
    %v1717 = vunpack.c.h.b16 %v1338
    %v1718 = vunpack.c.l.b16 %v1339
    %v1719 = vunpack.c.h.b16 %v1339
    %v1720 = vunpack.c.l.b16 %v1340
    %v1721 = vunpack.c.h.b16 %v1340
    %v1722 = vunpack.c.l.b16 %v1341
    %v1723 = vunpack.c.h.b16 %v1341
    %v1724 = vunpack.c.l.b16 %v1342
    %v1725 = vunpack.c.h.b16 %v1342
    %v1726 = vunpack.c.l.b16 %v1343
    %v1727 = vunpack.c.h.b16 %v1343
    %v1728 = vunpack.c.l.b16 %v1344
    %v1729 = vunpack.c.h.b16 %v1344
    %v1730 = vunpack.c.l.b16 %v1345
    %v1731 = vunpack.c.h.b16 %v1345
    %v1732 = vunpack.c.l.b16 %v1346
    %v1733 = vunpack.c.h.b16 %v1346
    %v1734 = vunpack.c.l.b16 %v1347
    %v1735 = vunpack.c.h.b16 %v1347
    %v1736 = vunpack.c.l.b16 %v1348
    %v1737 = vunpack.c.h.b16 %v1348
    %v1738 = vunpack.c.l.b16 %v1349
    %v1739 = vunpack.c.h.b16 %v1349
    %v1740 = vunpack.c.l.b16 %v1350
    %v1741 = vunpack.c.h.b16 %v1350
    %v1742 = vunpack.c.l.b16 %v1351
    %v1743 = vunpack.c.h.b16 %v1351
    %v1744 = vunpack.c.l.b16 %v1352
    %v1745 = vunpack.c.h.b16 %v1352
    %v1746 = vunpack.c.l.b16 %v1353
    %v1747 = vunpack.c.h.b16 %v1353
    %v1748 = vunpack.c.l.b16 %v1354
    %v1749 = vunpack.c.h.b16 %v1354
    %v1750 = vunpack.c.l.b16 %v1355
    %v1751 = vunpack.c.h.b16 %v1355
    %v1752 = vunpack.c.l.b16 %v1356
    %v1753 = vunpack.c.h.b16 %v1356
    %v1754 = vunpack.c.l.b16 %v1357
    %v1755 = vunpack.c.h.b16 %v1357
    %v1756 = vunpack.c.l.b16 %v1358
    %v1757 = vunpack.c.h.b16 %v1358
    %v1758 = vunpack.c.l.b16 %v1359
    %v1759 = vunpack.c.h.b16 %v1359
    %v1760 = vunpack.c.l.b16 %v1360
    %v1761 = vunpack.c.h.b16 %v1360
    %v1762 = vunpack.c.l.b16 %v1361
    %v1763 = vunpack.c.h.b16 %v1361
    %v1764 = vunpack.c.l.b16 %v1362
    %v1765 = vunpack.c.h.b16 %v1362
    %v1766 = vunpack.c.l.b16 %v1363
    %v1767 = vunpack.c.h.b16 %v1363
    %v1768 = vunpack.c.l.b16 %v1364
    %v1769 = vunpack.c.h.b16 %v1364
    %v1770 = vunpack.c.l.b16 %v1365
    %v1771 = vunpack.c.h.b16 %v1365
    %v1772 = vunpack.c.l.b16 %v1366
    %v1773 = vunpack.c.h.b16 %v1366
    %v1774 = vunpack.c.l.b16 %v1367
    %v1775 = vunpack.c.h.b16 %v1367
    %v1776 = vunpack.c.l.b16 %v1368
    %v1777 = vunpack.c.h.b16 %v1368
    %v1778 = vunpack.c.l.b16 %v1369
    %v1779 = vunpack.c.h.b16 %v1369
    %v1780 = vunpack.c.l.b16 %v1370
    %v1781 = vunpack.c.h.b16 %v1370
    %v1782 = vunpack.c.l.b16 %v1371
    %v1783 = vunpack.c.h.b16 %v1371
    %v1784 = vunpack.c.l.b16 %v1372
    %v1785 = vunpack.c.h.b16 %v1372
    %v1786 = vunpack.c.l.b16 %v1373
    %v1787 = vunpack.c.h.b16 %v1373
    %v1788 = vunpack.c.l.b16 %v1374
    %v1789 = vunpack.c.h.b16 %v1374
    %v1790 = vunpack.c.l.b16 %v1375
    %v1791 = vunpack.c.h.b16 %v1375
    %v1792 = vunpack.c.l.b16 %v1376
    %v1793 = vunpack.c.h.b16 %v1376
    %v1794 = vunpack.c.l.b16 %v1377
    %v1795 = vunpack.c.h.b16 %v1377
    %v1796 = vunpack.c.l.b16 %v1378
    %v1797 = vunpack.c.h.b16 %v1378
    %v1798 = vunpack.c.l.b16 %v1379
    %v1799 = vunpack.c.h.b16 %v1379
    %v1800 = vunpack.c.l.b16 %v1380
    %v1801 = vunpack.c.h.b16 %v1380
    %v1802 = vunpack.c.l.b16 %v1381
    %v1803 = vunpack.c.h.b16 %v1381
    %v1804 = vunpack.c.l.b16 %v1382
    %v1805 = vunpack.c.h.b16 %v1382
    %v1806 = vunpack.c.l.b16 %v1383
    %v1807 = vunpack.c.h.b16 %v1383
    %v1808 = vunpack.c.l.b16 %v1384
    %v1809 = vunpack.c.h.b16 %v1384
    %v1810 = vunpack.c.l.b16 %v1385
    %v1811 = vunpack.c.h.b16 %v1385
    %v1812 = vunpack.c.l.b16 %v1386
    %v1813 = vunpack.c.h.b16 %v1386
    %v1814 = vunpack.c.l.b16 %v1387
    %v1815 = vunpack.c.h.b16 %v1387
    %v1816 = vunpack.c.l.b16 %v1388
    %v1817 = vunpack.c.h.b16 %v1388
    %v1818 = vunpack.c.l.b16 %v1389
    %v1819 = vunpack.c.h.b16 %v1389
    %v1820 = vunpack.c.l.b16 %v1390
    %v1821 = vunpack.c.h.b16 %v1390
    %v1822 = vunpack.c.l.b16 %v1391
    %v1823 = vunpack.c.h.b16 %v1391
    %v1824 = vunpack.c.l.b16 %v1392
    %v1825 = vunpack.c.h.b16 %v1392
    %v1826 = vunpack.c.l.b16 %v1393
    %v1827 = vunpack.c.h.b16 %v1393
    %v1828 = vunpack.c.l.b16 %v1394
    %v1829 = vunpack.c.h.b16 %v1394
    %v1830 = vunpack.c.l.b16 %v1395
    %v1831 = vunpack.c.h.b16 %v1395
    %v1832 = vunpack.c.l.b16 %v1396
    %v1833 = vunpack.c.h.b16 %v1396
    %v1834 = vunpack.c.l.b16 %v1397
    %v1835 = vunpack.c.h.b16 %v1397
    %v1836 = vunpack.c.l.b16 %v1398
    %v1837 = vunpack.c.h.b16 %v1398
    %v1838 = vunpack.c.l.b16 %v1399
    %v1839 = vunpack.c.h.b16 %v1399
    %v1840 = vunpack.c.l.b16 %v1400
    %v1841 = vunpack.c.h.b16 %v1400
    %v1842 = vunpack.c.l.b16 %v1401
    %v1843 = vunpack.c.h.b16 %v1401
    %v1844 = vunpack.c.l.b16 %v1402
    %v1845 = vunpack.c.h.b16 %v1402
    %v1846 = vunpack.c.l.b16 %v1403
    %v1847 = vunpack.c.h.b16 %v1403
    %v1848 = vunpack.c.l.b16 %v1404
    %v1849 = vunpack.c.h.b16 %v1404
    %v1850 = vunpack.c.l.b16 %v1405
    %v1851 = vunpack.c.h.b16 %v1405
    %v1852 = vunpack.c.l.b16 %v1406
    %v1853 = vunpack.c.h.b16 %v1406
    %v1854 = vunpack.c.l.b16 %v1407
    %v1855 = vunpack.c.h.b16 %v1407
    %v1856 = vunpack.c.l.b16 %v1408
    %v1857 = vunpack.c.h.b16 %v1408
    %v1858 = vunpack.c.l.b16 %v1409
    %v1859 = vunpack.c.h.b16 %v1409
    %v1860 = vunpack.c.l.b16 %v1410
    %v1861 = vunpack.c.h.b16 %v1410
    %v1862 = vunpack.c.l.b16 %v1411
    %v1863 = vunpack.c.h.b16 %v1411
    %v1864 = vunpack.c.l.b16 %v1412
    %v1865 = vunpack.c.h.b16 %v1412
    %v1866 = vunpack.c.l.b16 %v1413
    %v1867 = vunpack.c.h.b16 %v1413
    %v1868 = vunpack.c.l.b16 %v1414
    %v1869 = vunpack.c.h.b16 %v1414
    %v1870 = vunpack.c.l.b16 %v1415
    %v1871 = vunpack.c.h.b16 %v1415
    %v1872 = vunpack.c.l.b16 %v1416
    %v1873 = vunpack.c.h.b16 %v1416
    %v1874 = vunpack.c.l.b16 %v1417
    %v1875 = vunpack.c.h.b16 %v1417
    %v1876 = vunpack.c.l.b16 %v1418
    %v1877 = vunpack.c.h.b16 %v1418
    %v1878 = vunpack.c.l.b16 %v1419
    %v1879 = vunpack.c.h.b16 %v1419
    %v1880 = vunpack.c.l.b16 %v1420
    %v1881 = vunpack.c.h.b16 %v1420
    %v1882 = vunpack.c.l.b16 %v1421
    %v1883 = vunpack.c.h.b16 %v1421
    %v1884 = vunpack.c.l.b16 %v1422
    %v1885 = vunpack.c.h.b16 %v1422
    %v1886 = vunpack.c.l.b16 %v1423
    %v1887 = vunpack.c.h.b16 %v1423
    %v1888 = vunpack.c.l.b16 %v1424
    %v1889 = vunpack.c.h.b16 %v1424
    %v1890 = vunpack.c.l.b16 %v1425
    %v1891 = vunpack.c.h.b16 %v1425
    %v1892 = vunpack.c.l.b16 %v1426
    %v1893 = vunpack.c.h.b16 %v1426
    %v1894 = vunpack.c.l.b16 %v1427
    %v1895 = vunpack.c.h.b16 %v1427
    %v1896 = vunpack.c.l.b16 %v1428
    %v1897 = vunpack.c.h.b16 %v1428
    %v1898 = vunpack.c.l.b16 %v1429
    %v1899 = vunpack.c.h.b16 %v1429
    %v1900 = vunpack.c.l.b16 %v1430
    %v1901 = vunpack.c.h.b16 %v1430
    %v1902 = vunpack.c.l.b16 %v1431
    %v1903 = vunpack.c.h.b16 %v1431
    %v1904 = vunpack.c.l.b16 %v1432
    %v1905 = vunpack.c.h.b16 %v1432
    %v1906 = vunpack.c.l.b16 %v1433
    %v1907 = vunpack.c.h.b16 %v1433
    %v1908 = vpack.c.b16 %v1668, %v1652
    %v1909 = vpack.c.b16 %v1669, %v1653
    %v1910 = vpack.c.b16 %v1670, %v1654
    %v1911 = vpack.c.b16 %v1671, %v1655
    %v1912 = vpack.c.b16 %v1672, %v1656
    %v1913 = vpack.c.b16 %v1673, %v1657
    %v1914 = vpack.c.b16 %v1674, %v1658
    %v1915 = vpack.c.b16 %v1675, %v1659
    %v1916 = vpack.c.b16 %v1676, %v1660
    %v1917 = vpack.c.b16 %v1677, %v1661
    %v1918 = vpack.c.b16 %v1678, %v1662
    %v1919 = vpack.c.b16 %v1679, %v1663
    %v1920 = vpack.c.b16 %v1680, %v1664
    %v1921 = vpack.c.b16 %v1681, %v1665
    %v1922 = vpack.c.b16 %v1682, %v1666
    %v1923 = vpack.c.b16 %v1683, %v1667
    %v1924 = vpack.c.b16 %v1700, %v1684
    %v1925 = vpack.c.b16 %v1701, %v1685
    %v1926 = vpack.c.b16 %v1702, %v1686
    %v1927 = vpack.c.b16 %v1703, %v1687
    %v1928 = vpack.c.b16 %v1704, %v1688
    %v1929 = vpack.c.b16 %v1705, %v1689
    %v1930 = vpack.c.b16 %v1706, %v1690
    %v1931 = vpack.c.b16 %v1707, %v1691
    %v1932 = vpack.c.b16 %v1708, %v1692
    %v1933 = vpack.c.b16 %v1709, %v1693
    %v1934 = vpack.c.b16 %v1710, %v1694
    %v1935 = vpack.c.b16 %v1711, %v1695
    %v1936 = vpack.c.b16 %v1712, %v1696
    %v1937 = vpack.c.b16 %v1713, %v1697
    %v1938 = vpack.c.b16 %v1714, %v1698
    %v1939 = vpack.c.b16 %v1715, %v1699
    %v1940 = vpack.c.b16 %v1732, %v1716
    %v1941 = vpack.c.b16 %v1733, %v1717
    %v1942 = vpack.c.b16 %v1734, %v1718
    %v1943 = vpack.c.b16 %v1735, %v1719
    %v1944 = vpack.c.b16 %v1736, %v1720
    %v1945 = vpack.c.b16 %v1737, %v1721
    %v1946 = vpack.c.b16 %v1738, %v1722
    %v1947 = vpack.c.b16 %v1739, %v1723
    %v1948 = vpack.c.b16 %v1740, %v1724
    %v1949 = vpack.c.b16 %v1741, %v1725
    %v1950 = vpack.c.b16 %v1742, %v1726
    %v1951 = vpack.c.b16 %v1743, %v1727
    %v1952 = vpack.c.b16 %v1744, %v1728
    %v1953 = vpack.c.b16 %v1745, %v1729
    %v1954 = vpack.c.b16 %v1746, %v1730
    %v1955 = vpack.c.b16 %v1747, %v1731
    %v1956 = vpack.c.b16 %v1764, %v1748
    %v1957 = vpack.c.b16 %v1765, %v1749
    %v1958 = vpack.c.b16 %v1766, %v1750
    %v1959 = vpack.c.b16 %v1767, %v1751
    %v1960 = vpack.c.b16 %v1768, %v1752
    %v1961 = vpack.c.b16 %v1769, %v1753
    %v1962 = vpack.c.b16 %v1770, %v1754
    %v1963 = vpack.c.b16 %v1771, %v1755
    %v1964 = vpack.c.b16 %v1772, %v1756
    %v1965 = vpack.c.b16 %v1773, %v1757
    %v1966 = vpack.c.b16 %v1774, %v1758
    %v1967 = vpack.c.b16 %v1775, %v1759
    %v1968 = vpack.c.b16 %v1776, %v1760
    %v1969 = vpack.c.b16 %v1777, %v1761
    %v1970 = vpack.c.b16 %v1778, %v1762
    %v1971 = vpack.c.b16 %v1779, %v1763
    %v1972 = vpack.c.b16 %v1796, %v1780
    %v1973 = vpack.c.b16 %v1797, %v1781
    %v1974 = vpack.c.b16 %v1798, %v1782
    %v1975 = vpack.c.b16 %v1799, %v1783
    %v1976 = vpack.c.b16 %v1800, %v1784
    %v1977 = vpack.c.b16 %v1801, %v1785
    %v1978 = vpack.c.b16 %v1802, %v1786
    %v1979 = vpack.c.b16 %v1803, %v1787
    %v1980 = vpack.c.b16 %v1804, %v1788
    %v1981 = vpack.c.b16 %v1805, %v1789
    %v1982 = vpack.c.b16 %v1806, %v1790
    %v1983 = vpack.c.b16 %v1807, %v1791
    %v1984 = vpack.c.b16 %v1808, %v1792
    %v1985 = vpack.c.b16 %v1809, %v1793
    %v1986 = vpack.c.b16 %v1810, %v1794
    %v1987 = vpack.c.b16 %v1811, %v1795
    %v1988 = vpack.c.b16 %v1828, %v1812
    %v1989 = vpack.c.b16 %v1829, %v1813
    %v1990 = vpack.c.b16 %v1830, %v1814
    %v1991 = vpack.c.b16 %v1831, %v1815
    %v1992 = vpack.c.b16 %v1832, %v1816
    %v1993 = vpack.c.b16 %v1833, %v1817
    %v1994 = vpack.c.b16 %v1834, %v1818
    %v1995 = vpack.c.b16 %v1835, %v1819
    %v1996 = vpack.c.b16 %v1836, %v1820
    %v1997 = vpack.c.b16 %v1837, %v1821
    %v1998 = vpack.c.b16 %v1838, %v1822
    %v1999 = vpack.c.b16 %v1839, %v1823
    %v2000 = vpack.c.b16 %v1840, %v1824
    %v2001 = vpack.c.b16 %v1841, %v1825
    %v2002 = vpack.c.b16 %v1842, %v1826
    %v2003 = vpack.c.b16 %v1843, %v1827
    %v2004 = vpack.c.b16 %v1860, %v1844
    %v2005 = vpack.c.b16 %v1861, %v1845
    %v2006 = vpack.c.b16 %v1862, %v1846
    %v2007 = vpack.c.b16 %v1863, %v1847
    %v2008 = vpack.c.b16 %v1864, %v1848
    %v2009 = vpack.c.b16 %v1865, %v1849
    %v2010 = vpack.c.b16 %v1866, %v1850
    %v2011 = vpack.c.b16 %v1867, %v1851
    %v2012 = vpack.c.b16 %v1868, %v1852
    %v2013 = vpack.c.b16 %v1869, %v1853
    %v2014 = vpack.c.b16 %v1870, %v1854
    %v2015 = vpack.c.b16 %v1871, %v1855
    %v2016 = vpack.c.b16 %v1872, %v1856
    %v2017 = vpack.c.b16 %v1873, %v1857
    %v2018 = vpack.c.b16 %v1874, %v1858
    %v2019 = vpack.c.b16 %v1875, %v1859
    %v2020 = vpack.c.b16 %v1892, %v1876
    %v2021 = vpack.c.b16 %v1893, %v1877
    %v2022 = vpack.c.b16 %v1894, %v1878
    %v2023 = vpack.c.b16 %v1895, %v1879
    %v2024 = vpack.c.b16 %v1896, %v1880
    %v2025 = vpack.c.b16 %v1897, %v1881
    %v2026 = vpack.c.b16 %v1898, %v1882
    %v2027 = vpack.c.b16 %v1899, %v1883
    %v2028 = vpack.c.b16 %v1900, %v1884
    %v2029 = vpack.c.b16 %v1901, %v1885
    %v2030 = vpack.c.b16 %v1902, %v1886
    %v2031 = vpack.c.b16 %v1903, %v1887
    %v2032 = vpack.c.b16 %v1904, %v1888
    %v2033 = vpack.c.b16 %v1905, %v1889
    %v2034 = vpack.c.b16 %v1906, %v1890
    %v2035 = vpack.c.b16 %v1907, %v1891
    %2164 = vmatprep.subr.bf16.mxu0 %v1909
    %2165 = vmatpush1.bf16.msra.mxu0 %v1908
    %2166 = vmatprep.subr.bf16.mxu0 %v1925
    %2167 = vmatpush1.bf16.msra.mxu0 %v1924
    %2168 = vmatprep.subr.bf16.mxu0 %v1941
    %2169 = vmatpush1.bf16.msra.mxu0 %v1940
    %2170 = vmatprep.subr.bf16.mxu0 %v1957
    %2171 = vmatpush1.bf16.msra.mxu0 %v1956
    %2172 = vmatprep.subr.bf16.mxu0 %v1973
    %2173 = vmatpush1.bf16.msra.mxu0 %v1972
    %2174 = vmatprep.subr.bf16.mxu0 %v1989
    %2175 = vmatpush1.bf16.msra.mxu0 %v1988
    %2176 = vmatprep.subr.bf16.mxu0 %v2005
    %2177 = vmatpush1.bf16.msra.mxu0 %v2004
    %2178 = vmatprep.subr.bf16.mxu0 %v2021
    %2179 = vmatpush1.bf16.msra.mxu0 %v2020
    %2180 = vmatprep.subr.bf16.mxu0 0
    %2181 = vmatpush1.bf16.msra.mxu0 0
    %2182 = vmatprep.subr.bf16.mxu0 0
    %2183 = vmatpush1.bf16.msra.mxu0 0
    %2184 = vmatprep.subr.bf16.mxu0 0
    %2185 = vmatpush1.bf16.msra.mxu0 0
    %2186 = vmatprep.subr.bf16.mxu0 0
    %2187 = vmatpush1.bf16.msra.mxu0 0
    %2188 = vmatprep.subr.bf16.mxu0 0
    %2189 = vmatpush1.bf16.msra.mxu0 0
    %2190 = vmatprep.subr.bf16.mxu0 0
    %2191 = vmatpush1.bf16.msra.mxu0 0
    %2192 = vmatprep.subr.bf16.mxu0 0
    %2193 = vmatpush1.bf16.msra.mxu0 0
    %2194 = vmatprep.subr.bf16.mxu0 0
    %2195 = vmatpush1.bf16.msra.mxu0 0
    %2196 = vmatprep.mubr.bf16.mxu0 0
    %2197 = vmatmul.mubr.bf16.gmra.mrb[0].mxu0 %v1305
    %v2198 = vpop.f32.mrb[0].mxu0
    %v2199 = vadd.f32 %v1447, %v2198
    %v2200 = vpop.f32.mrb[0].mxu0
    %v2201 = vadd.f32 %v1451, %v2200
    %v2202 = vpop.f32.mrb[0].mxu0
    %v2203 = vadd.f32 %v1447, %v2202
    %v2204 = vpop.f32.mrb[0].mxu0
    %v2205 = vadd.f32 %v1451, %v2204
    %2206 = vdwg.mxu0
    %2207 = vmatprep.subr.bf16.mxu0 %v1911
    %2208 = vmatpush1.bf16.msra.mxu0 %v1910
    %2209 = vmatprep.subr.bf16.mxu0 %v1927
    %2210 = vmatpush1.bf16.msra.mxu0 %v1926
    %2211 = vmatprep.subr.bf16.mxu0 %v1943
    %2212 = vmatpush1.bf16.msra.mxu0 %v1942
    %2213 = vmatprep.subr.bf16.mxu0 %v1959
    %2214 = vmatpush1.bf16.msra.mxu0 %v1958
    %2215 = vmatprep.subr.bf16.mxu0 %v1975
    %2216 = vmatpush1.bf16.msra.mxu0 %v1974
    %2217 = vmatprep.subr.bf16.mxu0 %v1991
    %2218 = vmatpush1.bf16.msra.mxu0 %v1990
    %2219 = vmatprep.subr.bf16.mxu0 %v2007
    %2220 = vmatpush1.bf16.msra.mxu0 %v2006
    %2221 = vmatprep.subr.bf16.mxu0 %v2023
    %2222 = vmatpush1.bf16.msra.mxu0 %v2022
    %2223 = vmatprep.subr.bf16.mxu0 0
    %2224 = vmatpush1.bf16.msra.mxu0 0
    %2225 = vmatprep.subr.bf16.mxu0 0
    %2226 = vmatpush1.bf16.msra.mxu0 0
    %2227 = vmatprep.subr.bf16.mxu0 0
    %2228 = vmatpush1.bf16.msra.mxu0 0
    %2229 = vmatprep.subr.bf16.mxu0 0
    %2230 = vmatpush1.bf16.msra.mxu0 0
    %2231 = vmatprep.subr.bf16.mxu0 0
    %2232 = vmatpush1.bf16.msra.mxu0 0
    %2233 = vmatprep.subr.bf16.mxu0 0
    %2234 = vmatpush1.bf16.msra.mxu0 0
    %2235 = vmatprep.subr.bf16.mxu0 0
    %2236 = vmatpush1.bf16.msra.mxu0 0
    %2237 = vmatprep.subr.bf16.mxu0 0
    %2238 = vmatpush1.bf16.msra.mxu0 0
    %2239 = vmatprep.mubr.bf16.mxu0 0
    %2240 = vmatmul.mubr.bf16.gmra.mrb[0].mxu0 %v1305
    %v2241 = vpop.f32.mrb[0].mxu0
    %v2242 = vadd.f32 %v1455, %v2241
    %v2243 = vpop.f32.mrb[0].mxu0
    %v2244 = vadd.f32 %v1459, %v2243
    %v2245 = vpop.f32.mrb[0].mxu0
    %v2246 = vadd.f32 %v1455, %v2245
    %v2247 = vpop.f32.mrb[0].mxu0
    %v2248 = vadd.f32 %v1459, %v2247
    %2249 = vdwg.mxu0
    %2250 = vmatprep.subr.bf16.mxu0 %v1913
    %2251 = vmatpush1.bf16.msra.mxu0 %v1912
    %2252 = vmatprep.subr.bf16.mxu0 %v1929
    %2253 = vmatpush1.bf16.msra.mxu0 %v1928
    %2254 = vmatprep.subr.bf16.mxu0 %v1945
    %2255 = vmatpush1.bf16.msra.mxu0 %v1944
    %2256 = vmatprep.subr.bf16.mxu0 %v1961
    %2257 = vmatpush1.bf16.msra.mxu0 %v1960
    %2258 = vmatprep.subr.bf16.mxu0 %v1977
    %2259 = vmatpush1.bf16.msra.mxu0 %v1976
    %2260 = vmatprep.subr.bf16.mxu0 %v1993
    %2261 = vmatpush1.bf16.msra.mxu0 %v1992
    %2262 = vmatprep.subr.bf16.mxu0 %v2009
    %2263 = vmatpush1.bf16.msra.mxu0 %v2008
    %2264 = vmatprep.subr.bf16.mxu0 %v2025
    %2265 = vmatpush1.bf16.msra.mxu0 %v2024
    %2266 = vmatprep.subr.bf16.mxu0 0
    %2267 = vmatpush1.bf16.msra.mxu0 0
    %2268 = vmatprep.subr.bf16.mxu0 0
    %2269 = vmatpush1.bf16.msra.mxu0 0
    %2270 = vmatprep.subr.bf16.mxu0 0
    %2271 = vmatpush1.bf16.msra.mxu0 0
    %2272 = vmatprep.subr.bf16.mxu0 0
    %2273 = vmatpush1.bf16.msra.mxu0 0
    %2274 = vmatprep.subr.bf16.mxu0 0
    %2275 = vmatpush1.bf16.msra.mxu0 0
    %2276 = vmatprep.subr.bf16.mxu0 0
    %2277 = vmatpush1.bf16.msra.mxu0 0
    %2278 = vmatprep.subr.bf16.mxu0 0
    %2279 = vmatpush1.bf16.msra.mxu0 0
    %2280 = vmatprep.subr.bf16.mxu0 0
    %2281 = vmatpush1.bf16.msra.mxu0 0
    %2282 = vmatprep.mubr.bf16.mxu0 0
    %2283 = vmatmul.mubr.bf16.gmra.mrb[0].mxu0 %v1305
    %v2284 = vpop.f32.mrb[0].mxu0
    %v2285 = vadd.f32 %v1463, %v2284
    %v2286 = vpop.f32.mrb[0].mxu0
    %v2287 = vadd.f32 %v1467, %v2286
    %v2288 = vpop.f32.mrb[0].mxu0
    %v2289 = vadd.f32 %v1463, %v2288
    %v2290 = vpop.f32.mrb[0].mxu0
    %v2291 = vadd.f32 %v1467, %v2290
    %2292 = vdwg.mxu0
    %2293 = vmatprep.subr.bf16.mxu0 %v1915
    %2294 = vmatpush1.bf16.msra.mxu0 %v1914
    %2295 = vmatprep.subr.bf16.mxu0 %v1931
    %2296 = vmatpush1.bf16.msra.mxu0 %v1930
    %2297 = vmatprep.subr.bf16.mxu0 %v1947
    %2298 = vmatpush1.bf16.msra.mxu0 %v1946
    %2299 = vmatprep.subr.bf16.mxu0 %v1963
    %2300 = vmatpush1.bf16.msra.mxu0 %v1962
    %2301 = vmatprep.subr.bf16.mxu0 %v1979
    %2302 = vmatpush1.bf16.msra.mxu0 %v1978
    %2303 = vmatprep.subr.bf16.mxu0 %v1995
    %2304 = vmatpush1.bf16.msra.mxu0 %v1994
    %2305 = vmatprep.subr.bf16.mxu0 %v2011
    %2306 = vmatpush1.bf16.msra.mxu0 %v2010
    %2307 = vmatprep.subr.bf16.mxu0 %v2027
    %2308 = vmatpush1.bf16.msra.mxu0 %v2026
    %2309 = vmatprep.subr.bf16.mxu0 0
    %2310 = vmatpush1.bf16.msra.mxu0 0
    %2311 = vmatprep.subr.bf16.mxu0 0
    %2312 = vmatpush1.bf16.msra.mxu0 0
    %2313 = vmatprep.subr.bf16.mxu0 0
    %2314 = vmatpush1.bf16.msra.mxu0 0
    %2315 = vmatprep.subr.bf16.mxu0 0
    %2316 = vmatpush1.bf16.msra.mxu0 0
    %2317 = vmatprep.subr.bf16.mxu0 0
    %2318 = vmatpush1.bf16.msra.mxu0 0
    %2319 = vmatprep.subr.bf16.mxu0 0
    %2320 = vmatpush1.bf16.msra.mxu0 0
    %2321 = vmatprep.subr.bf16.mxu0 0
    %2322 = vmatpush1.bf16.msra.mxu0 0
    %2323 = vmatprep.subr.bf16.mxu0 0
    %2324 = vmatpush1.bf16.msra.mxu0 0
    %2325 = vmatprep.mubr.bf16.mxu0 0
    %2326 = vmatmul.mubr.bf16.gmra.mrb[0].mxu0 %v1305
    %v2327 = vpop.f32.mrb[0].mxu0
    %v2328 = vadd.f32 %v1471, %v2327
    %v2329 = vpop.f32.mrb[0].mxu0
    %v2330 = vadd.f32 %v1475, %v2329
    %v2331 = vpop.f32.mrb[0].mxu0
    %v2332 = vadd.f32 %v1471, %v2331
    %v2333 = vpop.f32.mrb[0].mxu0
    %v2334 = vadd.f32 %v1475, %v2333
    %2335 = vdwg.mxu0
    %2336 = vmatprep.subr.bf16.mxu0 %v1917
    %2337 = vmatpush1.bf16.msra.mxu0 %v1916
    %2338 = vmatprep.subr.bf16.mxu0 %v1933
    %2339 = vmatpush1.bf16.msra.mxu0 %v1932
    %2340 = vmatprep.subr.bf16.mxu0 %v1949
    %2341 = vmatpush1.bf16.msra.mxu0 %v1948
    %2342 = vmatprep.subr.bf16.mxu0 %v1965
    %2343 = vmatpush1.bf16.msra.mxu0 %v1964
    %2344 = vmatprep.subr.bf16.mxu0 %v1981
    %2345 = vmatpush1.bf16.msra.mxu0 %v1980
    %2346 = vmatprep.subr.bf16.mxu0 %v1997
    %2347 = vmatpush1.bf16.msra.mxu0 %v1996
    %2348 = vmatprep.subr.bf16.mxu0 %v2013
    %2349 = vmatpush1.bf16.msra.mxu0 %v2012
    %2350 = vmatprep.subr.bf16.mxu0 %v2029
    %2351 = vmatpush1.bf16.msra.mxu0 %v2028
    %2352 = vmatprep.subr.bf16.mxu0 0
    %2353 = vmatpush1.bf16.msra.mxu0 0
    %2354 = vmatprep.subr.bf16.mxu0 0
    %2355 = vmatpush1.bf16.msra.mxu0 0
    %2356 = vmatprep.subr.bf16.mxu0 0
    %2357 = vmatpush1.bf16.msra.mxu0 0
    %2358 = vmatprep.subr.bf16.mxu0 0
    %2359 = vmatpush1.bf16.msra.mxu0 0
    %2360 = vmatprep.subr.bf16.mxu0 0
    %2361 = vmatpush1.bf16.msra.mxu0 0
    %2362 = vmatprep.subr.bf16.mxu0 0
    %2363 = vmatpush1.bf16.msra.mxu0 0
    %2364 = vmatprep.subr.bf16.mxu0 0
    %2365 = vmatpush1.bf16.msra.mxu0 0
    %2366 = vmatprep.subr.bf16.mxu0 0
    %2367 = vmatpush1.bf16.msra.mxu0 0
    %2368 = vmatprep.mubr.bf16.mxu0 0
    %2369 = vmatmul.mubr.bf16.gmra.mrb[0].mxu0 %v1305
    %v2370 = vpop.f32.mrb[0].mxu0
    %v2371 = vadd.f32 %v1479, %v2370
    %v2372 = vpop.f32.mrb[0].mxu0
    %v2373 = vadd.f32 %v1483, %v2372
    %v2374 = vpop.f32.mrb[0].mxu0
    %v2375 = vadd.f32 %v1479, %v2374
    %v2376 = vpop.f32.mrb[0].mxu0
    %v2377 = vadd.f32 %v1483, %v2376
    %2378 = vdwg.mxu0
    %2379 = vmatprep.subr.bf16.mxu0 %v1919
    %2380 = vmatpush1.bf16.msra.mxu0 %v1918
    %2381 = vmatprep.subr.bf16.mxu0 %v1935
    %2382 = vmatpush1.bf16.msra.mxu0 %v1934
    %2383 = vmatprep.subr.bf16.mxu0 %v1951
    %2384 = vmatpush1.bf16.msra.mxu0 %v1950
    %2385 = vmatprep.subr.bf16.mxu0 %v1967
    %2386 = vmatpush1.bf16.msra.mxu0 %v1966
    %2387 = vmatprep.subr.bf16.mxu0 %v1983
    %2388 = vmatpush1.bf16.msra.mxu0 %v1982
    %2389 = vmatprep.subr.bf16.mxu0 %v1999
    %2390 = vmatpush1.bf16.msra.mxu0 %v1998
    %2391 = vmatprep.subr.bf16.mxu0 %v2015
    %2392 = vmatpush1.bf16.msra.mxu0 %v2014
    %2393 = vmatprep.subr.bf16.mxu0 %v2031
    %2394 = vmatpush1.bf16.msra.mxu0 %v2030
    %2395 = vmatprep.subr.bf16.mxu0 0
    %2396 = vmatpush1.bf16.msra.mxu0 0
    %2397 = vmatprep.subr.bf16.mxu0 0
    %2398 = vmatpush1.bf16.msra.mxu0 0
    %2399 = vmatprep.subr.bf16.mxu0 0
    %2400 = vmatpush1.bf16.msra.mxu0 0
    %2401 = vmatprep.subr.bf16.mxu0 0
    %2402 = vmatpush1.bf16.msra.mxu0 0
    %2403 = vmatprep.subr.bf16.mxu0 0
    %2404 = vmatpush1.bf16.msra.mxu0 0
    %2405 = vmatprep.subr.bf16.mxu0 0
    %2406 = vmatpush1.bf16.msra.mxu0 0
    %2407 = vmatprep.subr.bf16.mxu0 0
    %2408 = vmatpush1.bf16.msra.mxu0 0
    %2409 = vmatprep.subr.bf16.mxu0 0
    %2410 = vmatpush1.bf16.msra.mxu0 0
    %2411 = vmatprep.mubr.bf16.mxu0 0
    %2412 = vmatmul.mubr.bf16.gmra.mrb[0].mxu0 %v1305
    %v2413 = vpop.f32.mrb[0].mxu0
    %v2414 = vadd.f32 %v1487, %v2413
    %v2415 = vpop.f32.mrb[0].mxu0
    %v2416 = vadd.f32 %v1491, %v2415
    %v2417 = vpop.f32.mrb[0].mxu0
    %v2418 = vadd.f32 %v1487, %v2417
    %v2419 = vpop.f32.mrb[0].mxu0
    %v2420 = vadd.f32 %v1491, %v2419
    %2421 = vdwg.mxu0
    %2422 = vmatprep.subr.bf16.mxu0 %v1921
    %2423 = vmatpush1.bf16.msra.mxu0 %v1920
    %2424 = vmatprep.subr.bf16.mxu0 %v1937
    %2425 = vmatpush1.bf16.msra.mxu0 %v1936
    %2426 = vmatprep.subr.bf16.mxu0 %v1953
    %2427 = vmatpush1.bf16.msra.mxu0 %v1952
    %2428 = vmatprep.subr.bf16.mxu0 %v1969
    %2429 = vmatpush1.bf16.msra.mxu0 %v1968
    %2430 = vmatprep.subr.bf16.mxu0 %v1985
    %2431 = vmatpush1.bf16.msra.mxu0 %v1984
    %2432 = vmatprep.subr.bf16.mxu0 %v2001
    %2433 = vmatpush1.bf16.msra.mxu0 %v2000
    %2434 = vmatprep.subr.bf16.mxu0 %v2017
    %2435 = vmatpush1.bf16.msra.mxu0 %v2016
    %2436 = vmatprep.subr.bf16.mxu0 %v2033
    %2437 = vmatpush1.bf16.msra.mxu0 %v2032
    %2438 = vmatprep.subr.bf16.mxu0 0
    %2439 = vmatpush1.bf16.msra.mxu0 0
    %2440 = vmatprep.subr.bf16.mxu0 0
    %2441 = vmatpush1.bf16.msra.mxu0 0
    %2442 = vmatprep.subr.bf16.mxu0 0
    %2443 = vmatpush1.bf16.msra.mxu0 0
    %2444 = vmatprep.subr.bf16.mxu0 0
    %2445 = vmatpush1.bf16.msra.mxu0 0
    %2446 = vmatprep.subr.bf16.mxu0 0
    %2447 = vmatpush1.bf16.msra.mxu0 0
    %2448 = vmatprep.subr.bf16.mxu0 0
    %2449 = vmatpush1.bf16.msra.mxu0 0
    %2450 = vmatprep.subr.bf16.mxu0 0
    %2451 = vmatpush1.bf16.msra.mxu0 0
    %2452 = vmatprep.subr.bf16.mxu0 0
    %2453 = vmatpush1.bf16.msra.mxu0 0
    %2454 = vmatprep.mubr.bf16.mxu0 0
    %2455 = vmatmul.mubr.bf16.gmra.mrb[0].mxu0 %v1305
    %v2456 = vpop.f32.mrb[0].mxu0
    %v2457 = vadd.f32 %v1495, %v2456
    %v2458 = vpop.f32.mrb[0].mxu0
    %v2459 = vadd.f32 %v1499, %v2458
    %v2460 = vpop.f32.mrb[0].mxu0
    %v2461 = vadd.f32 %v1495, %v2460
    %v2462 = vpop.f32.mrb[0].mxu0
    %v2463 = vadd.f32 %v1499, %v2462
    %2464 = vdwg.mxu0
    %2465 = vmatprep.subr.bf16.mxu0 %v1923
    %2466 = vmatpush1.bf16.msra.mxu0 %v1922
    %2467 = vmatprep.subr.bf16.mxu0 %v1939
    %2468 = vmatpush1.bf16.msra.mxu0 %v1938
    %2469 = vmatprep.subr.bf16.mxu0 %v1955
    %2470 = vmatpush1.bf16.msra.mxu0 %v1954
    %2471 = vmatprep.subr.bf16.mxu0 %v1971
    %2472 = vmatpush1.bf16.msra.mxu0 %v1970
    %2473 = vmatprep.subr.bf16.mxu0 %v1987
    %2474 = vmatpush1.bf16.msra.mxu0 %v1986
    %2475 = vmatprep.subr.bf16.mxu0 %v2003
    %2476 = vmatpush1.bf16.msra.mxu0 %v2002
    %2477 = vmatprep.subr.bf16.mxu0 %v2019
    %2478 = vmatpush1.bf16.msra.mxu0 %v2018
    %2479 = vmatprep.subr.bf16.mxu0 %v2035
    %2480 = vmatpush1.bf16.msra.mxu0 %v2034
    %2481 = vmatprep.subr.bf16.mxu0 0
    %2482 = vmatpush1.bf16.msra.mxu0 0
    %2483 = vmatprep.subr.bf16.mxu0 0
    %2484 = vmatpush1.bf16.msra.mxu0 0
    %2485 = vmatprep.subr.bf16.mxu0 0
    %2486 = vmatpush1.bf16.msra.mxu0 0
    %2487 = vmatprep.subr.bf16.mxu0 0
    %2488 = vmatpush1.bf16.msra.mxu0 0
    %2489 = vmatprep.subr.bf16.mxu0 0
    %2490 = vmatpush1.bf16.msra.mxu0 0
    %2491 = vmatprep.subr.bf16.mxu0 0
    %2492 = vmatpush1.bf16.msra.mxu0 0
    %2493 = vmatprep.subr.bf16.mxu0 0
    %2494 = vmatpush1.bf16.msra.mxu0 0
    %2495 = vmatprep.subr.bf16.mxu0 0
    %2496 = vmatpush1.bf16.msra.mxu0 0
    %2497 = vmatprep.mubr.bf16.mxu0 0
    %2498 = vmatmul.mubr.bf16.gmra.mrb[0].mxu0 %v1305
    %v2499 = vpop.f32.mrb[0].mxu0
    %v2500 = vadd.f32 %v1503, %v2499
    %v2501 = vpop.f32.mrb[0].mxu0
    %v2502 = vadd.f32 %v1507, %v2501
    %v2503 = vpop.f32.mrb[0].mxu0
    %v2504 = vadd.f32 %v1503, %v2503
    %v2505 = vpop.f32.mrb[0].mxu0
    %v2506 = vadd.f32 %v1507, %v2505
    %2507 = vdwg.mxu0
    %v2508 = vmax.f32 %v2199, 0.0
    %v2509 = vmax.f32 %v2201, 0.0
    %v2510 = vmax.f32 %v2242, 0.0
    %v2511 = vmax.f32 %v2244, 0.0
    %v2512 = vmax.f32 %v2285, 0.0
    %v2513 = vmax.f32 %v2287, 0.0
    %v2514 = vmax.f32 %v2328, 0.0
    %v2515 = vmax.f32 %v2330, 0.0
    %v2516 = vmax.f32 %v2371, 0.0
    %v2517 = vmax.f32 %v2373, 0.0
    %v2518 = vmax.f32 %v2414, 0.0
    %v2519 = vmax.f32 %v2416, 0.0
    %v2520 = vmax.f32 %v2457, 0.0
    %v2521 = vmax.f32 %v2459, 0.0
    %v2522 = vmax.f32 %v2500, 0.0
    %v2523 = vmax.f32 %v2502, 0.0
    %v2524 = vmax.f32 %v2203, 0.0
    %v2525 = vmax.f32 %v2205, 0.0
    %v2526 = vmax.f32 %v2246, 0.0
    %v2527 = vmax.f32 %v2248, 0.0
    %v2528 = vmax.f32 %v2289, 0.0
    %v2529 = vmax.f32 %v2291, 0.0
    %v2530 = vmax.f32 %v2332, 0.0
    %v2531 = vmax.f32 %v2334, 0.0
    %v2532 = vmax.f32 %v2375, 0.0
    %v2533 = vmax.f32 %v2377, 0.0
    %v2534 = vmax.f32 %v2418, 0.0
    %v2535 = vmax.f32 %v2420, 0.0
    %v2536 = vmax.f32 %v2461, 0.0
    %v2537 = vmax.f32 %v2463, 0.0
    %v2538 = vmax.f32 %v2504, 0.0
    %v2539 = vmax.f32 %v2506, 0.0
    %v2540 = vpack.c.bf16 %v2524, %v2508
    %v2541 = vpack.c.bf16 %v2525, %v2509
    %v2542 = vpack.c.bf16 %v2526, %v2510
    %v2543 = vpack.c.bf16 %v2527, %v2511
    %v2544 = vpack.c.bf16 %v2528, %v2512
    %v2545 = vpack.c.bf16 %v2529, %v2513
    %v2546 = vpack.c.bf16 %v2530, %v2514
    %v2547 = vpack.c.bf16 %v2531, %v2515
    %v2548 = vpack.c.bf16 %v2532, %v2516
    %v2549 = vpack.c.bf16 %v2533, %v2517
    %v2550 = vpack.c.bf16 %v2534, %v2518
    %v2551 = vpack.c.bf16 %v2535, %v2519
    %v2552 = vpack.c.bf16 %v2536, %v2520
    %v2553 = vpack.c.bf16 %v2537, %v2521
    %v2554 = vpack.c.bf16 %v2538, %v2522
    %v2555 = vpack.c.bf16 %v2539, %v2523
    %v2556 = vld [vmem:[%s4] sm:$0xf]
    %v2557 = vld [vmem:[%s4 + $0x8] sm:$0xf]
    %v2558 = vld [vmem:[%s4 + $0x10] sm:$0xf]
    %v2559 = vld [vmem:[%s4 + $0x18] sm:$0xf]
    %v2560 = vld [vmem:[%s4 + $0x20] sm:$0xf]
    %v2561 = vld [vmem:[%s4 + $0x28] sm:$0xf]
    %v2562 = vld [vmem:[%s4 + $0x30] sm:$0xf]
    %v2563 = vld [vmem:[%s4 + $0x38] sm:$0xf]
    %v2564 = vld [vmem:[%s4 + $0x40] sm:$0xf]
    %v2565 = vld [vmem:[%s4 + $0x48] sm:$0xf]
    %v2566 = vld [vmem:[%s4 + $0x50] sm:$0xf]
    %v2567 = vld [vmem:[%s4 + $0x58] sm:$0xf]
    %v2568 = vld [vmem:[%s4 + $0x60] sm:$0xf]
    %v2569 = vld [vmem:[%s4 + $0x68] sm:$0xf]
    %v2570 = vld [vmem:[%s4 + $0x70] sm:$0xf]
    %v2571 = vld [vmem:[%s4 + $0x78] sm:$0xf]
    %v2572 = vld [vmem:[%s4 + $0x80] sm:$0xf]
    %v2573 = vld [vmem:[%s4 + $0x88] sm:$0xf]
    %v2574 = vld [vmem:[%s4 + $0x90] sm:$0xf]
    %v2575 = vld [vmem:[%s4 + $0x98] sm:$0xf]
    %v2576 = vld [vmem:[%s4 + $0xa0] sm:$0xf]
    %v2577 = vld [vmem:[%s4 + $0xa8] sm:$0xf]
    %v2578 = vld [vmem:[%s4 + $0xb0] sm:$0xf]
    %v2579 = vld [vmem:[%s4 + $0xb8] sm:$0xf]
    %v2580 = vld [vmem:[%s4 + $0xc0] sm:$0xf]
    %v2581 = vld [vmem:[%s4 + $0xc8] sm:$0xf]
    %v2582 = vld [vmem:[%s4 + $0xd0] sm:$0xf]
    %v2583 = vld [vmem:[%s4 + $0xd8] sm:$0xf]
    %v2584 = vld [vmem:[%s4 + $0xe0] sm:$0xf]
    %v2585 = vld [vmem:[%s4 + $0xe8] sm:$0xf]
    %v2586 = vld [vmem:[%s4 + $0xf0] sm:$0xf]
    %v2587 = vld [vmem:[%s4 + $0xf8] sm:$0xf]
    %v2588 = vld [vmem:[%s4 + $0x100] sm:$0xf]
    %v2589 = vld [vmem:[%s4 + $0x108] sm:$0xf]
    %v2590 = vld [vmem:[%s4 + $0x110] sm:$0xf]
    %v2591 = vld [vmem:[%s4 + $0x118] sm:$0xf]
    %v2592 = vld [vmem:[%s4 + $0x120] sm:$0xf]
    %v2593 = vld [vmem:[%s4 + $0x128] sm:$0xf]
    %v2594 = vld [vmem:[%s4 + $0x130] sm:$0xf]
    %v2595 = vld [vmem:[%s4 + $0x138] sm:$0xf]
    %v2596 = vld [vmem:[%s4 + $0x140] sm:$0xf]
    %v2597 = vld [vmem:[%s4 + $0x148] sm:$0xf]
    %v2598 = vld [vmem:[%s4 + $0x150] sm:$0xf]
    %v2599 = vld [vmem:[%s4 + $0x158] sm:$0xf]
    %v2600 = vld [vmem:[%s4 + $0x160] sm:$0xf]
    %v2601 = vld [vmem:[%s4 + $0x168] sm:$0xf]
    %v2602 = vld [vmem:[%s4 + $0x170] sm:$0xf]
    %v2603 = vld [vmem:[%s4 + $0x178] sm:$0xf]
    %v2604 = vld [vmem:[%s4 + $0x180] sm:$0xf]
    %v2605 = vld [vmem:[%s4 + $0x188] sm:$0xf]
    %v2606 = vld [vmem:[%s4 + $0x190] sm:$0xf]
    %v2607 = vld [vmem:[%s4 + $0x198] sm:$0xf]
    %v2608 = vld [vmem:[%s4 + $0x1a0] sm:$0xf]
    %v2609 = vld [vmem:[%s4 + $0x1a8] sm:$0xf]
    %v2610 = vld [vmem:[%s4 + $0x1b0] sm:$0xf]
    %v2611 = vld [vmem:[%s4 + $0x1b8] sm:$0xf]
    %v2612 = vld [vmem:[%s4 + $0x1c0] sm:$0xf]
    %v2613 = vld [vmem:[%s4 + $0x1c8] sm:$0xf]
    %v2614 = vld [vmem:[%s4 + $0x1d0] sm:$0xf]
    %v2615 = vld [vmem:[%s4 + $0x1d8] sm:$0xf]
    %v2616 = vld [vmem:[%s4 + $0x1e0] sm:$0xf]
    %v2617 = vld [vmem:[%s4 + $0x1e8] sm:$0xf]
    %v2618 = vld [vmem:[%s4 + $0x1f0] sm:$0xf]
    %v2619 = vld [vmem:[%s4 + $0x1f8] sm:$0xf]
    %v2620 = vld [vmem:[%s4 + $0x200] sm:$0xf]
    %v2621 = vld [vmem:[%s4 + $0x208] sm:$0xf]
    %v2622 = vld [vmem:[%s4 + $0x210] sm:$0xf]
    %v2623 = vld [vmem:[%s4 + $0x218] sm:$0xf]
    %v2624 = vld [vmem:[%s4 + $0x220] sm:$0xf]
    %v2625 = vld [vmem:[%s4 + $0x228] sm:$0xf]
    %v2626 = vld [vmem:[%s4 + $0x230] sm:$0xf]
    %v2627 = vld [vmem:[%s4 + $0x238] sm:$0xf]
    %v2628 = vld [vmem:[%s4 + $0x240] sm:$0xf]
    %v2629 = vld [vmem:[%s4 + $0x248] sm:$0xf]
    %v2630 = vld [vmem:[%s4 + $0x250] sm:$0xf]
    %v2631 = vld [vmem:[%s4 + $0x258] sm:$0xf]
    %v2632 = vld [vmem:[%s4 + $0x260] sm:$0xf]
    %v2633 = vld [vmem:[%s4 + $0x268] sm:$0xf]
    %v2634 = vld [vmem:[%s4 + $0x270] sm:$0xf]
    %v2635 = vld [vmem:[%s4 + $0x278] sm:$0xf]
    %v2636 = vld [vmem:[%s4 + $0x280] sm:$0xf]
    %v2637 = vld [vmem:[%s4 + $0x288] sm:$0xf]
    %v2638 = vld [vmem:[%s4 + $0x290] sm:$0xf]
    %v2639 = vld [vmem:[%s4 + $0x298] sm:$0xf]
    %v2640 = vld [vmem:[%s4 + $0x2a0] sm:$0xf]
    %v2641 = vld [vmem:[%s4 + $0x2a8] sm:$0xf]
    %v2642 = vld [vmem:[%s4 + $0x2b0] sm:$0xf]
    %v2643 = vld [vmem:[%s4 + $0x2b8] sm:$0xf]
    %v2644 = vld [vmem:[%s4 + $0x2c0] sm:$0xf]
    %v2645 = vld [vmem:[%s4 + $0x2c8] sm:$0xf]
    %v2646 = vld [vmem:[%s4 + $0x2d0] sm:$0xf]
    %v2647 = vld [vmem:[%s4 + $0x2d8] sm:$0xf]
    %v2648 = vld [vmem:[%s4 + $0x2e0] sm:$0xf]
    %v2649 = vld [vmem:[%s4 + $0x2e8] sm:$0xf]
    %v2650 = vld [vmem:[%s4 + $0x2f0] sm:$0xf]
    %v2651 = vld [vmem:[%s4 + $0x2f8] sm:$0xf]
    %v2652 = vld [vmem:[%s4 + $0x300] sm:$0xf]
    %v2653 = vld [vmem:[%s4 + $0x308] sm:$0xf]
    %v2654 = vld [vmem:[%s4 + $0x310] sm:$0xf]
    %v2655 = vld [vmem:[%s4 + $0x318] sm:$0xf]
    %v2656 = vld [vmem:[%s4 + $0x320] sm:$0xf]
    %v2657 = vld [vmem:[%s4 + $0x328] sm:$0xf]
    %v2658 = vld [vmem:[%s4 + $0x330] sm:$0xf]
    %v2659 = vld [vmem:[%s4 + $0x338] sm:$0xf]
    %v2660 = vld [vmem:[%s4 + $0x340] sm:$0xf]
    %v2661 = vld [vmem:[%s4 + $0x348] sm:$0xf]
    %v2662 = vld [vmem:[%s4 + $0x350] sm:$0xf]
    %v2663 = vld [vmem:[%s4 + $0x358] sm:$0xf]
    %v2664 = vld [vmem:[%s4 + $0x360] sm:$0xf]
    %v2665 = vld [vmem:[%s4 + $0x368] sm:$0xf]
    %v2666 = vld [vmem:[%s4 + $0x370] sm:$0xf]
    %v2667 = vld [vmem:[%s4 + $0x378] sm:$0xf]
    %v2668 = vld [vmem:[%s4 + $0x380] sm:$0xf]
    %v2669 = vld [vmem:[%s4 + $0x388] sm:$0xf]
    %v2670 = vld [vmem:[%s4 + $0x390] sm:$0xf]
    %v2671 = vld [vmem:[%s4 + $0x398] sm:$0xf]
    %v2672 = vld [vmem:[%s4 + $0x3a0] sm:$0xf]
    %v2673 = vld [vmem:[%s4 + $0x3a8] sm:$0xf]
    %v2674 = vld [vmem:[%s4 + $0x3b0] sm:$0xf]
    %v2675 = vld [vmem:[%s4 + $0x3b8] sm:$0xf]
    %v2676 = vld [vmem:[%s4 + $0x3c0] sm:$0xf]
    %v2677 = vld [vmem:[%s4 + $0x3c8] sm:$0xf]
    %v2678 = vld [vmem:[%s4 + $0x3d0] sm:$0xf]
    %v2679 = vld [vmem:[%s4 + $0x3d8] sm:$0xf]
    %v2680 = vld [vmem:[%s4 + $0x3e0] sm:$0xf]
    %v2681 = vld [vmem:[%s4 + $0x3e8] sm:$0xf]
    %v2682 = vld [vmem:[%s4 + $0x3f0] sm:$0xf]
    %v2683 = vld [vmem:[%s4 + $0x3f8] sm:$0xf]
    %v2684 = vld [vmem:[%s4 + $0x400] sm:$0xf]
    %v2685 = vld [vmem:[%s4 + $0x408] sm:$0xf]
    %v2686 = vld [vmem:[%s4 + $0x410] sm:$0xf]
    %v2687 = vld [vmem:[%s4 + $0x418] sm:$0xf]
    %v2688 = vld [vmem:[%s4 + $0x420] sm:$0xf]
    %v2689 = vld [vmem:[%s4 + $0x428] sm:$0xf]
    %v2690 = vld [vmem:[%s4 + $0x430] sm:$0xf]
    %v2691 = vld [vmem:[%s4 + $0x438] sm:$0xf]
    %v2692 = vld [vmem:[%s4 + $0x440] sm:$0xf]
    %v2693 = vld [vmem:[%s4 + $0x448] sm:$0xf]
    %v2694 = vld [vmem:[%s4 + $0x450] sm:$0xf]
    %v2695 = vld [vmem:[%s4 + $0x458] sm:$0xf]
    %v2696 = vld [vmem:[%s4 + $0x460] sm:$0xf]
    %v2697 = vld [vmem:[%s4 + $0x468] sm:$0xf]
    %v2698 = vld [vmem:[%s4 + $0x470] sm:$0xf]
    %v2699 = vld [vmem:[%s4 + $0x478] sm:$0xf]
    %v2700 = vld [vmem:[%s4 + $0x480] sm:$0xf]
    %v2701 = vld [vmem:[%s4 + $0x488] sm:$0xf]
    %v2702 = vld [vmem:[%s4 + $0x490] sm:$0xf]
    %v2703 = vld [vmem:[%s4 + $0x498] sm:$0xf]
    %v2704 = vld [vmem:[%s4 + $0x4a0] sm:$0xf]
    %v2705 = vld [vmem:[%s4 + $0x4a8] sm:$0xf]
    %v2706 = vld [vmem:[%s4 + $0x4b0] sm:$0xf]
    %v2707 = vld [vmem:[%s4 + $0x4b8] sm:$0xf]
    %v2708 = vld [vmem:[%s4 + $0x4c0] sm:$0xf]
    %v2709 = vld [vmem:[%s4 + $0x4c8] sm:$0xf]
    %v2710 = vld [vmem:[%s4 + $0x4d0] sm:$0xf]
    %v2711 = vld [vmem:[%s4 + $0x4d8] sm:$0xf]
    %v2712 = vld [vmem:[%s4 + $0x4e0] sm:$0xf]
    %v2713 = vld [vmem:[%s4 + $0x4e8] sm:$0xf]
    %v2714 = vld [vmem:[%s4 + $0x4f0] sm:$0xf]
    %v2715 = vld [vmem:[%s4 + $0x4f8] sm:$0xf]
    %v2716 = vld [vmem:[%s4 + $0x500] sm:$0xf]
    %v2717 = vld [vmem:[%s4 + $0x508] sm:$0xf]
    %v2718 = vld [vmem:[%s4 + $0x510] sm:$0xf]
    %v2719 = vld [vmem:[%s4 + $0x518] sm:$0xf]
    %v2720 = vld [vmem:[%s4 + $0x520] sm:$0xf]
    %v2721 = vld [vmem:[%s4 + $0x528] sm:$0xf]
    %v2722 = vld [vmem:[%s4 + $0x530] sm:$0xf]
    %v2723 = vld [vmem:[%s4 + $0x538] sm:$0xf]
    %v2724 = vld [vmem:[%s4 + $0x540] sm:$0xf]
    %v2725 = vld [vmem:[%s4 + $0x548] sm:$0xf]
    %v2726 = vld [vmem:[%s4 + $0x550] sm:$0xf]
    %v2727 = vld [vmem:[%s4 + $0x558] sm:$0xf]
    %v2728 = vld [vmem:[%s4 + $0x560] sm:$0xf]
    %v2729 = vld [vmem:[%s4 + $0x568] sm:$0xf]
    %v2730 = vld [vmem:[%s4 + $0x570] sm:$0xf]
    %v2731 = vld [vmem:[%s4 + $0x578] sm:$0xf]
    %v2732 = vld [vmem:[%s4 + $0x580] sm:$0xf]
    %v2733 = vld [vmem:[%s4 + $0x588] sm:$0xf]
    %v2734 = vld [vmem:[%s4 + $0x590] sm:$0xf]
    %v2735 = vld [vmem:[%s4 + $0x598] sm:$0xf]
    %v2736 = vld [vmem:[%s4 + $0x5a0] sm:$0xf]
    %v2737 = vld [vmem:[%s4 + $0x5a8] sm:$0xf]
    %v2738 = vld [vmem:[%s4 + $0x5b0] sm:$0xf]
    %v2739 = vld [vmem:[%s4 + $0x5b8] sm:$0xf]
    %v2740 = vld [vmem:[%s4 + $0x5c0] sm:$0xf]
    %v2741 = vld [vmem:[%s4 + $0x5c8] sm:$0xf]
    %v2742 = vld [vmem:[%s4 + $0x5d0] sm:$0xf]
    %v2743 = vld [vmem:[%s4 + $0x5d8] sm:$0xf]
    %v2744 = vld [vmem:[%s4 + $0x5e0] sm:$0xf]
    %v2745 = vld [vmem:[%s4 + $0x5e8] sm:$0xf]
    %v2746 = vld [vmem:[%s4 + $0x5f0] sm:$0xf]
    %v2747 = vld [vmem:[%s4 + $0x5f8] sm:$0xf]
    %v2748 = vld [vmem:[%s4 + $0x600] sm:$0xf]
    %v2749 = vld [vmem:[%s4 + $0x608] sm:$0xf]
    %v2750 = vld [vmem:[%s4 + $0x610] sm:$0xf]
    %v2751 = vld [vmem:[%s4 + $0x618] sm:$0xf]
    %v2752 = vld [vmem:[%s4 + $0x620] sm:$0xf]
    %v2753 = vld [vmem:[%s4 + $0x628] sm:$0xf]
    %v2754 = vld [vmem:[%s4 + $0x630] sm:$0xf]
    %v2755 = vld [vmem:[%s4 + $0x638] sm:$0xf]
    %v2756 = vld [vmem:[%s4 + $0x640] sm:$0xf]
    %v2757 = vld [vmem:[%s4 + $0x648] sm:$0xf]
    %v2758 = vld [vmem:[%s4 + $0x650] sm:$0xf]
    %v2759 = vld [vmem:[%s4 + $0x658] sm:$0xf]
    %v2760 = vld [vmem:[%s4 + $0x660] sm:$0xf]
    %v2761 = vld [vmem:[%s4 + $0x668] sm:$0xf]
    %v2762 = vld [vmem:[%s4 + $0x670] sm:$0xf]
    %v2763 = vld [vmem:[%s4 + $0x678] sm:$0xf]
    %v2764 = vld [vmem:[%s4 + $0x680] sm:$0xf]
    %v2765 = vld [vmem:[%s4 + $0x688] sm:$0xf]
    %v2766 = vld [vmem:[%s4 + $0x690] sm:$0xf]
    %v2767 = vld [vmem:[%s4 + $0x698] sm:$0xf]
    %v2768 = vld [vmem:[%s4 + $0x6a0] sm:$0xf]
    %v2769 = vld [vmem:[%s4 + $0x6a8] sm:$0xf]
    %v2770 = vld [vmem:[%s4 + $0x6b0] sm:$0xf]
    %v2771 = vld [vmem:[%s4 + $0x6b8] sm:$0xf]
    %v2772 = vld [vmem:[%s4 + $0x6c0] sm:$0xf]
    %v2773 = vld [vmem:[%s4 + $0x6c8] sm:$0xf]
    %v2774 = vld [vmem:[%s4 + $0x6d0] sm:$0xf]
    %v2775 = vld [vmem:[%s4 + $0x6d8] sm:$0xf]
    %v2776 = vld [vmem:[%s4 + $0x6e0] sm:$0xf]
    %v2777 = vld [vmem:[%s4 + $0x6e8] sm:$0xf]
    %v2778 = vld [vmem:[%s4 + $0x6f0] sm:$0xf]
    %v2779 = vld [vmem:[%s4 + $0x6f8] sm:$0xf]
    %v2780 = vld [vmem:[%s4 + $0x700] sm:$0xf]
    %v2781 = vld [vmem:[%s4 + $0x708] sm:$0xf]
    %v2782 = vld [vmem:[%s4 + $0x710] sm:$0xf]
    %v2783 = vld [vmem:[%s4 + $0x718] sm:$0xf]
    %v2784 = vld [vmem:[%s4 + $0x720] sm:$0xf]
    %v2785 = vld [vmem:[%s4 + $0x728] sm:$0xf]
    %v2786 = vld [vmem:[%s4 + $0x730] sm:$0xf]
    %v2787 = vld [vmem:[%s4 + $0x738] sm:$0xf]
    %v2788 = vld [vmem:[%s4 + $0x740] sm:$0xf]
    %v2789 = vld [vmem:[%s4 + $0x748] sm:$0xf]
    %v2790 = vld [vmem:[%s4 + $0x750] sm:$0xf]
    %v2791 = vld [vmem:[%s4 + $0x758] sm:$0xf]
    %v2792 = vld [vmem:[%s4 + $0x760] sm:$0xf]
    %v2793 = vld [vmem:[%s4 + $0x768] sm:$0xf]
    %v2794 = vld [vmem:[%s4 + $0x770] sm:$0xf]
    %v2795 = vld [vmem:[%s4 + $0x778] sm:$0xf]
    %v2796 = vld [vmem:[%s4 + $0x780] sm:$0xf]
    %v2797 = vld [vmem:[%s4 + $0x788] sm:$0xf]
    %v2798 = vld [vmem:[%s4 + $0x790] sm:$0xf]
    %v2799 = vld [vmem:[%s4 + $0x798] sm:$0xf]
    %v2800 = vld [vmem:[%s4 + $0x7a0] sm:$0xf]
    %v2801 = vld [vmem:[%s4 + $0x7a8] sm:$0xf]
    %v2802 = vld [vmem:[%s4 + $0x7b0] sm:$0xf]
    %v2803 = vld [vmem:[%s4 + $0x7b8] sm:$0xf]
    %v2804 = vld [vmem:[%s4 + $0x7c0] sm:$0xf]
    %v2805 = vld [vmem:[%s4 + $0x7c8] sm:$0xf]
    %v2806 = vld [vmem:[%s4 + $0x7d0] sm:$0xf]
    %v2807 = vld [vmem:[%s4 + $0x7d8] sm:$0xf]
    %v2808 = vld [vmem:[%s4 + $0x7e0] sm:$0xf]
    %v2809 = vld [vmem:[%s4 + $0x7e8] sm:$0xf]
    %v2810 = vld [vmem:[%s4 + $0x7f0] sm:$0xf]
    %v2811 = vld [vmem:[%s4 + $0x7f8] sm:$0xf]
    %v2812 = vld [vmem:[%s5 + $0x5] ss:$0 sm:$0xff]
    %v3069 = vunpack.c.l.b16 %v2556
    %v3070 = vunpack.c.l.b16 %v2557
    %v3071 = vunpack.c.l.b16 %v2558
    %v3072 = vunpack.c.l.b16 %v2559
    %v3073 = vunpack.c.l.b16 %v2560
    %v3074 = vunpack.c.l.b16 %v2561
    %v3075 = vunpack.c.l.b16 %v2562
    %v3076 = vunpack.c.l.b16 %v2563
    %v3077 = vunpack.c.l.b16 %v2564
    %v3078 = vunpack.c.l.b16 %v2565
    %v3079 = vunpack.c.l.b16 %v2566
    %v3080 = vunpack.c.l.b16 %v2567
    %v3081 = vunpack.c.l.b16 %v2568
    %v3082 = vunpack.c.l.b16 %v2569
    %v3083 = vunpack.c.l.b16 %v2570
    %v3084 = vunpack.c.l.b16 %v2571
    %v3085 = vunpack.c.l.b16 %v2572
    %v3086 = vunpack.c.l.b16 %v2573
    %v3087 = vunpack.c.l.b16 %v2574
    %v3088 = vunpack.c.l.b16 %v2575
    %v3089 = vunpack.c.l.b16 %v2576
    %v3090 = vunpack.c.l.b16 %v2577
    %v3091 = vunpack.c.l.b16 %v2578
    %v3092 = vunpack.c.l.b16 %v2579
    %v3093 = vunpack.c.l.b16 %v2580
    %v3094 = vunpack.c.l.b16 %v2581
    %v3095 = vunpack.c.l.b16 %v2582
    %v3096 = vunpack.c.l.b16 %v2583
    %v3097 = vunpack.c.l.b16 %v2584
    %v3098 = vunpack.c.l.b16 %v2585
    %v3099 = vunpack.c.l.b16 %v2586
    %v3100 = vunpack.c.l.b16 %v2587
    %v3101 = vunpack.c.l.b16 %v2588
    %v3102 = vunpack.c.l.b16 %v2589
    %v3103 = vunpack.c.l.b16 %v2590
    %v3104 = vunpack.c.l.b16 %v2591
    %v3105 = vunpack.c.l.b16 %v2592
    %v3106 = vunpack.c.l.b16 %v2593
    %v3107 = vunpack.c.l.b16 %v2594
    %v3108 = vunpack.c.l.b16 %v2595
    %v3109 = vunpack.c.l.b16 %v2596
    %v3110 = vunpack.c.l.b16 %v2597
    %v3111 = vunpack.c.l.b16 %v2598
    %v3112 = vunpack.c.l.b16 %v2599
    %v3113 = vunpack.c.l.b16 %v2600
    %v3114 = vunpack.c.l.b16 %v2601
    %v3115 = vunpack.c.l.b16 %v2602
    %v3116 = vunpack.c.l.b16 %v2603
    %v3117 = vunpack.c.l.b16 %v2604
    %v3118 = vunpack.c.l.b16 %v2605
    %v3119 = vunpack.c.l.b16 %v2606
    %v3120 = vunpack.c.l.b16 %v2607
    %v3121 = vunpack.c.l.b16 %v2608
    %v3122 = vunpack.c.l.b16 %v2609
    %v3123 = vunpack.c.l.b16 %v2610
    %v3124 = vunpack.c.l.b16 %v2611
    %v3125 = vunpack.c.l.b16 %v2612
    %v3126 = vunpack.c.l.b16 %v2613
    %v3127 = vunpack.c.l.b16 %v2614
    %v3128 = vunpack.c.l.b16 %v2615
    %v3129 = vunpack.c.l.b16 %v2616
    %v3130 = vunpack.c.l.b16 %v2617
    %v3131 = vunpack.c.l.b16 %v2618
    %v3132 = vunpack.c.l.b16 %v2619
    %v3133 = vunpack.c.l.b16 %v2620
    %v3134 = vunpack.c.l.b16 %v2621
    %v3135 = vunpack.c.l.b16 %v2622
    %v3136 = vunpack.c.l.b16 %v2623
    %v3137 = vunpack.c.l.b16 %v2624
    %v3138 = vunpack.c.l.b16 %v2625
    %v3139 = vunpack.c.l.b16 %v2626
    %v3140 = vunpack.c.l.b16 %v2627
    %v3141 = vunpack.c.l.b16 %v2628
    %v3142 = vunpack.c.l.b16 %v2629
    %v3143 = vunpack.c.l.b16 %v2630
    %v3144 = vunpack.c.l.b16 %v2631
    %v3145 = vunpack.c.l.b16 %v2632
    %v3146 = vunpack.c.l.b16 %v2633
    %v3147 = vunpack.c.l.b16 %v2634
    %v3148 = vunpack.c.l.b16 %v2635
    %v3149 = vunpack.c.l.b16 %v2636
    %v3150 = vunpack.c.l.b16 %v2637
    %v3151 = vunpack.c.l.b16 %v2638
    %v3152 = vunpack.c.l.b16 %v2639
    %v3153 = vunpack.c.l.b16 %v2640
    %v3154 = vunpack.c.l.b16 %v2641
    %v3155 = vunpack.c.l.b16 %v2642
    %v3156 = vunpack.c.l.b16 %v2643
    %v3157 = vunpack.c.l.b16 %v2644
    %v3158 = vunpack.c.l.b16 %v2645
    %v3159 = vunpack.c.l.b16 %v2646
    %v3160 = vunpack.c.l.b16 %v2647
    %v3161 = vunpack.c.l.b16 %v2648
    %v3162 = vunpack.c.l.b16 %v2649
    %v3163 = vunpack.c.l.b16 %v2650
    %v3164 = vunpack.c.l.b16 %v2651
    %v3165 = vunpack.c.l.b16 %v2652
    %v3166 = vunpack.c.l.b16 %v2653
    %v3167 = vunpack.c.l.b16 %v2654
    %v3168 = vunpack.c.l.b16 %v2655
    %v3169 = vunpack.c.l.b16 %v2656
    %v3170 = vunpack.c.l.b16 %v2657
    %v3171 = vunpack.c.l.b16 %v2658
    %v3172 = vunpack.c.l.b16 %v2659
    %v3173 = vunpack.c.l.b16 %v2660
    %v3174 = vunpack.c.l.b16 %v2661
    %v3175 = vunpack.c.l.b16 %v2662
    %v3176 = vunpack.c.l.b16 %v2663
    %v3177 = vunpack.c.l.b16 %v2664
    %v3178 = vunpack.c.l.b16 %v2665
    %v3179 = vunpack.c.l.b16 %v2666
    %v3180 = vunpack.c.l.b16 %v2667
    %v3181 = vunpack.c.l.b16 %v2668
    %v3182 = vunpack.c.l.b16 %v2669
    %v3183 = vunpack.c.l.b16 %v2670
    %v3184 = vunpack.c.l.b16 %v2671
    %v3185 = vunpack.c.l.b16 %v2672
    %v3186 = vunpack.c.l.b16 %v2673
    %v3187 = vunpack.c.l.b16 %v2674
    %v3188 = vunpack.c.l.b16 %v2675
    %v3189 = vunpack.c.l.b16 %v2676
    %v3190 = vunpack.c.l.b16 %v2677
    %v3191 = vunpack.c.l.b16 %v2678
    %v3192 = vunpack.c.l.b16 %v2679
    %v3193 = vunpack.c.l.b16 %v2680
    %v3194 = vunpack.c.l.b16 %v2681
    %v3195 = vunpack.c.l.b16 %v2682
    %v3196 = vunpack.c.l.b16 %v2683
    %v3197 = vunpack.c.l.b16 %v2684
    %v3198 = vunpack.c.l.b16 %v2685
    %v3199 = vunpack.c.l.b16 %v2686
    %v3200 = vunpack.c.l.b16 %v2687
    %v3201 = vunpack.c.l.b16 %v2688
    %v3202 = vunpack.c.l.b16 %v2689
    %v3203 = vunpack.c.l.b16 %v2690
    %v3204 = vunpack.c.l.b16 %v2691
    %v3205 = vunpack.c.l.b16 %v2692
    %v3206 = vunpack.c.l.b16 %v2693
    %v3207 = vunpack.c.l.b16 %v2694
    %v3208 = vunpack.c.l.b16 %v2695
    %v3209 = vunpack.c.l.b16 %v2696
    %v3210 = vunpack.c.l.b16 %v2697
    %v3211 = vunpack.c.l.b16 %v2698
    %v3212 = vunpack.c.l.b16 %v2699
    %v3213 = vunpack.c.l.b16 %v2700
    %v3214 = vunpack.c.l.b16 %v2701
    %v3215 = vunpack.c.l.b16 %v2702
    %v3216 = vunpack.c.l.b16 %v2703
    %v3217 = vunpack.c.l.b16 %v2704
    %v3218 = vunpack.c.l.b16 %v2705
    %v3219 = vunpack.c.l.b16 %v2706
    %v3220 = vunpack.c.l.b16 %v2707
    %v3221 = vunpack.c.l.b16 %v2708
    %v3222 = vunpack.c.l.b16 %v2709
    %v3223 = vunpack.c.l.b16 %v2710
    %v3224 = vunpack.c.l.b16 %v2711
    %v3225 = vunpack.c.l.b16 %v2712
    %v3226 = vunpack.c.l.b16 %v2713
    %v3227 = vunpack.c.l.b16 %v2714
    %v3228 = vunpack.c.l.b16 %v2715
    %v3229 = vunpack.c.l.b16 %v2716
    %v3230 = vunpack.c.l.b16 %v2717
    %v3231 = vunpack.c.l.b16 %v2718
    %v3232 = vunpack.c.l.b16 %v2719
    %v3233 = vunpack.c.l.b16 %v2720
    %v3234 = vunpack.c.l.b16 %v2721
    %v3235 = vunpack.c.l.b16 %v2722
    %v3236 = vunpack.c.l.b16 %v2723
    %v3237 = vunpack.c.l.b16 %v2724
    %v3238 = vunpack.c.l.b16 %v2725
    %v3239 = vunpack.c.l.b16 %v2726
    %v3240 = vunpack.c.l.b16 %v2727
    %v3241 = vunpack.c.l.b16 %v2728
    %v3242 = vunpack.c.l.b16 %v2729
    %v3243 = vunpack.c.l.b16 %v2730
    %v3244 = vunpack.c.l.b16 %v2731
    %v3245 = vunpack.c.l.b16 %v2732
    %v3246 = vunpack.c.l.b16 %v2733
    %v3247 = vunpack.c.l.b16 %v2734
    %v3248 = vunpack.c.l.b16 %v2735
    %v3249 = vunpack.c.l.b16 %v2736
    %v3250 = vunpack.c.l.b16 %v2737
    %v3251 = vunpack.c.l.b16 %v2738
    %v3252 = vunpack.c.l.b16 %v2739
    %v3253 = vunpack.c.l.b16 %v2740
    %v3254 = vunpack.c.l.b16 %v2741
    %v3255 = vunpack.c.l.b16 %v2742
    %v3256 = vunpack.c.l.b16 %v2743
    %v3257 = vunpack.c.l.b16 %v2744
    %v3258 = vunpack.c.l.b16 %v2745
    %v3259 = vunpack.c.l.b16 %v2746
    %v3260 = vunpack.c.l.b16 %v2747
    %v3261 = vunpack.c.l.b16 %v2748
    %v3262 = vunpack.c.l.b16 %v2749
    %v3263 = vunpack.c.l.b16 %v2750
    %v3264 = vunpack.c.l.b16 %v2751
    %v3265 = vunpack.c.l.b16 %v2752
    %v3266 = vunpack.c.l.b16 %v2753
    %v3267 = vunpack.c.l.b16 %v2754
    %v3268 = vunpack.c.l.b16 %v2755
    %v3269 = vunpack.c.l.b16 %v2756
    %v3270 = vunpack.c.l.b16 %v2757
    %v3271 = vunpack.c.l.b16 %v2758
    %v3272 = vunpack.c.l.b16 %v2759
    %v3273 = vunpack.c.l.b16 %v2760
    %v3274 = vunpack.c.l.b16 %v2761
    %v3275 = vunpack.c.l.b16 %v2762
    %v3276 = vunpack.c.l.b16 %v2763
    %v3277 = vunpack.c.l.b16 %v2764
    %v3278 = vunpack.c.l.b16 %v2765
    %v3279 = vunpack.c.l.b16 %v2766
    %v3280 = vunpack.c.l.b16 %v2767
    %v3281 = vunpack.c.l.b16 %v2768
    %v3282 = vunpack.c.l.b16 %v2769
    %v3283 = vunpack.c.l.b16 %v2770
    %v3284 = vunpack.c.l.b16 %v2771
    %v3285 = vunpack.c.l.b16 %v2772
    %v3286 = vunpack.c.l.b16 %v2773
    %v3287 = vunpack.c.l.b16 %v2774
    %v3288 = vunpack.c.l.b16 %v2775
    %v3289 = vunpack.c.l.b16 %v2776
    %v3290 = vunpack.c.l.b16 %v2777
    %v3291 = vunpack.c.l.b16 %v2778
    %v3292 = vunpack.c.l.b16 %v2779
    %v3293 = vunpack.c.l.b16 %v2780
    %v3294 = vunpack.c.l.b16 %v2781
    %v3295 = vunpack.c.l.b16 %v2782
    %v3296 = vunpack.c.l.b16 %v2783
    %v3297 = vunpack.c.l.b16 %v2784
    %v3298 = vunpack.c.l.b16 %v2785
    %v3299 = vunpack.c.l.b16 %v2786
    %v3300 = vunpack.c.l.b16 %v2787
    %v3301 = vunpack.c.l.b16 %v2788
    %v3302 = vunpack.c.l.b16 %v2789
    %v3303 = vunpack.c.l.b16 %v2790
    %v3304 = vunpack.c.l.b16 %v2791
    %v3305 = vunpack.c.l.b16 %v2792
    %v3306 = vunpack.c.l.b16 %v2793
    %v3307 = vunpack.c.l.b16 %v2794
    %v3308 = vunpack.c.l.b16 %v2795
    %v3309 = vunpack.c.l.b16 %v2796
    %v3310 = vunpack.c.l.b16 %v2797
    %v3311 = vunpack.c.l.b16 %v2798
    %v3312 = vunpack.c.l.b16 %v2799
    %v3313 = vunpack.c.l.b16 %v2800
    %v3314 = vunpack.c.l.b16 %v2801
    %v3315 = vunpack.c.l.b16 %v2802
    %v3316 = vunpack.c.l.b16 %v2803
    %v3317 = vunpack.c.l.b16 %v2804
    %v3318 = vunpack.c.l.b16 %v2805
    %v3319 = vunpack.c.l.b16 %v2806
    %v3320 = vunpack.c.l.b16 %v2807
    %v3321 = vunpack.c.l.b16 %v2808
    %v3322 = vunpack.c.l.b16 %v2809
    %v3323 = vunpack.c.l.b16 %v2810
    %v3324 = vunpack.c.l.b16 %v2811
    %v3325 = vpack.c.b16 %v3070, %v3069
    %v3326 = vpack.c.b16 %v3072, %v3071
    %v3327 = vpack.c.b16 %v3074, %v3073
    %v3328 = vpack.c.b16 %v3076, %v3075
    %v3329 = vpack.c.b16 %v3078, %v3077
    %v3330 = vpack.c.b16 %v3080, %v3079
    %v3331 = vpack.c.b16 %v3082, %v3081
    %v3332 = vpack.c.b16 %v3084, %v3083
    %v3333 = vpack.c.b16 %v3086, %v3085
    %v3334 = vpack.c.b16 %v3088, %v3087
    %v3335 = vpack.c.b16 %v3090, %v3089
    %v3336 = vpack.c.b16 %v3092, %v3091
    %v3337 = vpack.c.b16 %v3094, %v3093
    %v3338 = vpack.c.b16 %v3096, %v3095
    %v3339 = vpack.c.b16 %v3098, %v3097
    %v3340 = vpack.c.b16 %v3100, %v3099
    %v3341 = vpack.c.b16 %v3102, %v3101
    %v3342 = vpack.c.b16 %v3104, %v3103
    %v3343 = vpack.c.b16 %v3106, %v3105
    %v3344 = vpack.c.b16 %v3108, %v3107
    %v3345 = vpack.c.b16 %v3110, %v3109
    %v3346 = vpack.c.b16 %v3112, %v3111
    %v3347 = vpack.c.b16 %v3114, %v3113
    %v3348 = vpack.c.b16 %v3116, %v3115
    %v3349 = vpack.c.b16 %v3118, %v3117
    %v3350 = vpack.c.b16 %v3120, %v3119
    %v3351 = vpack.c.b16 %v3122, %v3121
    %v3352 = vpack.c.b16 %v3124, %v3123
    %v3353 = vpack.c.b16 %v3126, %v3125
    %v3354 = vpack.c.b16 %v3128, %v3127
    %v3355 = vpack.c.b16 %v3130, %v3129
    %v3356 = vpack.c.b16 %v3132, %v3131
    %v3357 = vpack.c.b16 %v3134, %v3133
    %v3358 = vpack.c.b16 %v3136, %v3135
    %v3359 = vpack.c.b16 %v3138, %v3137
    %v3360 = vpack.c.b16 %v3140, %v3139
    %v3361 = vpack.c.b16 %v3142, %v3141
    %v3362 = vpack.c.b16 %v3144, %v3143
    %v3363 = vpack.c.b16 %v3146, %v3145
    %v3364 = vpack.c.b16 %v3148, %v3147
    %v3365 = vpack.c.b16 %v3150, %v3149
    %v3366 = vpack.c.b16 %v3152, %v3151
    %v3367 = vpack.c.b16 %v3154, %v3153
    %v3368 = vpack.c.b16 %v3156, %v3155
    %v3369 = vpack.c.b16 %v3158, %v3157
    %v3370 = vpack.c.b16 %v3160, %v3159
    %v3371 = vpack.c.b16 %v3162, %v3161
    %v3372 = vpack.c.b16 %v3164, %v3163
    %v3373 = vpack.c.b16 %v3166, %v3165
    %v3374 = vpack.c.b16 %v3168, %v3167
    %v3375 = vpack.c.b16 %v3170, %v3169
    %v3376 = vpack.c.b16 %v3172, %v3171
    %v3377 = vpack.c.b16 %v3174, %v3173
    %v3378 = vpack.c.b16 %v3176, %v3175
    %v3379 = vpack.c.b16 %v3178, %v3177
    %v3380 = vpack.c.b16 %v3180, %v3179
    %v3381 = vpack.c.b16 %v3182, %v3181
    %v3382 = vpack.c.b16 %v3184, %v3183
    %v3383 = vpack.c.b16 %v3186, %v3185
    %v3384 = vpack.c.b16 %v3188, %v3187
    %v3385 = vpack.c.b16 %v3190, %v3189
    %v3386 = vpack.c.b16 %v3192, %v3191
    %v3387 = vpack.c.b16 %v3194, %v3193
    %v3388 = vpack.c.b16 %v3196, %v3195
    %v3389 = vpack.c.b16 %v3198, %v3197
    %v3390 = vpack.c.b16 %v3200, %v3199
    %v3391 = vpack.c.b16 %v3202, %v3201
    %v3392 = vpack.c.b16 %v3204, %v3203
    %v3393 = vpack.c.b16 %v3206, %v3205
    %v3394 = vpack.c.b16 %v3208, %v3207
    %v3395 = vpack.c.b16 %v3210, %v3209
    %v3396 = vpack.c.b16 %v3212, %v3211
    %v3397 = vpack.c.b16 %v3214, %v3213
    %v3398 = vpack.c.b16 %v3216, %v3215
    %v3399 = vpack.c.b16 %v3218, %v3217
    %v3400 = vpack.c.b16 %v3220, %v3219
    %v3401 = vpack.c.b16 %v3222, %v3221
    %v3402 = vpack.c.b16 %v3224, %v3223
    %v3403 = vpack.c.b16 %v3226, %v3225
    %v3404 = vpack.c.b16 %v3228, %v3227
    %v3405 = vpack.c.b16 %v3230, %v3229
    %v3406 = vpack.c.b16 %v3232, %v3231
    %v3407 = vpack.c.b16 %v3234, %v3233
    %v3408 = vpack.c.b16 %v3236, %v3235
    %v3409 = vpack.c.b16 %v3238, %v3237
    %v3410 = vpack.c.b16 %v3240, %v3239
    %v3411 = vpack.c.b16 %v3242, %v3241
    %v3412 = vpack.c.b16 %v3244, %v3243
    %v3413 = vpack.c.b16 %v3246, %v3245
    %v3414 = vpack.c.b16 %v3248, %v3247
    %v3415 = vpack.c.b16 %v3250, %v3249
    %v3416 = vpack.c.b16 %v3252, %v3251
    %v3417 = vpack.c.b16 %v3254, %v3253
    %v3418 = vpack.c.b16 %v3256, %v3255
    %v3419 = vpack.c.b16 %v3258, %v3257
    %v3420 = vpack.c.b16 %v3260, %v3259
    %v3421 = vpack.c.b16 %v3262, %v3261
    %v3422 = vpack.c.b16 %v3264, %v3263
    %v3423 = vpack.c.b16 %v3266, %v3265
    %v3424 = vpack.c.b16 %v3268, %v3267
    %v3425 = vpack.c.b16 %v3270, %v3269
    %v3426 = vpack.c.b16 %v3272, %v3271
    %v3427 = vpack.c.b16 %v3274, %v3273
    %v3428 = vpack.c.b16 %v3276, %v3275
    %v3429 = vpack.c.b16 %v3278, %v3277
    %v3430 = vpack.c.b16 %v3280, %v3279
    %v3431 = vpack.c.b16 %v3282, %v3281
    %v3432 = vpack.c.b16 %v3284, %v3283
    %v3433 = vpack.c.b16 %v3286, %v3285
    %v3434 = vpack.c.b16 %v3288, %v3287
    %v3435 = vpack.c.b16 %v3290, %v3289
    %v3436 = vpack.c.b16 %v3292, %v3291
    %v3437 = vpack.c.b16 %v3294, %v3293
    %v3438 = vpack.c.b16 %v3296, %v3295
    %v3439 = vpack.c.b16 %v3298, %v3297
    %v3440 = vpack.c.b16 %v3300, %v3299
    %v3441 = vpack.c.b16 %v3302, %v3301
    %v3442 = vpack.c.b16 %v3304, %v3303
    %v3443 = vpack.c.b16 %v3306, %v3305
    %v3444 = vpack.c.b16 %v3308, %v3307
    %v3445 = vpack.c.b16 %v3310, %v3309
    %v3446 = vpack.c.b16 %v3312, %v3311
    %v3447 = vpack.c.b16 %v3314, %v3313
    %v3448 = vpack.c.b16 %v3316, %v3315
    %v3449 = vpack.c.b16 %v3318, %v3317
    %v3450 = vpack.c.b16 %v3320, %v3319
    %v3451 = vpack.c.b16 %v3322, %v3321
    %v3452 = vpack.c.b16 %v3324, %v3323
    %3581 = vmatprep.subr.bf16.mxu0 0
    %3582 = vmatpush1.bf16.msra.mxu0 %v3325
    %3583 = vmatprep.subr.bf16.mxu0 0
    %3584 = vmatpush1.bf16.msra.mxu0 %v3326
    %3585 = vmatprep.subr.bf16.mxu0 0
    %3586 = vmatpush1.bf16.msra.mxu0 %v3327
    %3587 = vmatprep.subr.bf16.mxu0 0
    %3588 = vmatpush1.bf16.msra.mxu0 %v3328
    %3589 = vmatprep.subr.bf16.mxu0 0
    %3590 = vmatpush1.bf16.msra.mxu0 %v3329
    %3591 = vmatprep.subr.bf16.mxu0 0
    %3592 = vmatpush1.bf16.msra.mxu0 %v3330
    %3593 = vmatprep.subr.bf16.mxu0 0
    %3594 = vmatpush1.bf16.msra.mxu0 %v3331
    %3595 = vmatprep.subr.bf16.mxu0 0
    %3596 = vmatpush1.bf16.msra.mxu0 %v3332
    %3597 = vmatprep.subr.bf16.mxu0 0
    %3598 = vmatpush1.bf16.msra.mxu0 %v3333
    %3599 = vmatprep.subr.bf16.mxu0 0
    %3600 = vmatpush1.bf16.msra.mxu0 %v3334
    %3601 = vmatprep.subr.bf16.mxu0 0
    %3602 = vmatpush1.bf16.msra.mxu0 %v3335
    %3603 = vmatprep.subr.bf16.mxu0 0
    %3604 = vmatpush1.bf16.msra.mxu0 %v3336
    %3605 = vmatprep.subr.bf16.mxu0 0
    %3606 = vmatpush1.bf16.msra.mxu0 %v3337
    %3607 = vmatprep.subr.bf16.mxu0 0
    %3608 = vmatpush1.bf16.msra.mxu0 %v3338
    %3609 = vmatprep.subr.bf16.mxu0 0
    %3610 = vmatpush1.bf16.msra.mxu0 %v3339
    %3611 = vmatprep.subr.bf16.mxu0 0
    %3612 = vmatpush1.bf16.msra.mxu0 %v3340
    %3613 = vmatprep.mubr.bf16.mxu0 %v2541
    %3614 = vmatmul.mubr.bf16.gmra.mrb[0].mxu0 %v2540
    %v3615 = vpop.f32.mrb[0].mxu0
    %v3616 = vadd.f32 %v2812, %v3615
    %v3617 = vpop.f32.mrb[0].mxu0
    %v3618 = vpop.f32.mrb[0].mxu0
    %v3619 = vadd.f32 %v2812, %v3618
    %v3620 = vpop.f32.mrb[0].mxu0
    %3621 = vdwg.mxu0
    %3622 = vmatprep.subr.bf16.mxu0 0
    %3623 = vmatpush1.bf16.msra.mxu0 %v3341
    %3624 = vmatprep.subr.bf16.mxu0 0
    %3625 = vmatpush1.bf16.msra.mxu0 %v3342
    %3626 = vmatprep.subr.bf16.mxu0 0
    %3627 = vmatpush1.bf16.msra.mxu0 %v3343
    %3628 = vmatprep.subr.bf16.mxu0 0
    %3629 = vmatpush1.bf16.msra.mxu0 %v3344
    %3630 = vmatprep.subr.bf16.mxu0 0
    %3631 = vmatpush1.bf16.msra.mxu0 %v3345
    %3632 = vmatprep.subr.bf16.mxu0 0
    %3633 = vmatpush1.bf16.msra.mxu0 %v3346
    %3634 = vmatprep.subr.bf16.mxu0 0
    %3635 = vmatpush1.bf16.msra.mxu0 %v3347
    %3636 = vmatprep.subr.bf16.mxu0 0
    %3637 = vmatpush1.bf16.msra.mxu0 %v3348
    %3638 = vmatprep.subr.bf16.mxu0 0
    %3639 = vmatpush1.bf16.msra.mxu0 %v3349
    %3640 = vmatprep.subr.bf16.mxu0 0
    %3641 = vmatpush1.bf16.msra.mxu0 %v3350
    %3642 = vmatprep.subr.bf16.mxu0 0
    %3643 = vmatpush1.bf16.msra.mxu0 %v3351
    %3644 = vmatprep.subr.bf16.mxu0 0
    %3645 = vmatpush1.bf16.msra.mxu0 %v3352
    %3646 = vmatprep.subr.bf16.mxu0 0
    %3647 = vmatpush1.bf16.msra.mxu0 %v3353
    %3648 = vmatprep.subr.bf16.mxu0 0
    %3649 = vmatpush1.bf16.msra.mxu0 %v3354
    %3650 = vmatprep.subr.bf16.mxu0 0
    %3651 = vmatpush1.bf16.msra.mxu0 %v3355
    %3652 = vmatprep.subr.bf16.mxu0 0
    %3653 = vmatpush1.bf16.msra.mxu0 %v3356
    %3654 = vmatprep.mubr.bf16.mxu0 %v2543
    %3655 = vmatmul.mubr.bf16.gmra.mrb[0].mxu0 %v2542
    %v3656 = vpop.f32.mrb[0].mxu0
    %v3657 = vadd.f32 %v3616, %v3656
    %v3658 = vpop.f32.mrb[0].mxu0
    %v3659 = vpop.f32.mrb[0].mxu0
    %v3660 = vadd.f32 %v3619, %v3659
    %v3661 = vpop.f32.mrb[0].mxu0
    %3662 = vdwg.mxu0
    %3663 = vmatprep.subr.bf16.mxu0 0
    %3664 = vmatpush1.bf16.msra.mxu0 %v3357
    %3665 = vmatprep.subr.bf16.mxu0 0
    %3666 = vmatpush1.bf16.msra.mxu0 %v3358
    %3667 = vmatprep.subr.bf16.mxu0 0
    %3668 = vmatpush1.bf16.msra.mxu0 %v3359
    %3669 = vmatprep.subr.bf16.mxu0 0
    %3670 = vmatpush1.bf16.msra.mxu0 %v3360
    %3671 = vmatprep.subr.bf16.mxu0 0
    %3672 = vmatpush1.bf16.msra.mxu0 %v3361
    %3673 = vmatprep.subr.bf16.mxu0 0
    %3674 = vmatpush1.bf16.msra.mxu0 %v3362
    %3675 = vmatprep.subr.bf16.mxu0 0
    %3676 = vmatpush1.bf16.msra.mxu0 %v3363
    %3677 = vmatprep.subr.bf16.mxu0 0
    %3678 = vmatpush1.bf16.msra.mxu0 %v3364
    %3679 = vmatprep.subr.bf16.mxu0 0
    %3680 = vmatpush1.bf16.msra.mxu0 %v3365
    %3681 = vmatprep.subr.bf16.mxu0 0
    %3682 = vmatpush1.bf16.msra.mxu0 %v3366
    %3683 = vmatprep.subr.bf16.mxu0 0
    %3684 = vmatpush1.bf16.msra.mxu0 %v3367
    %3685 = vmatprep.subr.bf16.mxu0 0
    %3686 = vmatpush1.bf16.msra.mxu0 %v3368
    %3687 = vmatprep.subr.bf16.mxu0 0
    %3688 = vmatpush1.bf16.msra.mxu0 %v3369
    %3689 = vmatprep.subr.bf16.mxu0 0
    %3690 = vmatpush1.bf16.msra.mxu0 %v3370
    %3691 = vmatprep.subr.bf16.mxu0 0
    %3692 = vmatpush1.bf16.msra.mxu0 %v3371
    %3693 = vmatprep.subr.bf16.mxu0 0
    %3694 = vmatpush1.bf16.msra.mxu0 %v3372
    %3695 = vmatprep.mubr.bf16.mxu0 %v2545
    %3696 = vmatmul.mubr.bf16.gmra.mrb[0].mxu0 %v2544
    %v3697 = vpop.f32.mrb[0].mxu0
    %v3698 = vadd.f32 %v3657, %v3697
    %v3699 = vpop.f32.mrb[0].mxu0
    %v3700 = vpop.f32.mrb[0].mxu0
    %v3701 = vadd.f32 %v3660, %v3700
    %v3702 = vpop.f32.mrb[0].mxu0
    %3703 = vdwg.mxu0
    %3704 = vmatprep.subr.bf16.mxu0 0
    %3705 = vmatpush1.bf16.msra.mxu0 %v3373
    %3706 = vmatprep.subr.bf16.mxu0 0
    %3707 = vmatpush1.bf16.msra.mxu0 %v3374
    %3708 = vmatprep.subr.bf16.mxu0 0
    %3709 = vmatpush1.bf16.msra.mxu0 %v3375
    %3710 = vmatprep.subr.bf16.mxu0 0
    %3711 = vmatpush1.bf16.msra.mxu0 %v3376
    %3712 = vmatprep.subr.bf16.mxu0 0
    %3713 = vmatpush1.bf16.msra.mxu0 %v3377
    %3714 = vmatprep.subr.bf16.mxu0 0
    %3715 = vmatpush1.bf16.msra.mxu0 %v3378
    %3716 = vmatprep.subr.bf16.mxu0 0
    %3717 = vmatpush1.bf16.msra.mxu0 %v3379
    %3718 = vmatprep.subr.bf16.mxu0 0
    %3719 = vmatpush1.bf16.msra.mxu0 %v3380
    %3720 = vmatprep.subr.bf16.mxu0 0
    %3721 = vmatpush1.bf16.msra.mxu0 %v3381
    %3722 = vmatprep.subr.bf16.mxu0 0
    %3723 = vmatpush1.bf16.msra.mxu0 %v3382
    %3724 = vmatprep.subr.bf16.mxu0 0
    %3725 = vmatpush1.bf16.msra.mxu0 %v3383
    %3726 = vmatprep.subr.bf16.mxu0 0
    %3727 = vmatpush1.bf16.msra.mxu0 %v3384
    %3728 = vmatprep.subr.bf16.mxu0 0
    %3729 = vmatpush1.bf16.msra.mxu0 %v3385
    %3730 = vmatprep.subr.bf16.mxu0 0
    %3731 = vmatpush1.bf16.msra.mxu0 %v3386
    %3732 = vmatprep.subr.bf16.mxu0 0
    %3733 = vmatpush1.bf16.msra.mxu0 %v3387
    %3734 = vmatprep.subr.bf16.mxu0 0
    %3735 = vmatpush1.bf16.msra.mxu0 %v3388
    %3736 = vmatprep.mubr.bf16.mxu0 %v2547
    %3737 = vmatmul.mubr.bf16.gmra.mrb[0].mxu0 %v2546
    %v3738 = vpop.f32.mrb[0].mxu0
    %v3739 = vadd.f32 %v3698, %v3738
    %v3740 = vpop.f32.mrb[0].mxu0
    %v3741 = vpop.f32.mrb[0].mxu0
    %v3742 = vadd.f32 %v3701, %v3741
    %v3743 = vpop.f32.mrb[0].mxu0
    %3744 = vdwg.mxu0
    %3745 = vmatprep.subr.bf16.mxu0 0
    %3746 = vmatpush1.bf16.msra.mxu0 %v3389
    %3747 = vmatprep.subr.bf16.mxu0 0
    %3748 = vmatpush1.bf16.msra.mxu0 %v3390
    %3749 = vmatprep.subr.bf16.mxu0 0
    %3750 = vmatpush1.bf16.msra.mxu0 %v3391
    %3751 = vmatprep.subr.bf16.mxu0 0
    %3752 = vmatpush1.bf16.msra.mxu0 %v3392
    %3753 = vmatprep.subr.bf16.mxu0 0
    %3754 = vmatpush1.bf16.msra.mxu0 %v3393
    %3755 = vmatprep.subr.bf16.mxu0 0
    %3756 = vmatpush1.bf16.msra.mxu0 %v3394
    %3757 = vmatprep.subr.bf16.mxu0 0
    %3758 = vmatpush1.bf16.msra.mxu0 %v3395
    %3759 = vmatprep.subr.bf16.mxu0 0
    %3760 = vmatpush1.bf16.msra.mxu0 %v3396
    %3761 = vmatprep.subr.bf16.mxu0 0
    %3762 = vmatpush1.bf16.msra.mxu0 %v3397
    %3763 = vmatprep.subr.bf16.mxu0 0
    %3764 = vmatpush1.bf16.msra.mxu0 %v3398
    %3765 = vmatprep.subr.bf16.mxu0 0
    %3766 = vmatpush1.bf16.msra.mxu0 %v3399
    %3767 = vmatprep.subr.bf16.mxu0 0
    %3768 = vmatpush1.bf16.msra.mxu0 %v3400
    %3769 = vmatprep.subr.bf16.mxu0 0
    %3770 = vmatpush1.bf16.msra.mxu0 %v3401
    %3771 = vmatprep.subr.bf16.mxu0 0
    %3772 = vmatpush1.bf16.msra.mxu0 %v3402
    %3773 = vmatprep.subr.bf16.mxu0 0
    %3774 = vmatpush1.bf16.msra.mxu0 %v3403
    %3775 = vmatprep.subr.bf16.mxu0 0
    %3776 = vmatpush1.bf16.msra.mxu0 %v3404
    %3777 = vmatprep.mubr.bf16.mxu0 %v2549
    %3778 = vmatmul.mubr.bf16.gmra.mrb[0].mxu0 %v2548
    %v3779 = vpop.f32.mrb[0].mxu0
    %v3780 = vadd.f32 %v3739, %v3779
    %v3781 = vpop.f32.mrb[0].mxu0
    %v3782 = vpop.f32.mrb[0].mxu0
    %v3783 = vadd.f32 %v3742, %v3782
    %v3784 = vpop.f32.mrb[0].mxu0
    %3785 = vdwg.mxu0
    %3786 = vmatprep.subr.bf16.mxu0 0
    %3787 = vmatpush1.bf16.msra.mxu0 %v3405
    %3788 = vmatprep.subr.bf16.mxu0 0
    %3789 = vmatpush1.bf16.msra.mxu0 %v3406
    %3790 = vmatprep.subr.bf16.mxu0 0
    %3791 = vmatpush1.bf16.msra.mxu0 %v3407
    %3792 = vmatprep.subr.bf16.mxu0 0
    %3793 = vmatpush1.bf16.msra.mxu0 %v3408
    %3794 = vmatprep.subr.bf16.mxu0 0
    %3795 = vmatpush1.bf16.msra.mxu0 %v3409
    %3796 = vmatprep.subr.bf16.mxu0 0
    %3797 = vmatpush1.bf16.msra.mxu0 %v3410
    %3798 = vmatprep.subr.bf16.mxu0 0
    %3799 = vmatpush1.bf16.msra.mxu0 %v3411
    %3800 = vmatprep.subr.bf16.mxu0 0
    %3801 = vmatpush1.bf16.msra.mxu0 %v3412
    %3802 = vmatprep.subr.bf16.mxu0 0
    %3803 = vmatpush1.bf16.msra.mxu0 %v3413
    %3804 = vmatprep.subr.bf16.mxu0 0
    %3805 = vmatpush1.bf16.msra.mxu0 %v3414
    %3806 = vmatprep.subr.bf16.mxu0 0
    %3807 = vmatpush1.bf16.msra.mxu0 %v3415
    %3808 = vmatprep.subr.bf16.mxu0 0
    %3809 = vmatpush1.bf16.msra.mxu0 %v3416
    %3810 = vmatprep.subr.bf16.mxu0 0
    %3811 = vmatpush1.bf16.msra.mxu0 %v3417
    %3812 = vmatprep.subr.bf16.mxu0 0
    %3813 = vmatpush1.bf16.msra.mxu0 %v3418
    %3814 = vmatprep.subr.bf16.mxu0 0
    %3815 = vmatpush1.bf16.msra.mxu0 %v3419
    %3816 = vmatprep.subr.bf16.mxu0 0
    %3817 = vmatpush1.bf16.msra.mxu0 %v3420
    %3818 = vmatprep.mubr.bf16.mxu0 %v2551
    %3819 = vmatmul.mubr.bf16.gmra.mrb[0].mxu0 %v2550
    %v3820 = vpop.f32.mrb[0].mxu0
    %v3821 = vadd.f32 %v3780, %v3820
    %v3822 = vpop.f32.mrb[0].mxu0
    %v3823 = vpop.f32.mrb[0].mxu0
    %v3824 = vadd.f32 %v3783, %v3823
    %v3825 = vpop.f32.mrb[0].mxu0
    %3826 = vdwg.mxu0
    %3827 = vmatprep.subr.bf16.mxu0 0
    %3828 = vmatpush1.bf16.msra.mxu0 %v3421
    %3829 = vmatprep.subr.bf16.mxu0 0
    %3830 = vmatpush1.bf16.msra.mxu0 %v3422
    %3831 = vmatprep.subr.bf16.mxu0 0
    %3832 = vmatpush1.bf16.msra.mxu0 %v3423
    %3833 = vmatprep.subr.bf16.mxu0 0
    %3834 = vmatpush1.bf16.msra.mxu0 %v3424
    %3835 = vmatprep.subr.bf16.mxu0 0
    %3836 = vmatpush1.bf16.msra.mxu0 %v3425
    %3837 = vmatprep.subr.bf16.mxu0 0
    %3838 = vmatpush1.bf16.msra.mxu0 %v3426
    %3839 = vmatprep.subr.bf16.mxu0 0
    %3840 = vmatpush1.bf16.msra.mxu0 %v3427
    %3841 = vmatprep.subr.bf16.mxu0 0
    %3842 = vmatpush1.bf16.msra.mxu0 %v3428
    %3843 = vmatprep.subr.bf16.mxu0 0
    %3844 = vmatpush1.bf16.msra.mxu0 %v3429
    %3845 = vmatprep.subr.bf16.mxu0 0
    %3846 = vmatpush1.bf16.msra.mxu0 %v3430
    %3847 = vmatprep.subr.bf16.mxu0 0
    %3848 = vmatpush1.bf16.msra.mxu0 %v3431
    %3849 = vmatprep.subr.bf16.mxu0 0
    %3850 = vmatpush1.bf16.msra.mxu0 %v3432
    %3851 = vmatprep.subr.bf16.mxu0 0
    %3852 = vmatpush1.bf16.msra.mxu0 %v3433
    %3853 = vmatprep.subr.bf16.mxu0 0
    %3854 = vmatpush1.bf16.msra.mxu0 %v3434
    %3855 = vmatprep.subr.bf16.mxu0 0
    %3856 = vmatpush1.bf16.msra.mxu0 %v3435
    %3857 = vmatprep.subr.bf16.mxu0 0
    %3858 = vmatpush1.bf16.msra.mxu0 %v3436
    %3859 = vmatprep.mubr.bf16.mxu0 %v2553
    %3860 = vmatmul.mubr.bf16.gmra.mrb[0].mxu0 %v2552
    %v3861 = vpop.f32.mrb[0].mxu0
    %v3862 = vadd.f32 %v3821, %v3861
    %v3863 = vpop.f32.mrb[0].mxu0
    %v3864 = vpop.f32.mrb[0].mxu0
    %v3865 = vadd.f32 %v3824, %v3864
    %v3866 = vpop.f32.mrb[0].mxu0
    %3867 = vdwg.mxu0
    %3868 = vmatprep.subr.bf16.mxu0 0
    %3869 = vmatpush1.bf16.msra.mxu0 %v3437
    %3870 = vmatprep.subr.bf16.mxu0 0
    %3871 = vmatpush1.bf16.msra.mxu0 %v3438
    %3872 = vmatprep.subr.bf16.mxu0 0
    %3873 = vmatpush1.bf16.msra.mxu0 %v3439
    %3874 = vmatprep.subr.bf16.mxu0 0
    %3875 = vmatpush1.bf16.msra.mxu0 %v3440
    %3876 = vmatprep.subr.bf16.mxu0 0
    %3877 = vmatpush1.bf16.msra.mxu0 %v3441
    %3878 = vmatprep.subr.bf16.mxu0 0
    %3879 = vmatpush1.bf16.msra.mxu0 %v3442
    %3880 = vmatprep.subr.bf16.mxu0 0
    %3881 = vmatpush1.bf16.msra.mxu0 %v3443
    %3882 = vmatprep.subr.bf16.mxu0 0
    %3883 = vmatpush1.bf16.msra.mxu0 %v3444
    %3884 = vmatprep.subr.bf16.mxu0 0
    %3885 = vmatpush1.bf16.msra.mxu0 %v3445
    %3886 = vmatprep.subr.bf16.mxu0 0
    %3887 = vmatpush1.bf16.msra.mxu0 %v3446
    %3888 = vmatprep.subr.bf16.mxu0 0
    %3889 = vmatpush1.bf16.msra.mxu0 %v3447
    %3890 = vmatprep.subr.bf16.mxu0 0
    %3891 = vmatpush1.bf16.msra.mxu0 %v3448
    %3892 = vmatprep.subr.bf16.mxu0 0
    %3893 = vmatpush1.bf16.msra.mxu0 %v3449
    %3894 = vmatprep.subr.bf16.mxu0 0
    %3895 = vmatpush1.bf16.msra.mxu0 %v3450
    %3896 = vmatprep.subr.bf16.mxu0 0
    %3897 = vmatpush1.bf16.msra.mxu0 %v3451
    %3898 = vmatprep.subr.bf16.mxu0 0
    %3899 = vmatpush1.bf16.msra.mxu0 %v3452
    %3900 = vmatprep.mubr.bf16.mxu0 %v2555
    %3901 = vmatmul.mubr.bf16.gmra.mrb[0].mxu0 %v2554
    %v3902 = vpop.f32.mrb[0].mxu0
    %v3903 = vadd.f32 %v3862, %v3902
    %v3904 = vpop.f32.mrb[0].mxu0
    %v3905 = vpop.f32.mrb[0].mxu0
    %v3906 = vadd.f32 %v3865, %v3905
    %v3907 = vpop.f32.mrb[0].mxu0
    %3908 = vdwg.mxu0
    %v3909 = vadd.f32 %v1303, %v3903
    %v3910 = vadd.f32 %v1304, %v3906
    %3911 = vadd.xlane.f32.xlu0 %v3909
    %v3912 = vpop.xlane.xlu0 %3911
    %3913 = vadd.xlane.f32.xlu0 %v3910
    %v3914 = vpop.xlane.xlu0 %3913
    %v3915 = vmul.f32 %v3912, 0.015151516
    %v3916 = vmul.f32 %v3914, 0.015151516
    %v3917 = vsub.f32 %v3909, %v3915
    %v3918 = vsub.f32 %v3910, %v3916
    %v3919 = vmul.f32 %v3917, %v29
    %v3920 = vmul.f32 %v3918, %v29
    %v3921 = vmul.f32 %v3919, %v3919
    %v3922 = vmul.f32 %v3920, %v3920
    %3923 = vadd.xlane.f32.xlu0 %v3921
    %v3924 = vpop.xlane.xlu0 %3923
    %3925 = vadd.xlane.f32.xlu0 %v3922
    %v3926 = vpop.xlane.xlu0 %3925
    %v3927 = vmul.f32 %v3924, 0.015151516
    %v3928 = vmul.f32 %v3926, 0.015151516
    %v3929 = vadd.f32 %v3927, 1e-05
    %v3930 = vadd.f32 %v3928, 1e-05
    %v3931 = vrsqrt.pop %v3929
    %v3932 = vrsqrt.pop %v3930
    %v3933 = vmul.f32 %v3919, %v3931
    %v3934 = vmul.f32 %v3920, %v3932
    %v3935 = vld [vmem:[%s5 + $0x6] ss:$0 sm:$0xff]
    %v3936 = vmul.f32 %v3933, %v3935
    %v3937 = vmul.f32 %v3934, %v3935
    %v3938 = vld [vmem:[%s5 + $0x7] ss:$0 sm:$0xff]
    %v3939 = vadd.f32 %v3936, %v3938
    %v3940 = vadd.f32 %v3937, %v3938
    %v3941 = vpack.c.bf16 %v3940, %v3939
    %v3942 = vld [vmem:[%s1 + $0x18] sm:$0xff]
    %v3943 = vld [vmem:[%s1 + $0x20] sm:$0xff]
    %v3944 = vld [vmem:[%s1 + $0x28] sm:$0xff]
    %v3945 = vld [vmem:[%s1 + $0x64] sm:$0xff]
    %v3946 = vld [vmem:[%s1 + $0x6c] sm:$0xff]
    %v3947 = vld [vmem:[%s1 + $0x74] sm:$0xff]
    %v3948 = vld [vmem:[%s1 + $0xb0] sm:$0xff]
    %v3949 = vld [vmem:[%s1 + $0xb8] sm:$0xff]
    %v3950 = vld [vmem:[%s1 + $0xc0] sm:$0xff]
    %v3951 = vld [vmem:[%s1 + $0xfc] sm:$0xff]
    %v3952 = vld [vmem:[%s1 + $0x104] sm:$0xff]
    %v3953 = vld [vmem:[%s1 + $0x10c] sm:$0xff]
    %v3954 = vld [vmem:[%s1 + $0x148] sm:$0xff]
    %v3955 = vld [vmem:[%s1 + $0x150] sm:$0xff]
    %v3956 = vld [vmem:[%s1 + $0x158] sm:$0xff]
    %v3957 = vld [vmem:[%s1 + $0x194] sm:$0xff]
    %v3958 = vld [vmem:[%s1 + $0x19c] sm:$0xff]
    %v3959 = vld [vmem:[%s1 + $0x1a4] sm:$0xff]
    %v3960 = vld [vmem:[%s1 + $0x1e0] sm:$0xff]
    %v3961 = vld [vmem:[%s1 + $0x1e8] sm:$0xff]
    %v3962 = vld [vmem:[%s1 + $0x1f0] sm:$0xff]
    %v3963 = vld [vmem:[%s1 + $0x22c] sm:$0xff]
    %v3964 = vld [vmem:[%s1 + $0x234] sm:$0xff]
    %v3965 = vld [vmem:[%s1 + $0x23c] sm:$0xff]
    %v3966 = vld [vmem:[%s1 + $0x278] sm:$0xff]
    %v3967 = vld [vmem:[%s1 + $0x280] sm:$0xff]
    %v3968 = vld [vmem:[%s1 + $0x288] sm:$0xff]
    %v3969 = vld [vmem:[%s1 + $0x2c4] sm:$0xff]
    %v3970 = vld [vmem:[%s1 + $0x2cc] sm:$0xff]
    %v3971 = vld [vmem:[%s1 + $0x2d4] sm:$0xff]
    %v3972 = vld [vmem:[%s1 + $0x310] sm:$0xff]
    %v3973 = vld [vmem:[%s1 + $0x318] sm:$0xff]
    %v3974 = vld [vmem:[%s1 + $0x320] sm:$0xff]
    %v3975 = vld [vmem:[%s1 + $0x35c] sm:$0xff]
    %v3976 = vld [vmem:[%s1 + $0x364] sm:$0xff]
    %v3977 = vld [vmem:[%s1 + $0x36c] sm:$0xff]
    %v3978 = vld [vmem:[%s1 + $0x3a8] sm:$0xff]
    %v3979 = vld [vmem:[%s1 + $0x3b0] sm:$0xff]
    %v3980 = vld [vmem:[%s1 + $0x3b8] sm:$0xff]
    %v3981 = vld [vmem:[%s1 + $0x3f4] sm:$0xff]
    %v3982 = vld [vmem:[%s1 + $0x3fc] sm:$0xff]
    %v3983 = vld [vmem:[%s1 + $0x404] sm:$0xff]
    %v3984 = vld [vmem:[%s1 + $0x440] sm:$0xff]
    %v3985 = vld [vmem:[%s1 + $0x448] sm:$0xff]
    %v3986 = vld [vmem:[%s1 + $0x450] sm:$0xff]
    %v3987 = vld [vmem:[%s1 + $0x48c] sm:$0xff]
    %v3988 = vld [vmem:[%s1 + $0x494] sm:$0xff]
    %v3989 = vld [vmem:[%s1 + $0x49c] sm:$0xff]
    %s3990 = scalar_lea.vmem %s5, 128
    %v3991 = vld [vmem:[%s3990] ss:$8 sm:$0xf]
    %v3992 = vld [vmem:[%s3990] ss:$8 sm:$0x30]
    %v3993 = vor.u32 %v3991, %v3992
    %v3995 = vlaneseq
    %v3996 = vshrl.u32 %v3995, 7
    %v3997 = vsub.s32 0, %v3996
    %v3998 = vrot.slane %v3993, %v3997
    %v3999 = vlaneseq
    %v4000 = vshrl.u32 %v3999, 7
    %v4001 = vsub.s32 1, %v4000
    %v4002 = vrot.slane %v3993, %v4001
    %v4003 = vlaneseq
    %v4004 = vshrl.u32 %v4003, 7
    %v4005 = vsub.s32 2, %v4004
    %v4006 = vrot.slane %v3993, %v4005
    %v4007 = vlaneseq
    %v4008 = vshrl.u32 %v4007, 7
    %v4009 = vsub.s32 3, %v4008
    %v4010 = vrot.slane %v3993, %v4009
    %v4011 = vlaneseq
    %v4012 = vshrl.u32 %v4011, 7
    %v4013 = vsub.s32 4, %v4012
    %v4014 = vrot.slane %v3993, %v4013
    %v4015 = vlaneseq
    %v4016 = vshrl.u32 %v4015, 7
    %v4017 = vsub.s32 5, %v4016
    %v4018 = vrot.slane %v3993, %v4017
    %v4073 = vunpack.c.l.b16 %v3942
    %v4074 = vunpack.c.h.b16 %v3942
    %v4075 = vunpack.c.l.b16 %v3943
    %v4076 = vunpack.c.h.b16 %v3943
    %v4077 = vunpack.c.l.b16 %v3944
    %v4078 = vunpack.c.h.b16 %v3944
    %v4079 = vunpack.c.l.b16 %v3945
    %v4080 = vunpack.c.h.b16 %v3945
    %v4081 = vunpack.c.l.b16 %v3946
    %v4082 = vunpack.c.h.b16 %v3946
    %v4083 = vunpack.c.l.b16 %v3947
    %v4084 = vunpack.c.h.b16 %v3947
    %v4085 = vunpack.c.l.b16 %v3948
    %v4086 = vunpack.c.h.b16 %v3948
    %v4087 = vunpack.c.l.b16 %v3949
    %v4088 = vunpack.c.h.b16 %v3949
    %v4089 = vunpack.c.l.b16 %v3950
    %v4090 = vunpack.c.h.b16 %v3950
    %v4091 = vunpack.c.l.b16 %v3951
    %v4092 = vunpack.c.h.b16 %v3951
    %v4093 = vunpack.c.l.b16 %v3952
    %v4094 = vunpack.c.h.b16 %v3952
    %v4095 = vunpack.c.l.b16 %v3953
    %v4096 = vunpack.c.h.b16 %v3953
    %v4097 = vunpack.c.l.b16 %v3954
    %v4098 = vunpack.c.h.b16 %v3954
    %v4099 = vunpack.c.l.b16 %v3955
    %v4100 = vunpack.c.h.b16 %v3955
    %v4101 = vunpack.c.l.b16 %v3956
    %v4102 = vunpack.c.h.b16 %v3956
    %v4103 = vunpack.c.l.b16 %v3957
    %v4104 = vunpack.c.h.b16 %v3957
    %v4105 = vunpack.c.l.b16 %v3958
    %v4106 = vunpack.c.h.b16 %v3958
    %v4107 = vunpack.c.l.b16 %v3959
    %v4108 = vunpack.c.h.b16 %v3959
    %v4109 = vunpack.c.l.b16 %v3960
    %v4110 = vunpack.c.h.b16 %v3960
    %v4111 = vunpack.c.l.b16 %v3961
    %v4112 = vunpack.c.h.b16 %v3961
    %v4113 = vunpack.c.l.b16 %v3962
    %v4114 = vunpack.c.h.b16 %v3962
    %v4115 = vunpack.c.l.b16 %v3963
    %v4116 = vunpack.c.h.b16 %v3963
    %v4117 = vunpack.c.l.b16 %v3964
    %v4118 = vunpack.c.h.b16 %v3964
    %v4119 = vunpack.c.l.b16 %v3965
    %v4120 = vunpack.c.h.b16 %v3965
    %v4121 = vunpack.c.l.b16 %v3966
    %v4122 = vunpack.c.h.b16 %v3966
    %v4123 = vunpack.c.l.b16 %v3967
    %v4124 = vunpack.c.h.b16 %v3967
    %v4125 = vunpack.c.l.b16 %v3968
    %v4126 = vunpack.c.h.b16 %v3968
    %v4127 = vunpack.c.l.b16 %v3969
    %v4128 = vunpack.c.h.b16 %v3969
    %v4129 = vunpack.c.l.b16 %v3970
    %v4130 = vunpack.c.h.b16 %v3970
    %v4131 = vunpack.c.l.b16 %v3971
    %v4132 = vunpack.c.h.b16 %v3971
    %v4133 = vunpack.c.l.b16 %v3972
    %v4134 = vunpack.c.h.b16 %v3972
    %v4135 = vunpack.c.l.b16 %v3973
    %v4136 = vunpack.c.h.b16 %v3973
    %v4137 = vunpack.c.l.b16 %v3974
    %v4138 = vunpack.c.h.b16 %v3974
    %v4139 = vunpack.c.l.b16 %v3975
    %v4140 = vunpack.c.h.b16 %v3975
    %v4141 = vunpack.c.l.b16 %v3976
    %v4142 = vunpack.c.h.b16 %v3976
    %v4143 = vunpack.c.l.b16 %v3977
    %v4144 = vunpack.c.h.b16 %v3977
    %v4145 = vunpack.c.l.b16 %v3978
    %v4146 = vunpack.c.h.b16 %v3978
    %v4147 = vunpack.c.l.b16 %v3979
    %v4148 = vunpack.c.h.b16 %v3979
    %v4149 = vunpack.c.l.b16 %v3980
    %v4150 = vunpack.c.h.b16 %v3980
    %v4151 = vunpack.c.l.b16 %v3981
    %v4152 = vunpack.c.h.b16 %v3981
    %v4153 = vunpack.c.l.b16 %v3982
    %v4154 = vunpack.c.h.b16 %v3982
    %v4155 = vunpack.c.l.b16 %v3983
    %v4156 = vunpack.c.h.b16 %v3983
    %v4157 = vunpack.c.l.b16 %v3984
    %v4158 = vunpack.c.h.b16 %v3984
    %v4159 = vunpack.c.l.b16 %v3985
    %v4160 = vunpack.c.h.b16 %v3985
    %v4161 = vunpack.c.l.b16 %v3986
    %v4162 = vunpack.c.h.b16 %v3986
    %v4163 = vunpack.c.l.b16 %v3987
    %v4164 = vunpack.c.h.b16 %v3987
    %v4165 = vunpack.c.l.b16 %v3988
    %v4166 = vunpack.c.h.b16 %v3988
    %v4167 = vunpack.c.l.b16 %v3989
    %v4168 = vunpack.c.h.b16 %v3989
    %v4169 = vpack.c.b16 %v4079, %v4073
    %v4170 = vpack.c.b16 %v4080, %v4074
    %v4171 = vpack.c.b16 %v4081, %v4075
    %v4172 = vpack.c.b16 %v4082, %v4076
    %v4173 = vpack.c.b16 %v4083, %v4077
    %v4174 = vpack.c.b16 %v4084, %v4078
    %v4175 = vpack.c.b16 %v4091, %v4085
    %v4176 = vpack.c.b16 %v4092, %v4086
    %v4177 = vpack.c.b16 %v4093, %v4087
    %v4178 = vpack.c.b16 %v4094, %v4088
    %v4179 = vpack.c.b16 %v4095, %v4089
    %v4180 = vpack.c.b16 %v4096, %v4090
    %v4181 = vpack.c.b16 %v4103, %v4097
    %v4182 = vpack.c.b16 %v4104, %v4098
    %v4183 = vpack.c.b16 %v4105, %v4099
    %v4184 = vpack.c.b16 %v4106, %v4100
    %v4185 = vpack.c.b16 %v4107, %v4101
    %v4186 = vpack.c.b16 %v4108, %v4102
    %v4187 = vpack.c.b16 %v4115, %v4109
    %v4188 = vpack.c.b16 %v4116, %v4110
    %v4189 = vpack.c.b16 %v4117, %v4111
    %v4190 = vpack.c.b16 %v4118, %v4112
    %v4191 = vpack.c.b16 %v4119, %v4113
    %v4192 = vpack.c.b16 %v4120, %v4114
    %v4193 = vpack.c.b16 %v4127, %v4121
    %v4194 = vpack.c.b16 %v4128, %v4122
    %v4195 = vpack.c.b16 %v4129, %v4123
    %v4196 = vpack.c.b16 %v4130, %v4124
    %v4197 = vpack.c.b16 %v4131, %v4125
    %v4198 = vpack.c.b16 %v4132, %v4126
    %v4199 = vpack.c.b16 %v4139, %v4133
    %v4200 = vpack.c.b16 %v4140, %v4134
    %v4201 = vpack.c.b16 %v4141, %v4135
    %v4202 = vpack.c.b16 %v4142, %v4136
    %v4203 = vpack.c.b16 %v4143, %v4137
    %v4204 = vpack.c.b16 %v4144, %v4138
    %v4205 = vpack.c.b16 %v4151, %v4145
    %v4206 = vpack.c.b16 %v4152, %v4146
    %v4207 = vpack.c.b16 %v4153, %v4147
    %v4208 = vpack.c.b16 %v4154, %v4148
    %v4209 = vpack.c.b16 %v4155, %v4149
    %v4210 = vpack.c.b16 %v4156, %v4150
    %v4211 = vpack.c.b16 %v4163, %v4157
    %v4212 = vpack.c.b16 %v4164, %v4158
    %v4213 = vpack.c.b16 %v4165, %v4159
    %v4214 = vpack.c.b16 %v4166, %v4160
    %v4215 = vpack.c.b16 %v4167, %v4161
    %v4216 = vpack.c.b16 %v4168, %v4162
    %4265 = vmatprep.subr.bf16.mxu0 %v4170
    %4266 = vmatpush1.bf16.msra.mxu0 %v4169
    %4267 = vmatprep.subr.bf16.mxu0 %v4176
    %4268 = vmatpush1.bf16.msra.mxu0 %v4175
    %4269 = vmatprep.subr.bf16.mxu0 %v4182
    %4270 = vmatpush1.bf16.msra.mxu0 %v4181
    %4271 = vmatprep.subr.bf16.mxu0 %v4188
    %4272 = vmatpush1.bf16.msra.mxu0 %v4187
    %4273 = vmatprep.subr.bf16.mxu0 %v4194
    %4274 = vmatpush1.bf16.msra.mxu0 %v4193
    %4275 = vmatprep.subr.bf16.mxu0 %v4200
    %4276 = vmatpush1.bf16.msra.mxu0 %v4199
    %4277 = vmatprep.subr.bf16.mxu0 %v4206
    %4278 = vmatpush1.bf16.msra.mxu0 %v4205
    %4279 = vmatprep.subr.bf16.mxu0 %v4212
    %4280 = vmatpush1.bf16.msra.mxu0 %v4211
    %4281 = vmatprep.subr.bf16.mxu0 0
    %4282 = vmatpush1.bf16.msra.mxu0 0
    %4283 = vmatprep.subr.bf16.mxu0 0
    %4284 = vmatpush1.bf16.msra.mxu0 0
    %4285 = vmatprep.subr.bf16.mxu0 0
    %4286 = vmatpush1.bf16.msra.mxu0 0
    %4287 = vmatprep.subr.bf16.mxu0 0
    %4288 = vmatpush1.bf16.msra.mxu0 0
    %4289 = vmatprep.subr.bf16.mxu0 0
    %4290 = vmatpush1.bf16.msra.mxu0 0
    %4291 = vmatprep.subr.bf16.mxu0 0
    %4292 = vmatpush1.bf16.msra.mxu0 0
    %4293 = vmatprep.subr.bf16.mxu0 0
    %4294 = vmatpush1.bf16.msra.mxu0 0
    %4295 = vmatprep.subr.bf16.mxu0 0
    %4296 = vmatpush1.bf16.msra.mxu0 0
    %4297 = vmatprep.mubr.bf16.mxu0 0
    %4298 = vmatmul.mubr.bf16.gmra.mrb[0].mxu0 %v3941
    %v4299 = vpop.f32.mrb[0].mxu0
    %v4300 = vadd.f32 %v3998, %v4299
    %v4301 = vpop.f32.mrb[0].mxu0
    %v4302 = vadd.f32 %v4002, %v4301
    %v4303 = vpop.f32.mrb[0].mxu0
    %v4304 = vadd.f32 %v3998, %v4303
    %v4305 = vpop.f32.mrb[0].mxu0
    %v4306 = vadd.f32 %v4002, %v4305
    %4307 = vdwg.mxu0
    %4308 = vmatprep.subr.bf16.mxu0 %v4172
    %4309 = vmatpush1.bf16.msra.mxu0 %v4171
    %4310 = vmatprep.subr.bf16.mxu0 %v4178
    %4311 = vmatpush1.bf16.msra.mxu0 %v4177
    %4312 = vmatprep.subr.bf16.mxu0 %v4184
    %4313 = vmatpush1.bf16.msra.mxu0 %v4183
    %4314 = vmatprep.subr.bf16.mxu0 %v4190
    %4315 = vmatpush1.bf16.msra.mxu0 %v4189
    %4316 = vmatprep.subr.bf16.mxu0 %v4196
    %4317 = vmatpush1.bf16.msra.mxu0 %v4195
    %4318 = vmatprep.subr.bf16.mxu0 %v4202
    %4319 = vmatpush1.bf16.msra.mxu0 %v4201
    %4320 = vmatprep.subr.bf16.mxu0 %v4208
    %4321 = vmatpush1.bf16.msra.mxu0 %v4207
    %4322 = vmatprep.subr.bf16.mxu0 %v4214
    %4323 = vmatpush1.bf16.msra.mxu0 %v4213
    %4324 = vmatprep.subr.bf16.mxu0 0
    %4325 = vmatpush1.bf16.msra.mxu0 0
    %4326 = vmatprep.subr.bf16.mxu0 0
    %4327 = vmatpush1.bf16.msra.mxu0 0
    %4328 = vmatprep.subr.bf16.mxu0 0
    %4329 = vmatpush1.bf16.msra.mxu0 0
    %4330 = vmatprep.subr.bf16.mxu0 0
    %4331 = vmatpush1.bf16.msra.mxu0 0
    %4332 = vmatprep.subr.bf16.mxu0 0
    %4333 = vmatpush1.bf16.msra.mxu0 0
    %4334 = vmatprep.subr.bf16.mxu0 0
    %4335 = vmatpush1.bf16.msra.mxu0 0
    %4336 = vmatprep.subr.bf16.mxu0 0
    %4337 = vmatpush1.bf16.msra.mxu0 0
    %4338 = vmatprep.subr.bf16.mxu0 0
    %4339 = vmatpush1.bf16.msra.mxu0 0
    %4340 = vmatprep.mubr.bf16.mxu0 0
    %4341 = vmatmul.mubr.bf16.gmra.mrb[0].mxu0 %v3941
    %v4342 = vpop.f32.mrb[0].mxu0
    %v4343 = vadd.f32 %v4006, %v4342
    %v4344 = vpop.f32.mrb[0].mxu0
    %v4345 = vadd.f32 %v4010, %v4344
    %v4346 = vpop.f32.mrb[0].mxu0
    %v4347 = vadd.f32 %v4006, %v4346
    %v4348 = vpop.f32.mrb[0].mxu0
    %v4349 = vadd.f32 %v4010, %v4348
    %4350 = vdwg.mxu0
    %4351 = vmatprep.subr.bf16.mxu0 %v4174
    %4352 = vmatpush1.bf16.msra.mxu0 %v4173
    %4353 = vmatprep.subr.bf16.mxu0 %v4180
    %4354 = vmatpush1.bf16.msra.mxu0 %v4179
    %4355 = vmatprep.subr.bf16.mxu0 %v4186
    %4356 = vmatpush1.bf16.msra.mxu0 %v4185
    %4357 = vmatprep.subr.bf16.mxu0 %v4192
    %4358 = vmatpush1.bf16.msra.mxu0 %v4191
    %4359 = vmatprep.subr.bf16.mxu0 %v4198
    %4360 = vmatpush1.bf16.msra.mxu0 %v4197
    %4361 = vmatprep.subr.bf16.mxu0 %v4204
    %4362 = vmatpush1.bf16.msra.mxu0 %v4203
    %4363 = vmatprep.subr.bf16.mxu0 %v4210
    %4364 = vmatpush1.bf16.msra.mxu0 %v4209
    %4365 = vmatprep.subr.bf16.mxu0 %v4216
    %4366 = vmatpush1.bf16.msra.mxu0 %v4215
    %4367 = vmatprep.subr.bf16.mxu0 0
    %4368 = vmatpush1.bf16.msra.mxu0 0
    %4369 = vmatprep.subr.bf16.mxu0 0
    %4370 = vmatpush1.bf16.msra.mxu0 0
    %4371 = vmatprep.subr.bf16.mxu0 0
    %4372 = vmatpush1.bf16.msra.mxu0 0
    %4373 = vmatprep.subr.bf16.mxu0 0
    %4374 = vmatpush1.bf16.msra.mxu0 0
    %4375 = vmatprep.subr.bf16.mxu0 0
    %4376 = vmatpush1.bf16.msra.mxu0 0
    %4377 = vmatprep.subr.bf16.mxu0 0
    %4378 = vmatpush1.bf16.msra.mxu0 0
    %4379 = vmatprep.subr.bf16.mxu0 0
    %4380 = vmatpush1.bf16.msra.mxu0 0
    %4381 = vmatprep.subr.bf16.mxu0 0
    %4382 = vmatpush1.bf16.msra.mxu0 0
    %4383 = vmatprep.mubr.bf16.mxu0 0
    %4384 = vmatmul.mubr.bf16.gmra.mrb[0].mxu0 %v3941
    %v4385 = vpop.f32.mrb[0].mxu0
    %v4386 = vadd.f32 %v4014, %v4385
    %v4387 = vpop.f32.mrb[0].mxu0
    %v4388 = vadd.f32 %v4018, %v4387
    %v4389 = vpop.f32.mrb[0].mxu0
    %v4390 = vadd.f32 %v4014, %v4389
    %v4391 = vpop.f32.mrb[0].mxu0
    %v4392 = vadd.f32 %v4018, %v4391
    %4393 = vdwg.mxu0
    %4394 = vmatprep.subr.mxu0 0.0
    %4395 = vmatpush1.xpose.msra.mxu0 %v4343
    %4396 = vmatprep.subr.mxu0 0.0
    %4397 = vmatpush1.xpose.msra.mxu0 0.0
    %4398 = vmatprep.subr.mxu0 0.0
    %4399 = vmatpush1.xpose.msra.mxu0 0.0
    %4400 = vmatprep.subr.mxu0 0.0
    %4401 = vmatpush1.xpose.msra.mxu0 0.0
    %4402 = vmatprep.subr.mxu0 0.0
    %4403 = vmatpush1.xpose.msra.mxu0 0.0
    %4404 = vmatprep.subr.mxu0 0.0
    %4405 = vmatpush1.xpose.msra.mxu0 0.0
    %4406 = vmatprep.subr.mxu0 0.0
    %4407 = vmatpush1.xpose.msra.mxu0 0.0
    %4408 = vmatprep.subr.mxu0 0.0
    %4409 = vmatpush1.xpose.msra.mxu0 0.0
    %4410 = vmatprep.subr.mxu0 0.0
    %4411 = vmatpush1.xpose.msra.mxu0 0.0
    %4412 = vmatprep.subr.mxu0 0.0
    %4413 = vmatpush1.xpose.msra.mxu0 0.0
    %4414 = vmatprep.subr.mxu0 0.0
    %4415 = vmatpush1.xpose.msra.mxu0 0.0
    %4416 = vmatprep.subr.mxu0 0.0
    %4417 = vmatpush1.xpose.msra.mxu0 0.0
    %4418 = vmatprep.subr.mxu0 0.0
    %4419 = vmatpush1.xpose.msra.mxu0 0.0
    %4420 = vmatprep.subr.mxu0 0.0
    %4421 = vmatpush1.xpose.msra.mxu0 0.0
    %4422 = vmatprep.subr.mxu0 0.0
    %4423 = vmatpush1.xpose.msra.mxu0 0.0
    %4424 = vmatprep.subr.mxu0 0.0
    %4425 = vmatpush1.xpose.msra.mxu0 0.0
    %4426 = vmatprep.subr.mxu0 0.0
    %4427 = vmatpush1.xpose.msra.mxu0 0.0
    %4428 = vmatprep.subr.mxu0 0.0
    %4429 = vmatpush1.xpose.msra.mxu0 0.0
    %4430 = vmatprep.subr.mxu0 0.0
    %4431 = vmatpush1.xpose.msra.mxu0 0.0
    %4432 = vmatprep.subr.mxu0 0.0
    %4433 = vmatpush1.xpose.msra.mxu0 0.0
    %4434 = vmatprep.subr.mxu0 0.0
    %4435 = vmatpush1.xpose.msra.mxu0 0.0
    %4436 = vmatprep.subr.mxu0 0.0
    %4437 = vmatpush1.xpose.msra.mxu0 0.0
    %4438 = vmatprep.subr.mxu0 0.0
    %4439 = vmatpush1.xpose.msra.mxu0 0.0
    %4440 = vmatprep.subr.mxu0 0.0
    %4441 = vmatpush1.xpose.msra.mxu0 0.0
    %4442 = vmatprep.subr.mxu0 0.0
    %4443 = vmatpush1.xpose.msra.mxu0 0.0
    %4444 = vmatprep.subr.mxu0 0.0
    %4445 = vmatpush1.xpose.msra.mxu0 0.0
    %4446 = vmatprep.subr.mxu0 0.0
    %4447 = vmatpush1.xpose.msra.mxu0 0.0
    %4448 = vmatprep.subr.mxu0 0.0
    %4449 = vmatpush1.xpose.msra.mxu0 0.0
    %4450 = vmatprep.subr.mxu0 0.0
    %4451 = vmatpush1.xpose.msra.mxu0 0.0
    %4452 = vmatprep.subr.mxu0 0.0
    %4453 = vmatpush1.xpose.msra.mxu0 0.0
    %4454 = vmatprep.subr.mxu0 0.0
    %4455 = vmatpush1.xpose.msra.mxu0 0.0
    %4456 = vmatprep.subr.mxu0 0.0
    %4457 = vmatpush1.xpose.msra.mxu0 0.0
    %4458 = vmatprep.mubr.f32.mxu0 0.0
    %4459 = vmatmul.mubr.f32.gmra.mrb[0].mxu0 %v4300
    %v4460 = vpop.f32.mrb[0].mxu0
    %v4461 = vadd.f32 0.0, %v4460
    %v4462 = vpop.f32.mrb[0].mxu0
    %4463 = vdwg.mxu0
    %v4464 = vsel %vm554, %v4461, -inf
    %4465 = vmax.xlane.f32.xlu0 %v4464
    %v4466 = vpop.xlane.xlu0 %4465
    %v4467 = vsub.f32 %v4461, %v4466
    %v4468 = vmul.f32 %v4467, 1.442695
    %v4469 = vpow.pop %v4468
    %v4470 = vsel %vm554, %v4469, 0.0
    %4471 = vadd.xlane.f32.xlu0 %v4470
    %v4472 = vpop.xlane.xlu0 %4471
    %v4473 = vrcp.pop %v4472
    %v4474 = vmul.f32 %v4469, %v4473
    %v4476 = vsel %vm554, %v4474, 0
    %4478 = vmatprep.subr.mxu0 0.0
    %4479 = vmatpush1.msra.mxu0 %v4386
    %4480 = vmatprep.subr.mxu0 0.0
    %4481 = vmatpush1.msra.mxu0 0.0
    %4482 = vmatprep.subr.mxu0 0.0
    %4483 = vmatpush1.msra.mxu0 0.0
    %4484 = vmatprep.subr.mxu0 0.0
    %4485 = vmatpush1.msra.mxu0 0.0
    %4486 = vmatprep.subr.mxu0 0.0
    %4487 = vmatpush1.msra.mxu0 0.0
    %4488 = vmatprep.subr.mxu0 0.0
    %4489 = vmatpush1.msra.mxu0 0.0
    %4490 = vmatprep.subr.mxu0 0.0
    %4491 = vmatpush1.msra.mxu0 0.0
    %4492 = vmatprep.subr.mxu0 0.0
    %4493 = vmatpush1.msra.mxu0 0.0
    %4494 = vmatprep.subr.mxu0 0.0
    %4495 = vmatpush1.msra.mxu0 0.0
    %4496 = vmatprep.subr.mxu0 0.0
    %4497 = vmatpush1.msra.mxu0 0.0
    %4498 = vmatprep.subr.mxu0 0.0
    %4499 = vmatpush1.msra.mxu0 0.0
    %4500 = vmatprep.subr.mxu0 0.0
    %4501 = vmatpush1.msra.mxu0 0.0
    %4502 = vmatprep.subr.mxu0 0.0
    %4503 = vmatpush1.msra.mxu0 0.0
    %4504 = vmatprep.subr.mxu0 0.0
    %4505 = vmatpush1.msra.mxu0 0.0
    %4506 = vmatprep.subr.mxu0 0.0
    %4507 = vmatpush1.msra.mxu0 0.0
    %4508 = vmatprep.subr.mxu0 0.0
    %4509 = vmatpush1.msra.mxu0 0.0
    %4510 = vmatprep.subr.mxu0 0.0
    %4511 = vmatpush1.msra.mxu0 0.0
    %4512 = vmatprep.subr.mxu0 0.0
    %4513 = vmatpush1.msra.mxu0 0.0
    %4514 = vmatprep.subr.mxu0 0.0
    %4515 = vmatpush1.msra.mxu0 0.0
    %4516 = vmatprep.subr.mxu0 0.0
    %4517 = vmatpush1.msra.mxu0 0.0
    %4518 = vmatprep.subr.mxu0 0.0
    %4519 = vmatpush1.msra.mxu0 0.0
    %4520 = vmatprep.subr.mxu0 0.0
    %4521 = vmatpush1.msra.mxu0 0.0
    %4522 = vmatprep.subr.mxu0 0.0
    %4523 = vmatpush1.msra.mxu0 0.0
    %4524 = vmatprep.subr.mxu0 0.0
    %4525 = vmatpush1.msra.mxu0 0.0
    %4526 = vmatprep.subr.mxu0 0.0
    %4527 = vmatpush1.msra.mxu0 0.0
    %4528 = vmatprep.subr.mxu0 0.0
    %4529 = vmatpush1.msra.mxu0 0.0
    %4530 = vmatprep.subr.mxu0 0.0
    %4531 = vmatpush1.msra.mxu0 0.0
    %4532 = vmatprep.subr.mxu0 0.0
    %4533 = vmatpush1.msra.mxu0 0.0
    %4534 = vmatprep.subr.mxu0 0.0
    %4535 = vmatpush1.msra.mxu0 0.0
    %4536 = vmatprep.subr.mxu0 0.0
    %4537 = vmatpush1.msra.mxu0 0.0
    %4538 = vmatprep.subr.mxu0 0.0
    %4539 = vmatpush1.msra.mxu0 0.0
    %4540 = vmatprep.subr.mxu0 0.0
    %4541 = vmatpush1.msra.mxu0 0.0
    %4542 = vmatprep.mubr.f32.mxu0 0.0
    %4543 = vmatmul.mubr.f32.gmra.mrb[0].mxu0 %v4476
    %v4544 = vpop.f32.mrb[0].mxu0
    %v4545 = vadd.f32 0.0, %v4544
    %v4546 = vpop.f32.mrb[0].mxu0
    %4547 = vdwg.mxu0
    %4548 = vmatprep.subr.mxu0 0.0
    %4549 = vmatpush1.xpose.msra.mxu0 %v4345
    %4550 = vmatprep.subr.mxu0 0.0
    %4551 = vmatpush1.xpose.msra.mxu0 0.0
    %4552 = vmatprep.subr.mxu0 0.0
    %4553 = vmatpush1.xpose.msra.mxu0 0.0
    %4554 = vmatprep.subr.mxu0 0.0
    %4555 = vmatpush1.xpose.msra.mxu0 0.0
    %4556 = vmatprep.subr.mxu0 0.0
    %4557 = vmatpush1.xpose.msra.mxu0 0.0
    %4558 = vmatprep.subr.mxu0 0.0
    %4559 = vmatpush1.xpose.msra.mxu0 0.0
    %4560 = vmatprep.subr.mxu0 0.0
    %4561 = vmatpush1.xpose.msra.mxu0 0.0
    %4562 = vmatprep.subr.mxu0 0.0
    %4563 = vmatpush1.xpose.msra.mxu0 0.0
    %4564 = vmatprep.subr.mxu0 0.0
    %4565 = vmatpush1.xpose.msra.mxu0 0.0
    %4566 = vmatprep.subr.mxu0 0.0
    %4567 = vmatpush1.xpose.msra.mxu0 0.0
    %4568 = vmatprep.subr.mxu0 0.0
    %4569 = vmatpush1.xpose.msra.mxu0 0.0
    %4570 = vmatprep.subr.mxu0 0.0
    %4571 = vmatpush1.xpose.msra.mxu0 0.0
    %4572 = vmatprep.subr.mxu0 0.0
    %4573 = vmatpush1.xpose.msra.mxu0 0.0
    %4574 = vmatprep.subr.mxu0 0.0
    %4575 = vmatpush1.xpose.msra.mxu0 0.0
    %4576 = vmatprep.subr.mxu0 0.0
    %4577 = vmatpush1.xpose.msra.mxu0 0.0
    %4578 = vmatprep.subr.mxu0 0.0
    %4579 = vmatpush1.xpose.msra.mxu0 0.0
    %4580 = vmatprep.subr.mxu0 0.0
    %4581 = vmatpush1.xpose.msra.mxu0 0.0
    %4582 = vmatprep.subr.mxu0 0.0
    %4583 = vmatpush1.xpose.msra.mxu0 0.0
    %4584 = vmatprep.subr.mxu0 0.0
    %4585 = vmatpush1.xpose.msra.mxu0 0.0
    %4586 = vmatprep.subr.mxu0 0.0
    %4587 = vmatpush1.xpose.msra.mxu0 0.0
    %4588 = vmatprep.subr.mxu0 0.0
    %4589 = vmatpush1.xpose.msra.mxu0 0.0
    %4590 = vmatprep.subr.mxu0 0.0
    %4591 = vmatpush1.xpose.msra.mxu0 0.0
    %4592 = vmatprep.subr.mxu0 0.0
    %4593 = vmatpush1.xpose.msra.mxu0 0.0
    %4594 = vmatprep.subr.mxu0 0.0
    %4595 = vmatpush1.xpose.msra.mxu0 0.0
    %4596 = vmatprep.subr.mxu0 0.0
    %4597 = vmatpush1.xpose.msra.mxu0 0.0
    %4598 = vmatprep.subr.mxu0 0.0
    %4599 = vmatpush1.xpose.msra.mxu0 0.0
    %4600 = vmatprep.subr.mxu0 0.0
    %4601 = vmatpush1.xpose.msra.mxu0 0.0
    %4602 = vmatprep.subr.mxu0 0.0
    %4603 = vmatpush1.xpose.msra.mxu0 0.0
    %4604 = vmatprep.subr.mxu0 0.0
    %4605 = vmatpush1.xpose.msra.mxu0 0.0
    %4606 = vmatprep.subr.mxu0 0.0
    %4607 = vmatpush1.xpose.msra.mxu0 0.0
    %4608 = vmatprep.subr.mxu0 0.0
    %4609 = vmatpush1.xpose.msra.mxu0 0.0
    %4610 = vmatprep.subr.mxu0 0.0
    %4611 = vmatpush1.xpose.msra.mxu0 0.0
    %4612 = vmatprep.mubr.f32.mxu0 0.0
    %4613 = vmatmul.mubr.f32.gmra.mrb[0].mxu0 %v4302
    %v4614 = vpop.f32.mrb[0].mxu0
    %v4615 = vadd.f32 0.0, %v4614
    %v4616 = vpop.f32.mrb[0].mxu0
    %4617 = vdwg.mxu0
    %v4618 = vsel %vm554, %v4615, -inf
    %4619 = vmax.xlane.f32.xlu0 %v4618
    %v4620 = vpop.xlane.xlu0 %4619
    %v4621 = vsub.f32 %v4615, %v4620
    %v4622 = vmul.f32 %v4621, 1.442695
    %v4623 = vpow.pop %v4622
    %v4624 = vsel %vm554, %v4623, 0.0
    %4625 = vadd.xlane.f32.xlu0 %v4624
    %v4626 = vpop.xlane.xlu0 %4625
    %v4627 = vrcp.pop %v4626
    %v4628 = vmul.f32 %v4623, %v4627
    %v4630 = vsel %vm554, %v4628, 0
    %4632 = vmatprep.subr.mxu0 0.0
    %4633 = vmatpush1.msra.mxu0 %v4388
    %4634 = vmatprep.subr.mxu0 0.0
    %4635 = vmatpush1.msra.mxu0 0.0
    %4636 = vmatprep.subr.mxu0 0.0
    %4637 = vmatpush1.msra.mxu0 0.0
    %4638 = vmatprep.subr.mxu0 0.0
    %4639 = vmatpush1.msra.mxu0 0.0
    %4640 = vmatprep.subr.mxu0 0.0
    %4641 = vmatpush1.msra.mxu0 0.0
    %4642 = vmatprep.subr.mxu0 0.0
    %4643 = vmatpush1.msra.mxu0 0.0
    %4644 = vmatprep.subr.mxu0 0.0
    %4645 = vmatpush1.msra.mxu0 0.0
    %4646 = vmatprep.subr.mxu0 0.0
    %4647 = vmatpush1.msra.mxu0 0.0
    %4648 = vmatprep.subr.mxu0 0.0
    %4649 = vmatpush1.msra.mxu0 0.0
    %4650 = vmatprep.subr.mxu0 0.0
    %4651 = vmatpush1.msra.mxu0 0.0
    %4652 = vmatprep.subr.mxu0 0.0
    %4653 = vmatpush1.msra.mxu0 0.0
    %4654 = vmatprep.subr.mxu0 0.0
    %4655 = vmatpush1.msra.mxu0 0.0
    %4656 = vmatprep.subr.mxu0 0.0
    %4657 = vmatpush1.msra.mxu0 0.0
    %4658 = vmatprep.subr.mxu0 0.0
    %4659 = vmatpush1.msra.mxu0 0.0
    %4660 = vmatprep.subr.mxu0 0.0
    %4661 = vmatpush1.msra.mxu0 0.0
    %4662 = vmatprep.subr.mxu0 0.0
    %4663 = vmatpush1.msra.mxu0 0.0
    %4664 = vmatprep.subr.mxu0 0.0
    %4665 = vmatpush1.msra.mxu0 0.0
    %4666 = vmatprep.subr.mxu0 0.0
    %4667 = vmatpush1.msra.mxu0 0.0
    %4668 = vmatprep.subr.mxu0 0.0
    %4669 = vmatpush1.msra.mxu0 0.0
    %4670 = vmatprep.subr.mxu0 0.0
    %4671 = vmatpush1.msra.mxu0 0.0
    %4672 = vmatprep.subr.mxu0 0.0
    %4673 = vmatpush1.msra.mxu0 0.0
    %4674 = vmatprep.subr.mxu0 0.0
    %4675 = vmatpush1.msra.mxu0 0.0
    %4676 = vmatprep.subr.mxu0 0.0
    %4677 = vmatpush1.msra.mxu0 0.0
    %4678 = vmatprep.subr.mxu0 0.0
    %4679 = vmatpush1.msra.mxu0 0.0
    %4680 = vmatprep.subr.mxu0 0.0
    %4681 = vmatpush1.msra.mxu0 0.0
    %4682 = vmatprep.subr.mxu0 0.0
    %4683 = vmatpush1.msra.mxu0 0.0
    %4684 = vmatprep.subr.mxu0 0.0
    %4685 = vmatpush1.msra.mxu0 0.0
    %4686 = vmatprep.subr.mxu0 0.0
    %4687 = vmatpush1.msra.mxu0 0.0
    %4688 = vmatprep.subr.mxu0 0.0
    %4689 = vmatpush1.msra.mxu0 0.0
    %4690 = vmatprep.subr.mxu0 0.0
    %4691 = vmatpush1.msra.mxu0 0.0
    %4692 = vmatprep.subr.mxu0 0.0
    %4693 = vmatpush1.msra.mxu0 0.0
    %4694 = vmatprep.subr.mxu0 0.0
    %4695 = vmatpush1.msra.mxu0 0.0
    %4696 = vmatprep.mubr.f32.mxu0 0.0
    %4697 = vmatmul.mubr.f32.gmra.mrb[0].mxu0 %v4630
    %v4698 = vpop.f32.mrb[0].mxu0
    %v4699 = vadd.f32 0.0, %v4698
    %v4700 = vpop.f32.mrb[0].mxu0
    %4701 = vdwg.mxu0
    %4702 = vmatprep.subr.mxu0 0.0
    %4703 = vmatpush1.xpose.msra.mxu0 %v4347
    %4704 = vmatprep.subr.mxu0 0.0
    %4705 = vmatpush1.xpose.msra.mxu0 0.0
    %4706 = vmatprep.subr.mxu0 0.0
    %4707 = vmatpush1.xpose.msra.mxu0 0.0
    %4708 = vmatprep.subr.mxu0 0.0
    %4709 = vmatpush1.xpose.msra.mxu0 0.0
    %4710 = vmatprep.subr.mxu0 0.0
    %4711 = vmatpush1.xpose.msra.mxu0 0.0
    %4712 = vmatprep.subr.mxu0 0.0
    %4713 = vmatpush1.xpose.msra.mxu0 0.0
    %4714 = vmatprep.subr.mxu0 0.0
    %4715 = vmatpush1.xpose.msra.mxu0 0.0
    %4716 = vmatprep.subr.mxu0 0.0
    %4717 = vmatpush1.xpose.msra.mxu0 0.0
    %4718 = vmatprep.subr.mxu0 0.0
    %4719 = vmatpush1.xpose.msra.mxu0 0.0
    %4720 = vmatprep.subr.mxu0 0.0
    %4721 = vmatpush1.xpose.msra.mxu0 0.0
    %4722 = vmatprep.subr.mxu0 0.0
    %4723 = vmatpush1.xpose.msra.mxu0 0.0
    %4724 = vmatprep.subr.mxu0 0.0
    %4725 = vmatpush1.xpose.msra.mxu0 0.0
    %4726 = vmatprep.subr.mxu0 0.0
    %4727 = vmatpush1.xpose.msra.mxu0 0.0
    %4728 = vmatprep.subr.mxu0 0.0
    %4729 = vmatpush1.xpose.msra.mxu0 0.0
    %4730 = vmatprep.subr.mxu0 0.0
    %4731 = vmatpush1.xpose.msra.mxu0 0.0
    %4732 = vmatprep.subr.mxu0 0.0
    %4733 = vmatpush1.xpose.msra.mxu0 0.0
    %4734 = vmatprep.subr.mxu0 0.0
    %4735 = vmatpush1.xpose.msra.mxu0 0.0
    %4736 = vmatprep.subr.mxu0 0.0
    %4737 = vmatpush1.xpose.msra.mxu0 0.0
    %4738 = vmatprep.subr.mxu0 0.0
    %4739 = vmatpush1.xpose.msra.mxu0 0.0
    %4740 = vmatprep.subr.mxu0 0.0
    %4741 = vmatpush1.xpose.msra.mxu0 0.0
    %4742 = vmatprep.subr.mxu0 0.0
    %4743 = vmatpush1.xpose.msra.mxu0 0.0
    %4744 = vmatprep.subr.mxu0 0.0
    %4745 = vmatpush1.xpose.msra.mxu0 0.0
    %4746 = vmatprep.subr.mxu0 0.0
    %4747 = vmatpush1.xpose.msra.mxu0 0.0
    %4748 = vmatprep.subr.mxu0 0.0
    %4749 = vmatpush1.xpose.msra.mxu0 0.0
    %4750 = vmatprep.subr.mxu0 0.0
    %4751 = vmatpush1.xpose.msra.mxu0 0.0
    %4752 = vmatprep.subr.mxu0 0.0
    %4753 = vmatpush1.xpose.msra.mxu0 0.0
    %4754 = vmatprep.subr.mxu0 0.0
    %4755 = vmatpush1.xpose.msra.mxu0 0.0
    %4756 = vmatprep.subr.mxu0 0.0
    %4757 = vmatpush1.xpose.msra.mxu0 0.0
    %4758 = vmatprep.subr.mxu0 0.0
    %4759 = vmatpush1.xpose.msra.mxu0 0.0
    %4760 = vmatprep.subr.mxu0 0.0
    %4761 = vmatpush1.xpose.msra.mxu0 0.0
    %4762 = vmatprep.subr.mxu0 0.0
    %4763 = vmatpush1.xpose.msra.mxu0 0.0
    %4764 = vmatprep.subr.mxu0 0.0
    %4765 = vmatpush1.xpose.msra.mxu0 0.0
    %4766 = vmatprep.mubr.f32.mxu0 0.0
    %4767 = vmatmul.mubr.f32.gmra.mrb[0].mxu0 %v4304
    %v4768 = vpop.f32.mrb[0].mxu0
    %v4769 = vadd.f32 0.0, %v4768
    %v4770 = vpop.f32.mrb[0].mxu0
    %4771 = vdwg.mxu0
    %v4772 = vsel %vm554, %v4769, -inf
    %4773 = vmax.xlane.f32.xlu0 %v4772
    %v4774 = vpop.xlane.xlu0 %4773
    %v4775 = vsub.f32 %v4769, %v4774
    %v4776 = vmul.f32 %v4775, 1.442695
    %v4777 = vpow.pop %v4776
    %v4778 = vsel %vm554, %v4777, 0.0
    %4779 = vadd.xlane.f32.xlu0 %v4778
    %v4780 = vpop.xlane.xlu0 %4779
    %v4781 = vrcp.pop %v4780
    %v4782 = vmul.f32 %v4777, %v4781
    %v4784 = vsel %vm554, %v4782, 0
    %4786 = vmatprep.subr.mxu0 0.0
    %4787 = vmatpush1.msra.mxu0 %v4390
    %4788 = vmatprep.subr.mxu0 0.0
    %4789 = vmatpush1.msra.mxu0 0.0
    %4790 = vmatprep.subr.mxu0 0.0
    %4791 = vmatpush1.msra.mxu0 0.0
    %4792 = vmatprep.subr.mxu0 0.0
    %4793 = vmatpush1.msra.mxu0 0.0
    %4794 = vmatprep.subr.mxu0 0.0
    %4795 = vmatpush1.msra.mxu0 0.0
    %4796 = vmatprep.subr.mxu0 0.0
    %4797 = vmatpush1.msra.mxu0 0.0
    %4798 = vmatprep.subr.mxu0 0.0
    %4799 = vmatpush1.msra.mxu0 0.0
    %4800 = vmatprep.subr.mxu0 0.0
    %4801 = vmatpush1.msra.mxu0 0.0
    %4802 = vmatprep.subr.mxu0 0.0
    %4803 = vmatpush1.msra.mxu0 0.0
    %4804 = vmatprep.subr.mxu0 0.0
    %4805 = vmatpush1.msra.mxu0 0.0
    %4806 = vmatprep.subr.mxu0 0.0
    %4807 = vmatpush1.msra.mxu0 0.0
    %4808 = vmatprep.subr.mxu0 0.0
    %4809 = vmatpush1.msra.mxu0 0.0
    %4810 = vmatprep.subr.mxu0 0.0
    %4811 = vmatpush1.msra.mxu0 0.0
    %4812 = vmatprep.subr.mxu0 0.0
    %4813 = vmatpush1.msra.mxu0 0.0
    %4814 = vmatprep.subr.mxu0 0.0
    %4815 = vmatpush1.msra.mxu0 0.0
    %4816 = vmatprep.subr.mxu0 0.0
    %4817 = vmatpush1.msra.mxu0 0.0
    %4818 = vmatprep.subr.mxu0 0.0
    %4819 = vmatpush1.msra.mxu0 0.0
    %4820 = vmatprep.subr.mxu0 0.0
    %4821 = vmatpush1.msra.mxu0 0.0
    %4822 = vmatprep.subr.mxu0 0.0
    %4823 = vmatpush1.msra.mxu0 0.0
    %4824 = vmatprep.subr.mxu0 0.0
    %4825 = vmatpush1.msra.mxu0 0.0
    %4826 = vmatprep.subr.mxu0 0.0
    %4827 = vmatpush1.msra.mxu0 0.0
    %4828 = vmatprep.subr.mxu0 0.0
    %4829 = vmatpush1.msra.mxu0 0.0
    %4830 = vmatprep.subr.mxu0 0.0
    %4831 = vmatpush1.msra.mxu0 0.0
    %4832 = vmatprep.subr.mxu0 0.0
    %4833 = vmatpush1.msra.mxu0 0.0
    %4834 = vmatprep.subr.mxu0 0.0
    %4835 = vmatpush1.msra.mxu0 0.0
    %4836 = vmatprep.subr.mxu0 0.0
    %4837 = vmatpush1.msra.mxu0 0.0
    %4838 = vmatprep.subr.mxu0 0.0
    %4839 = vmatpush1.msra.mxu0 0.0
    %4840 = vmatprep.subr.mxu0 0.0
    %4841 = vmatpush1.msra.mxu0 0.0
    %4842 = vmatprep.subr.mxu0 0.0
    %4843 = vmatpush1.msra.mxu0 0.0
    %4844 = vmatprep.subr.mxu0 0.0
    %4845 = vmatpush1.msra.mxu0 0.0
    %4846 = vmatprep.subr.mxu0 0.0
    %4847 = vmatpush1.msra.mxu0 0.0
    %4848 = vmatprep.subr.mxu0 0.0
    %4849 = vmatpush1.msra.mxu0 0.0
    %4850 = vmatprep.mubr.f32.mxu0 0.0
    %4851 = vmatmul.mubr.f32.gmra.mrb[0].mxu0 %v4784
    %v4852 = vpop.f32.mrb[0].mxu0
    %v4853 = vadd.f32 0.0, %v4852
    %v4854 = vpop.f32.mrb[0].mxu0
    %4855 = vdwg.mxu0
    %4856 = vmatprep.subr.mxu0 0.0
    %4857 = vmatpush1.xpose.msra.mxu0 %v4349
    %4858 = vmatprep.subr.mxu0 0.0
    %4859 = vmatpush1.xpose.msra.mxu0 0.0
    %4860 = vmatprep.subr.mxu0 0.0
    %4861 = vmatpush1.xpose.msra.mxu0 0.0
    %4862 = vmatprep.subr.mxu0 0.0
    %4863 = vmatpush1.xpose.msra.mxu0 0.0
    %4864 = vmatprep.subr.mxu0 0.0
    %4865 = vmatpush1.xpose.msra.mxu0 0.0
    %4866 = vmatprep.subr.mxu0 0.0
    %4867 = vmatpush1.xpose.msra.mxu0 0.0
    %4868 = vmatprep.subr.mxu0 0.0
    %4869 = vmatpush1.xpose.msra.mxu0 0.0
    %4870 = vmatprep.subr.mxu0 0.0
    %4871 = vmatpush1.xpose.msra.mxu0 0.0
    %4872 = vmatprep.subr.mxu0 0.0
    %4873 = vmatpush1.xpose.msra.mxu0 0.0
    %4874 = vmatprep.subr.mxu0 0.0
    %4875 = vmatpush1.xpose.msra.mxu0 0.0
    %4876 = vmatprep.subr.mxu0 0.0
    %4877 = vmatpush1.xpose.msra.mxu0 0.0
    %4878 = vmatprep.subr.mxu0 0.0
    %4879 = vmatpush1.xpose.msra.mxu0 0.0
    %4880 = vmatprep.subr.mxu0 0.0
    %4881 = vmatpush1.xpose.msra.mxu0 0.0
    %4882 = vmatprep.subr.mxu0 0.0
    %4883 = vmatpush1.xpose.msra.mxu0 0.0
    %4884 = vmatprep.subr.mxu0 0.0
    %4885 = vmatpush1.xpose.msra.mxu0 0.0
    %4886 = vmatprep.subr.mxu0 0.0
    %4887 = vmatpush1.xpose.msra.mxu0 0.0
    %4888 = vmatprep.subr.mxu0 0.0
    %4889 = vmatpush1.xpose.msra.mxu0 0.0
    %4890 = vmatprep.subr.mxu0 0.0
    %4891 = vmatpush1.xpose.msra.mxu0 0.0
    %4892 = vmatprep.subr.mxu0 0.0
    %4893 = vmatpush1.xpose.msra.mxu0 0.0
    %4894 = vmatprep.subr.mxu0 0.0
    %4895 = vmatpush1.xpose.msra.mxu0 0.0
    %4896 = vmatprep.subr.mxu0 0.0
    %4897 = vmatpush1.xpose.msra.mxu0 0.0
    %4898 = vmatprep.subr.mxu0 0.0
    %4899 = vmatpush1.xpose.msra.mxu0 0.0
    %4900 = vmatprep.subr.mxu0 0.0
    %4901 = vmatpush1.xpose.msra.mxu0 0.0
    %4902 = vmatprep.subr.mxu0 0.0
    %4903 = vmatpush1.xpose.msra.mxu0 0.0
    %4904 = vmatprep.subr.mxu0 0.0
    %4905 = vmatpush1.xpose.msra.mxu0 0.0
    %4906 = vmatprep.subr.mxu0 0.0
    %4907 = vmatpush1.xpose.msra.mxu0 0.0
    %4908 = vmatprep.subr.mxu0 0.0
    %4909 = vmatpush1.xpose.msra.mxu0 0.0
    %4910 = vmatprep.subr.mxu0 0.0
    %4911 = vmatpush1.xpose.msra.mxu0 0.0
    %4912 = vmatprep.subr.mxu0 0.0
    %4913 = vmatpush1.xpose.msra.mxu0 0.0
    %4914 = vmatprep.subr.mxu0 0.0
    %4915 = vmatpush1.xpose.msra.mxu0 0.0
    %4916 = vmatprep.subr.mxu0 0.0
    %4917 = vmatpush1.xpose.msra.mxu0 0.0
    %4918 = vmatprep.subr.mxu0 0.0
    %4919 = vmatpush1.xpose.msra.mxu0 0.0
    %4920 = vmatprep.mubr.f32.mxu0 0.0
    %4921 = vmatmul.mubr.f32.gmra.mrb[0].mxu0 %v4306
    %v4922 = vpop.f32.mrb[0].mxu0
    %v4923 = vadd.f32 0.0, %v4922
    %v4924 = vpop.f32.mrb[0].mxu0
    %4925 = vdwg.mxu0
    %v4926 = vsel %vm554, %v4923, -inf
    %4927 = vmax.xlane.f32.xlu0 %v4926
    %v4928 = vpop.xlane.xlu0 %4927
    %v4929 = vsub.f32 %v4923, %v4928
    %v4930 = vmul.f32 %v4929, 1.442695
    %v4931 = vpow.pop %v4930
    %v4932 = vsel %vm554, %v4931, 0.0
    %4933 = vadd.xlane.f32.xlu0 %v4932
    %v4934 = vpop.xlane.xlu0 %4933
    %v4935 = vrcp.pop %v4934
    %v4936 = vmul.f32 %v4931, %v4935
    %v4938 = vsel %vm554, %v4936, 0
    %4940 = vmatprep.subr.mxu0 0.0
    %4941 = vmatpush1.msra.mxu0 %v4392
    %4942 = vmatprep.subr.mxu0 0.0
    %4943 = vmatpush1.msra.mxu0 0.0
    %4944 = vmatprep.subr.mxu0 0.0
    %4945 = vmatpush1.msra.mxu0 0.0
    %4946 = vmatprep.subr.mxu0 0.0
    %4947 = vmatpush1.msra.mxu0 0.0
    %4948 = vmatprep.subr.mxu0 0.0
    %4949 = vmatpush1.msra.mxu0 0.0
    %4950 = vmatprep.subr.mxu0 0.0
    %4951 = vmatpush1.msra.mxu0 0.0
    %4952 = vmatprep.subr.mxu0 0.0
    %4953 = vmatpush1.msra.mxu0 0.0
    %4954 = vmatprep.subr.mxu0 0.0
    %4955 = vmatpush1.msra.mxu0 0.0
    %4956 = vmatprep.subr.mxu0 0.0
    %4957 = vmatpush1.msra.mxu0 0.0
    %4958 = vmatprep.subr.mxu0 0.0
    %4959 = vmatpush1.msra.mxu0 0.0
    %4960 = vmatprep.subr.mxu0 0.0
    %4961 = vmatpush1.msra.mxu0 0.0
    %4962 = vmatprep.subr.mxu0 0.0
    %4963 = vmatpush1.msra.mxu0 0.0
    %4964 = vmatprep.subr.mxu0 0.0
    %4965 = vmatpush1.msra.mxu0 0.0
    %4966 = vmatprep.subr.mxu0 0.0
    %4967 = vmatpush1.msra.mxu0 0.0
    %4968 = vmatprep.subr.mxu0 0.0
    %4969 = vmatpush1.msra.mxu0 0.0
    %4970 = vmatprep.subr.mxu0 0.0
    %4971 = vmatpush1.msra.mxu0 0.0
    %4972 = vmatprep.subr.mxu0 0.0
    %4973 = vmatpush1.msra.mxu0 0.0
    %4974 = vmatprep.subr.mxu0 0.0
    %4975 = vmatpush1.msra.mxu0 0.0
    %4976 = vmatprep.subr.mxu0 0.0
    %4977 = vmatpush1.msra.mxu0 0.0
    %4978 = vmatprep.subr.mxu0 0.0
    %4979 = vmatpush1.msra.mxu0 0.0
    %4980 = vmatprep.subr.mxu0 0.0
    %4981 = vmatpush1.msra.mxu0 0.0
    %4982 = vmatprep.subr.mxu0 0.0
    %4983 = vmatpush1.msra.mxu0 0.0
    %4984 = vmatprep.subr.mxu0 0.0
    %4985 = vmatpush1.msra.mxu0 0.0
    %4986 = vmatprep.subr.mxu0 0.0
    %4987 = vmatpush1.msra.mxu0 0.0
    %4988 = vmatprep.subr.mxu0 0.0
    %4989 = vmatpush1.msra.mxu0 0.0
    %4990 = vmatprep.subr.mxu0 0.0
    %4991 = vmatpush1.msra.mxu0 0.0
    %4992 = vmatprep.subr.mxu0 0.0
    %4993 = vmatpush1.msra.mxu0 0.0
    %4994 = vmatprep.subr.mxu0 0.0
    %4995 = vmatpush1.msra.mxu0 0.0
    %4996 = vmatprep.subr.mxu0 0.0
    %4997 = vmatpush1.msra.mxu0 0.0
    %4998 = vmatprep.subr.mxu0 0.0
    %4999 = vmatpush1.msra.mxu0 0.0
    %5000 = vmatprep.subr.mxu0 0.0
    %5001 = vmatpush1.msra.mxu0 0.0
    %5002 = vmatprep.subr.mxu0 0.0
    %5003 = vmatpush1.msra.mxu0 0.0
    %5004 = vmatprep.mubr.f32.mxu0 0.0
    %5005 = vmatmul.mubr.f32.gmra.mrb[0].mxu0 %v4938
    %v5006 = vpop.f32.mrb[0].mxu0
    %v5007 = vadd.f32 0.0, %v5006
    %v5008 = vpop.f32.mrb[0].mxu0
    %5009 = vdwg.mxu0
    %v5010 = vpack.c.bf16 %v4853, %v4545
    %v5011 = vpack.c.bf16 %v5007, %v4699
    %v5012 = vld [vmem:[%s2 + $0x4] sm:$0xf]
    %v5013 = vld [vmem:[%s2 + $0x10] sm:$0xf]
    %v5014 = vld [vmem:[%s2 + $0x1c] sm:$0xf]
    %v5015 = vld [vmem:[%s2 + $0x28] sm:$0xf]
    %v5016 = vld [vmem:[%s2 + $0x34] sm:$0xf]
    %v5017 = vld [vmem:[%s2 + $0x40] sm:$0xf]
    %v5018 = vld [vmem:[%s2 + $0x4c] sm:$0xf]
    %v5019 = vld [vmem:[%s2 + $0x58] sm:$0xf]
    %v5020 = vld [vmem:[%s2 + $0x64] sm:$0xf]
    %v5021 = vld [vmem:[%s2 + $0x70] sm:$0xf]
    %v5022 = vld [vmem:[%s2 + $0x7c] sm:$0xf]
    %v5023 = vld [vmem:[%s2 + $0x88] sm:$0xf]
    %v5024 = vld [vmem:[%s2 + $0x94] sm:$0xf]
    %v5025 = vld [vmem:[%s2 + $0xa0] sm:$0xf]
    %v5026 = vld [vmem:[%s2 + $0xac] sm:$0xf]
    %v5027 = vld [vmem:[%s2 + $0xb8] sm:$0xf]
    %v5028 = vld [vmem:[%s2 + $0xc4] sm:$0xf]
    %v5029 = vld [vmem:[%s2 + $0xd0] sm:$0xf]
    %v5030 = vld [vmem:[%s2 + $0xdc] sm:$0xf]
    %v5031 = vld [vmem:[%s2 + $0xe8] sm:$0xf]
    %v5032 = vld [vmem:[%s2 + $0xf4] sm:$0xf]
    %v5033 = vld [vmem:[%s2 + $0x100] sm:$0xf]
    %v5034 = vld [vmem:[%s2 + $0x10c] sm:$0xf]
    %v5035 = vld [vmem:[%s2 + $0x118] sm:$0xf]
    %v5036 = vld [vmem:[%s2 + $0x124] sm:$0xf]
    %v5037 = vld [vmem:[%s2 + $0x130] sm:$0xf]
    %v5038 = vld [vmem:[%s2 + $0x13c] sm:$0xf]
    %v5039 = vld [vmem:[%s2 + $0x148] sm:$0xf]
    %v5040 = vld [vmem:[%s2 + $0x154] sm:$0xf]
    %v5041 = vld [vmem:[%s2 + $0x160] sm:$0xf]
    %v5042 = vld [vmem:[%s2 + $0x16c] sm:$0xf]
    %v5043 = vld [vmem:[%s2 + $0x178] sm:$0xf]
    %v5044 = vld [vmem:[%s5 + $0x81] ss:$0 sm:$0xff]
    %v5077 = vunpack.c.l.b16 %v5012
    %v5078 = vunpack.c.l.b16 %v5013
    %v5079 = vunpack.c.l.b16 %v5014
    %v5080 = vunpack.c.l.b16 %v5015
    %v5081 = vunpack.c.l.b16 %v5016
    %v5082 = vunpack.c.l.b16 %v5017
    %v5083 = vunpack.c.l.b16 %v5018
    %v5084 = vunpack.c.l.b16 %v5019
    %v5085 = vunpack.c.l.b16 %v5020
    %v5086 = vunpack.c.l.b16 %v5021
    %v5087 = vunpack.c.l.b16 %v5022
    %v5088 = vunpack.c.l.b16 %v5023
    %v5089 = vunpack.c.l.b16 %v5024
    %v5090 = vunpack.c.l.b16 %v5025
    %v5091 = vunpack.c.l.b16 %v5026
    %v5092 = vunpack.c.l.b16 %v5027
    %v5093 = vunpack.c.l.b16 %v5028
    %v5094 = vunpack.c.l.b16 %v5029
    %v5095 = vunpack.c.l.b16 %v5030
    %v5096 = vunpack.c.l.b16 %v5031
    %v5097 = vunpack.c.l.b16 %v5032
    %v5098 = vunpack.c.l.b16 %v5033
    %v5099 = vunpack.c.l.b16 %v5034
    %v5100 = vunpack.c.l.b16 %v5035
    %v5101 = vunpack.c.l.b16 %v5036
    %v5102 = vunpack.c.l.b16 %v5037
    %v5103 = vunpack.c.l.b16 %v5038
    %v5104 = vunpack.c.l.b16 %v5039
    %v5105 = vunpack.c.l.b16 %v5040
    %v5106 = vunpack.c.l.b16 %v5041
    %v5107 = vunpack.c.l.b16 %v5042
    %v5108 = vunpack.c.l.b16 %v5043
    %v5109 = vpack.c.b16 %v5078, %v5077
    %v5110 = vpack.c.b16 %v5080, %v5079
    %v5111 = vpack.c.b16 %v5082, %v5081
    %v5112 = vpack.c.b16 %v5084, %v5083
    %v5113 = vpack.c.b16 %v5086, %v5085
    %v5114 = vpack.c.b16 %v5088, %v5087
    %v5115 = vpack.c.b16 %v5090, %v5089
    %v5116 = vpack.c.b16 %v5092, %v5091
    %v5117 = vpack.c.b16 %v5094, %v5093
    %v5118 = vpack.c.b16 %v5096, %v5095
    %v5119 = vpack.c.b16 %v5098, %v5097
    %v5120 = vpack.c.b16 %v5100, %v5099
    %v5121 = vpack.c.b16 %v5102, %v5101
    %v5122 = vpack.c.b16 %v5104, %v5103
    %v5123 = vpack.c.b16 %v5106, %v5105
    %v5124 = vpack.c.b16 %v5108, %v5107
    %5141 = vmatprep.subr.bf16.mxu0 0
    %5142 = vmatpush1.bf16.msra.mxu0 %v5109
    %5143 = vmatprep.subr.bf16.mxu0 0
    %5144 = vmatpush1.bf16.msra.mxu0 %v5110
    %5145 = vmatprep.subr.bf16.mxu0 0
    %5146 = vmatpush1.bf16.msra.mxu0 %v5111
    %5147 = vmatprep.subr.bf16.mxu0 0
    %5148 = vmatpush1.bf16.msra.mxu0 %v5112
    %5149 = vmatprep.subr.bf16.mxu0 0
    %5150 = vmatpush1.bf16.msra.mxu0 %v5113
    %5151 = vmatprep.subr.bf16.mxu0 0
    %5152 = vmatpush1.bf16.msra.mxu0 %v5114
    %5153 = vmatprep.subr.bf16.mxu0 0
    %5154 = vmatpush1.bf16.msra.mxu0 %v5115
    %5155 = vmatprep.subr.bf16.mxu0 0
    %5156 = vmatpush1.bf16.msra.mxu0 %v5116
    %5157 = vmatprep.subr.bf16.mxu0 0
    %5158 = vmatpush1.bf16.msra.mxu0 %v5117
    %5159 = vmatprep.subr.bf16.mxu0 0
    %5160 = vmatpush1.bf16.msra.mxu0 %v5118
    %5161 = vmatprep.subr.bf16.mxu0 0
    %5162 = vmatpush1.bf16.msra.mxu0 %v5119
    %5163 = vmatprep.subr.bf16.mxu0 0
    %5164 = vmatpush1.bf16.msra.mxu0 %v5120
    %5165 = vmatprep.subr.bf16.mxu0 0
    %5166 = vmatpush1.bf16.msra.mxu0 %v5121
    %5167 = vmatprep.subr.bf16.mxu0 0
    %5168 = vmatpush1.bf16.msra.mxu0 %v5122
    %5169 = vmatprep.subr.bf16.mxu0 0
    %5170 = vmatpush1.bf16.msra.mxu0 %v5123
    %5171 = vmatprep.subr.bf16.mxu0 0
    %5172 = vmatpush1.bf16.msra.mxu0 %v5124
    %5173 = vmatprep.mubr.bf16.mxu0 %v5011
    %5174 = vmatmul.mubr.bf16.gmra.mrb[0].mxu0 %v5010
    %v5175 = vpop.f32.mrb[0].mxu0
    %v5176 = vadd.f32 %v5044, %v5175
    %v5177 = vpop.f32.mrb[0].mxu0
    %v5178 = vpop.f32.mrb[0].mxu0
    %v5179 = vadd.f32 %v5044, %v5178
    %v5180 = vpop.f32.mrb[0].mxu0
    %5181 = vdwg.mxu0
    %v5182 = vadd.f32 %v3939, %v5176
    %v5183 = vadd.f32 %v3940, %v5179
    %5184 = vadd.xlane.f32.xlu0 %v5182
    %v5185 = vpop.xlane.xlu0 %5184
    %5186 = vadd.xlane.f32.xlu0 %v5183
    %v5187 = vpop.xlane.xlu0 %5186
    %v5188 = vmul.f32 %v5185, 0.015151516
    %v5189 = vmul.f32 %v5187, 0.015151516
    %v5190 = vsub.f32 %v5182, %v5188
    %v5191 = vsub.f32 %v5183, %v5189
    %v5192 = vmul.f32 %v5190, %v29
    %v5193 = vmul.f32 %v5191, %v29
    %v5194 = vmul.f32 %v5192, %v5192
    %v5195 = vmul.f32 %v5193, %v5193
    %5196 = vadd.xlane.f32.xlu0 %v5194
    %v5197 = vpop.xlane.xlu0 %5196
    %5198 = vadd.xlane.f32.xlu0 %v5195
    %v5199 = vpop.xlane.xlu0 %5198
    %v5200 = vmul.f32 %v5197, 0.015151516
    %v5201 = vmul.f32 %v5199, 0.015151516
    %v5202 = vadd.f32 %v5200, 1e-05
    %v5203 = vadd.f32 %v5201, 1e-05
    %v5204 = vrsqrt.pop %v5202
    %v5205 = vrsqrt.pop %v5203
    %v5206 = vmul.f32 %v5192, %v5204
    %v5207 = vmul.f32 %v5193, %v5205
    %v5208 = vld [vmem:[%s5 + $0x82] ss:$0 sm:$0xff]
    %v5209 = vmul.f32 %v5206, %v5208
    %v5210 = vmul.f32 %v5207, %v5208
    %v5211 = vld [vmem:[%s5 + $0x83] ss:$0 sm:$0xff]
    %v5212 = vadd.f32 %v5209, %v5211
    %v5213 = vadd.f32 %v5210, %v5211
    %v5214 = vpack.c.bf16 %v5213, %v5212
    %v5215 = vld [vmem:[%s1 + $0x30] sm:$0xff]
    %v5216 = vld [vmem:[%s1 + $0x7c] sm:$0xff]
    %v5217 = vld [vmem:[%s1 + $0xc8] sm:$0xff]
    %v5218 = vld [vmem:[%s1 + $0x114] sm:$0xff]
    %v5219 = vld [vmem:[%s1 + $0x160] sm:$0xff]
    %v5220 = vld [vmem:[%s1 + $0x1ac] sm:$0xff]
    %v5221 = vld [vmem:[%s1 + $0x1f8] sm:$0xff]
    %v5222 = vld [vmem:[%s1 + $0x244] sm:$0xff]
    %v5223 = vld [vmem:[%s1 + $0x290] sm:$0xff]
    %v5224 = vld [vmem:[%s1 + $0x2dc] sm:$0xff]
    %v5225 = vld [vmem:[%s1 + $0x328] sm:$0xff]
    %v5226 = vld [vmem:[%s1 + $0x374] sm:$0xff]
    %v5227 = vld [vmem:[%s1 + $0x3c0] sm:$0xff]
    %v5228 = vld [vmem:[%s1 + $0x40c] sm:$0xff]
    %v5229 = vld [vmem:[%s1 + $0x458] sm:$0xff]
    %v5230 = vld [vmem:[%s1 + $0x4a4] sm:$0xff]
    %s5231 = scalar_lea.vmem %s5, 132
    %v5232 = vld [vmem:[%s5231] ss:$8 sm:$0x3]
    %v5234 = vlaneseq
    %v5235 = vshrl.u32 %v5234, 7
    %v5236 = vsub.s32 0, %v5235
    %v5237 = vrot.slane %v5232, %v5236
    %v5238 = vlaneseq
    %v5239 = vshrl.u32 %v5238, 7
    %v5240 = vsub.s32 1, %v5239
    %v5241 = vrot.slane %v5232, %v5240
    %v5260 = vunpack.c.l.b16 %v5215
    %v5261 = vunpack.c.h.b16 %v5215
    %v5262 = vunpack.c.l.b16 %v5216
    %v5263 = vunpack.c.h.b16 %v5216
    %v5264 = vunpack.c.l.b16 %v5217
    %v5265 = vunpack.c.h.b16 %v5217
    %v5266 = vunpack.c.l.b16 %v5218
    %v5267 = vunpack.c.h.b16 %v5218
    %v5268 = vunpack.c.l.b16 %v5219
    %v5269 = vunpack.c.h.b16 %v5219
    %v5270 = vunpack.c.l.b16 %v5220
    %v5271 = vunpack.c.h.b16 %v5220
    %v5272 = vunpack.c.l.b16 %v5221
    %v5273 = vunpack.c.h.b16 %v5221
    %v5274 = vunpack.c.l.b16 %v5222
    %v5275 = vunpack.c.h.b16 %v5222
    %v5276 = vunpack.c.l.b16 %v5223
    %v5277 = vunpack.c.h.b16 %v5223
    %v5278 = vunpack.c.l.b16 %v5224
    %v5279 = vunpack.c.h.b16 %v5224
    %v5280 = vunpack.c.l.b16 %v5225
    %v5281 = vunpack.c.h.b16 %v5225
    %v5282 = vunpack.c.l.b16 %v5226
    %v5283 = vunpack.c.h.b16 %v5226
    %v5284 = vunpack.c.l.b16 %v5227
    %v5285 = vunpack.c.h.b16 %v5227
    %v5286 = vunpack.c.l.b16 %v5228
    %v5287 = vunpack.c.h.b16 %v5228
    %v5288 = vunpack.c.l.b16 %v5229
    %v5289 = vunpack.c.h.b16 %v5229
    %v5290 = vunpack.c.l.b16 %v5230
    %v5291 = vunpack.c.h.b16 %v5230
    %v5292 = vpack.c.b16 %v5262, %v5260
    %v5293 = vpack.c.b16 %v5263, %v5261
    %v5294 = vpack.c.b16 %v5266, %v5264
    %v5295 = vpack.c.b16 %v5267, %v5265
    %v5296 = vpack.c.b16 %v5270, %v5268
    %v5297 = vpack.c.b16 %v5271, %v5269
    %v5298 = vpack.c.b16 %v5274, %v5272
    %v5299 = vpack.c.b16 %v5275, %v5273
    %v5300 = vpack.c.b16 %v5278, %v5276
    %v5301 = vpack.c.b16 %v5279, %v5277
    %v5302 = vpack.c.b16 %v5282, %v5280
    %v5303 = vpack.c.b16 %v5283, %v5281
    %v5304 = vpack.c.b16 %v5286, %v5284
    %v5305 = vpack.c.b16 %v5287, %v5285
    %v5306 = vpack.c.b16 %v5290, %v5288
    %v5307 = vpack.c.b16 %v5291, %v5289
    %5324 = vmatprep.subr.bf16.mxu0 %v5293
    %5325 = vmatpush1.bf16.msra.mxu0 %v5292
    %5326 = vmatprep.subr.bf16.mxu0 %v5295
    %5327 = vmatpush1.bf16.msra.mxu0 %v5294
    %5328 = vmatprep.subr.bf16.mxu0 %v5297
    %5329 = vmatpush1.bf16.msra.mxu0 %v5296
    %5330 = vmatprep.subr.bf16.mxu0 %v5299
    %5331 = vmatpush1.bf16.msra.mxu0 %v5298
    %5332 = vmatprep.subr.bf16.mxu0 %v5301
    %5333 = vmatpush1.bf16.msra.mxu0 %v5300
    %5334 = vmatprep.subr.bf16.mxu0 %v5303
    %5335 = vmatpush1.bf16.msra.mxu0 %v5302
    %5336 = vmatprep.subr.bf16.mxu0 %v5305
    %5337 = vmatpush1.bf16.msra.mxu0 %v5304
    %5338 = vmatprep.subr.bf16.mxu0 %v5307
    %5339 = vmatpush1.bf16.msra.mxu0 %v5306
    %5340 = vmatprep.subr.bf16.mxu0 0
    %5341 = vmatpush1.bf16.msra.mxu0 0
    %5342 = vmatprep.subr.bf16.mxu0 0
    %5343 = vmatpush1.bf16.msra.mxu0 0
    %5344 = vmatprep.subr.bf16.mxu0 0
    %5345 = vmatpush1.bf16.msra.mxu0 0
    %5346 = vmatprep.subr.bf16.mxu0 0
    %5347 = vmatpush1.bf16.msra.mxu0 0
    %5348 = vmatprep.subr.bf16.mxu0 0
    %5349 = vmatpush1.bf16.msra.mxu0 0
    %5350 = vmatprep.subr.bf16.mxu0 0
    %5351 = vmatpush1.bf16.msra.mxu0 0
    %5352 = vmatprep.subr.bf16.mxu0 0
    %5353 = vmatpush1.bf16.msra.mxu0 0
    %5354 = vmatprep.subr.bf16.mxu0 0
    %5355 = vmatpush1.bf16.msra.mxu0 0
    %5356 = vmatprep.mubr.bf16.mxu0 0
    %5357 = vmatmul.mubr.bf16.gmra.mrb[0].mxu0 %v5214
    %v5358 = vpop.f32.mrb[0].mxu0
    %v5359 = vadd.f32 %v5237, %v5358
    %v5360 = vpop.f32.mrb[0].mxu0
    %v5361 = vadd.f32 %v5241, %v5360
    %v5362 = vpop.f32.mrb[0].mxu0
    %v5363 = vadd.f32 %v5237, %v5362
    %v5364 = vpop.f32.mrb[0].mxu0
    %v5365 = vadd.f32 %v5241, %v5364
    %5366 = vdwg.mxu0
    %v5367 = vld [vmem:[%s1 + $0x38] sm:$0xff]
    %v5368 = vld [vmem:[%s1 + $0x40] sm:$0xff]
    %v5369 = vld [vmem:[%s1 + $0x84] sm:$0xff]
    %v5370 = vld [vmem:[%s1 + $0x8c] sm:$0xff]
    %v5371 = vld [vmem:[%s1 + $0xd0] sm:$0xff]
    %v5372 = vld [vmem:[%s1 + $0xd8] sm:$0xff]
    %v5373 = vld [vmem:[%s1 + $0x11c] sm:$0xff]
    %v5374 = vld [vmem:[%s1 + $0x124] sm:$0xff]
    %v5375 = vld [vmem:[%s1 + $0x168] sm:$0xff]
    %v5376 = vld [vmem:[%s1 + $0x170] sm:$0xff]
    %v5377 = vld [vmem:[%s1 + $0x1b4] sm:$0xff]
    %v5378 = vld [vmem:[%s1 + $0x1bc] sm:$0xff]
    %v5379 = vld [vmem:[%s1 + $0x200] sm:$0xff]
    %v5380 = vld [vmem:[%s1 + $0x208] sm:$0xff]
    %v5381 = vld [vmem:[%s1 + $0x24c] sm:$0xff]
    %v5382 = vld [vmem:[%s1 + $0x254] sm:$0xff]
    %v5383 = vld [vmem:[%s1 + $0x298] sm:$0xff]
    %v5384 = vld [vmem:[%s1 + $0x2a0] sm:$0xff]
    %v5385 = vld [vmem:[%s1 + $0x2e4] sm:$0xff]
    %v5386 = vld [vmem:[%s1 + $0x2ec] sm:$0xff]
    %v5387 = vld [vmem:[%s1 + $0x330] sm:$0xff]
    %v5388 = vld [vmem:[%s1 + $0x338] sm:$0xff]
    %v5389 = vld [vmem:[%s1 + $0x37c] sm:$0xff]
    %v5390 = vld [vmem:[%s1 + $0x384] sm:$0xff]
    %v5391 = vld [vmem:[%s1 + $0x3c8] sm:$0xff]
    %v5392 = vld [vmem:[%s1 + $0x3d0] sm:$0xff]
    %v5393 = vld [vmem:[%s1 + $0x414] sm:$0xff]
    %v5394 = vld [vmem:[%s1 + $0x41c] sm:$0xff]
    %v5395 = vld [vmem:[%s1 + $0x460] sm:$0xff]
    %v5396 = vld [vmem:[%s1 + $0x468] sm:$0xff]
    %v5397 = vld [vmem:[%s1 + $0x4ac] sm:$0xff]
    %v5398 = vld [vmem:[%s1 + $0x4b4] sm:$0xff]
    %s5399 = scalar_lea.vmem %s5, 133
    %v5400 = vld [vmem:[%s5399] ss:$8 sm:$0xf]
    %v5402 = vlaneseq
    %v5403 = vshrl.u32 %v5402, 7
    %v5404 = vsub.s32 0, %v5403
    %v5405 = vrot.slane %v5400, %v5404
    %v5406 = vlaneseq
    %v5407 = vshrl.u32 %v5406, 7
    %v5408 = vsub.s32 1, %v5407
    %v5409 = vrot.slane %v5400, %v5408
    %v5410 = vlaneseq
    %v5411 = vshrl.u32 %v5410, 7
    %v5412 = vsub.s32 2, %v5411
    %v5413 = vrot.slane %v5400, %v5412
    %v5414 = vlaneseq
    %v5415 = vshrl.u32 %v5414, 7
    %v5416 = vsub.s32 3, %v5415
    %v5417 = vrot.slane %v5400, %v5416
    %v5454 = vunpack.c.l.b16 %v5367
    %v5455 = vunpack.c.h.b16 %v5367
    %v5456 = vunpack.c.l.b16 %v5368
    %v5457 = vunpack.c.h.b16 %v5368
    %v5458 = vunpack.c.l.b16 %v5369
    %v5459 = vunpack.c.h.b16 %v5369
    %v5460 = vunpack.c.l.b16 %v5370
    %v5461 = vunpack.c.h.b16 %v5370
    %v5462 = vunpack.c.l.b16 %v5371
    %v5463 = vunpack.c.h.b16 %v5371
    %v5464 = vunpack.c.l.b16 %v5372
    %v5465 = vunpack.c.h.b16 %v5372
    %v5466 = vunpack.c.l.b16 %v5373
    %v5467 = vunpack.c.h.b16 %v5373
    %v5468 = vunpack.c.l.b16 %v5374
    %v5469 = vunpack.c.h.b16 %v5374
    %v5470 = vunpack.c.l.b16 %v5375
    %v5471 = vunpack.c.h.b16 %v5375
    %v5472 = vunpack.c.l.b16 %v5376
    %v5473 = vunpack.c.h.b16 %v5376
    %v5474 = vunpack.c.l.b16 %v5377
    %v5475 = vunpack.c.h.b16 %v5377
    %v5476 = vunpack.c.l.b16 %v5378
    %v5477 = vunpack.c.h.b16 %v5378
    %v5478 = vunpack.c.l.b16 %v5379
    %v5479 = vunpack.c.h.b16 %v5379
    %v5480 = vunpack.c.l.b16 %v5380
    %v5481 = vunpack.c.h.b16 %v5380
    %v5482 = vunpack.c.l.b16 %v5381
    %v5483 = vunpack.c.h.b16 %v5381
    %v5484 = vunpack.c.l.b16 %v5382
    %v5485 = vunpack.c.h.b16 %v5382
    %v5486 = vunpack.c.l.b16 %v5383
    %v5487 = vunpack.c.h.b16 %v5383
    %v5488 = vunpack.c.l.b16 %v5384
    %v5489 = vunpack.c.h.b16 %v5384
    %v5490 = vunpack.c.l.b16 %v5385
    %v5491 = vunpack.c.h.b16 %v5385
    %v5492 = vunpack.c.l.b16 %v5386
    %v5493 = vunpack.c.h.b16 %v5386
    %v5494 = vunpack.c.l.b16 %v5387
    %v5495 = vunpack.c.h.b16 %v5387
    %v5496 = vunpack.c.l.b16 %v5388
    %v5497 = vunpack.c.h.b16 %v5388
    %v5498 = vunpack.c.l.b16 %v5389
    %v5499 = vunpack.c.h.b16 %v5389
    %v5500 = vunpack.c.l.b16 %v5390
    %v5501 = vunpack.c.h.b16 %v5390
    %v5502 = vunpack.c.l.b16 %v5391
    %v5503 = vunpack.c.h.b16 %v5391
    %v5504 = vunpack.c.l.b16 %v5392
    %v5505 = vunpack.c.h.b16 %v5392
    %v5506 = vunpack.c.l.b16 %v5393
    %v5507 = vunpack.c.h.b16 %v5393
    %v5508 = vunpack.c.l.b16 %v5394
    %v5509 = vunpack.c.h.b16 %v5394
    %v5510 = vunpack.c.l.b16 %v5395
    %v5511 = vunpack.c.h.b16 %v5395
    %v5512 = vunpack.c.l.b16 %v5396
    %v5513 = vunpack.c.h.b16 %v5396
    %v5514 = vunpack.c.l.b16 %v5397
    %v5515 = vunpack.c.h.b16 %v5397
    %v5516 = vunpack.c.l.b16 %v5398
    %v5517 = vunpack.c.h.b16 %v5398
    %v5518 = vpack.c.b16 %v5458, %v5454
    %v5519 = vpack.c.b16 %v5459, %v5455
    %v5520 = vpack.c.b16 %v5460, %v5456
    %v5521 = vpack.c.b16 %v5461, %v5457
    %v5522 = vpack.c.b16 %v5466, %v5462
    %v5523 = vpack.c.b16 %v5467, %v5463
    %v5524 = vpack.c.b16 %v5468, %v5464
    %v5525 = vpack.c.b16 %v5469, %v5465
    %v5526 = vpack.c.b16 %v5474, %v5470
    %v5527 = vpack.c.b16 %v5475, %v5471
    %v5528 = vpack.c.b16 %v5476, %v5472
    %v5529 = vpack.c.b16 %v5477, %v5473
    %v5530 = vpack.c.b16 %v5482, %v5478
    %v5531 = vpack.c.b16 %v5483, %v5479
    %v5532 = vpack.c.b16 %v5484, %v5480
    %v5533 = vpack.c.b16 %v5485, %v5481
    %v5534 = vpack.c.b16 %v5490, %v5486
    %v5535 = vpack.c.b16 %v5491, %v5487
    %v5536 = vpack.c.b16 %v5492, %v5488
    %v5537 = vpack.c.b16 %v5493, %v5489
    %v5538 = vpack.c.b16 %v5498, %v5494
    %v5539 = vpack.c.b16 %v5499, %v5495
    %v5540 = vpack.c.b16 %v5500, %v5496
    %v5541 = vpack.c.b16 %v5501, %v5497
    %v5542 = vpack.c.b16 %v5506, %v5502
    %v5543 = vpack.c.b16 %v5507, %v5503
    %v5544 = vpack.c.b16 %v5508, %v5504
    %v5545 = vpack.c.b16 %v5509, %v5505
    %v5546 = vpack.c.b16 %v5514, %v5510
    %v5547 = vpack.c.b16 %v5515, %v5511
    %v5548 = vpack.c.b16 %v5516, %v5512
    %v5549 = vpack.c.b16 %v5517, %v5513
    %5582 = vmatprep.subr.bf16.mxu0 %v5519
    %5583 = vmatpush1.bf16.msra.mxu0 %v5518
    %5584 = vmatprep.subr.bf16.mxu0 %v5523
    %5585 = vmatpush1.bf16.msra.mxu0 %v5522
    %5586 = vmatprep.subr.bf16.mxu0 %v5527
    %5587 = vmatpush1.bf16.msra.mxu0 %v5526
    %5588 = vmatprep.subr.bf16.mxu0 %v5531
    %5589 = vmatpush1.bf16.msra.mxu0 %v5530
    %5590 = vmatprep.subr.bf16.mxu0 %v5535
    %5591 = vmatpush1.bf16.msra.mxu0 %v5534
    %5592 = vmatprep.subr.bf16.mxu0 %v5539
    %5593 = vmatpush1.bf16.msra.mxu0 %v5538
    %5594 = vmatprep.subr.bf16.mxu0 %v5543
    %5595 = vmatpush1.bf16.msra.mxu0 %v5542
    %5596 = vmatprep.subr.bf16.mxu0 %v5547
    %5597 = vmatpush1.bf16.msra.mxu0 %v5546
    %5598 = vmatprep.subr.bf16.mxu0 0
    %5599 = vmatpush1.bf16.msra.mxu0 0
    %5600 = vmatprep.subr.bf16.mxu0 0
    %5601 = vmatpush1.bf16.msra.mxu0 0
    %5602 = vmatprep.subr.bf16.mxu0 0
    %5603 = vmatpush1.bf16.msra.mxu0 0
    %5604 = vmatprep.subr.bf16.mxu0 0
    %5605 = vmatpush1.bf16.msra.mxu0 0
    %5606 = vmatprep.subr.bf16.mxu0 0
    %5607 = vmatpush1.bf16.msra.mxu0 0
    %5608 = vmatprep.subr.bf16.mxu0 0
    %5609 = vmatpush1.bf16.msra.mxu0 0
    %5610 = vmatprep.subr.bf16.mxu0 0
    %5611 = vmatpush1.bf16.msra.mxu0 0
    %5612 = vmatprep.subr.bf16.mxu0 0
    %5613 = vmatpush1.bf16.msra.mxu0 0
    %5614 = vmatprep.mubr.bf16.mxu0 0
    %5615 = vmatmul.mubr.bf16.gmra.mrb[0].mxu0 %v32
    %v5616 = vpop.f32.mrb[0].mxu0
    %v5617 = vadd.f32 %v5405, %v5616
    %v5618 = vpop.f32.mrb[0].mxu0
    %v5619 = vadd.f32 %v5409, %v5618
    %v5620 = vpop.f32.mrb[0].mxu0
    %v5621 = vadd.f32 %v5405, %v5620
    %v5622 = vpop.f32.mrb[0].mxu0
    %v5623 = vadd.f32 %v5409, %v5622
    %5624 = vdwg.mxu0
    %5625 = vmatprep.subr.bf16.mxu0 %v5521
    %5626 = vmatpush1.bf16.msra.mxu0 %v5520
    %5627 = vmatprep.subr.bf16.mxu0 %v5525
    %5628 = vmatpush1.bf16.msra.mxu0 %v5524
    %5629 = vmatprep.subr.bf16.mxu0 %v5529
    %5630 = vmatpush1.bf16.msra.mxu0 %v5528
    %5631 = vmatprep.subr.bf16.mxu0 %v5533
    %5632 = vmatpush1.bf16.msra.mxu0 %v5532
    %5633 = vmatprep.subr.bf16.mxu0 %v5537
    %5634 = vmatpush1.bf16.msra.mxu0 %v5536
    %5635 = vmatprep.subr.bf16.mxu0 %v5541
    %5636 = vmatpush1.bf16.msra.mxu0 %v5540
    %5637 = vmatprep.subr.bf16.mxu0 %v5545
    %5638 = vmatpush1.bf16.msra.mxu0 %v5544
    %5639 = vmatprep.subr.bf16.mxu0 %v5549
    %5640 = vmatpush1.bf16.msra.mxu0 %v5548
    %5641 = vmatprep.subr.bf16.mxu0 0
    %5642 = vmatpush1.bf16.msra.mxu0 0
    %5643 = vmatprep.subr.bf16.mxu0 0
    %5644 = vmatpush1.bf16.msra.mxu0 0
    %5645 = vmatprep.subr.bf16.mxu0 0
    %5646 = vmatpush1.bf16.msra.mxu0 0
    %5647 = vmatprep.subr.bf16.mxu0 0
    %5648 = vmatpush1.bf16.msra.mxu0 0
    %5649 = vmatprep.subr.bf16.mxu0 0
    %5650 = vmatpush1.bf16.msra.mxu0 0
    %5651 = vmatprep.subr.bf16.mxu0 0
    %5652 = vmatpush1.bf16.msra.mxu0 0
    %5653 = vmatprep.subr.bf16.mxu0 0
    %5654 = vmatpush1.bf16.msra.mxu0 0
    %5655 = vmatprep.subr.bf16.mxu0 0
    %5656 = vmatpush1.bf16.msra.mxu0 0
    %5657 = vmatprep.mubr.bf16.mxu0 0
    %5658 = vmatmul.mubr.bf16.gmra.mrb[0].mxu0 %v32
    %v5659 = vpop.f32.mrb[0].mxu0
    %v5660 = vadd.f32 %v5413, %v5659
    %v5661 = vpop.f32.mrb[0].mxu0
    %v5662 = vadd.f32 %v5417, %v5661
    %v5663 = vpop.f32.mrb[0].mxu0
    %v5664 = vadd.f32 %v5413, %v5663
    %v5665 = vpop.f32.mrb[0].mxu0
    %v5666 = vadd.f32 %v5417, %v5665
    %5667 = vdwg.mxu0
    %5668 = vmatprep.subr.mxu0 0.0
    %5669 = vmatpush1.xpose.msra.mxu0 %v5617
    %5670 = vmatprep.subr.mxu0 0.0
    %5671 = vmatpush1.xpose.msra.mxu0 0.0
    %5672 = vmatprep.subr.mxu0 0.0
    %5673 = vmatpush1.xpose.msra.mxu0 0.0
    %5674 = vmatprep.subr.mxu0 0.0
    %5675 = vmatpush1.xpose.msra.mxu0 0.0
    %5676 = vmatprep.subr.mxu0 0.0
    %5677 = vmatpush1.xpose.msra.mxu0 0.0
    %5678 = vmatprep.subr.mxu0 0.0
    %5679 = vmatpush1.xpose.msra.mxu0 0.0
    %5680 = vmatprep.subr.mxu0 0.0
    %5681 = vmatpush1.xpose.msra.mxu0 0.0
    %5682 = vmatprep.subr.mxu0 0.0
    %5683 = vmatpush1.xpose.msra.mxu0 0.0
    %5684 = vmatprep.subr.mxu0 0.0
    %5685 = vmatpush1.xpose.msra.mxu0 0.0
    %5686 = vmatprep.subr.mxu0 0.0
    %5687 = vmatpush1.xpose.msra.mxu0 0.0
    %5688 = vmatprep.subr.mxu0 0.0
    %5689 = vmatpush1.xpose.msra.mxu0 0.0
    %5690 = vmatprep.subr.mxu0 0.0
    %5691 = vmatpush1.xpose.msra.mxu0 0.0
    %5692 = vmatprep.subr.mxu0 0.0
    %5693 = vmatpush1.xpose.msra.mxu0 0.0
    %5694 = vmatprep.subr.mxu0 0.0
    %5695 = vmatpush1.xpose.msra.mxu0 0.0
    %5696 = vmatprep.subr.mxu0 0.0
    %5697 = vmatpush1.xpose.msra.mxu0 0.0
    %5698 = vmatprep.subr.mxu0 0.0
    %5699 = vmatpush1.xpose.msra.mxu0 0.0
    %5700 = vmatprep.subr.mxu0 0.0
    %5701 = vmatpush1.xpose.msra.mxu0 0.0
    %5702 = vmatprep.subr.mxu0 0.0
    %5703 = vmatpush1.xpose.msra.mxu0 0.0
    %5704 = vmatprep.subr.mxu0 0.0
    %5705 = vmatpush1.xpose.msra.mxu0 0.0
    %5706 = vmatprep.subr.mxu0 0.0
    %5707 = vmatpush1.xpose.msra.mxu0 0.0
    %5708 = vmatprep.subr.mxu0 0.0
    %5709 = vmatpush1.xpose.msra.mxu0 0.0
    %5710 = vmatprep.subr.mxu0 0.0
    %5711 = vmatpush1.xpose.msra.mxu0 0.0
    %5712 = vmatprep.subr.mxu0 0.0
    %5713 = vmatpush1.xpose.msra.mxu0 0.0
    %5714 = vmatprep.subr.mxu0 0.0
    %5715 = vmatpush1.xpose.msra.mxu0 0.0
    %5716 = vmatprep.subr.mxu0 0.0
    %5717 = vmatpush1.xpose.msra.mxu0 0.0
    %5718 = vmatprep.subr.mxu0 0.0
    %5719 = vmatpush1.xpose.msra.mxu0 0.0
    %5720 = vmatprep.subr.mxu0 0.0
    %5721 = vmatpush1.xpose.msra.mxu0 0.0
    %5722 = vmatprep.subr.mxu0 0.0
    %5723 = vmatpush1.xpose.msra.mxu0 0.0
    %5724 = vmatprep.subr.mxu0 0.0
    %5725 = vmatpush1.xpose.msra.mxu0 0.0
    %5726 = vmatprep.subr.mxu0 0.0
    %5727 = vmatpush1.xpose.msra.mxu0 0.0
    %5728 = vmatprep.subr.mxu0 0.0
    %5729 = vmatpush1.xpose.msra.mxu0 0.0
    %5730 = vmatprep.subr.mxu0 0.0
    %5731 = vmatpush1.xpose.msra.mxu0 0.0
    %5732 = vmatprep.mubr.f32.mxu0 0.0
    %5733 = vmatmul.mubr.f32.gmra.mrb[0].mxu0 %v5359
    %v5734 = vpop.f32.mrb[0].mxu0
    %v5735 = vadd.f32 0.0, %v5734
    %v5736 = vpop.f32.mrb[0].mxu0
    %5737 = vdwg.mxu0
    %v5738 = vsel %vm554, %v5735, -inf
    %5739 = vmax.xlane.f32.xlu0 %v5738
    %v5740 = vpop.xlane.xlu0 %5739
    %v5741 = vsub.f32 %v5735, %v5740
    %v5742 = vmul.f32 %v5741, 1.442695
    %v5743 = vpow.pop %v5742
    %v5744 = vsel %vm554, %v5743, 0.0
    %5745 = vadd.xlane.f32.xlu0 %v5744
    %v5746 = vpop.xlane.xlu0 %5745
    %v5747 = vrcp.pop %v5746
    %v5748 = vmul.f32 %v5743, %v5747
    %v5750 = vsel %vm554, %v5748, 0
    %5752 = vmatprep.subr.mxu0 0.0
    %5753 = vmatpush1.msra.mxu0 %v5660
    %5754 = vmatprep.subr.mxu0 0.0
    %5755 = vmatpush1.msra.mxu0 0.0
    %5756 = vmatprep.subr.mxu0 0.0
    %5757 = vmatpush1.msra.mxu0 0.0
    %5758 = vmatprep.subr.mxu0 0.0
    %5759 = vmatpush1.msra.mxu0 0.0
    %5760 = vmatprep.subr.mxu0 0.0
    %5761 = vmatpush1.msra.mxu0 0.0
    %5762 = vmatprep.subr.mxu0 0.0
    %5763 = vmatpush1.msra.mxu0 0.0
    %5764 = vmatprep.subr.mxu0 0.0
    %5765 = vmatpush1.msra.mxu0 0.0
    %5766 = vmatprep.subr.mxu0 0.0
    %5767 = vmatpush1.msra.mxu0 0.0
    %5768 = vmatprep.subr.mxu0 0.0
    %5769 = vmatpush1.msra.mxu0 0.0
    %5770 = vmatprep.subr.mxu0 0.0
    %5771 = vmatpush1.msra.mxu0 0.0
    %5772 = vmatprep.subr.mxu0 0.0
    %5773 = vmatpush1.msra.mxu0 0.0
    %5774 = vmatprep.subr.mxu0 0.0
    %5775 = vmatpush1.msra.mxu0 0.0
    %5776 = vmatprep.subr.mxu0 0.0
    %5777 = vmatpush1.msra.mxu0 0.0
    %5778 = vmatprep.subr.mxu0 0.0
    %5779 = vmatpush1.msra.mxu0 0.0
    %5780 = vmatprep.subr.mxu0 0.0
    %5781 = vmatpush1.msra.mxu0 0.0
    %5782 = vmatprep.subr.mxu0 0.0
    %5783 = vmatpush1.msra.mxu0 0.0
    %5784 = vmatprep.subr.mxu0 0.0
    %5785 = vmatpush1.msra.mxu0 0.0
    %5786 = vmatprep.subr.mxu0 0.0
    %5787 = vmatpush1.msra.mxu0 0.0
    %5788 = vmatprep.subr.mxu0 0.0
    %5789 = vmatpush1.msra.mxu0 0.0
    %5790 = vmatprep.subr.mxu0 0.0
    %5791 = vmatpush1.msra.mxu0 0.0
    %5792 = vmatprep.subr.mxu0 0.0
    %5793 = vmatpush1.msra.mxu0 0.0
    %5794 = vmatprep.subr.mxu0 0.0
    %5795 = vmatpush1.msra.mxu0 0.0
    %5796 = vmatprep.subr.mxu0 0.0
    %5797 = vmatpush1.msra.mxu0 0.0
    %5798 = vmatprep.subr.mxu0 0.0
    %5799 = vmatpush1.msra.mxu0 0.0
    %5800 = vmatprep.subr.mxu0 0.0
    %5801 = vmatpush1.msra.mxu0 0.0
    %5802 = vmatprep.subr.mxu0 0.0
    %5803 = vmatpush1.msra.mxu0 0.0
    %5804 = vmatprep.subr.mxu0 0.0
    %5805 = vmatpush1.msra.mxu0 0.0
    %5806 = vmatprep.subr.mxu0 0.0
    %5807 = vmatpush1.msra.mxu0 0.0
    %5808 = vmatprep.subr.mxu0 0.0
    %5809 = vmatpush1.msra.mxu0 0.0
    %5810 = vmatprep.subr.mxu0 0.0
    %5811 = vmatpush1.msra.mxu0 0.0
    %5812 = vmatprep.subr.mxu0 0.0
    %5813 = vmatpush1.msra.mxu0 0.0
    %5814 = vmatprep.subr.mxu0 0.0
    %5815 = vmatpush1.msra.mxu0 0.0
    %5816 = vmatprep.mubr.f32.mxu0 0.0
    %5817 = vmatmul.mubr.f32.gmra.mrb[0].mxu0 %v5750
    %v5818 = vpop.f32.mrb[0].mxu0
    %v5819 = vadd.f32 0.0, %v5818
    %v5820 = vpop.f32.mrb[0].mxu0
    %5821 = vdwg.mxu0
    %5822 = vmatprep.subr.mxu0 0.0
    %5823 = vmatpush1.xpose.msra.mxu0 %v5619
    %5824 = vmatprep.subr.mxu0 0.0
    %5825 = vmatpush1.xpose.msra.mxu0 0.0
    %5826 = vmatprep.subr.mxu0 0.0
    %5827 = vmatpush1.xpose.msra.mxu0 0.0
    %5828 = vmatprep.subr.mxu0 0.0
    %5829 = vmatpush1.xpose.msra.mxu0 0.0
    %5830 = vmatprep.subr.mxu0 0.0
    %5831 = vmatpush1.xpose.msra.mxu0 0.0
    %5832 = vmatprep.subr.mxu0 0.0
    %5833 = vmatpush1.xpose.msra.mxu0 0.0
    %5834 = vmatprep.subr.mxu0 0.0
    %5835 = vmatpush1.xpose.msra.mxu0 0.0
    %5836 = vmatprep.subr.mxu0 0.0
    %5837 = vmatpush1.xpose.msra.mxu0 0.0
    %5838 = vmatprep.subr.mxu0 0.0
    %5839 = vmatpush1.xpose.msra.mxu0 0.0
    %5840 = vmatprep.subr.mxu0 0.0
    %5841 = vmatpush1.xpose.msra.mxu0 0.0
    %5842 = vmatprep.subr.mxu0 0.0
    %5843 = vmatpush1.xpose.msra.mxu0 0.0
    %5844 = vmatprep.subr.mxu0 0.0
    %5845 = vmatpush1.xpose.msra.mxu0 0.0
    %5846 = vmatprep.subr.mxu0 0.0
    %5847 = vmatpush1.xpose.msra.mxu0 0.0
    %5848 = vmatprep.subr.mxu0 0.0
    %5849 = vmatpush1.xpose.msra.mxu0 0.0
    %5850 = vmatprep.subr.mxu0 0.0
    %5851 = vmatpush1.xpose.msra.mxu0 0.0
    %5852 = vmatprep.subr.mxu0 0.0
    %5853 = vmatpush1.xpose.msra.mxu0 0.0
    %5854 = vmatprep.subr.mxu0 0.0
    %5855 = vmatpush1.xpose.msra.mxu0 0.0
    %5856 = vmatprep.subr.mxu0 0.0
    %5857 = vmatpush1.xpose.msra.mxu0 0.0
    %5858 = vmatprep.subr.mxu0 0.0
    %5859 = vmatpush1.xpose.msra.mxu0 0.0
    %5860 = vmatprep.subr.mxu0 0.0
    %5861 = vmatpush1.xpose.msra.mxu0 0.0
    %5862 = vmatprep.subr.mxu0 0.0
    %5863 = vmatpush1.xpose.msra.mxu0 0.0
    %5864 = vmatprep.subr.mxu0 0.0
    %5865 = vmatpush1.xpose.msra.mxu0 0.0
    %5866 = vmatprep.subr.mxu0 0.0
    %5867 = vmatpush1.xpose.msra.mxu0 0.0
    %5868 = vmatprep.subr.mxu0 0.0
    %5869 = vmatpush1.xpose.msra.mxu0 0.0
    %5870 = vmatprep.subr.mxu0 0.0
    %5871 = vmatpush1.xpose.msra.mxu0 0.0
    %5872 = vmatprep.subr.mxu0 0.0
    %5873 = vmatpush1.xpose.msra.mxu0 0.0
    %5874 = vmatprep.subr.mxu0 0.0
    %5875 = vmatpush1.xpose.msra.mxu0 0.0
    %5876 = vmatprep.subr.mxu0 0.0
    %5877 = vmatpush1.xpose.msra.mxu0 0.0
    %5878 = vmatprep.subr.mxu0 0.0
    %5879 = vmatpush1.xpose.msra.mxu0 0.0
    %5880 = vmatprep.subr.mxu0 0.0
    %5881 = vmatpush1.xpose.msra.mxu0 0.0
    %5882 = vmatprep.subr.mxu0 0.0
    %5883 = vmatpush1.xpose.msra.mxu0 0.0
    %5884 = vmatprep.subr.mxu0 0.0
    %5885 = vmatpush1.xpose.msra.mxu0 0.0
    %5886 = vmatprep.mubr.f32.mxu0 0.0
    %5887 = vmatmul.mubr.f32.gmra.mrb[0].mxu0 %v5361
    %v5888 = vpop.f32.mrb[0].mxu0
    %v5889 = vadd.f32 0.0, %v5888
    %v5890 = vpop.f32.mrb[0].mxu0
    %5891 = vdwg.mxu0
    %v5892 = vsel %vm554, %v5889, -inf
    %5893 = vmax.xlane.f32.xlu0 %v5892
    %v5894 = vpop.xlane.xlu0 %5893
    %v5895 = vsub.f32 %v5889, %v5894
    %v5896 = vmul.f32 %v5895, 1.442695
    %v5897 = vpow.pop %v5896
    %v5898 = vsel %vm554, %v5897, 0.0
    %5899 = vadd.xlane.f32.xlu0 %v5898
    %v5900 = vpop.xlane.xlu0 %5899
    %v5901 = vrcp.pop %v5900
    %v5902 = vmul.f32 %v5897, %v5901
    %v5904 = vsel %vm554, %v5902, 0
    %5906 = vmatprep.subr.mxu0 0.0
    %5907 = vmatpush1.msra.mxu0 %v5662
    %5908 = vmatprep.subr.mxu0 0.0
    %5909 = vmatpush1.msra.mxu0 0.0
    %5910 = vmatprep.subr.mxu0 0.0
    %5911 = vmatpush1.msra.mxu0 0.0
    %5912 = vmatprep.subr.mxu0 0.0
    %5913 = vmatpush1.msra.mxu0 0.0
    %5914 = vmatprep.subr.mxu0 0.0
    %5915 = vmatpush1.msra.mxu0 0.0
    %5916 = vmatprep.subr.mxu0 0.0
    %5917 = vmatpush1.msra.mxu0 0.0
    %5918 = vmatprep.subr.mxu0 0.0
    %5919 = vmatpush1.msra.mxu0 0.0
    %5920 = vmatprep.subr.mxu0 0.0
    %5921 = vmatpush1.msra.mxu0 0.0
    %5922 = vmatprep.subr.mxu0 0.0
    %5923 = vmatpush1.msra.mxu0 0.0
    %5924 = vmatprep.subr.mxu0 0.0
    %5925 = vmatpush1.msra.mxu0 0.0
    %5926 = vmatprep.subr.mxu0 0.0
    %5927 = vmatpush1.msra.mxu0 0.0
    %5928 = vmatprep.subr.mxu0 0.0
    %5929 = vmatpush1.msra.mxu0 0.0
    %5930 = vmatprep.subr.mxu0 0.0
    %5931 = vmatpush1.msra.mxu0 0.0
    %5932 = vmatprep.subr.mxu0 0.0
    %5933 = vmatpush1.msra.mxu0 0.0
    %5934 = vmatprep.subr.mxu0 0.0
    %5935 = vmatpush1.msra.mxu0 0.0
    %5936 = vmatprep.subr.mxu0 0.0
    %5937 = vmatpush1.msra.mxu0 0.0
    %5938 = vmatprep.subr.mxu0 0.0
    %5939 = vmatpush1.msra.mxu0 0.0
    %5940 = vmatprep.subr.mxu0 0.0
    %5941 = vmatpush1.msra.mxu0 0.0
    %5942 = vmatprep.subr.mxu0 0.0
    %5943 = vmatpush1.msra.mxu0 0.0
    %5944 = vmatprep.subr.mxu0 0.0
    %5945 = vmatpush1.msra.mxu0 0.0
    %5946 = vmatprep.subr.mxu0 0.0
    %5947 = vmatpush1.msra.mxu0 0.0
    %5948 = vmatprep.subr.mxu0 0.0
    %5949 = vmatpush1.msra.mxu0 0.0
    %5950 = vmatprep.subr.mxu0 0.0
    %5951 = vmatpush1.msra.mxu0 0.0
    %5952 = vmatprep.subr.mxu0 0.0
    %5953 = vmatpush1.msra.mxu0 0.0
    %5954 = vmatprep.subr.mxu0 0.0
    %5955 = vmatpush1.msra.mxu0 0.0
    %5956 = vmatprep.subr.mxu0 0.0
    %5957 = vmatpush1.msra.mxu0 0.0
    %5958 = vmatprep.subr.mxu0 0.0
    %5959 = vmatpush1.msra.mxu0 0.0
    %5960 = vmatprep.subr.mxu0 0.0
    %5961 = vmatpush1.msra.mxu0 0.0
    %5962 = vmatprep.subr.mxu0 0.0
    %5963 = vmatpush1.msra.mxu0 0.0
    %5964 = vmatprep.subr.mxu0 0.0
    %5965 = vmatpush1.msra.mxu0 0.0
    %5966 = vmatprep.subr.mxu0 0.0
    %5967 = vmatpush1.msra.mxu0 0.0
    %5968 = vmatprep.subr.mxu0 0.0
    %5969 = vmatpush1.msra.mxu0 0.0
    %5970 = vmatprep.mubr.f32.mxu0 0.0
    %5971 = vmatmul.mubr.f32.gmra.mrb[0].mxu0 %v5904
    %v5972 = vpop.f32.mrb[0].mxu0
    %v5973 = vadd.f32 0.0, %v5972
    %v5974 = vpop.f32.mrb[0].mxu0
    %5975 = vdwg.mxu0
    %5976 = vmatprep.subr.mxu0 0.0
    %5977 = vmatpush1.xpose.msra.mxu0 %v5621
    %5978 = vmatprep.subr.mxu0 0.0
    %5979 = vmatpush1.xpose.msra.mxu0 0.0
    %5980 = vmatprep.subr.mxu0 0.0
    %5981 = vmatpush1.xpose.msra.mxu0 0.0
    %5982 = vmatprep.subr.mxu0 0.0
    %5983 = vmatpush1.xpose.msra.mxu0 0.0
    %5984 = vmatprep.subr.mxu0 0.0
    %5985 = vmatpush1.xpose.msra.mxu0 0.0
    %5986 = vmatprep.subr.mxu0 0.0
    %5987 = vmatpush1.xpose.msra.mxu0 0.0
    %5988 = vmatprep.subr.mxu0 0.0
    %5989 = vmatpush1.xpose.msra.mxu0 0.0
    %5990 = vmatprep.subr.mxu0 0.0
    %5991 = vmatpush1.xpose.msra.mxu0 0.0
    %5992 = vmatprep.subr.mxu0 0.0
    %5993 = vmatpush1.xpose.msra.mxu0 0.0
    %5994 = vmatprep.subr.mxu0 0.0
    %5995 = vmatpush1.xpose.msra.mxu0 0.0
    %5996 = vmatprep.subr.mxu0 0.0
    %5997 = vmatpush1.xpose.msra.mxu0 0.0
    %5998 = vmatprep.subr.mxu0 0.0
    %5999 = vmatpush1.xpose.msra.mxu0 0.0
    %6000 = vmatprep.subr.mxu0 0.0
    %6001 = vmatpush1.xpose.msra.mxu0 0.0
    %6002 = vmatprep.subr.mxu0 0.0
    %6003 = vmatpush1.xpose.msra.mxu0 0.0
    %6004 = vmatprep.subr.mxu0 0.0
    %6005 = vmatpush1.xpose.msra.mxu0 0.0
    %6006 = vmatprep.subr.mxu0 0.0
    %6007 = vmatpush1.xpose.msra.mxu0 0.0
    %6008 = vmatprep.subr.mxu0 0.0
    %6009 = vmatpush1.xpose.msra.mxu0 0.0
    %6010 = vmatprep.subr.mxu0 0.0
    %6011 = vmatpush1.xpose.msra.mxu0 0.0
    %6012 = vmatprep.subr.mxu0 0.0
    %6013 = vmatpush1.xpose.msra.mxu0 0.0
    %6014 = vmatprep.subr.mxu0 0.0
    %6015 = vmatpush1.xpose.msra.mxu0 0.0
    %6016 = vmatprep.subr.mxu0 0.0
    %6017 = vmatpush1.xpose.msra.mxu0 0.0
    %6018 = vmatprep.subr.mxu0 0.0
    %6019 = vmatpush1.xpose.msra.mxu0 0.0
    %6020 = vmatprep.subr.mxu0 0.0
    %6021 = vmatpush1.xpose.msra.mxu0 0.0
    %6022 = vmatprep.subr.mxu0 0.0
    %6023 = vmatpush1.xpose.msra.mxu0 0.0
    %6024 = vmatprep.subr.mxu0 0.0
    %6025 = vmatpush1.xpose.msra.mxu0 0.0
    %6026 = vmatprep.subr.mxu0 0.0
    %6027 = vmatpush1.xpose.msra.mxu0 0.0
    %6028 = vmatprep.subr.mxu0 0.0
    %6029 = vmatpush1.xpose.msra.mxu0 0.0
    %6030 = vmatprep.subr.mxu0 0.0
    %6031 = vmatpush1.xpose.msra.mxu0 0.0
    %6032 = vmatprep.subr.mxu0 0.0
    %6033 = vmatpush1.xpose.msra.mxu0 0.0
    %6034 = vmatprep.subr.mxu0 0.0
    %6035 = vmatpush1.xpose.msra.mxu0 0.0
    %6036 = vmatprep.subr.mxu0 0.0
    %6037 = vmatpush1.xpose.msra.mxu0 0.0
    %6038 = vmatprep.subr.mxu0 0.0
    %6039 = vmatpush1.xpose.msra.mxu0 0.0
    %6040 = vmatprep.mubr.f32.mxu0 0.0
    %6041 = vmatmul.mubr.f32.gmra.mrb[0].mxu0 %v5363
    %v6042 = vpop.f32.mrb[0].mxu0
    %v6043 = vadd.f32 0.0, %v6042
    %v6044 = vpop.f32.mrb[0].mxu0
    %6045 = vdwg.mxu0
    %v6046 = vsel %vm554, %v6043, -inf
    %6047 = vmax.xlane.f32.xlu0 %v6046
    %v6048 = vpop.xlane.xlu0 %6047
    %v6049 = vsub.f32 %v6043, %v6048
    %v6050 = vmul.f32 %v6049, 1.442695
    %v6051 = vpow.pop %v6050
    %v6052 = vsel %vm554, %v6051, 0.0
    %6053 = vadd.xlane.f32.xlu0 %v6052
    %v6054 = vpop.xlane.xlu0 %6053
    %v6055 = vrcp.pop %v6054
    %v6056 = vmul.f32 %v6051, %v6055
    %v6058 = vsel %vm554, %v6056, 0
    %6060 = vmatprep.subr.mxu0 0.0
    %6061 = vmatpush1.msra.mxu0 %v5664
    %6062 = vmatprep.subr.mxu0 0.0
    %6063 = vmatpush1.msra.mxu0 0.0
    %6064 = vmatprep.subr.mxu0 0.0
    %6065 = vmatpush1.msra.mxu0 0.0
    %6066 = vmatprep.subr.mxu0 0.0
    %6067 = vmatpush1.msra.mxu0 0.0
    %6068 = vmatprep.subr.mxu0 0.0
    %6069 = vmatpush1.msra.mxu0 0.0
    %6070 = vmatprep.subr.mxu0 0.0
    %6071 = vmatpush1.msra.mxu0 0.0
    %6072 = vmatprep.subr.mxu0 0.0
    %6073 = vmatpush1.msra.mxu0 0.0
    %6074 = vmatprep.subr.mxu0 0.0
    %6075 = vmatpush1.msra.mxu0 0.0
    %6076 = vmatprep.subr.mxu0 0.0
    %6077 = vmatpush1.msra.mxu0 0.0
    %6078 = vmatprep.subr.mxu0 0.0
    %6079 = vmatpush1.msra.mxu0 0.0
    %6080 = vmatprep.subr.mxu0 0.0
    %6081 = vmatpush1.msra.mxu0 0.0
    %6082 = vmatprep.subr.mxu0 0.0
    %6083 = vmatpush1.msra.mxu0 0.0
    %6084 = vmatprep.subr.mxu0 0.0
    %6085 = vmatpush1.msra.mxu0 0.0
    %6086 = vmatprep.subr.mxu0 0.0
    %6087 = vmatpush1.msra.mxu0 0.0
    %6088 = vmatprep.subr.mxu0 0.0
    %6089 = vmatpush1.msra.mxu0 0.0
    %6090 = vmatprep.subr.mxu0 0.0
    %6091 = vmatpush1.msra.mxu0 0.0
    %6092 = vmatprep.subr.mxu0 0.0
    %6093 = vmatpush1.msra.mxu0 0.0
    %6094 = vmatprep.subr.mxu0 0.0
    %6095 = vmatpush1.msra.mxu0 0.0
    %6096 = vmatprep.subr.mxu0 0.0
    %6097 = vmatpush1.msra.mxu0 0.0
    %6098 = vmatprep.subr.mxu0 0.0
    %6099 = vmatpush1.msra.mxu0 0.0
    %6100 = vmatprep.subr.mxu0 0.0
    %6101 = vmatpush1.msra.mxu0 0.0
    %6102 = vmatprep.subr.mxu0 0.0
    %6103 = vmatpush1.msra.mxu0 0.0
    %6104 = vmatprep.subr.mxu0 0.0
    %6105 = vmatpush1.msra.mxu0 0.0
    %6106 = vmatprep.subr.mxu0 0.0
    %6107 = vmatpush1.msra.mxu0 0.0
    %6108 = vmatprep.subr.mxu0 0.0
    %6109 = vmatpush1.msra.mxu0 0.0
    %6110 = vmatprep.subr.mxu0 0.0
    %6111 = vmatpush1.msra.mxu0 0.0
    %6112 = vmatprep.subr.mxu0 0.0
    %6113 = vmatpush1.msra.mxu0 0.0
    %6114 = vmatprep.subr.mxu0 0.0
    %6115 = vmatpush1.msra.mxu0 0.0
    %6116 = vmatprep.subr.mxu0 0.0
    %6117 = vmatpush1.msra.mxu0 0.0
    %6118 = vmatprep.subr.mxu0 0.0
    %6119 = vmatpush1.msra.mxu0 0.0
    %6120 = vmatprep.subr.mxu0 0.0
    %6121 = vmatpush1.msra.mxu0 0.0
    %6122 = vmatprep.subr.mxu0 0.0
    %6123 = vmatpush1.msra.mxu0 0.0
    %6124 = vmatprep.mubr.f32.mxu0 0.0
    %6125 = vmatmul.mubr.f32.gmra.mrb[0].mxu0 %v6058
    %v6126 = vpop.f32.mrb[0].mxu0
    %v6127 = vadd.f32 0.0, %v6126
    %v6128 = vpop.f32.mrb[0].mxu0
    %6129 = vdwg.mxu0
    %6130 = vmatprep.subr.mxu0 0.0
    %6131 = vmatpush1.xpose.msra.mxu0 %v5623
    %6132 = vmatprep.subr.mxu0 0.0
    %6133 = vmatpush1.xpose.msra.mxu0 0.0
    %6134 = vmatprep.subr.mxu0 0.0
    %6135 = vmatpush1.xpose.msra.mxu0 0.0
    %6136 = vmatprep.subr.mxu0 0.0
    %6137 = vmatpush1.xpose.msra.mxu0 0.0
    %6138 = vmatprep.subr.mxu0 0.0
    %6139 = vmatpush1.xpose.msra.mxu0 0.0
    %6140 = vmatprep.subr.mxu0 0.0
    %6141 = vmatpush1.xpose.msra.mxu0 0.0
    %6142 = vmatprep.subr.mxu0 0.0
    %6143 = vmatpush1.xpose.msra.mxu0 0.0
    %6144 = vmatprep.subr.mxu0 0.0
    %6145 = vmatpush1.xpose.msra.mxu0 0.0
    %6146 = vmatprep.subr.mxu0 0.0
    %6147 = vmatpush1.xpose.msra.mxu0 0.0
    %6148 = vmatprep.subr.mxu0 0.0
    %6149 = vmatpush1.xpose.msra.mxu0 0.0
    %6150 = vmatprep.subr.mxu0 0.0
    %6151 = vmatpush1.xpose.msra.mxu0 0.0
    %6152 = vmatprep.subr.mxu0 0.0
    %6153 = vmatpush1.xpose.msra.mxu0 0.0
    %6154 = vmatprep.subr.mxu0 0.0
    %6155 = vmatpush1.xpose.msra.mxu0 0.0
    %6156 = vmatprep.subr.mxu0 0.0
    %6157 = vmatpush1.xpose.msra.mxu0 0.0
    %6158 = vmatprep.subr.mxu0 0.0
    %6159 = vmatpush1.xpose.msra.mxu0 0.0
    %6160 = vmatprep.subr.mxu0 0.0
    %6161 = vmatpush1.xpose.msra.mxu0 0.0
    %6162 = vmatprep.subr.mxu0 0.0
    %6163 = vmatpush1.xpose.msra.mxu0 0.0
    %6164 = vmatprep.subr.mxu0 0.0
    %6165 = vmatpush1.xpose.msra.mxu0 0.0
    %6166 = vmatprep.subr.mxu0 0.0
    %6167 = vmatpush1.xpose.msra.mxu0 0.0
    %6168 = vmatprep.subr.mxu0 0.0
    %6169 = vmatpush1.xpose.msra.mxu0 0.0
    %6170 = vmatprep.subr.mxu0 0.0
    %6171 = vmatpush1.xpose.msra.mxu0 0.0
    %6172 = vmatprep.subr.mxu0 0.0
    %6173 = vmatpush1.xpose.msra.mxu0 0.0
    %6174 = vmatprep.subr.mxu0 0.0
    %6175 = vmatpush1.xpose.msra.mxu0 0.0
    %6176 = vmatprep.subr.mxu0 0.0
    %6177 = vmatpush1.xpose.msra.mxu0 0.0
    %6178 = vmatprep.subr.mxu0 0.0
    %6179 = vmatpush1.xpose.msra.mxu0 0.0
    %6180 = vmatprep.subr.mxu0 0.0
    %6181 = vmatpush1.xpose.msra.mxu0 0.0
    %6182 = vmatprep.subr.mxu0 0.0
    %6183 = vmatpush1.xpose.msra.mxu0 0.0
    %6184 = vmatprep.subr.mxu0 0.0
    %6185 = vmatpush1.xpose.msra.mxu0 0.0
    %6186 = vmatprep.subr.mxu0 0.0
    %6187 = vmatpush1.xpose.msra.mxu0 0.0
    %6188 = vmatprep.subr.mxu0 0.0
    %6189 = vmatpush1.xpose.msra.mxu0 0.0
    %6190 = vmatprep.subr.mxu0 0.0
    %6191 = vmatpush1.xpose.msra.mxu0 0.0
    %6192 = vmatprep.subr.mxu0 0.0
    %6193 = vmatpush1.xpose.msra.mxu0 0.0
    %6194 = vmatprep.mubr.f32.mxu0 0.0
    %6195 = vmatmul.mubr.f32.gmra.mrb[0].mxu0 %v5365
    %v6196 = vpop.f32.mrb[0].mxu0
    %v6197 = vadd.f32 0.0, %v6196
    %v6198 = vpop.f32.mrb[0].mxu0
    %6199 = vdwg.mxu0
    %v6200 = vsel %vm554, %v6197, -inf
    %6201 = vmax.xlane.f32.xlu0 %v6200
    %v6202 = vpop.xlane.xlu0 %6201
    %v6203 = vsub.f32 %v6197, %v6202
    %v6204 = vmul.f32 %v6203, 1.442695
    %v6205 = vpow.pop %v6204
    %v6206 = vsel %vm554, %v6205, 0.0
    %6207 = vadd.xlane.f32.xlu0 %v6206
    %v6208 = vpop.xlane.xlu0 %6207
    %v6209 = vrcp.pop %v6208
    %v6210 = vmul.f32 %v6205, %v6209
    %v6212 = vsel %vm554, %v6210, 0
    %6214 = vmatprep.subr.mxu0 0.0
    %6215 = vmatpush1.msra.mxu0 %v5666
    %6216 = vmatprep.subr.mxu0 0.0
    %6217 = vmatpush1.msra.mxu0 0.0
    %6218 = vmatprep.subr.mxu0 0.0
    %6219 = vmatpush1.msra.mxu0 0.0
    %6220 = vmatprep.subr.mxu0 0.0
    %6221 = vmatpush1.msra.mxu0 0.0
    %6222 = vmatprep.subr.mxu0 0.0
    %6223 = vmatpush1.msra.mxu0 0.0
    %6224 = vmatprep.subr.mxu0 0.0
    %6225 = vmatpush1.msra.mxu0 0.0
    %6226 = vmatprep.subr.mxu0 0.0
    %6227 = vmatpush1.msra.mxu0 0.0
    %6228 = vmatprep.subr.mxu0 0.0
    %6229 = vmatpush1.msra.mxu0 0.0
    %6230 = vmatprep.subr.mxu0 0.0
    %6231 = vmatpush1.msra.mxu0 0.0
    %6232 = vmatprep.subr.mxu0 0.0
    %6233 = vmatpush1.msra.mxu0 0.0
    %6234 = vmatprep.subr.mxu0 0.0
    %6235 = vmatpush1.msra.mxu0 0.0
    %6236 = vmatprep.subr.mxu0 0.0
    %6237 = vmatpush1.msra.mxu0 0.0
    %6238 = vmatprep.subr.mxu0 0.0
    %6239 = vmatpush1.msra.mxu0 0.0
    %6240 = vmatprep.subr.mxu0 0.0
    %6241 = vmatpush1.msra.mxu0 0.0
    %6242 = vmatprep.subr.mxu0 0.0
    %6243 = vmatpush1.msra.mxu0 0.0
    %6244 = vmatprep.subr.mxu0 0.0
    %6245 = vmatpush1.msra.mxu0 0.0
    %6246 = vmatprep.subr.mxu0 0.0
    %6247 = vmatpush1.msra.mxu0 0.0
    %6248 = vmatprep.subr.mxu0 0.0
    %6249 = vmatpush1.msra.mxu0 0.0
    %6250 = vmatprep.subr.mxu0 0.0
    %6251 = vmatpush1.msra.mxu0 0.0
    %6252 = vmatprep.subr.mxu0 0.0
    %6253 = vmatpush1.msra.mxu0 0.0
    %6254 = vmatprep.subr.mxu0 0.0
    %6255 = vmatpush1.msra.mxu0 0.0
    %6256 = vmatprep.subr.mxu0 0.0
    %6257 = vmatpush1.msra.mxu0 0.0
    %6258 = vmatprep.subr.mxu0 0.0
    %6259 = vmatpush1.msra.mxu0 0.0
    %6260 = vmatprep.subr.mxu0 0.0
    %6261 = vmatpush1.msra.mxu0 0.0
    %6262 = vmatprep.subr.mxu0 0.0
    %6263 = vmatpush1.msra.mxu0 0.0
    %6264 = vmatprep.subr.mxu0 0.0
    %6265 = vmatpush1.msra.mxu0 0.0
    %6266 = vmatprep.subr.mxu0 0.0
    %6267 = vmatpush1.msra.mxu0 0.0
    %6268 = vmatprep.subr.mxu0 0.0
    %6269 = vmatpush1.msra.mxu0 0.0
    %6270 = vmatprep.subr.mxu0 0.0
    %6271 = vmatpush1.msra.mxu0 0.0
    %6272 = vmatprep.subr.mxu0 0.0
    %6273 = vmatpush1.msra.mxu0 0.0
    %6274 = vmatprep.subr.mxu0 0.0
    %6275 = vmatpush1.msra.mxu0 0.0
    %6276 = vmatprep.subr.mxu0 0.0
    %6277 = vmatpush1.msra.mxu0 0.0
    %6278 = vmatprep.mubr.f32.mxu0 0.0
    %6279 = vmatmul.mubr.f32.gmra.mrb[0].mxu0 %v6212
    %v6280 = vpop.f32.mrb[0].mxu0
    %v6281 = vadd.f32 0.0, %v6280
    %v6282 = vpop.f32.mrb[0].mxu0
    %6283 = vdwg.mxu0
    %v6284 = vpack.c.bf16 %v6127, %v5819
    %v6285 = vpack.c.bf16 %v6281, %v5973
    %v6286 = vld [vmem:[%s2 + $0x8] sm:$0xf]
    %v6287 = vld [vmem:[%s2 + $0x14] sm:$0xf]
    %v6288 = vld [vmem:[%s2 + $0x20] sm:$0xf]
    %v6289 = vld [vmem:[%s2 + $0x2c] sm:$0xf]
    %v6290 = vld [vmem:[%s2 + $0x38] sm:$0xf]
    %v6291 = vld [vmem:[%s2 + $0x44] sm:$0xf]
    %v6292 = vld [vmem:[%s2 + $0x50] sm:$0xf]
    %v6293 = vld [vmem:[%s2 + $0x5c] sm:$0xf]
    %v6294 = vld [vmem:[%s2 + $0x68] sm:$0xf]
    %v6295 = vld [vmem:[%s2 + $0x74] sm:$0xf]
    %v6296 = vld [vmem:[%s2 + $0x80] sm:$0xf]
    %v6297 = vld [vmem:[%s2 + $0x8c] sm:$0xf]
    %v6298 = vld [vmem:[%s2 + $0x98] sm:$0xf]
    %v6299 = vld [vmem:[%s2 + $0xa4] sm:$0xf]
    %v6300 = vld [vmem:[%s2 + $0xb0] sm:$0xf]
    %v6301 = vld [vmem:[%s2 + $0xbc] sm:$0xf]
    %v6302 = vld [vmem:[%s2 + $0xc8] sm:$0xf]
    %v6303 = vld [vmem:[%s2 + $0xd4] sm:$0xf]
    %v6304 = vld [vmem:[%s2 + $0xe0] sm:$0xf]
    %v6305 = vld [vmem:[%s2 + $0xec] sm:$0xf]
    %v6306 = vld [vmem:[%s2 + $0xf8] sm:$0xf]
    %v6307 = vld [vmem:[%s2 + $0x104] sm:$0xf]
    %v6308 = vld [vmem:[%s2 + $0x110] sm:$0xf]
    %v6309 = vld [vmem:[%s2 + $0x11c] sm:$0xf]
    %v6310 = vld [vmem:[%s2 + $0x128] sm:$0xf]
    %v6311 = vld [vmem:[%s2 + $0x134] sm:$0xf]
    %v6312 = vld [vmem:[%s2 + $0x140] sm:$0xf]
    %v6313 = vld [vmem:[%s2 + $0x14c] sm:$0xf]
    %v6314 = vld [vmem:[%s2 + $0x158] sm:$0xf]
    %v6315 = vld [vmem:[%s2 + $0x164] sm:$0xf]
    %v6316 = vld [vmem:[%s2 + $0x170] sm:$0xf]
    %v6317 = vld [vmem:[%s2 + $0x17c] sm:$0xf]
    %v6318 = vld [vmem:[%s5 + $0x86] ss:$0 sm:$0xff]
    %v6351 = vunpack.c.l.b16 %v6286
    %v6352 = vunpack.c.l.b16 %v6287
    %v6353 = vunpack.c.l.b16 %v6288
    %v6354 = vunpack.c.l.b16 %v6289
    %v6355 = vunpack.c.l.b16 %v6290
    %v6356 = vunpack.c.l.b16 %v6291
    %v6357 = vunpack.c.l.b16 %v6292
    %v6358 = vunpack.c.l.b16 %v6293
    %v6359 = vunpack.c.l.b16 %v6294
    %v6360 = vunpack.c.l.b16 %v6295
    %v6361 = vunpack.c.l.b16 %v6296
    %v6362 = vunpack.c.l.b16 %v6297
    %v6363 = vunpack.c.l.b16 %v6298
    %v6364 = vunpack.c.l.b16 %v6299
    %v6365 = vunpack.c.l.b16 %v6300
    %v6366 = vunpack.c.l.b16 %v6301
    %v6367 = vunpack.c.l.b16 %v6302
    %v6368 = vunpack.c.l.b16 %v6303
    %v6369 = vunpack.c.l.b16 %v6304
    %v6370 = vunpack.c.l.b16 %v6305
    %v6371 = vunpack.c.l.b16 %v6306
    %v6372 = vunpack.c.l.b16 %v6307
    %v6373 = vunpack.c.l.b16 %v6308
    %v6374 = vunpack.c.l.b16 %v6309
    %v6375 = vunpack.c.l.b16 %v6310
    %v6376 = vunpack.c.l.b16 %v6311
    %v6377 = vunpack.c.l.b16 %v6312
    %v6378 = vunpack.c.l.b16 %v6313
    %v6379 = vunpack.c.l.b16 %v6314
    %v6380 = vunpack.c.l.b16 %v6315
    %v6381 = vunpack.c.l.b16 %v6316
    %v6382 = vunpack.c.l.b16 %v6317
    %v6383 = vpack.c.b16 %v6352, %v6351
    %v6384 = vpack.c.b16 %v6354, %v6353
    %v6385 = vpack.c.b16 %v6356, %v6355
    %v6386 = vpack.c.b16 %v6358, %v6357
    %v6387 = vpack.c.b16 %v6360, %v6359
    %v6388 = vpack.c.b16 %v6362, %v6361
    %v6389 = vpack.c.b16 %v6364, %v6363
    %v6390 = vpack.c.b16 %v6366, %v6365
    %v6391 = vpack.c.b16 %v6368, %v6367
    %v6392 = vpack.c.b16 %v6370, %v6369
    %v6393 = vpack.c.b16 %v6372, %v6371
    %v6394 = vpack.c.b16 %v6374, %v6373
    %v6395 = vpack.c.b16 %v6376, %v6375
    %v6396 = vpack.c.b16 %v6378, %v6377
    %v6397 = vpack.c.b16 %v6380, %v6379
    %v6398 = vpack.c.b16 %v6382, %v6381
    %6415 = vmatprep.subr.bf16.mxu0 0
    %6416 = vmatpush1.bf16.msra.mxu0 %v6383
    %6417 = vmatprep.subr.bf16.mxu0 0
    %6418 = vmatpush1.bf16.msra.mxu0 %v6384
    %6419 = vmatprep.subr.bf16.mxu0 0
    %6420 = vmatpush1.bf16.msra.mxu0 %v6385
    %6421 = vmatprep.subr.bf16.mxu0 0
    %6422 = vmatpush1.bf16.msra.mxu0 %v6386
    %6423 = vmatprep.subr.bf16.mxu0 0
    %6424 = vmatpush1.bf16.msra.mxu0 %v6387
    %6425 = vmatprep.subr.bf16.mxu0 0
    %6426 = vmatpush1.bf16.msra.mxu0 %v6388
    %6427 = vmatprep.subr.bf16.mxu0 0
    %6428 = vmatpush1.bf16.msra.mxu0 %v6389
    %6429 = vmatprep.subr.bf16.mxu0 0
    %6430 = vmatpush1.bf16.msra.mxu0 %v6390
    %6431 = vmatprep.subr.bf16.mxu0 0
    %6432 = vmatpush1.bf16.msra.mxu0 %v6391
    %6433 = vmatprep.subr.bf16.mxu0 0
    %6434 = vmatpush1.bf16.msra.mxu0 %v6392
    %6435 = vmatprep.subr.bf16.mxu0 0
    %6436 = vmatpush1.bf16.msra.mxu0 %v6393
    %6437 = vmatprep.subr.bf16.mxu0 0
    %6438 = vmatpush1.bf16.msra.mxu0 %v6394
    %6439 = vmatprep.subr.bf16.mxu0 0
    %6440 = vmatpush1.bf16.msra.mxu0 %v6395
    %6441 = vmatprep.subr.bf16.mxu0 0
    %6442 = vmatpush1.bf16.msra.mxu0 %v6396
    %6443 = vmatprep.subr.bf16.mxu0 0
    %6444 = vmatpush1.bf16.msra.mxu0 %v6397
    %6445 = vmatprep.subr.bf16.mxu0 0
    %6446 = vmatpush1.bf16.msra.mxu0 %v6398
    %6447 = vmatprep.mubr.bf16.mxu0 %v6285
    %6448 = vmatmul.mubr.bf16.gmra.mrb[0].mxu0 %v6284
    %v6449 = vpop.f32.mrb[0].mxu0
    %v6450 = vadd.f32 %v6318, %v6449
    %v6451 = vpop.f32.mrb[0].mxu0
    %v6452 = vpop.f32.mrb[0].mxu0
    %v6453 = vadd.f32 %v6318, %v6452
    %v6454 = vpop.f32.mrb[0].mxu0
    %6455 = vdwg.mxu0
    %v6456 = vadd.f32 %v5212, %v6450
    %v6457 = vadd.f32 %v5213, %v6453
    %6458 = vadd.xlane.f32.xlu0 %v6456
    %v6459 = vpop.xlane.xlu0 %6458
    %6460 = vadd.xlane.f32.xlu0 %v6457
    %v6461 = vpop.xlane.xlu0 %6460
    %v6462 = vmul.f32 %v6459, 0.015151516
    %v6463 = vmul.f32 %v6461, 0.015151516
    %v6464 = vsub.f32 %v6456, %v6462
    %v6465 = vsub.f32 %v6457, %v6463
    %v6466 = vmul.f32 %v6464, %v29
    %v6467 = vmul.f32 %v6465, %v29
    %v6468 = vmul.f32 %v6466, %v6466
    %v6469 = vmul.f32 %v6467, %v6467
    %6470 = vadd.xlane.f32.xlu0 %v6468
    %v6471 = vpop.xlane.xlu0 %6470
    %6472 = vadd.xlane.f32.xlu0 %v6469
    %v6473 = vpop.xlane.xlu0 %6472
    %v6474 = vmul.f32 %v6471, 0.015151516
    %v6475 = vmul.f32 %v6473, 0.015151516
    %v6476 = vadd.f32 %v6474, 1e-05
    %v6477 = vadd.f32 %v6475, 1e-05
    %v6478 = vrsqrt.pop %v6476
    %v6479 = vrsqrt.pop %v6477
    %v6480 = vmul.f32 %v6466, %v6478
    %v6481 = vmul.f32 %v6467, %v6479
    %v6482 = vld [vmem:[%s5 + $0x87] ss:$0 sm:$0xff]
    %v6483 = vmul.f32 %v6480, %v6482
    %v6484 = vmul.f32 %v6481, %v6482
    %v6485 = vld [vmem:[%s5 + $0x100] ss:$0 sm:$0xff]
    %v6486 = vadd.f32 %v6483, %v6485
    %v6487 = vadd.f32 %v6484, %v6485
    %v6488 = vpack.c.bf16 %v6487, %v6486
    %v6489 = vld [vmem:[%s3 + $0x40] sm:$0xff]
    %v6490 = vld [vmem:[%s3 + $0x48] sm:$0xff]
    %v6491 = vld [vmem:[%s3 + $0x50] sm:$0xff]
    %v6492 = vld [vmem:[%s3 + $0x58] sm:$0xff]
    %v6493 = vld [vmem:[%s3 + $0x60] sm:$0xff]
    %v6494 = vld [vmem:[%s3 + $0x68] sm:$0xff]
    %v6495 = vld [vmem:[%s3 + $0x70] sm:$0xff]
    %v6496 = vld [vmem:[%s3 + $0x78] sm:$0xff]
    %v6497 = vld [vmem:[%s3 + $0xc0] sm:$0xff]
    %v6498 = vld [vmem:[%s3 + $0xc8] sm:$0xff]
    %v6499 = vld [vmem:[%s3 + $0xd0] sm:$0xff]
    %v6500 = vld [vmem:[%s3 + $0xd8] sm:$0xff]
    %v6501 = vld [vmem:[%s3 + $0xe0] sm:$0xff]
    %v6502 = vld [vmem:[%s3 + $0xe8] sm:$0xff]
    %v6503 = vld [vmem:[%s3 + $0xf0] sm:$0xff]
    %v6504 = vld [vmem:[%s3 + $0xf8] sm:$0xff]
    %v6505 = vld [vmem:[%s3 + $0x140] sm:$0xff]
    %v6506 = vld [vmem:[%s3 + $0x148] sm:$0xff]
    %v6507 = vld [vmem:[%s3 + $0x150] sm:$0xff]
    %v6508 = vld [vmem:[%s3 + $0x158] sm:$0xff]
    %v6509 = vld [vmem:[%s3 + $0x160] sm:$0xff]
    %v6510 = vld [vmem:[%s3 + $0x168] sm:$0xff]
    %v6511 = vld [vmem:[%s3 + $0x170] sm:$0xff]
    %v6512 = vld [vmem:[%s3 + $0x178] sm:$0xff]
    %v6513 = vld [vmem:[%s3 + $0x1c0] sm:$0xff]
    %v6514 = vld [vmem:[%s3 + $0x1c8] sm:$0xff]
    %v6515 = vld [vmem:[%s3 + $0x1d0] sm:$0xff]
    %v6516 = vld [vmem:[%s3 + $0x1d8] sm:$0xff]
    %v6517 = vld [vmem:[%s3 + $0x1e0] sm:$0xff]
    %v6518 = vld [vmem:[%s3 + $0x1e8] sm:$0xff]
    %v6519 = vld [vmem:[%s3 + $0x1f0] sm:$0xff]
    %v6520 = vld [vmem:[%s3 + $0x1f8] sm:$0xff]
    %v6521 = vld [vmem:[%s3 + $0x240] sm:$0xff]
    %v6522 = vld [vmem:[%s3 + $0x248] sm:$0xff]
    %v6523 = vld [vmem:[%s3 + $0x250] sm:$0xff]
    %v6524 = vld [vmem:[%s3 + $0x258] sm:$0xff]
    %v6525 = vld [vmem:[%s3 + $0x260] sm:$0xff]
    %v6526 = vld [vmem:[%s3 + $0x268] sm:$0xff]
    %v6527 = vld [vmem:[%s3 + $0x270] sm:$0xff]
    %v6528 = vld [vmem:[%s3 + $0x278] sm:$0xff]
    %v6529 = vld [vmem:[%s3 + $0x2c0] sm:$0xff]
    %v6530 = vld [vmem:[%s3 + $0x2c8] sm:$0xff]
    %v6531 = vld [vmem:[%s3 + $0x2d0] sm:$0xff]
    %v6532 = vld [vmem:[%s3 + $0x2d8] sm:$0xff]
    %v6533 = vld [vmem:[%s3 + $0x2e0] sm:$0xff]
    %v6534 = vld [vmem:[%s3 + $0x2e8] sm:$0xff]
    %v6535 = vld [vmem:[%s3 + $0x2f0] sm:$0xff]
    %v6536 = vld [vmem:[%s3 + $0x2f8] sm:$0xff]
    %v6537 = vld [vmem:[%s3 + $0x340] sm:$0xff]
    %v6538 = vld [vmem:[%s3 + $0x348] sm:$0xff]
    %v6539 = vld [vmem:[%s3 + $0x350] sm:$0xff]
    %v6540 = vld [vmem:[%s3 + $0x358] sm:$0xff]
    %v6541 = vld [vmem:[%s3 + $0x360] sm:$0xff]
    %v6542 = vld [vmem:[%s3 + $0x368] sm:$0xff]
    %v6543 = vld [vmem:[%s3 + $0x370] sm:$0xff]
    %v6544 = vld [vmem:[%s3 + $0x378] sm:$0xff]
    %v6545 = vld [vmem:[%s3 + $0x3c0] sm:$0xff]
    %v6546 = vld [vmem:[%s3 + $0x3c8] sm:$0xff]
    %v6547 = vld [vmem:[%s3 + $0x3d0] sm:$0xff]
    %v6548 = vld [vmem:[%s3 + $0x3d8] sm:$0xff]
    %v6549 = vld [vmem:[%s3 + $0x3e0] sm:$0xff]
    %v6550 = vld [vmem:[%s3 + $0x3e8] sm:$0xff]
    %v6551 = vld [vmem:[%s3 + $0x3f0] sm:$0xff]
    %v6552 = vld [vmem:[%s3 + $0x3f8] sm:$0xff]
    %v6553 = vld [vmem:[%s3 + $0x440] sm:$0xff]
    %v6554 = vld [vmem:[%s3 + $0x448] sm:$0xff]
    %v6555 = vld [vmem:[%s3 + $0x450] sm:$0xff]
    %v6556 = vld [vmem:[%s3 + $0x458] sm:$0xff]
    %v6557 = vld [vmem:[%s3 + $0x460] sm:$0xff]
    %v6558 = vld [vmem:[%s3 + $0x468] sm:$0xff]
    %v6559 = vld [vmem:[%s3 + $0x470] sm:$0xff]
    %v6560 = vld [vmem:[%s3 + $0x478] sm:$0xff]
    %v6561 = vld [vmem:[%s3 + $0x4c0] sm:$0xff]
    %v6562 = vld [vmem:[%s3 + $0x4c8] sm:$0xff]
    %v6563 = vld [vmem:[%s3 + $0x4d0] sm:$0xff]
    %v6564 = vld [vmem:[%s3 + $0x4d8] sm:$0xff]
    %v6565 = vld [vmem:[%s3 + $0x4e0] sm:$0xff]
    %v6566 = vld [vmem:[%s3 + $0x4e8] sm:$0xff]
    %v6567 = vld [vmem:[%s3 + $0x4f0] sm:$0xff]
    %v6568 = vld [vmem:[%s3 + $0x4f8] sm:$0xff]
    %v6569 = vld [vmem:[%s3 + $0x540] sm:$0xff]
    %v6570 = vld [vmem:[%s3 + $0x548] sm:$0xff]
    %v6571 = vld [vmem:[%s3 + $0x550] sm:$0xff]
    %v6572 = vld [vmem:[%s3 + $0x558] sm:$0xff]
    %v6573 = vld [vmem:[%s3 + $0x560] sm:$0xff]
    %v6574 = vld [vmem:[%s3 + $0x568] sm:$0xff]
    %v6575 = vld [vmem:[%s3 + $0x570] sm:$0xff]
    %v6576 = vld [vmem:[%s3 + $0x578] sm:$0xff]
    %v6577 = vld [vmem:[%s3 + $0x5c0] sm:$0xff]
    %v6578 = vld [vmem:[%s3 + $0x5c8] sm:$0xff]
    %v6579 = vld [vmem:[%s3 + $0x5d0] sm:$0xff]
    %v6580 = vld [vmem:[%s3 + $0x5d8] sm:$0xff]
    %v6581 = vld [vmem:[%s3 + $0x5e0] sm:$0xff]
    %v6582 = vld [vmem:[%s3 + $0x5e8] sm:$0xff]
    %v6583 = vld [vmem:[%s3 + $0x5f0] sm:$0xff]
    %v6584 = vld [vmem:[%s3 + $0x5f8] sm:$0xff]
    %v6585 = vld [vmem:[%s3 + $0x640] sm:$0xff]
    %v6586 = vld [vmem:[%s3 + $0x648] sm:$0xff]
    %v6587 = vld [vmem:[%s3 + $0x650] sm:$0xff]
    %v6588 = vld [vmem:[%s3 + $0x658] sm:$0xff]
    %v6589 = vld [vmem:[%s3 + $0x660] sm:$0xff]
    %v6590 = vld [vmem:[%s3 + $0x668] sm:$0xff]
    %v6591 = vld [vmem:[%s3 + $0x670] sm:$0xff]
    %v6592 = vld [vmem:[%s3 + $0x678] sm:$0xff]
    %v6593 = vld [vmem:[%s3 + $0x6c0] sm:$0xff]
    %v6594 = vld [vmem:[%s3 + $0x6c8] sm:$0xff]
    %v6595 = vld [vmem:[%s3 + $0x6d0] sm:$0xff]
    %v6596 = vld [vmem:[%s3 + $0x6d8] sm:$0xff]
    %v6597 = vld [vmem:[%s3 + $0x6e0] sm:$0xff]
    %v6598 = vld [vmem:[%s3 + $0x6e8] sm:$0xff]
    %v6599 = vld [vmem:[%s3 + $0x6f0] sm:$0xff]
    %v6600 = vld [vmem:[%s3 + $0x6f8] sm:$0xff]
    %v6601 = vld [vmem:[%s3 + $0x740] sm:$0xff]
    %v6602 = vld [vmem:[%s3 + $0x748] sm:$0xff]
    %v6603 = vld [vmem:[%s3 + $0x750] sm:$0xff]
    %v6604 = vld [vmem:[%s3 + $0x758] sm:$0xff]
    %v6605 = vld [vmem:[%s3 + $0x760] sm:$0xff]
    %v6606 = vld [vmem:[%s3 + $0x768] sm:$0xff]
    %v6607 = vld [vmem:[%s3 + $0x770] sm:$0xff]
    %v6608 = vld [vmem:[%s3 + $0x778] sm:$0xff]
    %v6609 = vld [vmem:[%s3 + $0x7c0] sm:$0xff]
    %v6610 = vld [vmem:[%s3 + $0x7c8] sm:$0xff]
    %v6611 = vld [vmem:[%s3 + $0x7d0] sm:$0xff]
    %v6612 = vld [vmem:[%s3 + $0x7d8] sm:$0xff]
    %v6613 = vld [vmem:[%s3 + $0x7e0] sm:$0xff]
    %v6614 = vld [vmem:[%s3 + $0x7e8] sm:$0xff]
    %v6615 = vld [vmem:[%s3 + $0x7f0] sm:$0xff]
    %v6616 = vld [vmem:[%s3 + $0x7f8] sm:$0xff]
    %s6617 = scalar_lea.vmem %s5, 257
    %v6618 = vld [vmem:[%s6617] ss:$8 sm:$0xf]
    %v6619 = vld [vmem:[%s6617] ss:$8 sm:$0xf0]
    %v6620 = vor.u32 %v6618, %v6619
    %s6621 = scalar_lea.vmem %s5, 321
    %v6622 = vld [vmem:[%s6621] ss:$8 sm:$0xf]
    %v6623 = vld [vmem:[%s6621] ss:$8 sm:$0xf0]
    %v6624 = vor.u32 %v6622, %v6623
    %v6627 = vlaneseq
    %v6628 = vshrl.u32 %v6627, 7
    %v6629 = vsub.s32 0, %v6628
    %v6630 = vrot.slane %v6620, %v6629
    %v6631 = vlaneseq
    %v6632 = vshrl.u32 %v6631, 7
    %v6633 = vsub.s32 1, %v6632
    %v6634 = vrot.slane %v6620, %v6633
    %v6635 = vlaneseq
    %v6636 = vshrl.u32 %v6635, 7
    %v6637 = vsub.s32 2, %v6636
    %v6638 = vrot.slane %v6620, %v6637
    %v6639 = vlaneseq
    %v6640 = vshrl.u32 %v6639, 7
    %v6641 = vsub.s32 3, %v6640
    %v6642 = vrot.slane %v6620, %v6641
    %v6643 = vlaneseq
    %v6644 = vshrl.u32 %v6643, 7
    %v6645 = vsub.s32 4, %v6644
    %v6646 = vrot.slane %v6620, %v6645
    %v6647 = vlaneseq
    %v6648 = vshrl.u32 %v6647, 7
    %v6649 = vsub.s32 5, %v6648
    %v6650 = vrot.slane %v6620, %v6649
    %v6651 = vlaneseq
    %v6652 = vshrl.u32 %v6651, 7
    %v6653 = vsub.s32 6, %v6652
    %v6654 = vrot.slane %v6620, %v6653
    %v6655 = vlaneseq
    %v6656 = vshrl.u32 %v6655, 7
    %v6657 = vsub.s32 7, %v6656
    %v6658 = vrot.slane %v6620, %v6657
    %v6659 = vlaneseq
    %v6660 = vshrl.u32 %v6659, 7
    %v6661 = vsub.s32 0, %v6660
    %v6662 = vrot.slane %v6624, %v6661
    %v6663 = vlaneseq
    %v6664 = vshrl.u32 %v6663, 7
    %v6665 = vsub.s32 1, %v6664
    %v6666 = vrot.slane %v6624, %v6665
    %v6667 = vlaneseq
    %v6668 = vshrl.u32 %v6667, 7
    %v6669 = vsub.s32 2, %v6668
    %v6670 = vrot.slane %v6624, %v6669
    %v6671 = vlaneseq
    %v6672 = vshrl.u32 %v6671, 7
    %v6673 = vsub.s32 3, %v6672
    %v6674 = vrot.slane %v6624, %v6673
    %v6675 = vlaneseq
    %v6676 = vshrl.u32 %v6675, 7
    %v6677 = vsub.s32 4, %v6676
    %v6678 = vrot.slane %v6624, %v6677
    %v6679 = vlaneseq
    %v6680 = vshrl.u32 %v6679, 7
    %v6681 = vsub.s32 5, %v6680
    %v6682 = vrot.slane %v6624, %v6681
    %v6683 = vlaneseq
    %v6684 = vshrl.u32 %v6683, 7
    %v6685 = vsub.s32 6, %v6684
    %v6686 = vrot.slane %v6624, %v6685
    %v6687 = vlaneseq
    %v6688 = vshrl.u32 %v6687, 7
    %v6689 = vsub.s32 7, %v6688
    %v6690 = vrot.slane %v6624, %v6689
    %v6835 = vunpack.c.l.b16 %v6489
    %v6836 = vunpack.c.h.b16 %v6489
    %v6837 = vunpack.c.l.b16 %v6490
    %v6838 = vunpack.c.h.b16 %v6490
    %v6839 = vunpack.c.l.b16 %v6491
    %v6840 = vunpack.c.h.b16 %v6491
    %v6841 = vunpack.c.l.b16 %v6492
    %v6842 = vunpack.c.h.b16 %v6492
    %v6843 = vunpack.c.l.b16 %v6493
    %v6844 = vunpack.c.h.b16 %v6493
    %v6845 = vunpack.c.l.b16 %v6494
    %v6846 = vunpack.c.h.b16 %v6494
    %v6847 = vunpack.c.l.b16 %v6495
    %v6848 = vunpack.c.h.b16 %v6495
    %v6849 = vunpack.c.l.b16 %v6496
    %v6850 = vunpack.c.h.b16 %v6496
    %v6851 = vunpack.c.l.b16 %v6497
    %v6852 = vunpack.c.h.b16 %v6497
    %v6853 = vunpack.c.l.b16 %v6498
    %v6854 = vunpack.c.h.b16 %v6498
    %v6855 = vunpack.c.l.b16 %v6499
    %v6856 = vunpack.c.h.b16 %v6499
    %v6857 = vunpack.c.l.b16 %v6500
    %v6858 = vunpack.c.h.b16 %v6500
    %v6859 = vunpack.c.l.b16 %v6501
    %v6860 = vunpack.c.h.b16 %v6501
    %v6861 = vunpack.c.l.b16 %v6502
    %v6862 = vunpack.c.h.b16 %v6502
    %v6863 = vunpack.c.l.b16 %v6503
    %v6864 = vunpack.c.h.b16 %v6503
    %v6865 = vunpack.c.l.b16 %v6504
    %v6866 = vunpack.c.h.b16 %v6504
    %v6867 = vunpack.c.l.b16 %v6505
    %v6868 = vunpack.c.h.b16 %v6505
    %v6869 = vunpack.c.l.b16 %v6506
    %v6870 = vunpack.c.h.b16 %v6506
    %v6871 = vunpack.c.l.b16 %v6507
    %v6872 = vunpack.c.h.b16 %v6507
    %v6873 = vunpack.c.l.b16 %v6508
    %v6874 = vunpack.c.h.b16 %v6508
    %v6875 = vunpack.c.l.b16 %v6509
    %v6876 = vunpack.c.h.b16 %v6509
    %v6877 = vunpack.c.l.b16 %v6510
    %v6878 = vunpack.c.h.b16 %v6510
    %v6879 = vunpack.c.l.b16 %v6511
    %v6880 = vunpack.c.h.b16 %v6511
    %v6881 = vunpack.c.l.b16 %v6512
    %v6882 = vunpack.c.h.b16 %v6512
    %v6883 = vunpack.c.l.b16 %v6513
    %v6884 = vunpack.c.h.b16 %v6513
    %v6885 = vunpack.c.l.b16 %v6514
    %v6886 = vunpack.c.h.b16 %v6514
    %v6887 = vunpack.c.l.b16 %v6515
    %v6888 = vunpack.c.h.b16 %v6515
    %v6889 = vunpack.c.l.b16 %v6516
    %v6890 = vunpack.c.h.b16 %v6516
    %v6891 = vunpack.c.l.b16 %v6517
    %v6892 = vunpack.c.h.b16 %v6517
    %v6893 = vunpack.c.l.b16 %v6518
    %v6894 = vunpack.c.h.b16 %v6518
    %v6895 = vunpack.c.l.b16 %v6519
    %v6896 = vunpack.c.h.b16 %v6519
    %v6897 = vunpack.c.l.b16 %v6520
    %v6898 = vunpack.c.h.b16 %v6520
    %v6899 = vunpack.c.l.b16 %v6521
    %v6900 = vunpack.c.h.b16 %v6521
    %v6901 = vunpack.c.l.b16 %v6522
    %v6902 = vunpack.c.h.b16 %v6522
    %v6903 = vunpack.c.l.b16 %v6523
    %v6904 = vunpack.c.h.b16 %v6523
    %v6905 = vunpack.c.l.b16 %v6524
    %v6906 = vunpack.c.h.b16 %v6524
    %v6907 = vunpack.c.l.b16 %v6525
    %v6908 = vunpack.c.h.b16 %v6525
    %v6909 = vunpack.c.l.b16 %v6526
    %v6910 = vunpack.c.h.b16 %v6526
    %v6911 = vunpack.c.l.b16 %v6527
    %v6912 = vunpack.c.h.b16 %v6527
    %v6913 = vunpack.c.l.b16 %v6528
    %v6914 = vunpack.c.h.b16 %v6528
    %v6915 = vunpack.c.l.b16 %v6529
    %v6916 = vunpack.c.h.b16 %v6529
    %v6917 = vunpack.c.l.b16 %v6530
    %v6918 = vunpack.c.h.b16 %v6530
    %v6919 = vunpack.c.l.b16 %v6531
    %v6920 = vunpack.c.h.b16 %v6531
    %v6921 = vunpack.c.l.b16 %v6532
    %v6922 = vunpack.c.h.b16 %v6532
    %v6923 = vunpack.c.l.b16 %v6533
    %v6924 = vunpack.c.h.b16 %v6533
    %v6925 = vunpack.c.l.b16 %v6534
    %v6926 = vunpack.c.h.b16 %v6534
    %v6927 = vunpack.c.l.b16 %v6535
    %v6928 = vunpack.c.h.b16 %v6535
    %v6929 = vunpack.c.l.b16 %v6536
    %v6930 = vunpack.c.h.b16 %v6536
    %v6931 = vunpack.c.l.b16 %v6537
    %v6932 = vunpack.c.h.b16 %v6537
    %v6933 = vunpack.c.l.b16 %v6538
    %v6934 = vunpack.c.h.b16 %v6538
    %v6935 = vunpack.c.l.b16 %v6539
    %v6936 = vunpack.c.h.b16 %v6539
    %v6937 = vunpack.c.l.b16 %v6540
    %v6938 = vunpack.c.h.b16 %v6540
    %v6939 = vunpack.c.l.b16 %v6541
    %v6940 = vunpack.c.h.b16 %v6541
    %v6941 = vunpack.c.l.b16 %v6542
    %v6942 = vunpack.c.h.b16 %v6542
    %v6943 = vunpack.c.l.b16 %v6543
    %v6944 = vunpack.c.h.b16 %v6543
    %v6945 = vunpack.c.l.b16 %v6544
    %v6946 = vunpack.c.h.b16 %v6544
    %v6947 = vunpack.c.l.b16 %v6545
    %v6948 = vunpack.c.h.b16 %v6545
    %v6949 = vunpack.c.l.b16 %v6546
    %v6950 = vunpack.c.h.b16 %v6546
    %v6951 = vunpack.c.l.b16 %v6547
    %v6952 = vunpack.c.h.b16 %v6547
    %v6953 = vunpack.c.l.b16 %v6548
    %v6954 = vunpack.c.h.b16 %v6548
    %v6955 = vunpack.c.l.b16 %v6549
    %v6956 = vunpack.c.h.b16 %v6549
    %v6957 = vunpack.c.l.b16 %v6550
    %v6958 = vunpack.c.h.b16 %v6550
    %v6959 = vunpack.c.l.b16 %v6551
    %v6960 = vunpack.c.h.b16 %v6551
    %v6961 = vunpack.c.l.b16 %v6552
    %v6962 = vunpack.c.h.b16 %v6552
    %v6963 = vunpack.c.l.b16 %v6553
    %v6964 = vunpack.c.h.b16 %v6553
    %v6965 = vunpack.c.l.b16 %v6554
    %v6966 = vunpack.c.h.b16 %v6554
    %v6967 = vunpack.c.l.b16 %v6555
    %v6968 = vunpack.c.h.b16 %v6555
    %v6969 = vunpack.c.l.b16 %v6556
    %v6970 = vunpack.c.h.b16 %v6556
    %v6971 = vunpack.c.l.b16 %v6557
    %v6972 = vunpack.c.h.b16 %v6557
    %v6973 = vunpack.c.l.b16 %v6558
    %v6974 = vunpack.c.h.b16 %v6558
    %v6975 = vunpack.c.l.b16 %v6559
    %v6976 = vunpack.c.h.b16 %v6559
    %v6977 = vunpack.c.l.b16 %v6560
    %v6978 = vunpack.c.h.b16 %v6560
    %v6979 = vunpack.c.l.b16 %v6561
    %v6980 = vunpack.c.h.b16 %v6561
    %v6981 = vunpack.c.l.b16 %v6562
    %v6982 = vunpack.c.h.b16 %v6562
    %v6983 = vunpack.c.l.b16 %v6563
    %v6984 = vunpack.c.h.b16 %v6563
    %v6985 = vunpack.c.l.b16 %v6564
    %v6986 = vunpack.c.h.b16 %v6564
    %v6987 = vunpack.c.l.b16 %v6565
    %v6988 = vunpack.c.h.b16 %v6565
    %v6989 = vunpack.c.l.b16 %v6566
    %v6990 = vunpack.c.h.b16 %v6566
    %v6991 = vunpack.c.l.b16 %v6567
    %v6992 = vunpack.c.h.b16 %v6567
    %v6993 = vunpack.c.l.b16 %v6568
    %v6994 = vunpack.c.h.b16 %v6568
    %v6995 = vunpack.c.l.b16 %v6569
    %v6996 = vunpack.c.h.b16 %v6569
    %v6997 = vunpack.c.l.b16 %v6570
    %v6998 = vunpack.c.h.b16 %v6570
    %v6999 = vunpack.c.l.b16 %v6571
    %v7000 = vunpack.c.h.b16 %v6571
    %v7001 = vunpack.c.l.b16 %v6572
    %v7002 = vunpack.c.h.b16 %v6572
    %v7003 = vunpack.c.l.b16 %v6573
    %v7004 = vunpack.c.h.b16 %v6573
    %v7005 = vunpack.c.l.b16 %v6574
    %v7006 = vunpack.c.h.b16 %v6574
    %v7007 = vunpack.c.l.b16 %v6575
    %v7008 = vunpack.c.h.b16 %v6575
    %v7009 = vunpack.c.l.b16 %v6576
    %v7010 = vunpack.c.h.b16 %v6576
    %v7011 = vunpack.c.l.b16 %v6577
    %v7012 = vunpack.c.h.b16 %v6577
    %v7013 = vunpack.c.l.b16 %v6578
    %v7014 = vunpack.c.h.b16 %v6578
    %v7015 = vunpack.c.l.b16 %v6579
    %v7016 = vunpack.c.h.b16 %v6579
    %v7017 = vunpack.c.l.b16 %v6580
    %v7018 = vunpack.c.h.b16 %v6580
    %v7019 = vunpack.c.l.b16 %v6581
    %v7020 = vunpack.c.h.b16 %v6581
    %v7021 = vunpack.c.l.b16 %v6582
    %v7022 = vunpack.c.h.b16 %v6582
    %v7023 = vunpack.c.l.b16 %v6583
    %v7024 = vunpack.c.h.b16 %v6583
    %v7025 = vunpack.c.l.b16 %v6584
    %v7026 = vunpack.c.h.b16 %v6584
    %v7027 = vunpack.c.l.b16 %v6585
    %v7028 = vunpack.c.h.b16 %v6585
    %v7029 = vunpack.c.l.b16 %v6586
    %v7030 = vunpack.c.h.b16 %v6586
    %v7031 = vunpack.c.l.b16 %v6587
    %v7032 = vunpack.c.h.b16 %v6587
    %v7033 = vunpack.c.l.b16 %v6588
    %v7034 = vunpack.c.h.b16 %v6588
    %v7035 = vunpack.c.l.b16 %v6589
    %v7036 = vunpack.c.h.b16 %v6589
    %v7037 = vunpack.c.l.b16 %v6590
    %v7038 = vunpack.c.h.b16 %v6590
    %v7039 = vunpack.c.l.b16 %v6591
    %v7040 = vunpack.c.h.b16 %v6591
    %v7041 = vunpack.c.l.b16 %v6592
    %v7042 = vunpack.c.h.b16 %v6592
    %v7043 = vunpack.c.l.b16 %v6593
    %v7044 = vunpack.c.h.b16 %v6593
    %v7045 = vunpack.c.l.b16 %v6594
    %v7046 = vunpack.c.h.b16 %v6594
    %v7047 = vunpack.c.l.b16 %v6595
    %v7048 = vunpack.c.h.b16 %v6595
    %v7049 = vunpack.c.l.b16 %v6596
    %v7050 = vunpack.c.h.b16 %v6596
    %v7051 = vunpack.c.l.b16 %v6597
    %v7052 = vunpack.c.h.b16 %v6597
    %v7053 = vunpack.c.l.b16 %v6598
    %v7054 = vunpack.c.h.b16 %v6598
    %v7055 = vunpack.c.l.b16 %v6599
    %v7056 = vunpack.c.h.b16 %v6599
    %v7057 = vunpack.c.l.b16 %v6600
    %v7058 = vunpack.c.h.b16 %v6600
    %v7059 = vunpack.c.l.b16 %v6601
    %v7060 = vunpack.c.h.b16 %v6601
    %v7061 = vunpack.c.l.b16 %v6602
    %v7062 = vunpack.c.h.b16 %v6602
    %v7063 = vunpack.c.l.b16 %v6603
    %v7064 = vunpack.c.h.b16 %v6603
    %v7065 = vunpack.c.l.b16 %v6604
    %v7066 = vunpack.c.h.b16 %v6604
    %v7067 = vunpack.c.l.b16 %v6605
    %v7068 = vunpack.c.h.b16 %v6605
    %v7069 = vunpack.c.l.b16 %v6606
    %v7070 = vunpack.c.h.b16 %v6606
    %v7071 = vunpack.c.l.b16 %v6607
    %v7072 = vunpack.c.h.b16 %v6607
    %v7073 = vunpack.c.l.b16 %v6608
    %v7074 = vunpack.c.h.b16 %v6608
    %v7075 = vunpack.c.l.b16 %v6609
    %v7076 = vunpack.c.h.b16 %v6609
    %v7077 = vunpack.c.l.b16 %v6610
    %v7078 = vunpack.c.h.b16 %v6610
    %v7079 = vunpack.c.l.b16 %v6611
    %v7080 = vunpack.c.h.b16 %v6611
    %v7081 = vunpack.c.l.b16 %v6612
    %v7082 = vunpack.c.h.b16 %v6612
    %v7083 = vunpack.c.l.b16 %v6613
    %v7084 = vunpack.c.h.b16 %v6613
    %v7085 = vunpack.c.l.b16 %v6614
    %v7086 = vunpack.c.h.b16 %v6614
    %v7087 = vunpack.c.l.b16 %v6615
    %v7088 = vunpack.c.h.b16 %v6615
    %v7089 = vunpack.c.l.b16 %v6616
    %v7090 = vunpack.c.h.b16 %v6616
    %v7091 = vpack.c.b16 %v6851, %v6835
    %v7092 = vpack.c.b16 %v6852, %v6836
    %v7093 = vpack.c.b16 %v6853, %v6837
    %v7094 = vpack.c.b16 %v6854, %v6838
    %v7095 = vpack.c.b16 %v6855, %v6839
    %v7096 = vpack.c.b16 %v6856, %v6840
    %v7097 = vpack.c.b16 %v6857, %v6841
    %v7098 = vpack.c.b16 %v6858, %v6842
    %v7099 = vpack.c.b16 %v6859, %v6843
    %v7100 = vpack.c.b16 %v6860, %v6844
    %v7101 = vpack.c.b16 %v6861, %v6845
    %v7102 = vpack.c.b16 %v6862, %v6846
    %v7103 = vpack.c.b16 %v6863, %v6847
    %v7104 = vpack.c.b16 %v6864, %v6848
    %v7105 = vpack.c.b16 %v6865, %v6849
    %v7106 = vpack.c.b16 %v6866, %v6850
    %v7107 = vpack.c.b16 %v6883, %v6867
    %v7108 = vpack.c.b16 %v6884, %v6868
    %v7109 = vpack.c.b16 %v6885, %v6869
    %v7110 = vpack.c.b16 %v6886, %v6870
    %v7111 = vpack.c.b16 %v6887, %v6871
    %v7112 = vpack.c.b16 %v6888, %v6872
    %v7113 = vpack.c.b16 %v6889, %v6873
    %v7114 = vpack.c.b16 %v6890, %v6874
    %v7115 = vpack.c.b16 %v6891, %v6875
    %v7116 = vpack.c.b16 %v6892, %v6876
    %v7117 = vpack.c.b16 %v6893, %v6877
    %v7118 = vpack.c.b16 %v6894, %v6878
    %v7119 = vpack.c.b16 %v6895, %v6879
    %v7120 = vpack.c.b16 %v6896, %v6880
    %v7121 = vpack.c.b16 %v6897, %v6881
    %v7122 = vpack.c.b16 %v6898, %v6882
    %v7123 = vpack.c.b16 %v6915, %v6899
    %v7124 = vpack.c.b16 %v6916, %v6900
    %v7125 = vpack.c.b16 %v6917, %v6901
    %v7126 = vpack.c.b16 %v6918, %v6902
    %v7127 = vpack.c.b16 %v6919, %v6903
    %v7128 = vpack.c.b16 %v6920, %v6904
    %v7129 = vpack.c.b16 %v6921, %v6905
    %v7130 = vpack.c.b16 %v6922, %v6906
    %v7131 = vpack.c.b16 %v6923, %v6907
    %v7132 = vpack.c.b16 %v6924, %v6908
    %v7133 = vpack.c.b16 %v6925, %v6909
    %v7134 = vpack.c.b16 %v6926, %v6910
    %v7135 = vpack.c.b16 %v6927, %v6911
    %v7136 = vpack.c.b16 %v6928, %v6912
    %v7137 = vpack.c.b16 %v6929, %v6913
    %v7138 = vpack.c.b16 %v6930, %v6914
    %v7139 = vpack.c.b16 %v6947, %v6931
    %v7140 = vpack.c.b16 %v6948, %v6932
    %v7141 = vpack.c.b16 %v6949, %v6933
    %v7142 = vpack.c.b16 %v6950, %v6934
    %v7143 = vpack.c.b16 %v6951, %v6935
    %v7144 = vpack.c.b16 %v6952, %v6936
    %v7145 = vpack.c.b16 %v6953, %v6937
    %v7146 = vpack.c.b16 %v6954, %v6938
    %v7147 = vpack.c.b16 %v6955, %v6939
    %v7148 = vpack.c.b16 %v6956, %v6940
    %v7149 = vpack.c.b16 %v6957, %v6941
    %v7150 = vpack.c.b16 %v6958, %v6942
    %v7151 = vpack.c.b16 %v6959, %v6943
    %v7152 = vpack.c.b16 %v6960, %v6944
    %v7153 = vpack.c.b16 %v6961, %v6945
    %v7154 = vpack.c.b16 %v6962, %v6946
    %v7155 = vpack.c.b16 %v6979, %v6963
    %v7156 = vpack.c.b16 %v6980, %v6964
    %v7157 = vpack.c.b16 %v6981, %v6965
    %v7158 = vpack.c.b16 %v6982, %v6966
    %v7159 = vpack.c.b16 %v6983, %v6967
    %v7160 = vpack.c.b16 %v6984, %v6968
    %v7161 = vpack.c.b16 %v6985, %v6969
    %v7162 = vpack.c.b16 %v6986, %v6970
    %v7163 = vpack.c.b16 %v6987, %v6971
    %v7164 = vpack.c.b16 %v6988, %v6972
    %v7165 = vpack.c.b16 %v6989, %v6973
    %v7166 = vpack.c.b16 %v6990, %v6974
    %v7167 = vpack.c.b16 %v6991, %v6975
    %v7168 = vpack.c.b16 %v6992, %v6976
    %v7169 = vpack.c.b16 %v6993, %v6977
    %v7170 = vpack.c.b16 %v6994, %v6978
    %v7171 = vpack.c.b16 %v7011, %v6995
    %v7172 = vpack.c.b16 %v7012, %v6996
    %v7173 = vpack.c.b16 %v7013, %v6997
    %v7174 = vpack.c.b16 %v7014, %v6998
    %v7175 = vpack.c.b16 %v7015, %v6999
    %v7176 = vpack.c.b16 %v7016, %v7000
    %v7177 = vpack.c.b16 %v7017, %v7001
    %v7178 = vpack.c.b16 %v7018, %v7002
    %v7179 = vpack.c.b16 %v7019, %v7003
    %v7180 = vpack.c.b16 %v7020, %v7004
    %v7181 = vpack.c.b16 %v7021, %v7005
    %v7182 = vpack.c.b16 %v7022, %v7006
    %v7183 = vpack.c.b16 %v7023, %v7007
    %v7184 = vpack.c.b16 %v7024, %v7008
    %v7185 = vpack.c.b16 %v7025, %v7009
    %v7186 = vpack.c.b16 %v7026, %v7010
    %v7187 = vpack.c.b16 %v7043, %v7027
    %v7188 = vpack.c.b16 %v7044, %v7028
    %v7189 = vpack.c.b16 %v7045, %v7029
    %v7190 = vpack.c.b16 %v7046, %v7030
    %v7191 = vpack.c.b16 %v7047, %v7031
    %v7192 = vpack.c.b16 %v7048, %v7032
    %v7193 = vpack.c.b16 %v7049, %v7033
    %v7194 = vpack.c.b16 %v7050, %v7034
    %v7195 = vpack.c.b16 %v7051, %v7035
    %v7196 = vpack.c.b16 %v7052, %v7036
    %v7197 = vpack.c.b16 %v7053, %v7037
    %v7198 = vpack.c.b16 %v7054, %v7038
    %v7199 = vpack.c.b16 %v7055, %v7039
    %v7200 = vpack.c.b16 %v7056, %v7040
    %v7201 = vpack.c.b16 %v7057, %v7041
    %v7202 = vpack.c.b16 %v7058, %v7042
    %v7203 = vpack.c.b16 %v7075, %v7059
    %v7204 = vpack.c.b16 %v7076, %v7060
    %v7205 = vpack.c.b16 %v7077, %v7061
    %v7206 = vpack.c.b16 %v7078, %v7062
    %v7207 = vpack.c.b16 %v7079, %v7063
    %v7208 = vpack.c.b16 %v7080, %v7064
    %v7209 = vpack.c.b16 %v7081, %v7065
    %v7210 = vpack.c.b16 %v7082, %v7066
    %v7211 = vpack.c.b16 %v7083, %v7067
    %v7212 = vpack.c.b16 %v7084, %v7068
    %v7213 = vpack.c.b16 %v7085, %v7069
    %v7214 = vpack.c.b16 %v7086, %v7070
    %v7215 = vpack.c.b16 %v7087, %v7071
    %v7216 = vpack.c.b16 %v7088, %v7072
    %v7217 = vpack.c.b16 %v7089, %v7073
    %v7218 = vpack.c.b16 %v7090, %v7074
    %7347 = vmatprep.subr.bf16.mxu0 %v7092
    %7348 = vmatpush1.bf16.msra.mxu0 %v7091
    %7349 = vmatprep.subr.bf16.mxu0 %v7108
    %7350 = vmatpush1.bf16.msra.mxu0 %v7107
    %7351 = vmatprep.subr.bf16.mxu0 %v7124
    %7352 = vmatpush1.bf16.msra.mxu0 %v7123
    %7353 = vmatprep.subr.bf16.mxu0 %v7140
    %7354 = vmatpush1.bf16.msra.mxu0 %v7139
    %7355 = vmatprep.subr.bf16.mxu0 %v7156
    %7356 = vmatpush1.bf16.msra.mxu0 %v7155
    %7357 = vmatprep.subr.bf16.mxu0 %v7172
    %7358 = vmatpush1.bf16.msra.mxu0 %v7171
    %7359 = vmatprep.subr.bf16.mxu0 %v7188
    %7360 = vmatpush1.bf16.msra.mxu0 %v7187
    %7361 = vmatprep.subr.bf16.mxu0 %v7204
    %7362 = vmatpush1.bf16.msra.mxu0 %v7203
    %7363 = vmatprep.subr.bf16.mxu0 0
    %7364 = vmatpush1.bf16.msra.mxu0 0
    %7365 = vmatprep.subr.bf16.mxu0 0
    %7366 = vmatpush1.bf16.msra.mxu0 0
    %7367 = vmatprep.subr.bf16.mxu0 0
    %7368 = vmatpush1.bf16.msra.mxu0 0
    %7369 = vmatprep.subr.bf16.mxu0 0
    %7370 = vmatpush1.bf16.msra.mxu0 0
    %7371 = vmatprep.subr.bf16.mxu0 0
    %7372 = vmatpush1.bf16.msra.mxu0 0
    %7373 = vmatprep.subr.bf16.mxu0 0
    %7374 = vmatpush1.bf16.msra.mxu0 0
    %7375 = vmatprep.subr.bf16.mxu0 0
    %7376 = vmatpush1.bf16.msra.mxu0 0
    %7377 = vmatprep.subr.bf16.mxu0 0
    %7378 = vmatpush1.bf16.msra.mxu0 0
    %7379 = vmatprep.mubr.bf16.mxu0 0
    %7380 = vmatmul.mubr.bf16.gmra.mrb[0].mxu0 %v6488
    %v7381 = vpop.f32.mrb[0].mxu0
    %v7382 = vadd.f32 %v6630, %v7381
    %v7383 = vpop.f32.mrb[0].mxu0
    %v7384 = vadd.f32 %v6634, %v7383
    %v7385 = vpop.f32.mrb[0].mxu0
    %v7386 = vadd.f32 %v6630, %v7385
    %v7387 = vpop.f32.mrb[0].mxu0
    %v7388 = vadd.f32 %v6634, %v7387
    %7389 = vdwg.mxu0
    %7390 = vmatprep.subr.bf16.mxu0 %v7094
    %7391 = vmatpush1.bf16.msra.mxu0 %v7093
    %7392 = vmatprep.subr.bf16.mxu0 %v7110
    %7393 = vmatpush1.bf16.msra.mxu0 %v7109
    %7394 = vmatprep.subr.bf16.mxu0 %v7126
    %7395 = vmatpush1.bf16.msra.mxu0 %v7125
    %7396 = vmatprep.subr.bf16.mxu0 %v7142
    %7397 = vmatpush1.bf16.msra.mxu0 %v7141
    %7398 = vmatprep.subr.bf16.mxu0 %v7158
    %7399 = vmatpush1.bf16.msra.mxu0 %v7157
    %7400 = vmatprep.subr.bf16.mxu0 %v7174
    %7401 = vmatpush1.bf16.msra.mxu0 %v7173
    %7402 = vmatprep.subr.bf16.mxu0 %v7190
    %7403 = vmatpush1.bf16.msra.mxu0 %v7189
    %7404 = vmatprep.subr.bf16.mxu0 %v7206
    %7405 = vmatpush1.bf16.msra.mxu0 %v7205
    %7406 = vmatprep.subr.bf16.mxu0 0
    %7407 = vmatpush1.bf16.msra.mxu0 0
    %7408 = vmatprep.subr.bf16.mxu0 0
    %7409 = vmatpush1.bf16.msra.mxu0 0
    %7410 = vmatprep.subr.bf16.mxu0 0
    %7411 = vmatpush1.bf16.msra.mxu0 0
    %7412 = vmatprep.subr.bf16.mxu0 0
    %7413 = vmatpush1.bf16.msra.mxu0 0
    %7414 = vmatprep.subr.bf16.mxu0 0
    %7415 = vmatpush1.bf16.msra.mxu0 0
    %7416 = vmatprep.subr.bf16.mxu0 0
    %7417 = vmatpush1.bf16.msra.mxu0 0
    %7418 = vmatprep.subr.bf16.mxu0 0
    %7419 = vmatpush1.bf16.msra.mxu0 0
    %7420 = vmatprep.subr.bf16.mxu0 0
    %7421 = vmatpush1.bf16.msra.mxu0 0
    %7422 = vmatprep.mubr.bf16.mxu0 0
    %7423 = vmatmul.mubr.bf16.gmra.mrb[0].mxu0 %v6488
    %v7424 = vpop.f32.mrb[0].mxu0
    %v7425 = vadd.f32 %v6638, %v7424
    %v7426 = vpop.f32.mrb[0].mxu0
    %v7427 = vadd.f32 %v6642, %v7426
    %v7428 = vpop.f32.mrb[0].mxu0
    %v7429 = vadd.f32 %v6638, %v7428
    %v7430 = vpop.f32.mrb[0].mxu0
    %v7431 = vadd.f32 %v6642, %v7430
    %7432 = vdwg.mxu0
    %7433 = vmatprep.subr.bf16.mxu0 %v7096
    %7434 = vmatpush1.bf16.msra.mxu0 %v7095
    %7435 = vmatprep.subr.bf16.mxu0 %v7112
    %7436 = vmatpush1.bf16.msra.mxu0 %v7111
    %7437 = vmatprep.subr.bf16.mxu0 %v7128
    %7438 = vmatpush1.bf16.msra.mxu0 %v7127
    %7439 = vmatprep.subr.bf16.mxu0 %v7144
    %7440 = vmatpush1.bf16.msra.mxu0 %v7143
    %7441 = vmatprep.subr.bf16.mxu0 %v7160
    %7442 = vmatpush1.bf16.msra.mxu0 %v7159
    %7443 = vmatprep.subr.bf16.mxu0 %v7176
    %7444 = vmatpush1.bf16.msra.mxu0 %v7175
    %7445 = vmatprep.subr.bf16.mxu0 %v7192
    %7446 = vmatpush1.bf16.msra.mxu0 %v7191
    %7447 = vmatprep.subr.bf16.mxu0 %v7208
    %7448 = vmatpush1.bf16.msra.mxu0 %v7207
    %7449 = vmatprep.subr.bf16.mxu0 0
    %7450 = vmatpush1.bf16.msra.mxu0 0
    %7451 = vmatprep.subr.bf16.mxu0 0
    %7452 = vmatpush1.bf16.msra.mxu0 0
    %7453 = vmatprep.subr.bf16.mxu0 0
    %7454 = vmatpush1.bf16.msra.mxu0 0
    %7455 = vmatprep.subr.bf16.mxu0 0
    %7456 = vmatpush1.bf16.msra.mxu0 0
    %7457 = vmatprep.subr.bf16.mxu0 0
    %7458 = vmatpush1.bf16.msra.mxu0 0
    %7459 = vmatprep.subr.bf16.mxu0 0
    %7460 = vmatpush1.bf16.msra.mxu0 0
    %7461 = vmatprep.subr.bf16.mxu0 0
    %7462 = vmatpush1.bf16.msra.mxu0 0
    %7463 = vmatprep.subr.bf16.mxu0 0
    %7464 = vmatpush1.bf16.msra.mxu0 0
    %7465 = vmatprep.mubr.bf16.mxu0 0
    %7466 = vmatmul.mubr.bf16.gmra.mrb[0].mxu0 %v6488
    %v7467 = vpop.f32.mrb[0].mxu0
    %v7468 = vadd.f32 %v6646, %v7467
    %v7469 = vpop.f32.mrb[0].mxu0
    %v7470 = vadd.f32 %v6650, %v7469
    %v7471 = vpop.f32.mrb[0].mxu0
    %v7472 = vadd.f32 %v6646, %v7471
    %v7473 = vpop.f32.mrb[0].mxu0
    %v7474 = vadd.f32 %v6650, %v7473
    %7475 = vdwg.mxu0
    %7476 = vmatprep.subr.bf16.mxu0 %v7098
    %7477 = vmatpush1.bf16.msra.mxu0 %v7097
    %7478 = vmatprep.subr.bf16.mxu0 %v7114
    %7479 = vmatpush1.bf16.msra.mxu0 %v7113
    %7480 = vmatprep.subr.bf16.mxu0 %v7130
    %7481 = vmatpush1.bf16.msra.mxu0 %v7129
    %7482 = vmatprep.subr.bf16.mxu0 %v7146
    %7483 = vmatpush1.bf16.msra.mxu0 %v7145
    %7484 = vmatprep.subr.bf16.mxu0 %v7162
    %7485 = vmatpush1.bf16.msra.mxu0 %v7161
    %7486 = vmatprep.subr.bf16.mxu0 %v7178
    %7487 = vmatpush1.bf16.msra.mxu0 %v7177
    %7488 = vmatprep.subr.bf16.mxu0 %v7194
    %7489 = vmatpush1.bf16.msra.mxu0 %v7193
    %7490 = vmatprep.subr.bf16.mxu0 %v7210
    %7491 = vmatpush1.bf16.msra.mxu0 %v7209
    %7492 = vmatprep.subr.bf16.mxu0 0
    %7493 = vmatpush1.bf16.msra.mxu0 0
    %7494 = vmatprep.subr.bf16.mxu0 0
    %7495 = vmatpush1.bf16.msra.mxu0 0
    %7496 = vmatprep.subr.bf16.mxu0 0
    %7497 = vmatpush1.bf16.msra.mxu0 0
    %7498 = vmatprep.subr.bf16.mxu0 0
    %7499 = vmatpush1.bf16.msra.mxu0 0
    %7500 = vmatprep.subr.bf16.mxu0 0
    %7501 = vmatpush1.bf16.msra.mxu0 0
    %7502 = vmatprep.subr.bf16.mxu0 0
    %7503 = vmatpush1.bf16.msra.mxu0 0
    %7504 = vmatprep.subr.bf16.mxu0 0
    %7505 = vmatpush1.bf16.msra.mxu0 0
    %7506 = vmatprep.subr.bf16.mxu0 0
    %7507 = vmatpush1.bf16.msra.mxu0 0
    %7508 = vmatprep.mubr.bf16.mxu0 0
    %7509 = vmatmul.mubr.bf16.gmra.mrb[0].mxu0 %v6488
    %v7510 = vpop.f32.mrb[0].mxu0
    %v7511 = vadd.f32 %v6654, %v7510
    %v7512 = vpop.f32.mrb[0].mxu0
    %v7513 = vadd.f32 %v6658, %v7512
    %v7514 = vpop.f32.mrb[0].mxu0
    %v7515 = vadd.f32 %v6654, %v7514
    %v7516 = vpop.f32.mrb[0].mxu0
    %v7517 = vadd.f32 %v6658, %v7516
    %7518 = vdwg.mxu0
    %7519 = vmatprep.subr.bf16.mxu0 %v7100
    %7520 = vmatpush1.bf16.msra.mxu0 %v7099
    %7521 = vmatprep.subr.bf16.mxu0 %v7116
    %7522 = vmatpush1.bf16.msra.mxu0 %v7115
    %7523 = vmatprep.subr.bf16.mxu0 %v7132
    %7524 = vmatpush1.bf16.msra.mxu0 %v7131
    %7525 = vmatprep.subr.bf16.mxu0 %v7148
    %7526 = vmatpush1.bf16.msra.mxu0 %v7147
    %7527 = vmatprep.subr.bf16.mxu0 %v7164
    %7528 = vmatpush1.bf16.msra.mxu0 %v7163
    %7529 = vmatprep.subr.bf16.mxu0 %v7180
    %7530 = vmatpush1.bf16.msra.mxu0 %v7179
    %7531 = vmatprep.subr.bf16.mxu0 %v7196
    %7532 = vmatpush1.bf16.msra.mxu0 %v7195
    %7533 = vmatprep.subr.bf16.mxu0 %v7212
    %7534 = vmatpush1.bf16.msra.mxu0 %v7211
    %7535 = vmatprep.subr.bf16.mxu0 0
    %7536 = vmatpush1.bf16.msra.mxu0 0
    %7537 = vmatprep.subr.bf16.mxu0 0
    %7538 = vmatpush1.bf16.msra.mxu0 0
    %7539 = vmatprep.subr.bf16.mxu0 0
    %7540 = vmatpush1.bf16.msra.mxu0 0
    %7541 = vmatprep.subr.bf16.mxu0 0
    %7542 = vmatpush1.bf16.msra.mxu0 0
    %7543 = vmatprep.subr.bf16.mxu0 0
    %7544 = vmatpush1.bf16.msra.mxu0 0
    %7545 = vmatprep.subr.bf16.mxu0 0
    %7546 = vmatpush1.bf16.msra.mxu0 0
    %7547 = vmatprep.subr.bf16.mxu0 0
    %7548 = vmatpush1.bf16.msra.mxu0 0
    %7549 = vmatprep.subr.bf16.mxu0 0
    %7550 = vmatpush1.bf16.msra.mxu0 0
    %7551 = vmatprep.mubr.bf16.mxu0 0
    %7552 = vmatmul.mubr.bf16.gmra.mrb[0].mxu0 %v6488
    %v7553 = vpop.f32.mrb[0].mxu0
    %v7554 = vadd.f32 %v6662, %v7553
    %v7555 = vpop.f32.mrb[0].mxu0
    %v7556 = vadd.f32 %v6666, %v7555
    %v7557 = vpop.f32.mrb[0].mxu0
    %v7558 = vadd.f32 %v6662, %v7557
    %v7559 = vpop.f32.mrb[0].mxu0
    %v7560 = vadd.f32 %v6666, %v7559
    %7561 = vdwg.mxu0
    %7562 = vmatprep.subr.bf16.mxu0 %v7102
    %7563 = vmatpush1.bf16.msra.mxu0 %v7101
    %7564 = vmatprep.subr.bf16.mxu0 %v7118
    %7565 = vmatpush1.bf16.msra.mxu0 %v7117
    %7566 = vmatprep.subr.bf16.mxu0 %v7134
    %7567 = vmatpush1.bf16.msra.mxu0 %v7133
    %7568 = vmatprep.subr.bf16.mxu0 %v7150
    %7569 = vmatpush1.bf16.msra.mxu0 %v7149
    %7570 = vmatprep.subr.bf16.mxu0 %v7166
    %7571 = vmatpush1.bf16.msra.mxu0 %v7165
    %7572 = vmatprep.subr.bf16.mxu0 %v7182
    %7573 = vmatpush1.bf16.msra.mxu0 %v7181
    %7574 = vmatprep.subr.bf16.mxu0 %v7198
    %7575 = vmatpush1.bf16.msra.mxu0 %v7197
    %7576 = vmatprep.subr.bf16.mxu0 %v7214
    %7577 = vmatpush1.bf16.msra.mxu0 %v7213
    %7578 = vmatprep.subr.bf16.mxu0 0
    %7579 = vmatpush1.bf16.msra.mxu0 0
    %7580 = vmatprep.subr.bf16.mxu0 0
    %7581 = vmatpush1.bf16.msra.mxu0 0
    %7582 = vmatprep.subr.bf16.mxu0 0
    %7583 = vmatpush1.bf16.msra.mxu0 0
    %7584 = vmatprep.subr.bf16.mxu0 0
    %7585 = vmatpush1.bf16.msra.mxu0 0
    %7586 = vmatprep.subr.bf16.mxu0 0
    %7587 = vmatpush1.bf16.msra.mxu0 0
    %7588 = vmatprep.subr.bf16.mxu0 0
    %7589 = vmatpush1.bf16.msra.mxu0 0
    %7590 = vmatprep.subr.bf16.mxu0 0
    %7591 = vmatpush1.bf16.msra.mxu0 0
    %7592 = vmatprep.subr.bf16.mxu0 0
    %7593 = vmatpush1.bf16.msra.mxu0 0
    %7594 = vmatprep.mubr.bf16.mxu0 0
    %7595 = vmatmul.mubr.bf16.gmra.mrb[0].mxu0 %v6488
    %v7596 = vpop.f32.mrb[0].mxu0
    %v7597 = vadd.f32 %v6670, %v7596
    %v7598 = vpop.f32.mrb[0].mxu0
    %v7599 = vadd.f32 %v6674, %v7598
    %v7600 = vpop.f32.mrb[0].mxu0
    %v7601 = vadd.f32 %v6670, %v7600
    %v7602 = vpop.f32.mrb[0].mxu0
    %v7603 = vadd.f32 %v6674, %v7602
    %7604 = vdwg.mxu0
    %7605 = vmatprep.subr.bf16.mxu0 %v7104
    %7606 = vmatpush1.bf16.msra.mxu0 %v7103
    %7607 = vmatprep.subr.bf16.mxu0 %v7120
    %7608 = vmatpush1.bf16.msra.mxu0 %v7119
    %7609 = vmatprep.subr.bf16.mxu0 %v7136
    %7610 = vmatpush1.bf16.msra.mxu0 %v7135
    %7611 = vmatprep.subr.bf16.mxu0 %v7152
    %7612 = vmatpush1.bf16.msra.mxu0 %v7151
    %7613 = vmatprep.subr.bf16.mxu0 %v7168
    %7614 = vmatpush1.bf16.msra.mxu0 %v7167
    %7615 = vmatprep.subr.bf16.mxu0 %v7184
    %7616 = vmatpush1.bf16.msra.mxu0 %v7183
    %7617 = vmatprep.subr.bf16.mxu0 %v7200
    %7618 = vmatpush1.bf16.msra.mxu0 %v7199
    %7619 = vmatprep.subr.bf16.mxu0 %v7216
    %7620 = vmatpush1.bf16.msra.mxu0 %v7215
    %7621 = vmatprep.subr.bf16.mxu0 0
    %7622 = vmatpush1.bf16.msra.mxu0 0
    %7623 = vmatprep.subr.bf16.mxu0 0
    %7624 = vmatpush1.bf16.msra.mxu0 0
    %7625 = vmatprep.subr.bf16.mxu0 0
    %7626 = vmatpush1.bf16.msra.mxu0 0
    %7627 = vmatprep.subr.bf16.mxu0 0
    %7628 = vmatpush1.bf16.msra.mxu0 0
    %7629 = vmatprep.subr.bf16.mxu0 0
    %7630 = vmatpush1.bf16.msra.mxu0 0
    %7631 = vmatprep.subr.bf16.mxu0 0
    %7632 = vmatpush1.bf16.msra.mxu0 0
    %7633 = vmatprep.subr.bf16.mxu0 0
    %7634 = vmatpush1.bf16.msra.mxu0 0
    %7635 = vmatprep.subr.bf16.mxu0 0
    %7636 = vmatpush1.bf16.msra.mxu0 0
    %7637 = vmatprep.mubr.bf16.mxu0 0
    %7638 = vmatmul.mubr.bf16.gmra.mrb[0].mxu0 %v6488
    %v7639 = vpop.f32.mrb[0].mxu0
    %v7640 = vadd.f32 %v6678, %v7639
    %v7641 = vpop.f32.mrb[0].mxu0
    %v7642 = vadd.f32 %v6682, %v7641
    %v7643 = vpop.f32.mrb[0].mxu0
    %v7644 = vadd.f32 %v6678, %v7643
    %v7645 = vpop.f32.mrb[0].mxu0
    %v7646 = vadd.f32 %v6682, %v7645
    %7647 = vdwg.mxu0
    %7648 = vmatprep.subr.bf16.mxu0 %v7106
    %7649 = vmatpush1.bf16.msra.mxu0 %v7105
    %7650 = vmatprep.subr.bf16.mxu0 %v7122
    %7651 = vmatpush1.bf16.msra.mxu0 %v7121
    %7652 = vmatprep.subr.bf16.mxu0 %v7138
    %7653 = vmatpush1.bf16.msra.mxu0 %v7137
    %7654 = vmatprep.subr.bf16.mxu0 %v7154
    %7655 = vmatpush1.bf16.msra.mxu0 %v7153
    %7656 = vmatprep.subr.bf16.mxu0 %v7170
    %7657 = vmatpush1.bf16.msra.mxu0 %v7169
    %7658 = vmatprep.subr.bf16.mxu0 %v7186
    %7659 = vmatpush1.bf16.msra.mxu0 %v7185
    %7660 = vmatprep.subr.bf16.mxu0 %v7202
    %7661 = vmatpush1.bf16.msra.mxu0 %v7201
    %7662 = vmatprep.subr.bf16.mxu0 %v7218
    %7663 = vmatpush1.bf16.msra.mxu0 %v7217
    %7664 = vmatprep.subr.bf16.mxu0 0
    %7665 = vmatpush1.bf16.msra.mxu0 0
    %7666 = vmatprep.subr.bf16.mxu0 0
    %7667 = vmatpush1.bf16.msra.mxu0 0
    %7668 = vmatprep.subr.bf16.mxu0 0
    %7669 = vmatpush1.bf16.msra.mxu0 0
    %7670 = vmatprep.subr.bf16.mxu0 0
    %7671 = vmatpush1.bf16.msra.mxu0 0
    %7672 = vmatprep.subr.bf16.mxu0 0
    %7673 = vmatpush1.bf16.msra.mxu0 0
    %7674 = vmatprep.subr.bf16.mxu0 0
    %7675 = vmatpush1.bf16.msra.mxu0 0
    %7676 = vmatprep.subr.bf16.mxu0 0
    %7677 = vmatpush1.bf16.msra.mxu0 0
    %7678 = vmatprep.subr.bf16.mxu0 0
    %7679 = vmatpush1.bf16.msra.mxu0 0
    %7680 = vmatprep.mubr.bf16.mxu0 0
    %7681 = vmatmul.mubr.bf16.gmra.mrb[0].mxu0 %v6488
    %v7682 = vpop.f32.mrb[0].mxu0
    %v7683 = vadd.f32 %v6686, %v7682
    %v7684 = vpop.f32.mrb[0].mxu0
    %v7685 = vadd.f32 %v6690, %v7684
    %v7686 = vpop.f32.mrb[0].mxu0
    %v7687 = vadd.f32 %v6686, %v7686
    %v7688 = vpop.f32.mrb[0].mxu0
    %v7689 = vadd.f32 %v6690, %v7688
    %7690 = vdwg.mxu0
    %v7691 = vmax.f32 %v7382, 0.0
    %v7692 = vmax.f32 %v7384, 0.0
    %v7693 = vmax.f32 %v7425, 0.0
    %v7694 = vmax.f32 %v7427, 0.0
    %v7695 = vmax.f32 %v7468, 0.0
    %v7696 = vmax.f32 %v7470, 0.0
    %v7697 = vmax.f32 %v7511, 0.0
    %v7698 = vmax.f32 %v7513, 0.0
    %v7699 = vmax.f32 %v7554, 0.0
    %v7700 = vmax.f32 %v7556, 0.0
    %v7701 = vmax.f32 %v7597, 0.0
    %v7702 = vmax.f32 %v7599, 0.0
    %v7703 = vmax.f32 %v7640, 0.0
    %v7704 = vmax.f32 %v7642, 0.0
    %v7705 = vmax.f32 %v7683, 0.0
    %v7706 = vmax.f32 %v7685, 0.0
    %v7707 = vmax.f32 %v7386, 0.0
    %v7708 = vmax.f32 %v7388, 0.0
    %v7709 = vmax.f32 %v7429, 0.0
    %v7710 = vmax.f32 %v7431, 0.0
    %v7711 = vmax.f32 %v7472, 0.0
    %v7712 = vmax.f32 %v7474, 0.0
    %v7713 = vmax.f32 %v7515, 0.0
    %v7714 = vmax.f32 %v7517, 0.0
    %v7715 = vmax.f32 %v7558, 0.0
    %v7716 = vmax.f32 %v7560, 0.0
    %v7717 = vmax.f32 %v7601, 0.0
    %v7718 = vmax.f32 %v7603, 0.0
    %v7719 = vmax.f32 %v7644, 0.0
    %v7720 = vmax.f32 %v7646, 0.0
    %v7721 = vmax.f32 %v7687, 0.0
    %v7722 = vmax.f32 %v7689, 0.0
    %v7723 = vpack.c.bf16 %v7707, %v7691
    %v7724 = vpack.c.bf16 %v7708, %v7692
    %v7725 = vpack.c.bf16 %v7709, %v7693
    %v7726 = vpack.c.bf16 %v7710, %v7694
    %v7727 = vpack.c.bf16 %v7711, %v7695
    %v7728 = vpack.c.bf16 %v7712, %v7696
    %v7729 = vpack.c.bf16 %v7713, %v7697
    %v7730 = vpack.c.bf16 %v7714, %v7698
    %v7731 = vpack.c.bf16 %v7715, %v7699
    %v7732 = vpack.c.bf16 %v7716, %v7700
    %v7733 = vpack.c.bf16 %v7717, %v7701
    %v7734 = vpack.c.bf16 %v7718, %v7702
    %v7735 = vpack.c.bf16 %v7719, %v7703
    %v7736 = vpack.c.bf16 %v7720, %v7704
    %v7737 = vpack.c.bf16 %v7721, %v7705
    %v7738 = vpack.c.bf16 %v7722, %v7706
    %v7739 = vld [vmem:[%s4 + $0x4] sm:$0xf]
    %v7740 = vld [vmem:[%s4 + $0xc] sm:$0xf]
    %v7741 = vld [vmem:[%s4 + $0x14] sm:$0xf]
    %v7742 = vld [vmem:[%s4 + $0x1c] sm:$0xf]
    %v7743 = vld [vmem:[%s4 + $0x24] sm:$0xf]
    %v7744 = vld [vmem:[%s4 + $0x2c] sm:$0xf]
    %v7745 = vld [vmem:[%s4 + $0x34] sm:$0xf]
    %v7746 = vld [vmem:[%s4 + $0x3c] sm:$0xf]
    %v7747 = vld [vmem:[%s4 + $0x44] sm:$0xf]
    %v7748 = vld [vmem:[%s4 + $0x4c] sm:$0xf]
    %v7749 = vld [vmem:[%s4 + $0x54] sm:$0xf]
    %v7750 = vld [vmem:[%s4 + $0x5c] sm:$0xf]
    %v7751 = vld [vmem:[%s4 + $0x64] sm:$0xf]
    %v7752 = vld [vmem:[%s4 + $0x6c] sm:$0xf]
    %v7753 = vld [vmem:[%s4 + $0x74] sm:$0xf]
    %v7754 = vld [vmem:[%s4 + $0x7c] sm:$0xf]
    %v7755 = vld [vmem:[%s4 + $0x84] sm:$0xf]
    %v7756 = vld [vmem:[%s4 + $0x8c] sm:$0xf]
    %v7757 = vld [vmem:[%s4 + $0x94] sm:$0xf]
    %v7758 = vld [vmem:[%s4 + $0x9c] sm:$0xf]
    %v7759 = vld [vmem:[%s4 + $0xa4] sm:$0xf]
    %v7760 = vld [vmem:[%s4 + $0xac] sm:$0xf]
    %v7761 = vld [vmem:[%s4 + $0xb4] sm:$0xf]
    %v7762 = vld [vmem:[%s4 + $0xbc] sm:$0xf]
    %v7763 = vld [vmem:[%s4 + $0xc4] sm:$0xf]
    %v7764 = vld [vmem:[%s4 + $0xcc] sm:$0xf]
    %v7765 = vld [vmem:[%s4 + $0xd4] sm:$0xf]
    %v7766 = vld [vmem:[%s4 + $0xdc] sm:$0xf]
    %v7767 = vld [vmem:[%s4 + $0xe4] sm:$0xf]
    %v7768 = vld [vmem:[%s4 + $0xec] sm:$0xf]
    %v7769 = vld [vmem:[%s4 + $0xf4] sm:$0xf]
    %v7770 = vld [vmem:[%s4 + $0xfc] sm:$0xf]
    %v7771 = vld [vmem:[%s4 + $0x104] sm:$0xf]
    %v7772 = vld [vmem:[%s4 + $0x10c] sm:$0xf]
    %v7773 = vld [vmem:[%s4 + $0x114] sm:$0xf]
    %v7774 = vld [vmem:[%s4 + $0x11c] sm:$0xf]
    %v7775 = vld [vmem:[%s4 + $0x124] sm:$0xf]
    %v7776 = vld [vmem:[%s4 + $0x12c] sm:$0xf]
    %v7777 = vld [vmem:[%s4 + $0x134] sm:$0xf]
    %v7778 = vld [vmem:[%s4 + $0x13c] sm:$0xf]
    %v7779 = vld [vmem:[%s4 + $0x144] sm:$0xf]
    %v7780 = vld [vmem:[%s4 + $0x14c] sm:$0xf]
    %v7781 = vld [vmem:[%s4 + $0x154] sm:$0xf]
    %v7782 = vld [vmem:[%s4 + $0x15c] sm:$0xf]
    %v7783 = vld [vmem:[%s4 + $0x164] sm:$0xf]
    %v7784 = vld [vmem:[%s4 + $0x16c] sm:$0xf]
    %v7785 = vld [vmem:[%s4 + $0x174] sm:$0xf]
    %v7786 = vld [vmem:[%s4 + $0x17c] sm:$0xf]
    %v7787 = vld [vmem:[%s4 + $0x184] sm:$0xf]
    %v7788 = vld [vmem:[%s4 + $0x18c] sm:$0xf]
    %v7789 = vld [vmem:[%s4 + $0x194] sm:$0xf]
    %v7790 = vld [vmem:[%s4 + $0x19c] sm:$0xf]
    %v7791 = vld [vmem:[%s4 + $0x1a4] sm:$0xf]
    %v7792 = vld [vmem:[%s4 + $0x1ac] sm:$0xf]
    %v7793 = vld [vmem:[%s4 + $0x1b4] sm:$0xf]
    %v7794 = vld [vmem:[%s4 + $0x1bc] sm:$0xf]
    %v7795 = vld [vmem:[%s4 + $0x1c4] sm:$0xf]
    %v7796 = vld [vmem:[%s4 + $0x1cc] sm:$0xf]
    %v7797 = vld [vmem:[%s4 + $0x1d4] sm:$0xf]
    %v7798 = vld [vmem:[%s4 + $0x1dc] sm:$0xf]
    %v7799 = vld [vmem:[%s4 + $0x1e4] sm:$0xf]
    %v7800 = vld [vmem:[%s4 + $0x1ec] sm:$0xf]
    %v7801 = vld [vmem:[%s4 + $0x1f4] sm:$0xf]
    %v7802 = vld [vmem:[%s4 + $0x1fc] sm:$0xf]
    %v7803 = vld [vmem:[%s4 + $0x204] sm:$0xf]
    %v7804 = vld [vmem:[%s4 + $0x20c] sm:$0xf]
    %v7805 = vld [vmem:[%s4 + $0x214] sm:$0xf]
    %v7806 = vld [vmem:[%s4 + $0x21c] sm:$0xf]
    %v7807 = vld [vmem:[%s4 + $0x224] sm:$0xf]
    %v7808 = vld [vmem:[%s4 + $0x22c] sm:$0xf]
    %v7809 = vld [vmem:[%s4 + $0x234] sm:$0xf]
    %v7810 = vld [vmem:[%s4 + $0x23c] sm:$0xf]
    %v7811 = vld [vmem:[%s4 + $0x244] sm:$0xf]
    %v7812 = vld [vmem:[%s4 + $0x24c] sm:$0xf]
    %v7813 = vld [vmem:[%s4 + $0x254] sm:$0xf]
    %v7814 = vld [vmem:[%s4 + $0x25c] sm:$0xf]
    %v7815 = vld [vmem:[%s4 + $0x264] sm:$0xf]
    %v7816 = vld [vmem:[%s4 + $0x26c] sm:$0xf]
    %v7817 = vld [vmem:[%s4 + $0x274] sm:$0xf]
    %v7818 = vld [vmem:[%s4 + $0x27c] sm:$0xf]
    %v7819 = vld [vmem:[%s4 + $0x284] sm:$0xf]
    %v7820 = vld [vmem:[%s4 + $0x28c] sm:$0xf]
    %v7821 = vld [vmem:[%s4 + $0x294] sm:$0xf]
    %v7822 = vld [vmem:[%s4 + $0x29c] sm:$0xf]
    %v7823 = vld [vmem:[%s4 + $0x2a4] sm:$0xf]
    %v7824 = vld [vmem:[%s4 + $0x2ac] sm:$0xf]
    %v7825 = vld [vmem:[%s4 + $0x2b4] sm:$0xf]
    %v7826 = vld [vmem:[%s4 + $0x2bc] sm:$0xf]
    %v7827 = vld [vmem:[%s4 + $0x2c4] sm:$0xf]
    %v7828 = vld [vmem:[%s4 + $0x2cc] sm:$0xf]
    %v7829 = vld [vmem:[%s4 + $0x2d4] sm:$0xf]
    %v7830 = vld [vmem:[%s4 + $0x2dc] sm:$0xf]
    %v7831 = vld [vmem:[%s4 + $0x2e4] sm:$0xf]
    %v7832 = vld [vmem:[%s4 + $0x2ec] sm:$0xf]
    %v7833 = vld [vmem:[%s4 + $0x2f4] sm:$0xf]
    %v7834 = vld [vmem:[%s4 + $0x2fc] sm:$0xf]
    %v7835 = vld [vmem:[%s4 + $0x304] sm:$0xf]
    %v7836 = vld [vmem:[%s4 + $0x30c] sm:$0xf]
    %v7837 = vld [vmem:[%s4 + $0x314] sm:$0xf]
    %v7838 = vld [vmem:[%s4 + $0x31c] sm:$0xf]
    %v7839 = vld [vmem:[%s4 + $0x324] sm:$0xf]
    %v7840 = vld [vmem:[%s4 + $0x32c] sm:$0xf]
    %v7841 = vld [vmem:[%s4 + $0x334] sm:$0xf]
    %v7842 = vld [vmem:[%s4 + $0x33c] sm:$0xf]
    %v7843 = vld [vmem:[%s4 + $0x344] sm:$0xf]
    %v7844 = vld [vmem:[%s4 + $0x34c] sm:$0xf]
    %v7845 = vld [vmem:[%s4 + $0x354] sm:$0xf]
    %v7846 = vld [vmem:[%s4 + $0x35c] sm:$0xf]
    %v7847 = vld [vmem:[%s4 + $0x364] sm:$0xf]
    %v7848 = vld [vmem:[%s4 + $0x36c] sm:$0xf]
    %v7849 = vld [vmem:[%s4 + $0x374] sm:$0xf]
    %v7850 = vld [vmem:[%s4 + $0x37c] sm:$0xf]
    %v7851 = vld [vmem:[%s4 + $0x384] sm:$0xf]
    %v7852 = vld [vmem:[%s4 + $0x38c] sm:$0xf]
    %v7853 = vld [vmem:[%s4 + $0x394] sm:$0xf]
    %v7854 = vld [vmem:[%s4 + $0x39c] sm:$0xf]
    %v7855 = vld [vmem:[%s4 + $0x3a4] sm:$0xf]
    %v7856 = vld [vmem:[%s4 + $0x3ac] sm:$0xf]
    %v7857 = vld [vmem:[%s4 + $0x3b4] sm:$0xf]
    %v7858 = vld [vmem:[%s4 + $0x3bc] sm:$0xf]
    %v7859 = vld [vmem:[%s4 + $0x3c4] sm:$0xf]
    %v7860 = vld [vmem:[%s4 + $0x3cc] sm:$0xf]
    %v7861 = vld [vmem:[%s4 + $0x3d4] sm:$0xf]
    %v7862 = vld [vmem:[%s4 + $0x3dc] sm:$0xf]
    %v7863 = vld [vmem:[%s4 + $0x3e4] sm:$0xf]
    %v7864 = vld [vmem:[%s4 + $0x3ec] sm:$0xf]
    %v7865 = vld [vmem:[%s4 + $0x3f4] sm:$0xf]
    %v7866 = vld [vmem:[%s4 + $0x3fc] sm:$0xf]
    %v7867 = vld [vmem:[%s4 + $0x404] sm:$0xf]
    %v7868 = vld [vmem:[%s4 + $0x40c] sm:$0xf]
    %v7869 = vld [vmem:[%s4 + $0x414] sm:$0xf]
    %v7870 = vld [vmem:[%s4 + $0x41c] sm:$0xf]
    %v7871 = vld [vmem:[%s4 + $0x424] sm:$0xf]
    %v7872 = vld [vmem:[%s4 + $0x42c] sm:$0xf]
    %v7873 = vld [vmem:[%s4 + $0x434] sm:$0xf]
    %v7874 = vld [vmem:[%s4 + $0x43c] sm:$0xf]
    %v7875 = vld [vmem:[%s4 + $0x444] sm:$0xf]
    %v7876 = vld [vmem:[%s4 + $0x44c] sm:$0xf]
    %v7877 = vld [vmem:[%s4 + $0x454] sm:$0xf]
    %v7878 = vld [vmem:[%s4 + $0x45c] sm:$0xf]
    %v7879 = vld [vmem:[%s4 + $0x464] sm:$0xf]
    %v7880 = vld [vmem:[%s4 + $0x46c] sm:$0xf]
    %v7881 = vld [vmem:[%s4 + $0x474] sm:$0xf]
    %v7882 = vld [vmem:[%s4 + $0x47c] sm:$0xf]
    %v7883 = vld [vmem:[%s4 + $0x484] sm:$0xf]
    %v7884 = vld [vmem:[%s4 + $0x48c] sm:$0xf]
    %v7885 = vld [vmem:[%s4 + $0x494] sm:$0xf]
    %v7886 = vld [vmem:[%s4 + $0x49c] sm:$0xf]
    %v7887 = vld [vmem:[%s4 + $0x4a4] sm:$0xf]
    %v7888 = vld [vmem:[%s4 + $0x4ac] sm:$0xf]
    %v7889 = vld [vmem:[%s4 + $0x4b4] sm:$0xf]
    %v7890 = vld [vmem:[%s4 + $0x4bc] sm:$0xf]
    %v7891 = vld [vmem:[%s4 + $0x4c4] sm:$0xf]
    %v7892 = vld [vmem:[%s4 + $0x4cc] sm:$0xf]
    %v7893 = vld [vmem:[%s4 + $0x4d4] sm:$0xf]
    %v7894 = vld [vmem:[%s4 + $0x4dc] sm:$0xf]
    %v7895 = vld [vmem:[%s4 + $0x4e4] sm:$0xf]
    %v7896 = vld [vmem:[%s4 + $0x4ec] sm:$0xf]
    %v7897 = vld [vmem:[%s4 + $0x4f4] sm:$0xf]
    %v7898 = vld [vmem:[%s4 + $0x4fc] sm:$0xf]
    %v7899 = vld [vmem:[%s4 + $0x504] sm:$0xf]
    %v7900 = vld [vmem:[%s4 + $0x50c] sm:$0xf]
    %v7901 = vld [vmem:[%s4 + $0x514] sm:$0xf]
    %v7902 = vld [vmem:[%s4 + $0x51c] sm:$0xf]
    %v7903 = vld [vmem:[%s4 + $0x524] sm:$0xf]
    %v7904 = vld [vmem:[%s4 + $0x52c] sm:$0xf]
    %v7905 = vld [vmem:[%s4 + $0x534] sm:$0xf]
    %v7906 = vld [vmem:[%s4 + $0x53c] sm:$0xf]
    %v7907 = vld [vmem:[%s4 + $0x544] sm:$0xf]
    %v7908 = vld [vmem:[%s4 + $0x54c] sm:$0xf]
    %v7909 = vld [vmem:[%s4 + $0x554] sm:$0xf]
    %v7910 = vld [vmem:[%s4 + $0x55c] sm:$0xf]
    %v7911 = vld [vmem:[%s4 + $0x564] sm:$0xf]
    %v7912 = vld [vmem:[%s4 + $0x56c] sm:$0xf]
    %v7913 = vld [vmem:[%s4 + $0x574] sm:$0xf]
    %v7914 = vld [vmem:[%s4 + $0x57c] sm:$0xf]
    %v7915 = vld [vmem:[%s4 + $0x584] sm:$0xf]
    %v7916 = vld [vmem:[%s4 + $0x58c] sm:$0xf]
    %v7917 = vld [vmem:[%s4 + $0x594] sm:$0xf]
    %v7918 = vld [vmem:[%s4 + $0x59c] sm:$0xf]
    %v7919 = vld [vmem:[%s4 + $0x5a4] sm:$0xf]
    %v7920 = vld [vmem:[%s4 + $0x5ac] sm:$0xf]
    %v7921 = vld [vmem:[%s4 + $0x5b4] sm:$0xf]
    %v7922 = vld [vmem:[%s4 + $0x5bc] sm:$0xf]
    %v7923 = vld [vmem:[%s4 + $0x5c4] sm:$0xf]
    %v7924 = vld [vmem:[%s4 + $0x5cc] sm:$0xf]
    %v7925 = vld [vmem:[%s4 + $0x5d4] sm:$0xf]
    %v7926 = vld [vmem:[%s4 + $0x5dc] sm:$0xf]
    %v7927 = vld [vmem:[%s4 + $0x5e4] sm:$0xf]
    %v7928 = vld [vmem:[%s4 + $0x5ec] sm:$0xf]
    %v7929 = vld [vmem:[%s4 + $0x5f4] sm:$0xf]
    %v7930 = vld [vmem:[%s4 + $0x5fc] sm:$0xf]
    %v7931 = vld [vmem:[%s4 + $0x604] sm:$0xf]
    %v7932 = vld [vmem:[%s4 + $0x60c] sm:$0xf]
    %v7933 = vld [vmem:[%s4 + $0x614] sm:$0xf]
    %v7934 = vld [vmem:[%s4 + $0x61c] sm:$0xf]
    %v7935 = vld [vmem:[%s4 + $0x624] sm:$0xf]
    %v7936 = vld [vmem:[%s4 + $0x62c] sm:$0xf]
    %v7937 = vld [vmem:[%s4 + $0x634] sm:$0xf]
    %v7938 = vld [vmem:[%s4 + $0x63c] sm:$0xf]
    %v7939 = vld [vmem:[%s4 + $0x644] sm:$0xf]
    %v7940 = vld [vmem:[%s4 + $0x64c] sm:$0xf]
    %v7941 = vld [vmem:[%s4 + $0x654] sm:$0xf]
    %v7942 = vld [vmem:[%s4 + $0x65c] sm:$0xf]
    %v7943 = vld [vmem:[%s4 + $0x664] sm:$0xf]
    %v7944 = vld [vmem:[%s4 + $0x66c] sm:$0xf]
    %v7945 = vld [vmem:[%s4 + $0x674] sm:$0xf]
    %v7946 = vld [vmem:[%s4 + $0x67c] sm:$0xf]
    %v7947 = vld [vmem:[%s4 + $0x684] sm:$0xf]
    %v7948 = vld [vmem:[%s4 + $0x68c] sm:$0xf]
    %v7949 = vld [vmem:[%s4 + $0x694] sm:$0xf]
    %v7950 = vld [vmem:[%s4 + $0x69c] sm:$0xf]
    %v7951 = vld [vmem:[%s4 + $0x6a4] sm:$0xf]
    %v7952 = vld [vmem:[%s4 + $0x6ac] sm:$0xf]
    %v7953 = vld [vmem:[%s4 + $0x6b4] sm:$0xf]
    %v7954 = vld [vmem:[%s4 + $0x6bc] sm:$0xf]
    %v7955 = vld [vmem:[%s4 + $0x6c4] sm:$0xf]
    %v7956 = vld [vmem:[%s4 + $0x6cc] sm:$0xf]
    %v7957 = vld [vmem:[%s4 + $0x6d4] sm:$0xf]
    %v7958 = vld [vmem:[%s4 + $0x6dc] sm:$0xf]
    %v7959 = vld [vmem:[%s4 + $0x6e4] sm:$0xf]
    %v7960 = vld [vmem:[%s4 + $0x6ec] sm:$0xf]
    %v7961 = vld [vmem:[%s4 + $0x6f4] sm:$0xf]
    %v7962 = vld [vmem:[%s4 + $0x6fc] sm:$0xf]
    %v7963 = vld [vmem:[%s4 + $0x704] sm:$0xf]
    %v7964 = vld [vmem:[%s4 + $0x70c] sm:$0xf]
    %v7965 = vld [vmem:[%s4 + $0x714] sm:$0xf]
    %v7966 = vld [vmem:[%s4 + $0x71c] sm:$0xf]
    %v7967 = vld [vmem:[%s4 + $0x724] sm:$0xf]
    %v7968 = vld [vmem:[%s4 + $0x72c] sm:$0xf]
    %v7969 = vld [vmem:[%s4 + $0x734] sm:$0xf]
    %v7970 = vld [vmem:[%s4 + $0x73c] sm:$0xf]
    %v7971 = vld [vmem:[%s4 + $0x744] sm:$0xf]
    %v7972 = vld [vmem:[%s4 + $0x74c] sm:$0xf]
    %v7973 = vld [vmem:[%s4 + $0x754] sm:$0xf]
    %v7974 = vld [vmem:[%s4 + $0x75c] sm:$0xf]
    %v7975 = vld [vmem:[%s4 + $0x764] sm:$0xf]
    %v7976 = vld [vmem:[%s4 + $0x76c] sm:$0xf]
    %v7977 = vld [vmem:[%s4 + $0x774] sm:$0xf]
    %v7978 = vld [vmem:[%s4 + $0x77c] sm:$0xf]
    %v7979 = vld [vmem:[%s4 + $0x784] sm:$0xf]
    %v7980 = vld [vmem:[%s4 + $0x78c] sm:$0xf]
    %v7981 = vld [vmem:[%s4 + $0x794] sm:$0xf]
    %v7982 = vld [vmem:[%s4 + $0x79c] sm:$0xf]
    %v7983 = vld [vmem:[%s4 + $0x7a4] sm:$0xf]
    %v7984 = vld [vmem:[%s4 + $0x7ac] sm:$0xf]
    %v7985 = vld [vmem:[%s4 + $0x7b4] sm:$0xf]
    %v7986 = vld [vmem:[%s4 + $0x7bc] sm:$0xf]
    %v7987 = vld [vmem:[%s4 + $0x7c4] sm:$0xf]
    %v7988 = vld [vmem:[%s4 + $0x7cc] sm:$0xf]
    %v7989 = vld [vmem:[%s4 + $0x7d4] sm:$0xf]
    %v7990 = vld [vmem:[%s4 + $0x7dc] sm:$0xf]
    %v7991 = vld [vmem:[%s4 + $0x7e4] sm:$0xf]
    %v7992 = vld [vmem:[%s4 + $0x7ec] sm:$0xf]
    %v7993 = vld [vmem:[%s4 + $0x7f4] sm:$0xf]
    %v7994 = vld [vmem:[%s4 + $0x7fc] sm:$0xf]
    %v7995 = vld [vmem:[%s5 + $0x102] ss:$0 sm:$0xff]
    %v8252 = vunpack.c.l.b16 %v7739
    %v8253 = vunpack.c.l.b16 %v7740
    %v8254 = vunpack.c.l.b16 %v7741
    %v8255 = vunpack.c.l.b16 %v7742
    %v8256 = vunpack.c.l.b16 %v7743
    %v8257 = vunpack.c.l.b16 %v7744
    %v8258 = vunpack.c.l.b16 %v7745
    %v8259 = vunpack.c.l.b16 %v7746
    %v8260 = vunpack.c.l.b16 %v7747
    %v8261 = vunpack.c.l.b16 %v7748
    %v8262 = vunpack.c.l.b16 %v7749
    %v8263 = vunpack.c.l.b16 %v7750
    %v8264 = vunpack.c.l.b16 %v7751
    %v8265 = vunpack.c.l.b16 %v7752
    %v8266 = vunpack.c.l.b16 %v7753
    %v8267 = vunpack.c.l.b16 %v7754
    %v8268 = vunpack.c.l.b16 %v7755
    %v8269 = vunpack.c.l.b16 %v7756
    %v8270 = vunpack.c.l.b16 %v7757
    %v8271 = vunpack.c.l.b16 %v7758
    %v8272 = vunpack.c.l.b16 %v7759
    %v8273 = vunpack.c.l.b16 %v7760
    %v8274 = vunpack.c.l.b16 %v7761
    %v8275 = vunpack.c.l.b16 %v7762
    %v8276 = vunpack.c.l.b16 %v7763
    %v8277 = vunpack.c.l.b16 %v7764
    %v8278 = vunpack.c.l.b16 %v7765
    %v8279 = vunpack.c.l.b16 %v7766
    %v8280 = vunpack.c.l.b16 %v7767
    %v8281 = vunpack.c.l.b16 %v7768
    %v8282 = vunpack.c.l.b16 %v7769
    %v8283 = vunpack.c.l.b16 %v7770
    %v8284 = vunpack.c.l.b16 %v7771
    %v8285 = vunpack.c.l.b16 %v7772
    %v8286 = vunpack.c.l.b16 %v7773
    %v8287 = vunpack.c.l.b16 %v7774
    %v8288 = vunpack.c.l.b16 %v7775
    %v8289 = vunpack.c.l.b16 %v7776
    %v8290 = vunpack.c.l.b16 %v7777
    %v8291 = vunpack.c.l.b16 %v7778
    %v8292 = vunpack.c.l.b16 %v7779
    %v8293 = vunpack.c.l.b16 %v7780
    %v8294 = vunpack.c.l.b16 %v7781
    %v8295 = vunpack.c.l.b16 %v7782
    %v8296 = vunpack.c.l.b16 %v7783
    %v8297 = vunpack.c.l.b16 %v7784
    %v8298 = vunpack.c.l.b16 %v7785
    %v8299 = vunpack.c.l.b16 %v7786
    %v8300 = vunpack.c.l.b16 %v7787
    %v8301 = vunpack.c.l.b16 %v7788
    %v8302 = vunpack.c.l.b16 %v7789
    %v8303 = vunpack.c.l.b16 %v7790
    %v8304 = vunpack.c.l.b16 %v7791
    %v8305 = vunpack.c.l.b16 %v7792
    %v8306 = vunpack.c.l.b16 %v7793
    %v8307 = vunpack.c.l.b16 %v7794
    %v8308 = vunpack.c.l.b16 %v7795
    %v8309 = vunpack.c.l.b16 %v7796
    %v8310 = vunpack.c.l.b16 %v7797
    %v8311 = vunpack.c.l.b16 %v7798
    %v8312 = vunpack.c.l.b16 %v7799
    %v8313 = vunpack.c.l.b16 %v7800
    %v8314 = vunpack.c.l.b16 %v7801
    %v8315 = vunpack.c.l.b16 %v7802
    %v8316 = vunpack.c.l.b16 %v7803
    %v8317 = vunpack.c.l.b16 %v7804
    %v8318 = vunpack.c.l.b16 %v7805
    %v8319 = vunpack.c.l.b16 %v7806
    %v8320 = vunpack.c.l.b16 %v7807
    %v8321 = vunpack.c.l.b16 %v7808
    %v8322 = vunpack.c.l.b16 %v7809
    %v8323 = vunpack.c.l.b16 %v7810
    %v8324 = vunpack.c.l.b16 %v7811
    %v8325 = vunpack.c.l.b16 %v7812
    %v8326 = vunpack.c.l.b16 %v7813
    %v8327 = vunpack.c.l.b16 %v7814
    %v8328 = vunpack.c.l.b16 %v7815
    %v8329 = vunpack.c.l.b16 %v7816
    %v8330 = vunpack.c.l.b16 %v7817
    %v8331 = vunpack.c.l.b16 %v7818
    %v8332 = vunpack.c.l.b16 %v7819
    %v8333 = vunpack.c.l.b16 %v7820
    %v8334 = vunpack.c.l.b16 %v7821
    %v8335 = vunpack.c.l.b16 %v7822
    %v8336 = vunpack.c.l.b16 %v7823
    %v8337 = vunpack.c.l.b16 %v7824
    %v8338 = vunpack.c.l.b16 %v7825
    %v8339 = vunpack.c.l.b16 %v7826
    %v8340 = vunpack.c.l.b16 %v7827
    %v8341 = vunpack.c.l.b16 %v7828
    %v8342 = vunpack.c.l.b16 %v7829
    %v8343 = vunpack.c.l.b16 %v7830
    %v8344 = vunpack.c.l.b16 %v7831
    %v8345 = vunpack.c.l.b16 %v7832
    %v8346 = vunpack.c.l.b16 %v7833
    %v8347 = vunpack.c.l.b16 %v7834
    %v8348 = vunpack.c.l.b16 %v7835
    %v8349 = vunpack.c.l.b16 %v7836
    %v8350 = vunpack.c.l.b16 %v7837
    %v8351 = vunpack.c.l.b16 %v7838
    %v8352 = vunpack.c.l.b16 %v7839
    %v8353 = vunpack.c.l.b16 %v7840
    %v8354 = vunpack.c.l.b16 %v7841
    %v8355 = vunpack.c.l.b16 %v7842
    %v8356 = vunpack.c.l.b16 %v7843
    %v8357 = vunpack.c.l.b16 %v7844
    %v8358 = vunpack.c.l.b16 %v7845
    %v8359 = vunpack.c.l.b16 %v7846
    %v8360 = vunpack.c.l.b16 %v7847
    %v8361 = vunpack.c.l.b16 %v7848
    %v8362 = vunpack.c.l.b16 %v7849
    %v8363 = vunpack.c.l.b16 %v7850
    %v8364 = vunpack.c.l.b16 %v7851
    %v8365 = vunpack.c.l.b16 %v7852
    %v8366 = vunpack.c.l.b16 %v7853
    %v8367 = vunpack.c.l.b16 %v7854
    %v8368 = vunpack.c.l.b16 %v7855
    %v8369 = vunpack.c.l.b16 %v7856
    %v8370 = vunpack.c.l.b16 %v7857
    %v8371 = vunpack.c.l.b16 %v7858
    %v8372 = vunpack.c.l.b16 %v7859
    %v8373 = vunpack.c.l.b16 %v7860
    %v8374 = vunpack.c.l.b16 %v7861
    %v8375 = vunpack.c.l.b16 %v7862
    %v8376 = vunpack.c.l.b16 %v7863
    %v8377 = vunpack.c.l.b16 %v7864
    %v8378 = vunpack.c.l.b16 %v7865
    %v8379 = vunpack.c.l.b16 %v7866
    %v8380 = vunpack.c.l.b16 %v7867
    %v8381 = vunpack.c.l.b16 %v7868
    %v8382 = vunpack.c.l.b16 %v7869
    %v8383 = vunpack.c.l.b16 %v7870
    %v8384 = vunpack.c.l.b16 %v7871
    %v8385 = vunpack.c.l.b16 %v7872
    %v8386 = vunpack.c.l.b16 %v7873
    %v8387 = vunpack.c.l.b16 %v7874
    %v8388 = vunpack.c.l.b16 %v7875
    %v8389 = vunpack.c.l.b16 %v7876
    %v8390 = vunpack.c.l.b16 %v7877
    %v8391 = vunpack.c.l.b16 %v7878
    %v8392 = vunpack.c.l.b16 %v7879
    %v8393 = vunpack.c.l.b16 %v7880
    %v8394 = vunpack.c.l.b16 %v7881
    %v8395 = vunpack.c.l.b16 %v7882
    %v8396 = vunpack.c.l.b16 %v7883
    %v8397 = vunpack.c.l.b16 %v7884
    %v8398 = vunpack.c.l.b16 %v7885
    %v8399 = vunpack.c.l.b16 %v7886
    %v8400 = vunpack.c.l.b16 %v7887
    %v8401 = vunpack.c.l.b16 %v7888
    %v8402 = vunpack.c.l.b16 %v7889
    %v8403 = vunpack.c.l.b16 %v7890
    %v8404 = vunpack.c.l.b16 %v7891
    %v8405 = vunpack.c.l.b16 %v7892
    %v8406 = vunpack.c.l.b16 %v7893
    %v8407 = vunpack.c.l.b16 %v7894
    %v8408 = vunpack.c.l.b16 %v7895
    %v8409 = vunpack.c.l.b16 %v7896
    %v8410 = vunpack.c.l.b16 %v7897
    %v8411 = vunpack.c.l.b16 %v7898
    %v8412 = vunpack.c.l.b16 %v7899
    %v8413 = vunpack.c.l.b16 %v7900
    %v8414 = vunpack.c.l.b16 %v7901
    %v8415 = vunpack.c.l.b16 %v7902
    %v8416 = vunpack.c.l.b16 %v7903
    %v8417 = vunpack.c.l.b16 %v7904
    %v8418 = vunpack.c.l.b16 %v7905
    %v8419 = vunpack.c.l.b16 %v7906
    %v8420 = vunpack.c.l.b16 %v7907
    %v8421 = vunpack.c.l.b16 %v7908
    %v8422 = vunpack.c.l.b16 %v7909
    %v8423 = vunpack.c.l.b16 %v7910
    %v8424 = vunpack.c.l.b16 %v7911
    %v8425 = vunpack.c.l.b16 %v7912
    %v8426 = vunpack.c.l.b16 %v7913
    %v8427 = vunpack.c.l.b16 %v7914
    %v8428 = vunpack.c.l.b16 %v7915
    %v8429 = vunpack.c.l.b16 %v7916
    %v8430 = vunpack.c.l.b16 %v7917
    %v8431 = vunpack.c.l.b16 %v7918
    %v8432 = vunpack.c.l.b16 %v7919
    %v8433 = vunpack.c.l.b16 %v7920
    %v8434 = vunpack.c.l.b16 %v7921
    %v8435 = vunpack.c.l.b16 %v7922
    %v8436 = vunpack.c.l.b16 %v7923
    %v8437 = vunpack.c.l.b16 %v7924
    %v8438 = vunpack.c.l.b16 %v7925
    %v8439 = vunpack.c.l.b16 %v7926
    %v8440 = vunpack.c.l.b16 %v7927
    %v8441 = vunpack.c.l.b16 %v7928
    %v8442 = vunpack.c.l.b16 %v7929
    %v8443 = vunpack.c.l.b16 %v7930
    %v8444 = vunpack.c.l.b16 %v7931
    %v8445 = vunpack.c.l.b16 %v7932
    %v8446 = vunpack.c.l.b16 %v7933
    %v8447 = vunpack.c.l.b16 %v7934
    %v8448 = vunpack.c.l.b16 %v7935
    %v8449 = vunpack.c.l.b16 %v7936
    %v8450 = vunpack.c.l.b16 %v7937
    %v8451 = vunpack.c.l.b16 %v7938
    %v8452 = vunpack.c.l.b16 %v7939
    %v8453 = vunpack.c.l.b16 %v7940
    %v8454 = vunpack.c.l.b16 %v7941
    %v8455 = vunpack.c.l.b16 %v7942
    %v8456 = vunpack.c.l.b16 %v7943
    %v8457 = vunpack.c.l.b16 %v7944
    %v8458 = vunpack.c.l.b16 %v7945
    %v8459 = vunpack.c.l.b16 %v7946
    %v8460 = vunpack.c.l.b16 %v7947
    %v8461 = vunpack.c.l.b16 %v7948
    %v8462 = vunpack.c.l.b16 %v7949
    %v8463 = vunpack.c.l.b16 %v7950
    %v8464 = vunpack.c.l.b16 %v7951
    %v8465 = vunpack.c.l.b16 %v7952
    %v8466 = vunpack.c.l.b16 %v7953
    %v8467 = vunpack.c.l.b16 %v7954
    %v8468 = vunpack.c.l.b16 %v7955
    %v8469 = vunpack.c.l.b16 %v7956
    %v8470 = vunpack.c.l.b16 %v7957
    %v8471 = vunpack.c.l.b16 %v7958
    %v8472 = vunpack.c.l.b16 %v7959
    %v8473 = vunpack.c.l.b16 %v7960
    %v8474 = vunpack.c.l.b16 %v7961
    %v8475 = vunpack.c.l.b16 %v7962
    %v8476 = vunpack.c.l.b16 %v7963
    %v8477 = vunpack.c.l.b16 %v7964
    %v8478 = vunpack.c.l.b16 %v7965
    %v8479 = vunpack.c.l.b16 %v7966
    %v8480 = vunpack.c.l.b16 %v7967
    %v8481 = vunpack.c.l.b16 %v7968
    %v8482 = vunpack.c.l.b16 %v7969
    %v8483 = vunpack.c.l.b16 %v7970
    %v8484 = vunpack.c.l.b16 %v7971
    %v8485 = vunpack.c.l.b16 %v7972
    %v8486 = vunpack.c.l.b16 %v7973
    %v8487 = vunpack.c.l.b16 %v7974
    %v8488 = vunpack.c.l.b16 %v7975
    %v8489 = vunpack.c.l.b16 %v7976
    %v8490 = vunpack.c.l.b16 %v7977
    %v8491 = vunpack.c.l.b16 %v7978
    %v8492 = vunpack.c.l.b16 %v7979
    %v8493 = vunpack.c.l.b16 %v7980
    %v8494 = vunpack.c.l.b16 %v7981
    %v8495 = vunpack.c.l.b16 %v7982
    %v8496 = vunpack.c.l.b16 %v7983
    %v8497 = vunpack.c.l.b16 %v7984
    %v8498 = vunpack.c.l.b16 %v7985
    %v8499 = vunpack.c.l.b16 %v7986
    %v8500 = vunpack.c.l.b16 %v7987
    %v8501 = vunpack.c.l.b16 %v7988
    %v8502 = vunpack.c.l.b16 %v7989
    %v8503 = vunpack.c.l.b16 %v7990
    %v8504 = vunpack.c.l.b16 %v7991
    %v8505 = vunpack.c.l.b16 %v7992
    %v8506 = vunpack.c.l.b16 %v7993
    %v8507 = vunpack.c.l.b16 %v7994
    %v8508 = vpack.c.b16 %v8253, %v8252
    %v8509 = vpack.c.b16 %v8255, %v8254
    %v8510 = vpack.c.b16 %v8257, %v8256
    %v8511 = vpack.c.b16 %v8259, %v8258
    %v8512 = vpack.c.b16 %v8261, %v8260
    %v8513 = vpack.c.b16 %v8263, %v8262
    %v8514 = vpack.c.b16 %v8265, %v8264
    %v8515 = vpack.c.b16 %v8267, %v8266
    %v8516 = vpack.c.b16 %v8269, %v8268
    %v8517 = vpack.c.b16 %v8271, %v8270
    %v8518 = vpack.c.b16 %v8273, %v8272
    %v8519 = vpack.c.b16 %v8275, %v8274
    %v8520 = vpack.c.b16 %v8277, %v8276
    %v8521 = vpack.c.b16 %v8279, %v8278
    %v8522 = vpack.c.b16 %v8281, %v8280
    %v8523 = vpack.c.b16 %v8283, %v8282
    %v8524 = vpack.c.b16 %v8285, %v8284
    %v8525 = vpack.c.b16 %v8287, %v8286
    %v8526 = vpack.c.b16 %v8289, %v8288
    %v8527 = vpack.c.b16 %v8291, %v8290
    %v8528 = vpack.c.b16 %v8293, %v8292
    %v8529 = vpack.c.b16 %v8295, %v8294
    %v8530 = vpack.c.b16 %v8297, %v8296
    %v8531 = vpack.c.b16 %v8299, %v8298
    %v8532 = vpack.c.b16 %v8301, %v8300
    %v8533 = vpack.c.b16 %v8303, %v8302
    %v8534 = vpack.c.b16 %v8305, %v8304
    %v8535 = vpack.c.b16 %v8307, %v8306
    %v8536 = vpack.c.b16 %v8309, %v8308
    %v8537 = vpack.c.b16 %v8311, %v8310
    %v8538 = vpack.c.b16 %v8313, %v8312
    %v8539 = vpack.c.b16 %v8315, %v8314
    %v8540 = vpack.c.b16 %v8317, %v8316
    %v8541 = vpack.c.b16 %v8319, %v8318
    %v8542 = vpack.c.b16 %v8321, %v8320
    %v8543 = vpack.c.b16 %v8323, %v8322
    %v8544 = vpack.c.b16 %v8325, %v8324
    %v8545 = vpack.c.b16 %v8327, %v8326
    %v8546 = vpack.c.b16 %v8329, %v8328
    %v8547 = vpack.c.b16 %v8331, %v8330
    %v8548 = vpack.c.b16 %v8333, %v8332
    %v8549 = vpack.c.b16 %v8335, %v8334
    %v8550 = vpack.c.b16 %v8337, %v8336
    %v8551 = vpack.c.b16 %v8339, %v8338
    %v8552 = vpack.c.b16 %v8341, %v8340
    %v8553 = vpack.c.b16 %v8343, %v8342
    %v8554 = vpack.c.b16 %v8345, %v8344
    %v8555 = vpack.c.b16 %v8347, %v8346
    %v8556 = vpack.c.b16 %v8349, %v8348
    %v8557 = vpack.c.b16 %v8351, %v8350
    %v8558 = vpack.c.b16 %v8353, %v8352
    %v8559 = vpack.c.b16 %v8355, %v8354
    %v8560 = vpack.c.b16 %v8357, %v8356
    %v8561 = vpack.c.b16 %v8359, %v8358
    %v8562 = vpack.c.b16 %v8361, %v8360
    %v8563 = vpack.c.b16 %v8363, %v8362
    %v8564 = vpack.c.b16 %v8365, %v8364
    %v8565 = vpack.c.b16 %v8367, %v8366
    %v8566 = vpack.c.b16 %v8369, %v8368
    %v8567 = vpack.c.b16 %v8371, %v8370
    %v8568 = vpack.c.b16 %v8373, %v8372
    %v8569 = vpack.c.b16 %v8375, %v8374
    %v8570 = vpack.c.b16 %v8377, %v8376
    %v8571 = vpack.c.b16 %v8379, %v8378
    %v8572 = vpack.c.b16 %v8381, %v8380
    %v8573 = vpack.c.b16 %v8383, %v8382
    %v8574 = vpack.c.b16 %v8385, %v8384
    %v8575 = vpack.c.b16 %v8387, %v8386
    %v8576 = vpack.c.b16 %v8389, %v8388
    %v8577 = vpack.c.b16 %v8391, %v8390
    %v8578 = vpack.c.b16 %v8393, %v8392
    %v8579 = vpack.c.b16 %v8395, %v8394
    %v8580 = vpack.c.b16 %v8397, %v8396
    %v8581 = vpack.c.b16 %v8399, %v8398
    %v8582 = vpack.c.b16 %v8401, %v8400
    %v8583 = vpack.c.b16 %v8403, %v8402
    %v8584 = vpack.c.b16 %v8405, %v8404
    %v8585 = vpack.c.b16 %v8407, %v8406
    %v8586 = vpack.c.b16 %v8409, %v8408
    %v8587 = vpack.c.b16 %v8411, %v8410
    %v8588 = vpack.c.b16 %v8413, %v8412
    %v8589 = vpack.c.b16 %v8415, %v8414
    %v8590 = vpack.c.b16 %v8417, %v8416
    %v8591 = vpack.c.b16 %v8419, %v8418
    %v8592 = vpack.c.b16 %v8421, %v8420
    %v8593 = vpack.c.b16 %v8423, %v8422
    %v8594 = vpack.c.b16 %v8425, %v8424
    %v8595 = vpack.c.b16 %v8427, %v8426
    %v8596 = vpack.c.b16 %v8429, %v8428
    %v8597 = vpack.c.b16 %v8431, %v8430
    %v8598 = vpack.c.b16 %v8433, %v8432
    %v8599 = vpack.c.b16 %v8435, %v8434
    %v8600 = vpack.c.b16 %v8437, %v8436
    %v8601 = vpack.c.b16 %v8439, %v8438
    %v8602 = vpack.c.b16 %v8441, %v8440
    %v8603 = vpack.c.b16 %v8443, %v8442
    %v8604 = vpack.c.b16 %v8445, %v8444
    %v8605 = vpack.c.b16 %v8447, %v8446
    %v8606 = vpack.c.b16 %v8449, %v8448
    %v8607 = vpack.c.b16 %v8451, %v8450
    %v8608 = vpack.c.b16 %v8453, %v8452
    %v8609 = vpack.c.b16 %v8455, %v8454
    %v8610 = vpack.c.b16 %v8457, %v8456
    %v8611 = vpack.c.b16 %v8459, %v8458
    %v8612 = vpack.c.b16 %v8461, %v8460
    %v8613 = vpack.c.b16 %v8463, %v8462
    %v8614 = vpack.c.b16 %v8465, %v8464
    %v8615 = vpack.c.b16 %v8467, %v8466
    %v8616 = vpack.c.b16 %v8469, %v8468
    %v8617 = vpack.c.b16 %v8471, %v8470
    %v8618 = vpack.c.b16 %v8473, %v8472
    %v8619 = vpack.c.b16 %v8475, %v8474
    %v8620 = vpack.c.b16 %v8477, %v8476
    %v8621 = vpack.c.b16 %v8479, %v8478
    %v8622 = vpack.c.b16 %v8481, %v8480
    %v8623 = vpack.c.b16 %v8483, %v8482
    %v8624 = vpack.c.b16 %v8485, %v8484
    %v8625 = vpack.c.b16 %v8487, %v8486
    %v8626 = vpack.c.b16 %v8489, %v8488
    %v8627 = vpack.c.b16 %v8491, %v8490
    %v8628 = vpack.c.b16 %v8493, %v8492
    %v8629 = vpack.c.b16 %v8495, %v8494
    %v8630 = vpack.c.b16 %v8497, %v8496
    %v8631 = vpack.c.b16 %v8499, %v8498
    %v8632 = vpack.c.b16 %v8501, %v8500
    %v8633 = vpack.c.b16 %v8503, %v8502
    %v8634 = vpack.c.b16 %v8505, %v8504
    %v8635 = vpack.c.b16 %v8507, %v8506
    %8764 = vmatprep.subr.bf16.mxu0 0
    %8765 = vmatpush1.bf16.msra.mxu0 %v8508
    %8766 = vmatprep.subr.bf16.mxu0 0
    %8767 = vmatpush1.bf16.msra.mxu0 %v8509
    %8768 = vmatprep.subr.bf16.mxu0 0
    %8769 = vmatpush1.bf16.msra.mxu0 %v8510
    %8770 = vmatprep.subr.bf16.mxu0 0
    %8771 = vmatpush1.bf16.msra.mxu0 %v8511
    %8772 = vmatprep.subr.bf16.mxu0 0
    %8773 = vmatpush1.bf16.msra.mxu0 %v8512
    %8774 = vmatprep.subr.bf16.mxu0 0
    %8775 = vmatpush1.bf16.msra.mxu0 %v8513
    %8776 = vmatprep.subr.bf16.mxu0 0
    %8777 = vmatpush1.bf16.msra.mxu0 %v8514
    %8778 = vmatprep.subr.bf16.mxu0 0
    %8779 = vmatpush1.bf16.msra.mxu0 %v8515
    %8780 = vmatprep.subr.bf16.mxu0 0
    %8781 = vmatpush1.bf16.msra.mxu0 %v8516
    %8782 = vmatprep.subr.bf16.mxu0 0
    %8783 = vmatpush1.bf16.msra.mxu0 %v8517
    %8784 = vmatprep.subr.bf16.mxu0 0
    %8785 = vmatpush1.bf16.msra.mxu0 %v8518
    %8786 = vmatprep.subr.bf16.mxu0 0
    %8787 = vmatpush1.bf16.msra.mxu0 %v8519
    %8788 = vmatprep.subr.bf16.mxu0 0
    %8789 = vmatpush1.bf16.msra.mxu0 %v8520
    %8790 = vmatprep.subr.bf16.mxu0 0
    %8791 = vmatpush1.bf16.msra.mxu0 %v8521
    %8792 = vmatprep.subr.bf16.mxu0 0
    %8793 = vmatpush1.bf16.msra.mxu0 %v8522
    %8794 = vmatprep.subr.bf16.mxu0 0
    %8795 = vmatpush1.bf16.msra.mxu0 %v8523
    %8796 = vmatprep.mubr.bf16.mxu0 %v7724
    %8797 = vmatmul.mubr.bf16.gmra.mrb[0].mxu0 %v7723
    %v8798 = vpop.f32.mrb[0].mxu0
    %v8799 = vadd.f32 %v7995, %v8798
    %v8800 = vpop.f32.mrb[0].mxu0
    %v8801 = vpop.f32.mrb[0].mxu0
    %v8802 = vadd.f32 %v7995, %v8801
    %v8803 = vpop.f32.mrb[0].mxu0
    %8804 = vdwg.mxu0
    %8805 = vmatprep.subr.bf16.mxu0 0
    %8806 = vmatpush1.bf16.msra.mxu0 %v8524
    %8807 = vmatprep.subr.bf16.mxu0 0
    %8808 = vmatpush1.bf16.msra.mxu0 %v8525
    %8809 = vmatprep.subr.bf16.mxu0 0
    %8810 = vmatpush1.bf16.msra.mxu0 %v8526
    %8811 = vmatprep.subr.bf16.mxu0 0
    %8812 = vmatpush1.bf16.msra.mxu0 %v8527
    %8813 = vmatprep.subr.bf16.mxu0 0
    %8814 = vmatpush1.bf16.msra.mxu0 %v8528
    %8815 = vmatprep.subr.bf16.mxu0 0
    %8816 = vmatpush1.bf16.msra.mxu0 %v8529
    %8817 = vmatprep.subr.bf16.mxu0 0
    %8818 = vmatpush1.bf16.msra.mxu0 %v8530
    %8819 = vmatprep.subr.bf16.mxu0 0
    %8820 = vmatpush1.bf16.msra.mxu0 %v8531
    %8821 = vmatprep.subr.bf16.mxu0 0
    %8822 = vmatpush1.bf16.msra.mxu0 %v8532
    %8823 = vmatprep.subr.bf16.mxu0 0
    %8824 = vmatpush1.bf16.msra.mxu0 %v8533
    %8825 = vmatprep.subr.bf16.mxu0 0
    %8826 = vmatpush1.bf16.msra.mxu0 %v8534
    %8827 = vmatprep.subr.bf16.mxu0 0
    %8828 = vmatpush1.bf16.msra.mxu0 %v8535
    %8829 = vmatprep.subr.bf16.mxu0 0
    %8830 = vmatpush1.bf16.msra.mxu0 %v8536
    %8831 = vmatprep.subr.bf16.mxu0 0
    %8832 = vmatpush1.bf16.msra.mxu0 %v8537
    %8833 = vmatprep.subr.bf16.mxu0 0
    %8834 = vmatpush1.bf16.msra.mxu0 %v8538
    %8835 = vmatprep.subr.bf16.mxu0 0
    %8836 = vmatpush1.bf16.msra.mxu0 %v8539
    %8837 = vmatprep.mubr.bf16.mxu0 %v7726
    %8838 = vmatmul.mubr.bf16.gmra.mrb[0].mxu0 %v7725
    %v8839 = vpop.f32.mrb[0].mxu0
    %v8840 = vadd.f32 %v8799, %v8839
    %v8841 = vpop.f32.mrb[0].mxu0
    %v8842 = vpop.f32.mrb[0].mxu0
    %v8843 = vadd.f32 %v8802, %v8842
    %v8844 = vpop.f32.mrb[0].mxu0
    %8845 = vdwg.mxu0
    %8846 = vmatprep.subr.bf16.mxu0 0
    %8847 = vmatpush1.bf16.msra.mxu0 %v8540
    %8848 = vmatprep.subr.bf16.mxu0 0
    %8849 = vmatpush1.bf16.msra.mxu0 %v8541
    %8850 = vmatprep.subr.bf16.mxu0 0
    %8851 = vmatpush1.bf16.msra.mxu0 %v8542
    %8852 = vmatprep.subr.bf16.mxu0 0
    %8853 = vmatpush1.bf16.msra.mxu0 %v8543
    %8854 = vmatprep.subr.bf16.mxu0 0
    %8855 = vmatpush1.bf16.msra.mxu0 %v8544
    %8856 = vmatprep.subr.bf16.mxu0 0
    %8857 = vmatpush1.bf16.msra.mxu0 %v8545
    %8858 = vmatprep.subr.bf16.mxu0 0
    %8859 = vmatpush1.bf16.msra.mxu0 %v8546
    %8860 = vmatprep.subr.bf16.mxu0 0
    %8861 = vmatpush1.bf16.msra.mxu0 %v8547
    %8862 = vmatprep.subr.bf16.mxu0 0
    %8863 = vmatpush1.bf16.msra.mxu0 %v8548
    %8864 = vmatprep.subr.bf16.mxu0 0
    %8865 = vmatpush1.bf16.msra.mxu0 %v8549
    %8866 = vmatprep.subr.bf16.mxu0 0
    %8867 = vmatpush1.bf16.msra.mxu0 %v8550
    %8868 = vmatprep.subr.bf16.mxu0 0
    %8869 = vmatpush1.bf16.msra.mxu0 %v8551
    %8870 = vmatprep.subr.bf16.mxu0 0
    %8871 = vmatpush1.bf16.msra.mxu0 %v8552
    %8872 = vmatprep.subr.bf16.mxu0 0
    %8873 = vmatpush1.bf16.msra.mxu0 %v8553
    %8874 = vmatprep.subr.bf16.mxu0 0
    %8875 = vmatpush1.bf16.msra.mxu0 %v8554
    %8876 = vmatprep.subr.bf16.mxu0 0
    %8877 = vmatpush1.bf16.msra.mxu0 %v8555
    %8878 = vmatprep.mubr.bf16.mxu0 %v7728
    %8879 = vmatmul.mubr.bf16.gmra.mrb[0].mxu0 %v7727
    %v8880 = vpop.f32.mrb[0].mxu0
    %v8881 = vadd.f32 %v8840, %v8880
    %v8882 = vpop.f32.mrb[0].mxu0
    %v8883 = vpop.f32.mrb[0].mxu0
    %v8884 = vadd.f32 %v8843, %v8883
    %v8885 = vpop.f32.mrb[0].mxu0
    %8886 = vdwg.mxu0
    %8887 = vmatprep.subr.bf16.mxu0 0
    %8888 = vmatpush1.bf16.msra.mxu0 %v8556
    %8889 = vmatprep.subr.bf16.mxu0 0
    %8890 = vmatpush1.bf16.msra.mxu0 %v8557
    %8891 = vmatprep.subr.bf16.mxu0 0
    %8892 = vmatpush1.bf16.msra.mxu0 %v8558
    %8893 = vmatprep.subr.bf16.mxu0 0
    %8894 = vmatpush1.bf16.msra.mxu0 %v8559
    %8895 = vmatprep.subr.bf16.mxu0 0
    %8896 = vmatpush1.bf16.msra.mxu0 %v8560
    %8897 = vmatprep.subr.bf16.mxu0 0
    %8898 = vmatpush1.bf16.msra.mxu0 %v8561
    %8899 = vmatprep.subr.bf16.mxu0 0
    %8900 = vmatpush1.bf16.msra.mxu0 %v8562
    %8901 = vmatprep.subr.bf16.mxu0 0
    %8902 = vmatpush1.bf16.msra.mxu0 %v8563
    %8903 = vmatprep.subr.bf16.mxu0 0
    %8904 = vmatpush1.bf16.msra.mxu0 %v8564
    %8905 = vmatprep.subr.bf16.mxu0 0
    %8906 = vmatpush1.bf16.msra.mxu0 %v8565
    %8907 = vmatprep.subr.bf16.mxu0 0
    %8908 = vmatpush1.bf16.msra.mxu0 %v8566
    %8909 = vmatprep.subr.bf16.mxu0 0
    %8910 = vmatpush1.bf16.msra.mxu0 %v8567
    %8911 = vmatprep.subr.bf16.mxu0 0
    %8912 = vmatpush1.bf16.msra.mxu0 %v8568
    %8913 = vmatprep.subr.bf16.mxu0 0
    %8914 = vmatpush1.bf16.msra.mxu0 %v8569
    %8915 = vmatprep.subr.bf16.mxu0 0
    %8916 = vmatpush1.bf16.msra.mxu0 %v8570
    %8917 = vmatprep.subr.bf16.mxu0 0
    %8918 = vmatpush1.bf16.msra.mxu0 %v8571
    %8919 = vmatprep.mubr.bf16.mxu0 %v7730
    %8920 = vmatmul.mubr.bf16.gmra.mrb[0].mxu0 %v7729
    %v8921 = vpop.f32.mrb[0].mxu0
    %v8922 = vadd.f32 %v8881, %v8921
    %v8923 = vpop.f32.mrb[0].mxu0
    %v8924 = vpop.f32.mrb[0].mxu0
    %v8925 = vadd.f32 %v8884, %v8924
    %v8926 = vpop.f32.mrb[0].mxu0
    %8927 = vdwg.mxu0
    %8928 = vmatprep.subr.bf16.mxu0 0
    %8929 = vmatpush1.bf16.msra.mxu0 %v8572
    %8930 = vmatprep.subr.bf16.mxu0 0
    %8931 = vmatpush1.bf16.msra.mxu0 %v8573
    %8932 = vmatprep.subr.bf16.mxu0 0
    %8933 = vmatpush1.bf16.msra.mxu0 %v8574
    %8934 = vmatprep.subr.bf16.mxu0 0
    %8935 = vmatpush1.bf16.msra.mxu0 %v8575
    %8936 = vmatprep.subr.bf16.mxu0 0
    %8937 = vmatpush1.bf16.msra.mxu0 %v8576
    %8938 = vmatprep.subr.bf16.mxu0 0
    %8939 = vmatpush1.bf16.msra.mxu0 %v8577
    %8940 = vmatprep.subr.bf16.mxu0 0
    %8941 = vmatpush1.bf16.msra.mxu0 %v8578
    %8942 = vmatprep.subr.bf16.mxu0 0
    %8943 = vmatpush1.bf16.msra.mxu0 %v8579
    %8944 = vmatprep.subr.bf16.mxu0 0
    %8945 = vmatpush1.bf16.msra.mxu0 %v8580
    %8946 = vmatprep.subr.bf16.mxu0 0
    %8947 = vmatpush1.bf16.msra.mxu0 %v8581
    %8948 = vmatprep.subr.bf16.mxu0 0
    %8949 = vmatpush1.bf16.msra.mxu0 %v8582
    %8950 = vmatprep.subr.bf16.mxu0 0
    %8951 = vmatpush1.bf16.msra.mxu0 %v8583
    %8952 = vmatprep.subr.bf16.mxu0 0
    %8953 = vmatpush1.bf16.msra.mxu0 %v8584
    %8954 = vmatprep.subr.bf16.mxu0 0
    %8955 = vmatpush1.bf16.msra.mxu0 %v8585
    %8956 = vmatprep.subr.bf16.mxu0 0
    %8957 = vmatpush1.bf16.msra.mxu0 %v8586
    %8958 = vmatprep.subr.bf16.mxu0 0
    %8959 = vmatpush1.bf16.msra.mxu0 %v8587
    %8960 = vmatprep.mubr.bf16.mxu0 %v7732
    %8961 = vmatmul.mubr.bf16.gmra.mrb[0].mxu0 %v7731
    %v8962 = vpop.f32.mrb[0].mxu0
    %v8963 = vadd.f32 %v8922, %v8962
    %v8964 = vpop.f32.mrb[0].mxu0
    %v8965 = vpop.f32.mrb[0].mxu0
    %v8966 = vadd.f32 %v8925, %v8965
    %v8967 = vpop.f32.mrb[0].mxu0
    %8968 = vdwg.mxu0
    %8969 = vmatprep.subr.bf16.mxu0 0
    %8970 = vmatpush1.bf16.msra.mxu0 %v8588
    %8971 = vmatprep.subr.bf16.mxu0 0
    %8972 = vmatpush1.bf16.msra.mxu0 %v8589
    %8973 = vmatprep.subr.bf16.mxu0 0
    %8974 = vmatpush1.bf16.msra.mxu0 %v8590
    %8975 = vmatprep.subr.bf16.mxu0 0
    %8976 = vmatpush1.bf16.msra.mxu0 %v8591
    %8977 = vmatprep.subr.bf16.mxu0 0
    %8978 = vmatpush1.bf16.msra.mxu0 %v8592
    %8979 = vmatprep.subr.bf16.mxu0 0
    %8980 = vmatpush1.bf16.msra.mxu0 %v8593
    %8981 = vmatprep.subr.bf16.mxu0 0
    %8982 = vmatpush1.bf16.msra.mxu0 %v8594
    %8983 = vmatprep.subr.bf16.mxu0 0
    %8984 = vmatpush1.bf16.msra.mxu0 %v8595
    %8985 = vmatprep.subr.bf16.mxu0 0
    %8986 = vmatpush1.bf16.msra.mxu0 %v8596
    %8987 = vmatprep.subr.bf16.mxu0 0
    %8988 = vmatpush1.bf16.msra.mxu0 %v8597
    %8989 = vmatprep.subr.bf16.mxu0 0
    %8990 = vmatpush1.bf16.msra.mxu0 %v8598
    %8991 = vmatprep.subr.bf16.mxu0 0
    %8992 = vmatpush1.bf16.msra.mxu0 %v8599
    %8993 = vmatprep.subr.bf16.mxu0 0
    %8994 = vmatpush1.bf16.msra.mxu0 %v8600
    %8995 = vmatprep.subr.bf16.mxu0 0
    %8996 = vmatpush1.bf16.msra.mxu0 %v8601
    %8997 = vmatprep.subr.bf16.mxu0 0
    %8998 = vmatpush1.bf16.msra.mxu0 %v8602
    %8999 = vmatprep.subr.bf16.mxu0 0
    %9000 = vmatpush1.bf16.msra.mxu0 %v8603
    %9001 = vmatprep.mubr.bf16.mxu0 %v7734
    %9002 = vmatmul.mubr.bf16.gmra.mrb[0].mxu0 %v7733
    %v9003 = vpop.f32.mrb[0].mxu0
    %v9004 = vadd.f32 %v8963, %v9003
    %v9005 = vpop.f32.mrb[0].mxu0
    %v9006 = vpop.f32.mrb[0].mxu0
    %v9007 = vadd.f32 %v8966, %v9006
    %v9008 = vpop.f32.mrb[0].mxu0
    %9009 = vdwg.mxu0
    %9010 = vmatprep.subr.bf16.mxu0 0
    %9011 = vmatpush1.bf16.msra.mxu0 %v8604
    %9012 = vmatprep.subr.bf16.mxu0 0
    %9013 = vmatpush1.bf16.msra.mxu0 %v8605
    %9014 = vmatprep.subr.bf16.mxu0 0
    %9015 = vmatpush1.bf16.msra.mxu0 %v8606
    %9016 = vmatprep.subr.bf16.mxu0 0
    %9017 = vmatpush1.bf16.msra.mxu0 %v8607
    %9018 = vmatprep.subr.bf16.mxu0 0
    %9019 = vmatpush1.bf16.msra.mxu0 %v8608
    %9020 = vmatprep.subr.bf16.mxu0 0
    %9021 = vmatpush1.bf16.msra.mxu0 %v8609
    %9022 = vmatprep.subr.bf16.mxu0 0
    %9023 = vmatpush1.bf16.msra.mxu0 %v8610
    %9024 = vmatprep.subr.bf16.mxu0 0
    %9025 = vmatpush1.bf16.msra.mxu0 %v8611
    %9026 = vmatprep.subr.bf16.mxu0 0
    %9027 = vmatpush1.bf16.msra.mxu0 %v8612
    %9028 = vmatprep.subr.bf16.mxu0 0
    %9029 = vmatpush1.bf16.msra.mxu0 %v8613
    %9030 = vmatprep.subr.bf16.mxu0 0
    %9031 = vmatpush1.bf16.msra.mxu0 %v8614
    %9032 = vmatprep.subr.bf16.mxu0 0
    %9033 = vmatpush1.bf16.msra.mxu0 %v8615
    %9034 = vmatprep.subr.bf16.mxu0 0
    %9035 = vmatpush1.bf16.msra.mxu0 %v8616
    %9036 = vmatprep.subr.bf16.mxu0 0
    %9037 = vmatpush1.bf16.msra.mxu0 %v8617
    %9038 = vmatprep.subr.bf16.mxu0 0
    %9039 = vmatpush1.bf16.msra.mxu0 %v8618
    %9040 = vmatprep.subr.bf16.mxu0 0
    %9041 = vmatpush1.bf16.msra.mxu0 %v8619
    %9042 = vmatprep.mubr.bf16.mxu0 %v7736
    %9043 = vmatmul.mubr.bf16.gmra.mrb[0].mxu0 %v7735
    %v9044 = vpop.f32.mrb[0].mxu0
    %v9045 = vadd.f32 %v9004, %v9044
    %v9046 = vpop.f32.mrb[0].mxu0
    %v9047 = vpop.f32.mrb[0].mxu0
    %v9048 = vadd.f32 %v9007, %v9047
    %v9049 = vpop.f32.mrb[0].mxu0
    %9050 = vdwg.mxu0
    %9051 = vmatprep.subr.bf16.mxu0 0
    %9052 = vmatpush1.bf16.msra.mxu0 %v8620
    %9053 = vmatprep.subr.bf16.mxu0 0
    %9054 = vmatpush1.bf16.msra.mxu0 %v8621
    %9055 = vmatprep.subr.bf16.mxu0 0
    %9056 = vmatpush1.bf16.msra.mxu0 %v8622
    %9057 = vmatprep.subr.bf16.mxu0 0
    %9058 = vmatpush1.bf16.msra.mxu0 %v8623
    %9059 = vmatprep.subr.bf16.mxu0 0
    %9060 = vmatpush1.bf16.msra.mxu0 %v8624
    %9061 = vmatprep.subr.bf16.mxu0 0
    %9062 = vmatpush1.bf16.msra.mxu0 %v8625
    %9063 = vmatprep.subr.bf16.mxu0 0
    %9064 = vmatpush1.bf16.msra.mxu0 %v8626
    %9065 = vmatprep.subr.bf16.mxu0 0
    %9066 = vmatpush1.bf16.msra.mxu0 %v8627
    %9067 = vmatprep.subr.bf16.mxu0 0
    %9068 = vmatpush1.bf16.msra.mxu0 %v8628
    %9069 = vmatprep.subr.bf16.mxu0 0
    %9070 = vmatpush1.bf16.msra.mxu0 %v8629
    %9071 = vmatprep.subr.bf16.mxu0 0
    %9072 = vmatpush1.bf16.msra.mxu0 %v8630
    %9073 = vmatprep.subr.bf16.mxu0 0
    %9074 = vmatpush1.bf16.msra.mxu0 %v8631
    %9075 = vmatprep.subr.bf16.mxu0 0
    %9076 = vmatpush1.bf16.msra.mxu0 %v8632
    %9077 = vmatprep.subr.bf16.mxu0 0
    %9078 = vmatpush1.bf16.msra.mxu0 %v8633
    %9079 = vmatprep.subr.bf16.mxu0 0
    %9080 = vmatpush1.bf16.msra.mxu0 %v8634
    %9081 = vmatprep.subr.bf16.mxu0 0
    %9082 = vmatpush1.bf16.msra.mxu0 %v8635
    %9083 = vmatprep.mubr.bf16.mxu0 %v7738
    %9084 = vmatmul.mubr.bf16.gmra.mrb[0].mxu0 %v7737
    %v9085 = vpop.f32.mrb[0].mxu0
    %v9086 = vadd.f32 %v9045, %v9085
    %v9087 = vpop.f32.mrb[0].mxu0
    %v9088 = vpop.f32.mrb[0].mxu0
    %v9089 = vadd.f32 %v9048, %v9088
    %v9090 = vpop.f32.mrb[0].mxu0
    %9091 = vdwg.mxu0
    %v9092 = vadd.f32 %v6486, %v9086
    %v9093 = vadd.f32 %v6487, %v9089
    %9094 = vadd.xlane.f32.xlu0 %v9092
    %v9095 = vpop.xlane.xlu0 %9094
    %9096 = vadd.xlane.f32.xlu0 %v9093
    %v9097 = vpop.xlane.xlu0 %9096
    %v9098 = vmul.f32 %v9095, 0.015151516
    %v9099 = vmul.f32 %v9097, 0.015151516
    %v9100 = vsub.f32 %v9092, %v9098
    %v9101 = vsub.f32 %v9093, %v9099
    %v9102 = vmul.f32 %v9100, %v29
    %v9103 = vmul.f32 %v9101, %v29
    %v9104 = vmul.f32 %v9102, %v9102
    %v9105 = vmul.f32 %v9103, %v9103
    %9106 = vadd.xlane.f32.xlu0 %v9104
    %v9107 = vpop.xlane.xlu0 %9106
    %9108 = vadd.xlane.f32.xlu0 %v9105
    %v9109 = vpop.xlane.xlu0 %9108
    %v9110 = vmul.f32 %v9107, 0.015151516
    %v9111 = vmul.f32 %v9109, 0.015151516
    %v9112 = vadd.f32 %v9110, 1e-05
    %v9113 = vadd.f32 %v9111, 1e-05
    %v9114 = vrsqrt.pop %v9112
    %v9115 = vrsqrt.pop %v9113
    %v9116 = vmul.f32 %v9102, %v9114
    %v9117 = vmul.f32 %v9103, %v9115
    %v9118 = vld [vmem:[%s5 + $0x103] ss:$0 sm:$0xff]
    %v9119 = vmul.f32 %v9116, %v9118
    %v9120 = vmul.f32 %v9117, %v9118
    %v9121 = vld [vmem:[%s5 + $0x104] ss:$0 sm:$0xff]
    %v9122 = vadd.f32 %v9119, %v9121
    %v9123 = vadd.f32 %v9120, %v9121
    %v9124 = vpack.c.bf16 %v9123, %v9122
    %v9125 = vld [vmem:[%s1 + $0x48] sm:$0xf]
    %v9126 = vld [vmem:[%s1 + $0x94] sm:$0xf]
    %v9127 = vld [vmem:[%s1 + $0xe0] sm:$0xf]
    %v9128 = vld [vmem:[%s1 + $0x12c] sm:$0xf]
    %v9129 = vld [vmem:[%s1 + $0x178] sm:$0xf]
    %v9130 = vld [vmem:[%s1 + $0x1c4] sm:$0xf]
    %v9131 = vld [vmem:[%s1 + $0x210] sm:$0xf]
    %v9132 = vld [vmem:[%s1 + $0x25c] sm:$0xf]
    %v9133 = vld [vmem:[%s1 + $0x2a8] sm:$0xf]
    %v9134 = vld [vmem:[%s1 + $0x2f4] sm:$0xf]
    %v9135 = vld [vmem:[%s1 + $0x340] sm:$0xf]
    %v9136 = vld [vmem:[%s1 + $0x38c] sm:$0xf]
    %v9137 = vld [vmem:[%s1 + $0x3d8] sm:$0xf]
    %v9138 = vld [vmem:[%s1 + $0x424] sm:$0xf]
    %v9139 = vld [vmem:[%s1 + $0x470] sm:$0xf]
    %v9140 = vld [vmem:[%s1 + $0x4bc] sm:$0xf]
    %v9141 = vld [vmem:[%s5 + $0x105] ss:$0 sm:$0xff]
    %v9158 = vunpack.c.l.b16 %v9125
    %v9159 = vunpack.c.l.b16 %v9126
    %v9160 = vunpack.c.l.b16 %v9127
    %v9161 = vunpack.c.l.b16 %v9128
    %v9162 = vunpack.c.l.b16 %v9129
    %v9163 = vunpack.c.l.b16 %v9130
    %v9164 = vunpack.c.l.b16 %v9131
    %v9165 = vunpack.c.l.b16 %v9132
    %v9166 = vunpack.c.l.b16 %v9133
    %v9167 = vunpack.c.l.b16 %v9134
    %v9168 = vunpack.c.l.b16 %v9135
    %v9169 = vunpack.c.l.b16 %v9136
    %v9170 = vunpack.c.l.b16 %v9137
    %v9171 = vunpack.c.l.b16 %v9138
    %v9172 = vunpack.c.l.b16 %v9139
    %v9173 = vunpack.c.l.b16 %v9140
    %v9174 = vpack.c.b16 %v9159, %v9158
    %v9175 = vpack.c.b16 %v9161, %v9160
    %v9176 = vpack.c.b16 %v9163, %v9162
    %v9177 = vpack.c.b16 %v9165, %v9164
    %v9178 = vpack.c.b16 %v9167, %v9166
    %v9179 = vpack.c.b16 %v9169, %v9168
    %v9180 = vpack.c.b16 %v9171, %v9170
    %v9181 = vpack.c.b16 %v9173, %v9172
    %9190 = vmatprep.subr.bf16.mxu0 0
    %9191 = vmatpush1.bf16.msra.mxu0 %v9174
    %9192 = vmatprep.subr.bf16.mxu0 0
    %9193 = vmatpush1.bf16.msra.mxu0 %v9175
    %9194 = vmatprep.subr.bf16.mxu0 0
    %9195 = vmatpush1.bf16.msra.mxu0 %v9176
    %9196 = vmatprep.subr.bf16.mxu0 0
    %9197 = vmatpush1.bf16.msra.mxu0 %v9177
    %9198 = vmatprep.subr.bf16.mxu0 0
    %9199 = vmatpush1.bf16.msra.mxu0 %v9178
    %9200 = vmatprep.subr.bf16.mxu0 0
    %9201 = vmatpush1.bf16.msra.mxu0 %v9179
    %9202 = vmatprep.subr.bf16.mxu0 0
    %9203 = vmatpush1.bf16.msra.mxu0 %v9180
    %9204 = vmatprep.subr.bf16.mxu0 0
    %9205 = vmatpush1.bf16.msra.mxu0 %v9181
    %9206 = vmatprep.subr.bf16.mxu0 0
    %9207 = vmatpush1.bf16.msra.mxu0 0
    %9208 = vmatprep.subr.bf16.mxu0 0
    %9209 = vmatpush1.bf16.msra.mxu0 0
    %9210 = vmatprep.subr.bf16.mxu0 0
    %9211 = vmatpush1.bf16.msra.mxu0 0
    %9212 = vmatprep.subr.bf16.mxu0 0
    %9213 = vmatpush1.bf16.msra.mxu0 0
    %9214 = vmatprep.subr.bf16.mxu0 0
    %9215 = vmatpush1.bf16.msra.mxu0 0
    %9216 = vmatprep.subr.bf16.mxu0 0
    %9217 = vmatpush1.bf16.msra.mxu0 0
    %9218 = vmatprep.subr.bf16.mxu0 0
    %9219 = vmatpush1.bf16.msra.mxu0 0
    %9220 = vmatprep.subr.bf16.mxu0 0
    %9221 = vmatpush1.bf16.msra.mxu0 0
    %9222 = vmatprep.mubr.bf16.mxu0 0
    %9223 = vmatmul.mubr.bf16.gmra.mrb[0].mxu0 %v9124
    %v9224 = vpop.f32.mrb[0].mxu0
    %v9225 = vadd.f32 %v9141, %v9224
    %v9226 = vpop.f32.mrb[0].mxu0
    %v9227 = vpop.f32.mrb[0].mxu0
    %v9228 = vadd.f32 %v9141, %v9227
    %v9229 = vpop.f32.mrb[0].mxu0
    %9230 = vdwg.mxu0
    %v9231 = vtanh.pop %v9225
    %v9232 = vtanh.pop %v9228
    %9233 = vst [vmem:[#allocation2] sm:$0xff] %v9231
    %9234 = vst [vmem:[#allocation2 + $0x8] sm:$0xff] %v9232
    // Predicated region
    $region26: #{pose_generator_forward.1} parent=1 // pred_check
      _
    $region27: #{pose_generator_forward.1} parent=1 // pred_check_branch
      %9236 = sbr.rel (0) target = $region29
    $region28: #{pose_generator_forward.1} parent=1 // pred_region
      %s9238 = ssub.s32 256, 256
      %9239 = vsyncadd [#allocation3], %s9238
      %s9240 = sshll.u32 [#allocation2], 4
      %s9241 = int_to_ptr.vmem [resolvable:$true] %s9240
      %9246 = dma.vmem_to_hbm [thread:$0]  %s9241, 256, %s6, [#allocation3], 128, 128, 8
    $region29: #{pose_generator_forward.1} parent=1 // pred_fallthru
      _
    // Predicated region
    $region30: #{pose_generator_forward.1} parent=1 // pred_check
      _
    $region31: #{pose_generator_forward.1} parent=1 // pred_check_branch
      %9248 = sbr.rel (0) target = $region33
    $region32: #{pose_generator_forward.1} parent=1 // pred_region
      %9249 = dma.done [#allocation3], 256
    $region33: #{pose_generator_forward.1} parent=1 // pred_fallthru
      _
    %9250 = vsyncpa [#allocation3], 1

</llo_original>
